<compile_context>
chip_gen: v7x
topology: tpu7x:2x2x1
jax: 0.10.0
libtpu: 0.0.40
codegen_flags: <defaults>
</compile_context>

<pallas_src>
import numpy as np
import jax
import jax.numpy as jnp
from jax.experimental import pallas as pl
from jax.experimental.pallas import tpu as pltpu

PROD_N = 2                      # forward signature: Tuple[Tensor, Tensor]
NUM_DIGITS = 10
NUM_SYMBOLS = 9 ** PROD_N + 1   # 82 symbols: products 0..81

# MNIST geometry (baked into the net: fc1 expects 64*4*4 = 1024 features)
H_IN = 28
C1, C2 = 32, 64
CONV1_ROWS, POOL1_ROWS, POOL1_COLS = 24, 12, 12     # 28-5+1=24 -> pool -> 12
CONV2_ROWS, POOL2_ROWS, POOL2_COLS = 8, 4, 4        # 12-5+1=8  -> pool -> 4
LANE1 = POOL1_COLS * C1                             # 384
LANE2 = POOL2_COLS * C2                             # 256
FC_HID = 1024


# ----------------------- fused conv1+pool1+conv2+pool2 ------------------------
def _convstack_kernel(x_ref, t1e_ref, t1o_ref, b1_ref, t2e_ref, t2o_ref, b2_ref,
                      feat_ref):
    f32 = jnp.float32
    x = x_ref[0]                                              # (28, 28) f32

    # ---- conv1 (5x5, 1->32) via W-Toeplitz matmuls, even/odd output columns ----
    acc_e = jnp.zeros((CONV1_ROWS, LANE1), f32)
    acc_o = jnp.zeros((CONV1_ROWS, LANE1), f32)
    for kh in range(5):
        xk = x[kh:kh + CONV1_ROWS, :].astype(jnp.bfloat16)    # (24, 28)
        acc_e = acc_e + jnp.dot(xk, t1e_ref[kh], preferred_element_type=f32)
        acc_o = acc_o + jnp.dot(xk, t1o_ref[kh], preferred_element_type=f32)
    b1 = b1_ref[...]                                          # (1, 384)
    pool_w = jnp.maximum(acc_e + b1, acc_o + b1)              # maxpool over W, (24, 384)

    # maxpool over H via exact 0/1 row-selection matmuls (no strided / reshaped rows)
    rows = jax.lax.broadcasted_iota(jnp.int32, (POOL1_ROWS, CONV1_ROWS), 0)
    cols = jax.lax.broadcasted_iota(jnp.int32, (POOL1_ROWS, CONV1_ROWS), 1)
    sel_e = (cols == 2 * rows).astype(f32)
    sel_o = (cols == 2 * rows + 1).astype(f32)
    p1 = jnp.maximum(jnp.dot(sel_e, pool_w, preferred_element_type=f32),
                     jnp.dot(sel_o, pool_w, preferred_element_type=f32))   # (12, 384)

    # ---- conv2 (5x5, 32->64), same structure ----
    acc2_e = jnp.zeros((CONV2_ROWS, LANE2), f32)
    acc2_o = jnp.zeros((CONV2_ROWS, LANE2), f32)
    for kh in range(5):
        pk = p1[kh:kh + CONV2_ROWS, :].astype(jnp.bfloat16)   # (8, 384)
        acc2_e = acc2_e + jnp.dot(pk, t2e_ref[kh], preferred_element_type=f32)
        acc2_o = acc2_o + jnp.dot(pk, t2o_ref[kh], preferred_element_type=f32)
    b2 = b2_ref[...]                                          # (1, 256)
    pool2_w = jnp.maximum(acc2_e + b2, acc2_o + b2)           # (8, 256)

    rows2 = jax.lax.broadcasted_iota(jnp.int32, (POOL2_ROWS, CONV2_ROWS), 0)
    cols2 = jax.lax.broadcasted_iota(jnp.int32, (POOL2_ROWS, CONV2_ROWS), 1)
    sel2_e = (cols2 == 2 * rows2).astype(f32)
    sel2_o = (cols2 == 2 * rows2 + 1).astype(f32)
    p2 = jnp.maximum(jnp.dot(sel2_e, pool2_w, preferred_element_type=f32),
                     jnp.dot(sel2_o, pool2_w, preferred_element_type=f32))  # (4, 256)

    # feature layout: feat[n, hp, wp*64 + cout] = pool2[hp, wp, cout]
    feat_ref[0] = p2


# ------------- fused fc1+relu+fc2+softmax+product-distribution head ----------
def _head_kernel(feat_ref, w3_ref, b3_ref, w4_ref, b4_ref, emap_ref, out_ref):
    f32 = jnp.float32
    b = out_ref.shape[0]                      # pair batch size (PROD_N == 2)

    # fc1 (1024 -> 1024): K split over the 4 pooled rows so no in-kernel flatten.
    acc = jnp.zeros((feat_ref.shape[0], w3_ref.shape[2]), f32)
    for hp in range(feat_ref.shape[1]):
        acc = acc + jnp.dot(feat_ref[:, hp, :].astype(jnp.bfloat16), w3_ref[hp],
                            preferred_element_type=f32)
    y = jnp.maximum(acc + b3_ref[...], 0.0)
    # TODO(synk): F.dropout(p=0.5) is the identity in eval mode; training-mode
    # stochastic dropout is not implemented.

    # fc2 (1024 -> 10) + softmax
    logits = jnp.dot(y.astype(jnp.bfloat16), w4_ref[...],
                     preferred_element_type=f32) + b4_ref[...]
    m = jnp.max(logits, axis=1, keepdims=True)
    e = jnp.exp(logits - m)
    p = e / jnp.sum(e, axis=1, keepdims=True)                 # (2B, 10)

    # product of the two digit distributions mapped onto symbols {0..81}
    pa = p[:b, :]                                             # image 0 of each pair
    pb = p[b:, :]                                             # image 1 of each pair
    acc_s = jnp.zeros(out_ref.shape, f32)
    for d in range(NUM_DIGITS):
        acc_s = acc_s + pa[:, d:d + 1] * jnp.dot(pb, emap_ref[d],
                                                 preferred_element_type=f32)
    out_ref[...] = acc_s


# ------------------------------- model wrapper --------------------------------
def mnist_prod_n_net(prep, xs):
    """xs: tuple of PROD_N tensors, each (B, 1, 28, 28) NCHW. Returns (B, 82)."""
    assert len(xs) == PROD_N
    b = xs[0].shape[0]
    n2 = PROD_N * b
    # Cin == 1, so NCHW -> (N, 28, 28) is a pure reshape; batch both images together.
    x_all = jnp.concatenate([xi.reshape(b, H_IN, H_IN) for xi in xs], axis=0)

    feat = pl.pallas_call(
        _convstack_kernel,
        out_shape=jax.ShapeDtypeStruct((n2, POOL2_ROWS, LANE2), jnp.float32),
        grid=(n2,),
        in_specs=[
            pl.BlockSpec((1, H_IN, H_IN), lambda n: (n, 0, 0)),
            pl.BlockSpec((5, H_IN, LANE1), lambda n: (0, 0, 0)),
            pl.BlockSpec((5, H_IN, LANE1), lambda n: (0, 0, 0)),
            pl.BlockSpec((1, LANE1), lambda n: (0, 0)),
            pl.BlockSpec((5, LANE1, LANE2), lambda n: (0, 0, 0)),
            pl.BlockSpec((5, LANE1, LANE2), lambda n: (0, 0, 0)),
            pl.BlockSpec((1, LANE2), lambda n: (0, 0)),
        ],
        out_specs=pl.BlockSpec((1, POOL2_ROWS, LANE2), lambda n: (n, 0, 0)),
        compiler_params=pltpu.CompilerParams(dimension_semantics=("parallel",)),
    )(x_all, prep["t1e"], prep["t1o"], prep["b1t"],
      prep["t2e"], prep["t2o"], prep["b2t"])

    out = pl.pallas_call(
        _head_kernel,
        out_shape=jax.ShapeDtypeStruct((b, NUM_SYMBOLS), jnp.float32),
        grid=(1,),
        in_specs=[
            pl.BlockSpec((n2, POOL2_ROWS, LANE2), lambda i: (0, 0, 0)),
            pl.BlockSpec((POOL2_ROWS, LANE2, FC_HID), lambda i: (0, 0, 0)),
            pl.BlockSpec((1, FC_HID), lambda i: (0, 0)),
            pl.BlockSpec((FC_HID, NUM_DIGITS), lambda i: (0, 0)),
            pl.BlockSpec((1, NUM_DIGITS), lambda i: (0, 0)),
            pl.BlockSpec((NUM_DIGITS, NUM_DIGITS, NUM_SYMBOLS), lambda i: (0, 0, 0)),
        ],
        out_specs=pl.BlockSpec((b, NUM_SYMBOLS), lambda i: (0, 0)),
        compiler_params=pltpu.CompilerParams(dimension_semantics=("arbitrary",)),
    )(feat, prep["w3r"], prep["b3"], prep["w4"], prep["b4"], prep["emap"])
    return out


# --------------------------- parameters & prep --------------------------------
def init_params(key):
    ks = jax.random.split(key, 8)
    p = {}
    p["w1"] = 0.10 * jax.random.normal(ks[0], (5, 5, 1, C1), jnp.float32)   # KH,KW,Cin,Cout
    p["b1"] = 0.05 * jax.random.normal(ks[1], (C1,), jnp.float32)
    p["w2"] = 0.05 * jax.random.normal(ks[2], (5, 5, C1, C2), jnp.float32)
    p["b2"] = 0.05 * jax.random.normal(ks[3], (C2,), jnp.float32)
    p["w3t"] = 0.03 * jax.random.normal(ks[4], (FC_HID, FC_HID), jnp.float32)  # torch W.T
    p["b3"] = 0.05 * jax.random.normal(ks[5], (FC_HID,), jnp.float32)
    p["w4t"] = 0.10 * jax.random.normal(ks[6], (FC_HID, NUM_DIGITS), jnp.float32)
    p["b4"] = 0.05 * jax.random.normal(ks[7], (NUM_DIGITS,), jnp.float32)
    return p


def _build_emap():
    d = np.arange(NUM_DIGITS)
    prods = d[:, None] * d[None, :]
    e = (prods[:, :, None] == np.arange(NUM_SYMBOLS)[None, None, :]).astype(np.float32)
    return jnp.asarray(e)                                     # (10, 10, 82)


def prepare_params(params):
    """One-time host-side weight prep (Toeplitz slabs, tiled biases, flatten fold)."""
    w1 = np.asarray(params["w1"], np.float32)
    b1 = np.asarray(params["b1"], np.float32)
    w2 = np.asarray(params["w2"], np.float32)
    b2 = np.asarray(params["b2"], np.float32)
    w3t = np.asarray(params["w3t"], np.float32)
    b3 = np.asarray(params["b3"], np.float32)
    w4t = np.asarray(params["w4t"], np.float32)
    b4 = np.asarray(params["b4"], np.float32)

    def toeplitz(w, w_in_size, w_out_half, parity):
        # T[kh, w_in*Cin + cin, j*Cout + cout] = w[kh, w_in - (2j+parity), cin, cout]
        kh_n, kw_n, cin, cout = w.shape
        t = np.zeros((kh_n, w_in_size * cin, w_out_half * cout), np.float32)
        for kh in range(kh_n):
            for j in range(w_out_half):
                wo = 2 * j + parity
                for kw in range(kw_n):
                    wi = wo + kw
                    t[kh, wi * cin:(wi + 1) * cin, j * cout:(j + 1) * cout] = w[kh, kw]
        return t

    t1e = toeplitz(w1, H_IN, POOL1_COLS, 0)      # (5, 28, 384)
    t1o = toeplitz(w1, H_IN, POOL1_COLS, 1)
    t2e = toeplitz(w2, POOL1_COLS, POOL2_COLS, 0)  # (5, 384, 256)
    t2o = toeplitz(w2, POOL1_COLS, POOL2_COLS, 1)

    # Fold torch's `view(-1, 1024)` (C,H,W) flatten order into fc1's weight rows.
    # Our feature layout is flat index hp*256 + wp*64 + cout.
    idx = np.empty((POOL2_ROWS, LANE2), np.int32)
    for hp in range(POOL2_ROWS):
        for wp in range(POOL2_COLS):
            for co in range(C2):
                idx[hp, wp * C2 + co] = co * 16 + hp * 4 + wp
    w3r = w3t[idx]                               # (4, 256, 1024)

    return {
        "t1e": jnp.asarray(t1e, jnp.bfloat16),
        "t1o": jnp.asarray(t1o, jnp.bfloat16),
        "b1t": jnp.asarray(np.tile(b1, POOL1_COLS).reshape(1, LANE1), jnp.float32),
        "t2e": jnp.asarray(t2e, jnp.bfloat16),
        "t2o": jnp.asarray(t2o, jnp.bfloat16),
        "b2t": jnp.asarray(np.tile(b2, POOL2_COLS).reshape(1, LANE2), jnp.float32),
        "w3r": jnp.asarray(w3r, jnp.bfloat16),
        "b3": jnp.asarray(b3.reshape(1, FC_HID), jnp.float32),
        "w4": jnp.asarray(w4t, jnp.bfloat16),
        "b4": jnp.asarray(b4.reshape(1, NUM_DIGITS), jnp.float32),
        "emap": _build_emap(),
    }


# ------------------------ pure-JAX reference (f32) -----------------------------
def _reference_forward(params, xs, emap):
    dn = ("NCHW", "HWIO", "NCHW")

    def mnist_ref(x):
        y = jax.lax.conv_general_dilated(x, params["w1"], (1, 1), "VALID",
                                         dimension_numbers=dn)
        y = y + params["b1"][None, :, None, None]
        y = jax.lax.reduce_window(y, -jnp.inf, jax.lax.max,
                                  (1, 1, 2, 2), (1, 1, 2, 2), "VALID")
        y = jax.lax.conv_general_dilated(y, params["w2"], (1, 1), "VALID",
                                         dimension_numbers=dn)
        y = y + params["b2"][None, :, None, None]
        y = jax.lax.reduce_window(y, -jnp.inf, jax.lax.max,
                                  (1, 1, 2, 2), (1, 1, 2, 2), "VALID")
        y = y.reshape(y.shape[0], -1)                 # torch .view(-1, 1024) order
        y = jax.nn.relu(y @ params["w3t"] + params["b3"])
        logits = y @ params["w4t"] + params["b4"]
        return jax.nn.softmax(logits, axis=1)

    p0 = mnist_ref(xs[0])
    p1 = mnist_ref(xs[1])
    return jnp.einsum("bi,bj,ijs->bs", p0, p1, emap)


if __name__ == "__main__":
    key = jax.random.PRNGKey(0)
    pkey, xkey0, xkey1 = jax.random.split(key, 3)
    params = init_params(pkey)
    prep = prepare_params(params)

    B = 2
    x0 = jax.random.uniform(xkey0, (B, 1, H_IN, H_IN), jnp.float32)   # NCHW like torch
    x1 = jax.random.uniform(xkey1, (B, 1, H_IN, H_IN), jnp.float32)

    fwd = jax.jit(lambda pr, a, b: mnist_prod_n_net(pr, (a, b)))
    out = jax.block_until_ready(fwd(prep, x0, x1))
    assert out.shape == (B, NUM_SYMBOLS)

    ref = _reference_forward(params, (x0, x1), prep["emap"])
    np.testing.assert_allclose(np.asarray(out), np.asarray(ref), atol=0.06, rtol=0.0)

    print("KERNEL_OK")
</pallas_src>

<mosaic_0001>
module attributes {stable_mosaic.version = 11 : i64} {
  func.func @_convstack_kernel(%arg0: i32, %arg1: memref<1x28x28xf32, #tpu.memory_space<vmem>>, %arg2: memref<5x28x384xbf16, #tpu.memory_space<vmem>>, %arg3: memref<5x28x384xbf16, #tpu.memory_space<vmem>>, %arg4: memref<1x384xf32, #tpu.memory_space<vmem>>, %arg5: memref<5x384x256xbf16, #tpu.memory_space<vmem>>, %arg6: memref<5x384x256xbf16, #tpu.memory_space<vmem>>, %arg7: memref<1x256xf32, #tpu.memory_space<vmem>>, %arg8: memref<1x4x256xf32, #tpu.memory_space<vmem>>) attributes {dimension_semantics = [#tpu.dimension_semantics<parallel>], iteration_bounds = array<i64: 4>, scalar_prefetch = 0 : i64, scratch_operands = 0 : i64, tpu.core_type = #tpu.core_type<tc>, window_params = [{transform_indices = @transform_0, window_bounds = array<i64: 1, 28, 28>}, {pipeline_mode = #tpu.pipeline_mode<synchronous>, transform_indices = @transform_1, window_bounds = array<i64: 5, 28, 384>}, {pipeline_mode = #tpu.pipeline_mode<synchronous>, transform_indices = @transform_2, window_bounds = array<i64: 5, 28, 384>}, {pipeline_mode = #tpu.pipeline_mode<synchronous>, transform_indices = @transform_3, window_bounds = array<i64: 1, 384>}, {pipeline_mode = #tpu.pipeline_mode<synchronous>, transform_indices = @transform_4, window_bounds = array<i64: 5, 384, 256>}, {pipeline_mode = #tpu.pipeline_mode<synchronous>, transform_indices = @transform_5, window_bounds = array<i64: 5, 384, 256>}, {pipeline_mode = #tpu.pipeline_mode<synchronous>, transform_indices = @transform_6, window_bounds = array<i64: 1, 256>}, {transform_indices = @transform_7, window_bounds = array<i64: 1, 4, 256>}]} {
    %c0 = arith.constant 0 : index
    %c0_0 = arith.constant 0 : index
    %c0_1 = arith.constant 0 : index
    %0 = vector.load %arg1[%c0, %c0_0, %c0_1] : memref<1x28x28xf32, #tpu.memory_space<vmem>>, vector<1x28x28xf32>
    %1 = vector.shape_cast %0 : vector<1x28x28xf32> to vector<28x28xf32>
    %cst = arith.constant 0.000000e+00 : f32
    %2 = vector.broadcast %cst : f32 to vector<24x384xf32>
    %cst_2 = arith.constant 0.000000e+00 : f32
    %3 = vector.broadcast %cst_2 : f32 to vector<24x384xf32>
    %4 = vector.extract_strided_slice %1 {offsets = [0, 0], sizes = [24, 28], strides = [1, 1]} : vector<28x28xf32> to vector<24x28xf32>
    %5 = arith.truncf %4 : vector<24x28xf32> to vector<24x28xbf16>
    %c0_3 = arith.constant 0 : index
    %c0_4 = arith.constant 0 : index
    %c0_5 = arith.constant 0 : index
    %6 = vector.load %arg2[%c0_3, %c0_4, %c0_5] : memref<5x28x384xbf16, #tpu.memory_space<vmem>>, vector<1x28x384xbf16>
    %7 = vector.shape_cast %6 : vector<1x28x384xbf16> to vector<28x384xbf16>
    %cst_6 = arith.constant dense<0.000000e+00> : vector<24x384xf32>
    %8 = tpu.matmul %5, %7, %cst_6 {dimension_numbers = #tpu.dot_dimension_numbers<[1], [0], [0], [1], [0, 0, 1, 1], [], []>} : vector<24x28xbf16>, vector<28x384xbf16>, vector<24x384xf32> -> vector<24x384xf32>
    %9 = arith.addf %2, %8 : vector<24x384xf32>
    %c0_7 = arith.constant 0 : index
    %c0_8 = arith.constant 0 : index
    %c0_9 = arith.constant 0 : index
    %10 = vector.load %arg3[%c0_7, %c0_8, %c0_9] : memref<5x28x384xbf16, #tpu.memory_space<vmem>>, vector<1x28x384xbf16>
    %11 = vector.shape_cast %10 : vector<1x28x384xbf16> to vector<28x384xbf16>
    %cst_10 = arith.constant dense<0.000000e+00> : vector<24x384xf32>
    %12 = tpu.matmul %5, %11, %cst_10 {dimension_numbers = #tpu.dot_dimension_numbers<[1], [0], [0], [1], [0, 0, 1, 1], [], []>} : vector<24x28xbf16>, vector<28x384xbf16>, vector<24x384xf32> -> vector<24x384xf32>
    %13 = arith.addf %3, %12 : vector<24x384xf32>
    %14 = vector.extract_strided_slice %1 {offsets = [1, 0], sizes = [24, 28], strides = [1, 1]} : vector<28x28xf32> to vector<24x28xf32>
    %15 = arith.truncf %14 : vector<24x28xf32> to vector<24x28xbf16>
    %c1 = arith.constant 1 : index
    %c0_11 = arith.constant 0 : index
    %c0_12 = arith.constant 0 : index
    %16 = vector.load %arg2[%c1, %c0_11, %c0_12] : memref<5x28x384xbf16, #tpu.memory_space<vmem>>, vector<1x28x384xbf16>
    %17 = vector.shape_cast %16 : vector<1x28x384xbf16> to vector<28x384xbf16>
    %cst_13 = arith.constant dense<0.000000e+00> : vector<24x384xf32>
    %18 = tpu.matmul %15, %17, %cst_13 {dimension_numbers = #tpu.dot_dimension_numbers<[1], [0], [0], [1], [0, 0, 1, 1], [], []>} : vector<24x28xbf16>, vector<28x384xbf16>, vector<24x384xf32> -> vector<24x384xf32>
    %19 = arith.addf %9, %18 : vector<24x384xf32>
    %c1_14 = arith.constant 1 : index
    %c0_15 = arith.constant 0 : index
    %c0_16 = arith.constant 0 : index
    %20 = vector.load %arg3[%c1_14, %c0_15, %c0_16] : memref<5x28x384xbf16, #tpu.memory_space<vmem>>, vector<1x28x384xbf16>
    %21 = vector.shape_cast %20 : vector<1x28x384xbf16> to vector<28x384xbf16>
    %cst_17 = arith.constant dense<0.000000e+00> : vector<24x384xf32>
    %22 = tpu.matmul %15, %21, %cst_17 {dimension_numbers = #tpu.dot_dimension_numbers<[1], [0], [0], [1], [0, 0, 1, 1], [], []>} : vector<24x28xbf16>, vector<28x384xbf16>, vector<24x384xf32> -> vector<24x384xf32>
    %23 = arith.addf %13, %22 : vector<24x384xf32>
    %24 = vector.extract_strided_slice %1 {offsets = [2, 0], sizes = [24, 28], strides = [1, 1]} : vector<28x28xf32> to vector<24x28xf32>
    %25 = arith.truncf %24 : vector<24x28xf32> to vector<24x28xbf16>
    %c2 = arith.constant 2 : index
    %c0_18 = arith.constant 0 : index
    %c0_19 = arith.constant 0 : index
    %26 = vector.load %arg2[%c2, %c0_18, %c0_19] : memref<5x28x384xbf16, #tpu.memory_space<vmem>>, vector<1x28x384xbf16>
    %27 = vector.shape_cast %26 : vector<1x28x384xbf16> to vector<28x384xbf16>
    %cst_20 = arith.constant dense<0.000000e+00> : vector<24x384xf32>
    %28 = tpu.matmul %25, %27, %cst_20 {dimension_numbers = #tpu.dot_dimension_numbers<[1], [0], [0], [1], [0, 0, 1, 1], [], []>} : vector<24x28xbf16>, vector<28x384xbf16>, vector<24x384xf32> -> vector<24x384xf32>
    %29 = arith.addf %19, %28 : vector<24x384xf32>
    %c2_21 = arith.constant 2 : index
    %c0_22 = arith.constant 0 : index
    %c0_23 = arith.constant 0 : index
    %30 = vector.load %arg3[%c2_21, %c0_22, %c0_23] : memref<5x28x384xbf16, #tpu.memory_space<vmem>>, vector<1x28x384xbf16>
    %31 = vector.shape_cast %30 : vector<1x28x384xbf16> to vector<28x384xbf16>
    %cst_24 = arith.constant dense<0.000000e+00> : vector<24x384xf32>
    %32 = tpu.matmul %25, %31, %cst_24 {dimension_numbers = #tpu.dot_dimension_numbers<[1], [0], [0], [1], [0, 0, 1, 1], [], []>} : vector<24x28xbf16>, vector<28x384xbf16>, vector<24x384xf32> -> vector<24x384xf32>
    %33 = arith.addf %23, %32 : vector<24x384xf32>
    %34 = vector.extract_strided_slice %1 {offsets = [3, 0], sizes = [24, 28], strides = [1, 1]} : vector<28x28xf32> to vector<24x28xf32>
    %35 = arith.truncf %34 : vector<24x28xf32> to vector<24x28xbf16>
    %c3 = arith.constant 3 : index
    %c0_25 = arith.constant 0 : index
    %c0_26 = arith.constant 0 : index
    %36 = vector.load %arg2[%c3, %c0_25, %c0_26] : memref<5x28x384xbf16, #tpu.memory_space<vmem>>, vector<1x28x384xbf16>
    %37 = vector.shape_cast %36 : vector<1x28x384xbf16> to vector<28x384xbf16>
    %cst_27 = arith.constant dense<0.000000e+00> : vector<24x384xf32>
    %38 = tpu.matmul %35, %37, %cst_27 {dimension_numbers = #tpu.dot_dimension_numbers<[1], [0], [0], [1], [0, 0, 1, 1], [], []>} : vector<24x28xbf16>, vector<28x384xbf16>, vector<24x384xf32> -> vector<24x384xf32>
    %39 = arith.addf %29, %38 : vector<24x384xf32>
    %c3_28 = arith.constant 3 : index
    %c0_29 = arith.constant 0 : index
    %c0_30 = arith.constant 0 : index
    %40 = vector.load %arg3[%c3_28, %c0_29, %c0_30] : memref<5x28x384xbf16, #tpu.memory_space<vmem>>, vector<1x28x384xbf16>
    %41 = vector.shape_cast %40 : vector<1x28x384xbf16> to vector<28x384xbf16>
    %cst_31 = arith.constant dense<0.000000e+00> : vector<24x384xf32>
    %42 = tpu.matmul %35, %41, %cst_31 {dimension_numbers = #tpu.dot_dimension_numbers<[1], [0], [0], [1], [0, 0, 1, 1], [], []>} : vector<24x28xbf16>, vector<28x384xbf16>, vector<24x384xf32> -> vector<24x384xf32>
    %43 = arith.addf %33, %42 : vector<24x384xf32>
    %44 = vector.extract_strided_slice %1 {offsets = [4, 0], sizes = [24, 28], strides = [1, 1]} : vector<28x28xf32> to vector<24x28xf32>
    %45 = arith.truncf %44 : vector<24x28xf32> to vector<24x28xbf16>
    %c4 = arith.constant 4 : index
    %c0_32 = arith.constant 0 : index
    %c0_33 = arith.constant 0 : index
    %46 = vector.load %arg2[%c4, %c0_32, %c0_33] : memref<5x28x384xbf16, #tpu.memory_space<vmem>>, vector<1x28x384xbf16>
    %47 = vector.shape_cast %46 : vector<1x28x384xbf16> to vector<28x384xbf16>
    %cst_34 = arith.constant dense<0.000000e+00> : vector<24x384xf32>
    %48 = tpu.matmul %45, %47, %cst_34 {dimension_numbers = #tpu.dot_dimension_numbers<[1], [0], [0], [1], [0, 0, 1, 1], [], []>} : vector<24x28xbf16>, vector<28x384xbf16>, vector<24x384xf32> -> vector<24x384xf32>
    %49 = arith.addf %39, %48 : vector<24x384xf32>
    %c4_35 = arith.constant 4 : index
    %c0_36 = arith.constant 0 : index
    %c0_37 = arith.constant 0 : index
    %50 = vector.load %arg3[%c4_35, %c0_36, %c0_37] : memref<5x28x384xbf16, #tpu.memory_space<vmem>>, vector<1x28x384xbf16>
    %51 = vector.shape_cast %50 : vector<1x28x384xbf16> to vector<28x384xbf16>
    %cst_38 = arith.constant dense<0.000000e+00> : vector<24x384xf32>
    %52 = tpu.matmul %45, %51, %cst_38 {dimension_numbers = #tpu.dot_dimension_numbers<[1], [0], [0], [1], [0, 0, 1, 1], [], []>} : vector<24x28xbf16>, vector<28x384xbf16>, vector<24x384xf32> -> vector<24x384xf32>
    %53 = arith.addf %43, %52 : vector<24x384xf32>
    %c0_39 = arith.constant 0 : index
    %c0_40 = arith.constant 0 : index
    %54 = vector.load %arg4[%c0_39, %c0_40] : memref<1x384xf32, #tpu.memory_space<vmem>>, vector<1x384xf32>
    %55 = vector.broadcast %54 : vector<1x384xf32> to vector<24x384xf32>
    %56 = arith.addf %49, %55 : vector<24x384xf32>
    %57 = vector.broadcast %54 : vector<1x384xf32> to vector<24x384xf32>
    %58 = arith.addf %53, %57 : vector<24x384xf32>
    %59 = arith.maximumf %56, %58 : vector<24x384xf32>
    %60 = tpu.iota {dimensions = array<i32: 0>} : vector<12x24xi32>
    %61 = tpu.iota {dimensions = array<i32: 1>} : vector<12x24xi32>
    %c2_i32 = arith.constant 2 : i32
    %62 = vector.broadcast %c2_i32 : i32 to vector<12x24xi32>
    %63 = arith.muli %62, %60 : vector<12x24xi32>
    %64 = arith.cmpi eq, %61, %63 : vector<12x24xi32>
    %65 = arith.extui %64 : vector<12x24xi1> to vector<12x24xi32>
    %66 = arith.sitofp %65 : vector<12x24xi32> to vector<12x24xf32>
    %c2_i32_41 = arith.constant 2 : i32
    %67 = vector.broadcast %c2_i32_41 : i32 to vector<12x24xi32>
    %68 = arith.muli %67, %60 : vector<12x24xi32>
    %c1_i32 = arith.constant 1 : i32
    %69 = vector.broadcast %c1_i32 : i32 to vector<12x24xi32>
    %70 = arith.addi %68, %69 : vector<12x24xi32>
    %71 = arith.cmpi eq, %61, %70 : vector<12x24xi32>
    %72 = arith.extui %71 : vector<12x24xi1> to vector<12x24xi32>
    %73 = arith.sitofp %72 : vector<12x24xi32> to vector<12x24xf32>
    %cst_42 = arith.constant dense<0.000000e+00> : vector<12x384xf32>
    %74 = tpu.matmul %66, %59, %cst_42 {dimension_numbers = #tpu.dot_dimension_numbers<[1], [0], [0], [1], [0, 0, 1, 1], [], []>} : vector<12x24xf32>, vector<24x384xf32>, vector<12x384xf32> -> vector<12x384xf32>
    %cst_43 = arith.constant dense<0.000000e+00> : vector<12x384xf32>
    %75 = tpu.matmul %73, %59, %cst_43 {dimension_numbers = #tpu.dot_dimension_numbers<[1], [0], [0], [1], [0, 0, 1, 1], [], []>} : vector<12x24xf32>, vector<24x384xf32>, vector<12x384xf32> -> vector<12x384xf32>
    %76 = arith.maximumf %74, %75 : vector<12x384xf32>
    %cst_44 = arith.constant 0.000000e+00 : f32
    %77 = vector.broadcast %cst_44 : f32 to vector<8x256xf32>
    %cst_45 = arith.constant 0.000000e+00 : f32
    %78 = vector.broadcast %cst_45 : f32 to vector<8x256xf32>
    %79 = vector.extract_strided_slice %76 {offsets = [0, 0], sizes = [8, 384], strides = [1, 1]} : vector<12x384xf32> to vector<8x384xf32>
    %80 = arith.truncf %79 : vector<8x384xf32> to vector<8x384xbf16>
    %c0_46 = arith.constant 0 : index
    %c0_47 = arith.constant 0 : index
    %c0_48 = arith.constant 0 : index
    %81 = vector.load %arg5[%c0_46, %c0_47, %c0_48] : memref<5x384x256xbf16, #tpu.memory_space<vmem>>, vector<1x384x256xbf16>
    %82 = vector.shape_cast %81 : vector<1x384x256xbf16> to vector<384x256xbf16>
    %cst_49 = arith.constant dense<0.000000e+00> : vector<8x256xf32>
    %83 = tpu.matmul %80, %82, %cst_49 {dimension_numbers = #tpu.dot_dimension_numbers<[1], [0], [0], [1], [0, 0, 1, 1], [], []>} : vector<8x384xbf16>, vector<384x256xbf16>, vector<8x256xf32> -> vector<8x256xf32>
    %84 = arith.addf %77, %83 : vector<8x256xf32>
    %c0_50 = arith.constant 0 : index
    %c0_51 = arith.constant 0 : index
    %c0_52 = arith.constant 0 : index
    %85 = vector.load %arg6[%c0_50, %c0_51, %c0_52] : memref<5x384x256xbf16, #tpu.memory_space<vmem>>, vector<1x384x256xbf16>
    %86 = vector.shape_cast %85 : vector<1x384x256xbf16> to vector<384x256xbf16>
    %cst_53 = arith.constant dense<0.000000e+00> : vector<8x256xf32>
    %87 = tpu.matmul %80, %86, %cst_53 {dimension_numbers = #tpu.dot_dimension_numbers<[1], [0], [0], [1], [0, 0, 1, 1], [], []>} : vector<8x384xbf16>, vector<384x256xbf16>, vector<8x256xf32> -> vector<8x256xf32>
    %88 = arith.addf %78, %87 : vector<8x256xf32>
    %89 = vector.extract_strided_slice %76 {offsets = [1, 0], sizes = [8, 384], strides = [1, 1]} : vector<12x384xf32> to vector<8x384xf32>
    %90 = arith.truncf %89 : vector<8x384xf32> to vector<8x384xbf16>
    %c1_54 = arith.constant 1 : index
    %c0_55 = arith.constant 0 : index
    %c0_56 = arith.constant 0 : index
    %91 = vector.load %arg5[%c1_54, %c0_55, %c0_56] : memref<5x384x256xbf16, #tpu.memory_space<vmem>>, vector<1x384x256xbf16>
    %92 = vector.shape_cast %91 : vector<1x384x256xbf16> to vector<384x256xbf16>
    %cst_57 = arith.constant dense<0.000000e+00> : vector<8x256xf32>
    %93 = tpu.matmul %90, %92, %cst_57 {dimension_numbers = #tpu.dot_dimension_numbers<[1], [0], [0], [1], [0, 0, 1, 1], [], []>} : vector<8x384xbf16>, vector<384x256xbf16>, vector<8x256xf32> -> vector<8x256xf32>
    %94 = arith.addf %84, %93 : vector<8x256xf32>
    %c1_58 = arith.constant 1 : index
    %c0_59 = arith.constant 0 : index
    %c0_60 = arith.constant 0 : index
    %95 = vector.load %arg6[%c1_58, %c0_59, %c0_60] : memref<5x384x256xbf16, #tpu.memory_space<vmem>>, vector<1x384x256xbf16>
    %96 = vector.shape_cast %95 : vector<1x384x256xbf16> to vector<384x256xbf16>
    %cst_61 = arith.constant dense<0.000000e+00> : vector<8x256xf32>
    %97 = tpu.matmul %90, %96, %cst_61 {dimension_numbers = #tpu.dot_dimension_numbers<[1], [0], [0], [1], [0, 0, 1, 1], [], []>} : vector<8x384xbf16>, vector<384x256xbf16>, vector<8x256xf32> -> vector<8x256xf32>
    %98 = arith.addf %88, %97 : vector<8x256xf32>
    %99 = vector.extract_strided_slice %76 {offsets = [2, 0], sizes = [8, 384], strides = [1, 1]} : vector<12x384xf32> to vector<8x384xf32>
    %100 = arith.truncf %99 : vector<8x384xf32> to vector<8x384xbf16>
    %c2_62 = arith.constant 2 : index
    %c0_63 = arith.constant 0 : index
    %c0_64 = arith.constant 0 : index
    %101 = vector.load %arg5[%c2_62, %c0_63, %c0_64] : memref<5x384x256xbf16, #tpu.memory_space<vmem>>, vector<1x384x256xbf16>
    %102 = vector.shape_cast %101 : vector<1x384x256xbf16> to vector<384x256xbf16>
    %cst_65 = arith.constant dense<0.000000e+00> : vector<8x256xf32>
    %103 = tpu.matmul %100, %102, %cst_65 {dimension_numbers = #tpu.dot_dimension_numbers<[1], [0], [0], [1], [0, 0, 1, 1], [], []>} : vector<8x384xbf16>, vector<384x256xbf16>, vector<8x256xf32> -> vector<8x256xf32>
    %104 = arith.addf %94, %103 : vector<8x256xf32>
    %c2_66 = arith.constant 2 : index
    %c0_67 = arith.constant 0 : index
    %c0_68 = arith.constant 0 : index
    %105 = vector.load %arg6[%c2_66, %c0_67, %c0_68] : memref<5x384x256xbf16, #tpu.memory_space<vmem>>, vector<1x384x256xbf16>
    %106 = vector.shape_cast %105 : vector<1x384x256xbf16> to vector<384x256xbf16>
    %cst_69 = arith.constant dense<0.000000e+00> : vector<8x256xf32>
    %107 = tpu.matmul %100, %106, %cst_69 {dimension_numbers = #tpu.dot_dimension_numbers<[1], [0], [0], [1], [0, 0, 1, 1], [], []>} : vector<8x384xbf16>, vector<384x256xbf16>, vector<8x256xf32> -> vector<8x256xf32>
    %108 = arith.addf %98, %107 : vector<8x256xf32>
    %109 = vector.extract_strided_slice %76 {offsets = [3, 0], sizes = [8, 384], strides = [1, 1]} : vector<12x384xf32> to vector<8x384xf32>
    %110 = arith.truncf %109 : vector<8x384xf32> to vector<8x384xbf16>
    %c3_70 = arith.constant 3 : index
    %c0_71 = arith.constant 0 : index
    %c0_72 = arith.constant 0 : index
    %111 = vector.load %arg5[%c3_70, %c0_71, %c0_72] : memref<5x384x256xbf16, #tpu.memory_space<vmem>>, vector<1x384x256xbf16>
    %112 = vector.shape_cast %111 : vector<1x384x256xbf16> to vector<384x256xbf16>
    %cst_73 = arith.constant dense<0.000000e+00> : vector<8x256xf32>
    %113 = tpu.matmul %110, %112, %cst_73 {dimension_numbers = #tpu.dot_dimension_numbers<[1], [0], [0], [1], [0, 0, 1, 1], [], []>} : vector<8x384xbf16>, vector<384x256xbf16>, vector<8x256xf32> -> vector<8x256xf32>
    %114 = arith.addf %104, %113 : vector<8x256xf32>
    %c3_74 = arith.constant 3 : index
    %c0_75 = arith.constant 0 : index
    %c0_76 = arith.constant 0 : index
    %115 = vector.load %arg6[%c3_74, %c0_75, %c0_76] : memref<5x384x256xbf16, #tpu.memory_space<vmem>>, vector<1x384x256xbf16>
    %116 = vector.shape_cast %115 : vector<1x384x256xbf16> to vector<384x256xbf16>
    %cst_77 = arith.constant dense<0.000000e+00> : vector<8x256xf32>
    %117 = tpu.matmul %110, %116, %cst_77 {dimension_numbers = #tpu.dot_dimension_numbers<[1], [0], [0], [1], [0, 0, 1, 1], [], []>} : vector<8x384xbf16>, vector<384x256xbf16>, vector<8x256xf32> -> vector<8x256xf32>
    %118 = arith.addf %108, %117 : vector<8x256xf32>
    %119 = vector.extract_strided_slice %76 {offsets = [4, 0], sizes = [8, 384], strides = [1, 1]} : vector<12x384xf32> to vector<8x384xf32>
    %120 = arith.truncf %119 : vector<8x384xf32> to vector<8x384xbf16>
    %c4_78 = arith.constant 4 : index
    %c0_79 = arith.constant 0 : index
    %c0_80 = arith.constant 0 : index
    %121 = vector.load %arg5[%c4_78, %c0_79, %c0_80] : memref<5x384x256xbf16, #tpu.memory_space<vmem>>, vector<1x384x256xbf16>
    %122 = vector.shape_cast %121 : vector<1x384x256xbf16> to vector<384x256xbf16>
    %cst_81 = arith.constant dense<0.000000e+00> : vector<8x256xf32>
    %123 = tpu.matmul %120, %122, %cst_81 {dimension_numbers = #tpu.dot_dimension_numbers<[1], [0], [0], [1], [0, 0, 1, 1], [], []>} : vector<8x384xbf16>, vector<384x256xbf16>, vector<8x256xf32> -> vector<8x256xf32>
    %124 = arith.addf %114, %123 : vector<8x256xf32>
    %c4_82 = arith.constant 4 : index
    %c0_83 = arith.constant 0 : index
    %c0_84 = arith.constant 0 : index
    %125 = vector.load %arg6[%c4_82, %c0_83, %c0_84] : memref<5x384x256xbf16, #tpu.memory_space<vmem>>, vector<1x384x256xbf16>
    %126 = vector.shape_cast %125 : vector<1x384x256xbf16> to vector<384x256xbf16>
    %cst_85 = arith.constant dense<0.000000e+00> : vector<8x256xf32>
    %127 = tpu.matmul %120, %126, %cst_85 {dimension_numbers = #tpu.dot_dimension_numbers<[1], [0], [0], [1], [0, 0, 1, 1], [], []>} : vector<8x384xbf16>, vector<384x256xbf16>, vector<8x256xf32> -> vector<8x256xf32>
    %128 = arith.addf %118, %127 : vector<8x256xf32>
    %c0_86 = arith.constant 0 : index
    %c0_87 = arith.constant 0 : index
    %129 = vector.load %arg7[%c0_86, %c0_87] : memref<1x256xf32, #tpu.memory_space<vmem>>, vector<1x256xf32>
    %130 = vector.broadcast %129 : vector<1x256xf32> to vector<8x256xf32>
    %131 = arith.addf %124, %130 : vector<8x256xf32>
    %132 = vector.broadcast %129 : vector<1x256xf32> to vector<8x256xf32>
    %133 = arith.addf %128, %132 : vector<8x256xf32>
    %134 = arith.maximumf %131, %133 : vector<8x256xf32>
    %135 = tpu.iota {dimensions = array<i32: 0>} : vector<4x8xi32>
    %136 = tpu.iota {dimensions = array<i32: 1>} : vector<4x8xi32>
    %c2_i32_88 = arith.constant 2 : i32
    %137 = vector.broadcast %c2_i32_88 : i32 to vector<4x8xi32>
    %138 = arith.muli %137, %135 : vector<4x8xi32>
    %139 = arith.cmpi eq, %136, %138 : vector<4x8xi32>
    %140 = arith.extui %139 : vector<4x8xi1> to vector<4x8xi32>
    %141 = arith.sitofp %140 : vector<4x8xi32> to vector<4x8xf32>
    %c2_i32_89 = arith.constant 2 : i32
    %142 = vector.broadcast %c2_i32_89 : i32 to vector<4x8xi32>
    %143 = arith.muli %142, %135 : vector<4x8xi32>
    %c1_i32_90 = arith.constant 1 : i32
    %144 = vector.broadcast %c1_i32_90 : i32 to vector<4x8xi32>
    %145 = arith.addi %143, %144 : vector<4x8xi32>
    %146 = arith.cmpi eq, %136, %145 : vector<4x8xi32>
    %147 = arith.extui %146 : vector<4x8xi1> to vector<4x8xi32>
    %148 = arith.sitofp %147 : vector<4x8xi32> to vector<4x8xf32>
    %cst_91 = arith.constant dense<0.000000e+00> : vector<4x256xf32>
    %149 = tpu.matmul %141, %134, %cst_91 {dimension_numbers = #tpu.dot_dimension_numbers<[1], [0], [0], [1], [0, 0, 1, 1], [], []>} : vector<4x8xf32>, vector<8x256xf32>, vector<4x256xf32> -> vector<4x256xf32>
    %cst_92 = arith.constant dense<0.000000e+00> : vector<4x256xf32>
    %150 = tpu.matmul %148, %134, %cst_92 {dimension_numbers = #tpu.dot_dimension_numbers<[1], [0], [0], [1], [0, 0, 1, 1], [], []>} : vector<4x8xf32>, vector<8x256xf32>, vector<4x256xf32> -> vector<4x256xf32>
    %151 = arith.maximumf %149, %150 : vector<4x256xf32>
    %c0_93 = arith.constant 0 : index
    %c0_94 = arith.constant 0 : index
    %c0_95 = arith.constant 0 : index
    %152 = vector.load %arg8[%c0_93, %c0_94, %c0_95] : memref<1x4x256xf32, #tpu.memory_space<vmem>>, vector<1x4x256xf32>
    %153 = vector.shape_cast %152 : vector<1x4x256xf32> to vector<4x256xf32>
    %154 = vector.shape_cast %151 : vector<4x256xf32> to vector<1x4x256xf32>
    tpu.vector_store %arg8[%c0_93, %c0_94, %c0_95], %154 {strides = array<i32>} : memref<1x4x256xf32, #tpu.memory_space<vmem>>, vector<1x4x256xf32>,
    return
  }
  func.func @transform_0(%arg0: i32) -> (i32, i32, i32) {
    %c0_i32 = arith.constant 0 : i32
    %c0_i32_0 = arith.constant 0 : i32
    %c0_i32_1 = arith.constant 0 : i32
    return %arg0, %c0_i32, %c0_i32_0 : i32, i32, i32
  }
  func.func @transform_1(%arg0: i32) -> (i32, i32, i32) {
    %c0_i32 = arith.constant 0 : i32
    %c0_i32_0 = arith.constant 0 : i32
    %c0_i32_1 = arith.constant 0 : i32
    %c0_i32_2 = arith.constant 0 : i32
    return %c0_i32, %c0_i32_0, %c0_i32_1 : i32, i32, i32
  }
  func.func @transform_2(%arg0: i32) -> (i32, i32, i32) {
    %c0_i32 = arith.constant 0 : i32
    %c0_i32_0 = arith.constant 0 : i32
    %c0_i32_1 = arith.constant 0 : i32
    %c0_i32_2 = arith.constant 0 : i32
    return %c0_i32, %c0_i32_0, %c0_i32_1 : i32, i32, i32
  }
  func.func @transform_3(%arg0: i32) -> (i32, i32) {
    %c0_i32 = arith.constant 0 : i32
    %c0_i32_0 = arith.constant 0 : i32
    %c0_i32_1 = arith.constant 0 : i32
    return %c0_i32, %c0_i32_0 : i32, i32
  }
  func.func @transform_4(%arg0: i32) -> (i32, i32, i32) {
    %c0_i32 = arith.constant 0 : i32
    %c0_i32_0 = arith.constant 0 : i32
    %c0_i32_1 = arith.constant 0 : i32
    %c0_i32_2 = arith.constant 0 : i32
    return %c0_i32, %c0_i32_0, %c0_i32_1 : i32, i32, i32
  }
  func.func @transform_5(%arg0: i32) -> (i32, i32, i32) {
    %c0_i32 = arith.constant 0 : i32
    %c0_i32_0 = arith.constant 0 : i32
    %c0_i32_1 = arith.constant 0 : i32
    %c0_i32_2 = arith.constant 0 : i32
    return %c0_i32, %c0_i32_0, %c0_i32_1 : i32, i32, i32
  }
  func.func @transform_6(%arg0: i32) -> (i32, i32) {
    %c0_i32 = arith.constant 0 : i32
    %c0_i32_0 = arith.constant 0 : i32
    %c0_i32_1 = arith.constant 0 : i32
    return %c0_i32, %c0_i32_0 : i32, i32
  }
  func.func @transform_7(%arg0: i32) -> (i32, i32, i32) {
    %c0_i32 = arith.constant 0 : i32
    %c0_i32_0 = arith.constant 0 : i32
    %c0_i32_1 = arith.constant 0 : i32
    return %arg0, %c0_i32, %c0_i32_0 : i32, i32, i32
  }
}

module attributes {stable_mosaic.version = 11 : i64} {
  func.func @_head_kernel(%arg0: i32, %arg1: memref<4x4x256xf32, #tpu.memory_space<vmem>>, %arg2: memref<4x256x1024xbf16, #tpu.memory_space<vmem>>, %arg3: memref<1x1024xf32, #tpu.memory_space<vmem>>, %arg4: memref<1024x10xbf16, #tpu.memory_space<vmem>>, %arg5: memref<1x10xf32, #tpu.memory_space<vmem>>, %arg6: memref<10x10x82xf32, #tpu.memory_space<vmem>>, %arg7: memref<2x82xf32, #tpu.memory_space<vmem>>) attributes {dimension_semantics = [#tpu.dimension_semantics<arbitrary>], iteration_bounds = array<i64: 1>, scalar_prefetch = 0 : i64, scratch_operands = 0 : i64, tpu.core_type = #tpu.core_type<tc>, window_params = [{pipeline_mode = #tpu.pipeline_mode<synchronous>, transform_indices = @transform_0, window_bounds = array<i64: 4, 4, 256>}, {pipeline_mode = #tpu.pipeline_mode<synchronous>, transform_indices = @transform_1, window_bounds = array<i64: 4, 256, 1024>}, {pipeline_mode = #tpu.pipeline_mode<synchronous>, transform_indices = @transform_2, window_bounds = array<i64: 1, 1024>}, {pipeline_mode = #tpu.pipeline_mode<synchronous>, transform_indices = @transform_3, window_bounds = array<i64: 1024, 10>}, {pipeline_mode = #tpu.pipeline_mode<synchronous>, transform_indices = @transform_4, window_bounds = array<i64: 1, 10>}, {pipeline_mode = #tpu.pipeline_mode<synchronous>, transform_indices = @transform_5, window_bounds = array<i64: 10, 10, 82>}, {pipeline_mode = #tpu.pipeline_mode<synchronous>, transform_indices = @transform_6, window_bounds = array<i64: 2, 82>}]} {
    %cst = arith.constant 0.000000e+00 : f32
    %0 = vector.broadcast %cst : f32 to vector<4x1024xf32>
    %c0 = arith.constant 0 : index
    %c0_0 = arith.constant 0 : index
    %c0_1 = arith.constant 0 : index
    %1 = vector.load %arg1[%c0, %c0_0, %c0_1] : memref<4x4x256xf32, #tpu.memory_space<vmem>>, vector<4x1x256xf32>
    %2 = vector.shape_cast %1 : vector<4x1x256xf32> to vector<4x256xf32>
    %3 = arith.truncf %2 : vector<4x256xf32> to vector<4x256xbf16>
    %c0_2 = arith.constant 0 : index
    %c0_3 = arith.constant 0 : index
    %c0_4 = arith.constant 0 : index
    %4 = vector.load %arg2[%c0_2, %c0_3, %c0_4] : memref<4x256x1024xbf16, #tpu.memory_space<vmem>>, vector<1x256x1024xbf16>
    %5 = vector.shape_cast %4 : vector<1x256x1024xbf16> to vector<256x1024xbf16>
    %cst_5 = arith.constant dense<0.000000e+00> : vector<4x1024xf32>
    %6 = tpu.matmul %3, %5, %cst_5 {dimension_numbers = #tpu.dot_dimension_numbers<[1], [0], [0], [1], [0, 0, 1, 1], [], []>} : vector<4x256xbf16>, vector<256x1024xbf16>, vector<4x1024xf32> -> vector<4x1024xf32>
    %7 = arith.addf %0, %6 : vector<4x1024xf32>
    %c0_6 = arith.constant 0 : index
    %c1 = arith.constant 1 : index
    %c0_7 = arith.constant 0 : index
    %8 = vector.load %arg1[%c0_6, %c1, %c0_7] : memref<4x4x256xf32, #tpu.memory_space<vmem>>, vector<4x1x256xf32>
    %9 = vector.shape_cast %8 : vector<4x1x256xf32> to vector<4x256xf32>
    %10 = arith.truncf %9 : vector<4x256xf32> to vector<4x256xbf16>
    %c1_8 = arith.constant 1 : index
    %c0_9 = arith.constant 0 : index
    %c0_10 = arith.constant 0 : index
    %11 = vector.load %arg2[%c1_8, %c0_9, %c0_10] : memref<4x256x1024xbf16, #tpu.memory_space<vmem>>, vector<1x256x1024xbf16>
    %12 = vector.shape_cast %11 : vector<1x256x1024xbf16> to vector<256x1024xbf16>
    %cst_11 = arith.constant dense<0.000000e+00> : vector<4x1024xf32>
    %13 = tpu.matmul %10, %12, %cst_11 {dimension_numbers = #tpu.dot_dimension_numbers<[1], [0], [0], [1], [0, 0, 1, 1], [], []>} : vector<4x256xbf16>, vector<256x1024xbf16>, vector<4x1024xf32> -> vector<4x1024xf32>
    %14 = arith.addf %7, %13 : vector<4x1024xf32>
    %c0_12 = arith.constant 0 : index
    %c2 = arith.constant 2 : index
    %c0_13 = arith.constant 0 : index
    %15 = vector.load %arg1[%c0_12, %c2, %c0_13] : memref<4x4x256xf32, #tpu.memory_space<vmem>>, vector<4x1x256xf32>
    %16 = vector.shape_cast %15 : vector<4x1x256xf32> to vector<4x256xf32>
    %17 = arith.truncf %16 : vector<4x256xf32> to vector<4x256xbf16>
    %c2_14 = arith.constant 2 : index
    %c0_15 = arith.constant 0 : index
    %c0_16 = arith.constant 0 : index
    %18 = vector.load %arg2[%c2_14, %c0_15, %c0_16] : memref<4x256x1024xbf16, #tpu.memory_space<vmem>>, vector<1x256x1024xbf16>
    %19 = vector.shape_cast %18 : vector<1x256x1024xbf16> to vector<256x1024xbf16>
    %cst_17 = arith.constant dense<0.000000e+00> : vector<4x1024xf32>
    %20 = tpu.matmul %17, %19, %cst_17 {dimension_numbers = #tpu.dot_dimension_numbers<[1], [0], [0], [1], [0, 0, 1, 1], [], []>} : vector<4x256xbf16>, vector<256x1024xbf16>, vector<4x1024xf32> -> vector<4x1024xf32>
    %21 = arith.addf %14, %20 : vector<4x1024xf32>
    %c0_18 = arith.constant 0 : index
    %c3 = arith.constant 3 : index
    %c0_19 = arith.constant 0 : index
    %22 = vector.load %arg1[%c0_18, %c3, %c0_19] : memref<4x4x256xf32, #tpu.memory_space<vmem>>, vector<4x1x256xf32>
    %23 = vector.shape_cast %22 : vector<4x1x256xf32> to vector<4x256xf32>
    %24 = arith.truncf %23 : vector<4x256xf32> to vector<4x256xbf16>
    %c3_20 = arith.constant 3 : index
    %c0_21 = arith.constant 0 : index
    %c0_22 = arith.constant 0 : index
    %25 = vector.load %arg2[%c3_20, %c0_21, %c0_22] : memref<4x256x1024xbf16, #tpu.memory_space<vmem>>, vector<1x256x1024xbf16>
    %26 = vector.shape_cast %25 : vector<1x256x1024xbf16> to vector<256x1024xbf16>
    %cst_23 = arith.constant dense<0.000000e+00> : vector<4x1024xf32>
    %27 = tpu.matmul %24, %26, %cst_23 {dimension_numbers = #tpu.dot_dimension_numbers<[1], [0], [0], [1], [0, 0, 1, 1], [], []>} : vector<4x256xbf16>, vector<256x1024xbf16>, vector<4x1024xf32> -> vector<4x1024xf32>
    %28 = arith.addf %21, %27 : vector<4x1024xf32>
    %c0_24 = arith.constant 0 : index
    %c0_25 = arith.constant 0 : index
    %29 = vector.load %arg3[%c0_24, %c0_25] : memref<1x1024xf32, #tpu.memory_space<vmem>>, vector<1x1024xf32>
    %30 = vector.broadcast %29 : vector<1x1024xf32> to vector<4x1024xf32>
    %31 = arith.addf %28, %30 : vector<4x1024xf32>
    %cst_26 = arith.constant 0.000000e+00 : f32
    %32 = vector.broadcast %cst_26 : f32 to vector<4x1024xf32>
    %33 = arith.maximumf %31, %32 : vector<4x1024xf32>
    %34 = arith.truncf %33 : vector<4x1024xf32> to vector<4x1024xbf16>
    %c0_27 = arith.constant 0 : index
    %c0_28 = arith.constant 0 : index
    %35 = vector.load %arg4[%c0_27, %c0_28] : memref<1024x10xbf16, #tpu.memory_space<vmem>>, vector<1024x10xbf16>
    %cst_29 = arith.constant dense<0.000000e+00> : vector<4x10xf32>
    %36 = tpu.matmul %34, %35, %cst_29 {dimension_numbers = #tpu.dot_dimension_numbers<[1], [0], [0], [1], [0, 0, 1, 1], [], []>} : vector<4x1024xbf16>, vector<1024x10xbf16>, vector<4x10xf32> -> vector<4x10xf32>
    %c0_30 = arith.constant 0 : index
    %c0_31 = arith.constant 0 : index
    %37 = vector.load %arg5[%c0_30, %c0_31] : memref<1x10xf32, #tpu.memory_space<vmem>>, vector<1x10xf32>
    %38 = vector.broadcast %37 : vector<1x10xf32> to vector<4x10xf32>
    %39 = arith.addf %36, %38 : vector<4x10xf32>
    %cst_32 = arith.constant dense<0xFF800000> : vector<4xf32>
    %40 = vector.multi_reduction <maximumf>, %39, %cst_32 [1] : vector<4x10xf32> to vector<4xf32>
    %41 = vector.shape_cast %40 : vector<4xf32> to vector<4x1xf32>
    %42 = vector.broadcast %41 : vector<4x1xf32> to vector<4x10xf32>
    %43 = arith.subf %39, %42 : vector<4x10xf32>
    %44 = math.exp %43 : vector<4x10xf32>
    %cst_33 = arith.constant dense<0.000000e+00> : vector<4xf32>
    %45 = vector.multi_reduction <add>, %44, %cst_33 [1] : vector<4x10xf32> to vector<4xf32>
    %46 = vector.shape_cast %45 : vector<4xf32> to vector<4x1xf32>
    %47 = vector.broadcast %46 : vector<4x1xf32> to vector<4x10xf32>
    %48 = arith.divf %44, %47 : vector<4x10xf32>
    %49 = vector.extract_strided_slice %48 {offsets = [0, 0], sizes = [2, 10], strides = [1, 1]} : vector<4x10xf32> to vector<2x10xf32>
    %50 = vector.extract_strided_slice %48 {offsets = [2, 0], sizes = [2, 10], strides = [1, 1]} : vector<4x10xf32> to vector<2x10xf32>
    %cst_34 = arith.constant 0.000000e+00 : f32
    %51 = vector.broadcast %cst_34 : f32 to vector<2x82xf32>
    %52 = vector.extract_strided_slice %49 {offsets = [0, 0], sizes = [2, 1], strides = [1, 1]} : vector<2x10xf32> to vector<2x1xf32>
    %c0_35 = arith.constant 0 : index
    %c0_36 = arith.constant 0 : index
    %c0_37 = arith.constant 0 : index
    %53 = vector.load %arg6[%c0_35, %c0_36, %c0_37] : memref<10x10x82xf32, #tpu.memory_space<vmem>>, vector<1x10x82xf32>
    %54 = vector.shape_cast %53 : vector<1x10x82xf32> to vector<10x82xf32>
    %cst_38 = arith.constant dense<0.000000e+00> : vector<2x82xf32>
    %55 = tpu.matmul %50, %54, %cst_38 {dimension_numbers = #tpu.dot_dimension_numbers<[1], [0], [0], [1], [0, 0, 1, 1], [], []>} : vector<2x10xf32>, vector<10x82xf32>, vector<2x82xf32> -> vector<2x82xf32>
    %56 = vector.broadcast %52 : vector<2x1xf32> to vector<2x82xf32>
    %57 = arith.mulf %56, %55 : vector<2x82xf32>
    %58 = arith.addf %51, %57 : vector<2x82xf32>
    %59 = vector.extract_strided_slice %49 {offsets = [0, 1], sizes = [2, 1], strides = [1, 1]} : vector<2x10xf32> to vector<2x1xf32>
    %c1_39 = arith.constant 1 : index
    %c0_40 = arith.constant 0 : index
    %c0_41 = arith.constant 0 : index
    %60 = vector.load %arg6[%c1_39, %c0_40, %c0_41] : memref<10x10x82xf32, #tpu.memory_space<vmem>>, vector<1x10x82xf32>
    %61 = vector.shape_cast %60 : vector<1x10x82xf32> to vector<10x82xf32>
    %cst_42 = arith.constant dense<0.000000e+00> : vector<2x82xf32>
    %62 = tpu.matmul %50, %61, %cst_42 {dimension_numbers = #tpu.dot_dimension_numbers<[1], [0], [0], [1], [0, 0, 1, 1], [], []>} : vector<2x10xf32>, vector<10x82xf32>, vector<2x82xf32> -> vector<2x82xf32>
    %63 = vector.broadcast %59 : vector<2x1xf32> to vector<2x82xf32>
    %64 = arith.mulf %63, %62 : vector<2x82xf32>
    %65 = arith.addf %58, %64 : vector<2x82xf32>
    %66 = vector.extract_strided_slice %49 {offsets = [0, 2], sizes = [2, 1], strides = [1, 1]} : vector<2x10xf32> to vector<2x1xf32>
    %c2_43 = arith.constant 2 : index
    %c0_44 = arith.constant 0 : index
    %c0_45 = arith.constant 0 : index
    %67 = vector.load %arg6[%c2_43, %c0_44, %c0_45] : memref<10x10x82xf32, #tpu.memory_space<vmem>>, vector<1x10x82xf32>
    %68 = vector.shape_cast %67 : vector<1x10x82xf32> to vector<10x82xf32>
    %cst_46 = arith.constant dense<0.000000e+00> : vector<2x82xf32>
    %69 = tpu.matmul %50, %68, %cst_46 {dimension_numbers = #tpu.dot_dimension_numbers<[1], [0], [0], [1], [0, 0, 1, 1], [], []>} : vector<2x10xf32>, vector<10x82xf32>, vector<2x82xf32> -> vector<2x82xf32>
    %70 = vector.broadcast %66 : vector<2x1xf32> to vector<2x82xf32>
    %71 = arith.mulf %70, %69 : vector<2x82xf32>
    %72 = arith.addf %65, %71 : vector<2x82xf32>
    %73 = vector.extract_strided_slice %49 {offsets = [0, 3], sizes = [2, 1], strides = [1, 1]} : vector<2x10xf32> to vector<2x1xf32>
    %c3_47 = arith.constant 3 : index
    %c0_48 = arith.constant 0 : index
    %c0_49 = arith.constant 0 : index
    %74 = vector.load %arg6[%c3_47, %c0_48, %c0_49] : memref<10x10x82xf32, #tpu.memory_space<vmem>>, vector<1x10x82xf32>
    %75 = vector.shape_cast %74 : vector<1x10x82xf32> to vector<10x82xf32>
    %cst_50 = arith.constant dense<0.000000e+00> : vector<2x82xf32>
    %76 = tpu.matmul %50, %75, %cst_50 {dimension_numbers = #tpu.dot_dimension_numbers<[1], [0], [0], [1], [0, 0, 1, 1], [], []>} : vector<2x10xf32>, vector<10x82xf32>, vector<2x82xf32> -> vector<2x82xf32>
    %77 = vector.broadcast %73 : vector<2x1xf32> to vector<2x82xf32>
    %78 = arith.mulf %77, %76 : vector<2x82xf32>
    %79 = arith.addf %72, %78 : vector<2x82xf32>
    %80 = vector.extract_strided_slice %49 {offsets = [0, 4], sizes = [2, 1], strides = [1, 1]} : vector<2x10xf32> to vector<2x1xf32>
    %c4 = arith.constant 4 : index
    %c0_51 = arith.constant 0 : index
    %c0_52 = arith.constant 0 : index
    %81 = vector.load %arg6[%c4, %c0_51, %c0_52] : memref<10x10x82xf32, #tpu.memory_space<vmem>>, vector<1x10x82xf32>
    %82 = vector.shape_cast %81 : vector<1x10x82xf32> to vector<10x82xf32>
    %cst_53 = arith.constant dense<0.000000e+00> : vector<2x82xf32>
    %83 = tpu.matmul %50, %82, %cst_53 {dimension_numbers = #tpu.dot_dimension_numbers<[1], [0], [0], [1], [0, 0, 1, 1], [], []>} : vector<2x10xf32>, vector<10x82xf32>, vector<2x82xf32> -> vector<2x82xf32>
    %84 = vector.broadcast %80 : vector<2x1xf32> to vector<2x82xf32>
    %85 = arith.mulf %84, %83 : vector<2x82xf32>
    %86 = arith.addf %79, %85 : vector<2x82xf32>
    %87 = vector.extract_strided_slice %49 {offsets = [0, 5], sizes = [2, 1], strides = [1, 1]} : vector<2x10xf32> to vector<2x1xf32>
    %c5 = arith.constant 5 : index
    %c0_54 = arith.constant 0 : index
    %c0_55 = arith.constant 0 : index
    %88 = vector.load %arg6[%c5, %c0_54, %c0_55] : memref<10x10x82xf32, #tpu.memory_space<vmem>>, vector<1x10x82xf32>
    %89 = vector.shape_cast %88 : vector<1x10x82xf32> to vector<10x82xf32>
    %cst_56 = arith.constant dense<0.000000e+00> : vector<2x82xf32>
    %90 = tpu.matmul %50, %89, %cst_56 {dimension_numbers = #tpu.dot_dimension_numbers<[1], [0], [0], [1], [0, 0, 1, 1], [], []>} : vector<2x10xf32>, vector<10x82xf32>, vector<2x82xf32> -> vector<2x82xf32>
    %91 = vector.broadcast %87 : vector<2x1xf32> to vector<2x82xf32>
    %92 = arith.mulf %91, %90 : vector<2x82xf32>
    %93 = arith.addf %86, %92 : vector<2x82xf32>
    %94 = vector.extract_strided_slice %49 {offsets = [0, 6], sizes = [2, 1], strides = [1, 1]} : vector<2x10xf32> to vector<2x1xf32>
    %c6 = arith.constant 6 : index
    %c0_57 = arith.constant 0 : index
    %c0_58 = arith.constant 0 : index
    %95 = vector.load %arg6[%c6, %c0_57, %c0_58] : memref<10x10x82xf32, #tpu.memory_space<vmem>>, vector<1x10x82xf32>
    %96 = vector.shape_cast %95 : vector<1x10x82xf32> to vector<10x82xf32>
    %cst_59 = arith.constant dense<0.000000e+00> : vector<2x82xf32>
    %97 = tpu.matmul %50, %96, %cst_59 {dimension_numbers = #tpu.dot_dimension_numbers<[1], [0], [0], [1], [0, 0, 1, 1], [], []>} : vector<2x10xf32>, vector<10x82xf32>, vector<2x82xf32> -> vector<2x82xf32>
    %98 = vector.broadcast %94 : vector<2x1xf32> to vector<2x82xf32>
    %99 = arith.mulf %98, %97 : vector<2x82xf32>
    %100 = arith.addf %93, %99 : vector<2x82xf32>
    %101 = vector.extract_strided_slice %49 {offsets = [0, 7], sizes = [2, 1], strides = [1, 1]} : vector<2x10xf32> to vector<2x1xf32>
    %c7 = arith.constant 7 : index
    %c0_60 = arith.constant 0 : index
    %c0_61 = arith.constant 0 : index
    %102 = vector.load %arg6[%c7, %c0_60, %c0_61] : memref<10x10x82xf32, #tpu.memory_space<vmem>>, vector<1x10x82xf32>
    %103 = vector.shape_cast %102 : vector<1x10x82xf32> to vector<10x82xf32>
    %cst_62 = arith.constant dense<0.000000e+00> : vector<2x82xf32>
    %104 = tpu.matmul %50, %103, %cst_62 {dimension_numbers = #tpu.dot_dimension_numbers<[1], [0], [0], [1], [0, 0, 1, 1], [], []>} : vector<2x10xf32>, vector<10x82xf32>, vector<2x82xf32> -> vector<2x82xf32>
    %105 = vector.broadcast %101 : vector<2x1xf32> to vector<2x82xf32>
    %106 = arith.mulf %105, %104 : vector<2x82xf32>
    %107 = arith.addf %100, %106 : vector<2x82xf32>
    %108 = vector.extract_strided_slice %49 {offsets = [0, 8], sizes = [2, 1], strides = [1, 1]} : vector<2x10xf32> to vector<2x1xf32>
    %c8 = arith.constant 8 : index
    %c0_63 = arith.constant 0 : index
    %c0_64 = arith.constant 0 : index
    %109 = vector.load %arg6[%c8, %c0_63, %c0_64] : memref<10x10x82xf32, #tpu.memory_space<vmem>>, vector<1x10x82xf32>
    %110 = vector.shape_cast %109 : vector<1x10x82xf32> to vector<10x82xf32>
    %cst_65 = arith.constant dense<0.000000e+00> : vector<2x82xf32>
    %111 = tpu.matmul %50, %110, %cst_65 {dimension_numbers = #tpu.dot_dimension_numbers<[1], [0], [0], [1], [0, 0, 1, 1], [], []>} : vector<2x10xf32>, vector<10x82xf32>, vector<2x82xf32> -> vector<2x82xf32>
    %112 = vector.broadcast %108 : vector<2x1xf32> to vector<2x82xf32>
    %113 = arith.mulf %112, %111 : vector<2x82xf32>
    %114 = arith.addf %107, %113 : vector<2x82xf32>
    %115 = vector.extract_strided_slice %49 {offsets = [0, 9], sizes = [2, 1], strides = [1, 1]} : vector<2x10xf32> to vector<2x1xf32>
    %c9 = arith.constant 9 : index
    %c0_66 = arith.constant 0 : index
    %c0_67 = arith.constant 0 : index
    %116 = vector.load %arg6[%c9, %c0_66, %c0_67] : memref<10x10x82xf32, #tpu.memory_space<vmem>>, vector<1x10x82xf32>
    %117 = vector.shape_cast %116 : vector<1x10x82xf32> to vector<10x82xf32>
    %cst_68 = arith.constant dense<0.000000e+00> : vector<2x82xf32>
    %118 = tpu.matmul %50, %117, %cst_68 {dimension_numbers = #tpu.dot_dimension_numbers<[1], [0], [0], [1], [0, 0, 1, 1], [], []>} : vector<2x10xf32>, vector<10x82xf32>, vector<2x82xf32> -> vector<2x82xf32>
    %119 = vector.broadcast %115 : vector<2x1xf32> to vector<2x82xf32>
    %120 = arith.mulf %119, %118 : vector<2x82xf32>
    %121 = arith.addf %114, %120 : vector<2x82xf32>
    %c0_69 = arith.constant 0 : index
    %c0_70 = arith.constant 0 : index
    %122 = vector.load %arg7[%c0_69, %c0_70] : memref<2x82xf32, #tpu.memory_space<vmem>>, vector<2x82xf32>
    tpu.vector_store %arg7[%c0_69, %c0_70], %121 {strides = array<i32>} : memref<2x82xf32, #tpu.memory_space<vmem>>, vector<2x82xf32>,
    return
  }
  func.func @transform_0(%arg0: i32) -> (i32, i32, i32) {
    %c0_i32 = arith.constant 0 : i32
    %c0_i32_0 = arith.constant 0 : i32
    %c0_i32_1 = arith.constant 0 : i32
    %c0_i32_2 = arith.constant 0 : i32
    return %c0_i32, %c0_i32_0, %c0_i32_1 : i32, i32, i32
  }
  func.func @transform_1(%arg0: i32) -> (i32, i32, i32) {
    %c0_i32 = arith.constant 0 : i32
    %c0_i32_0 = arith.constant 0 : i32
    %c0_i32_1 = arith.constant 0 : i32
    %c0_i32_2 = arith.constant 0 : i32
    return %c0_i32, %c0_i32_0, %c0_i32_1 : i32, i32, i32
  }
  func.func @transform_2(%arg0: i32) -> (i32, i32) {
    %c0_i32 = arith.constant 0 : i32
    %c0_i32_0 = arith.constant 0 : i32
    %c0_i32_1 = arith.constant 0 : i32
    return %c0_i32, %c0_i32_0 : i32, i32
  }
  func.func @transform_3(%arg0: i32) -> (i32, i32) {
    %c0_i32 = arith.constant 0 : i32
    %c0_i32_0 = arith.constant 0 : i32
    %c0_i32_1 = arith.constant 0 : i32
    return %c0_i32, %c0_i32_0 : i32, i32
  }
  func.func @transform_4(%arg0: i32) -> (i32, i32) {
    %c0_i32 = arith.constant 0 : i32
    %c0_i32_0 = arith.constant 0 : i32
    %c0_i32_1 = arith.constant 0 : i32
    return %c0_i32, %c0_i32_0 : i32, i32
  }
  func.func @transform_5(%arg0: i32) -> (i32, i32, i32) {
    %c0_i32 = arith.constant 0 : i32
    %c0_i32_0 = arith.constant 0 : i32
    %c0_i32_1 = arith.constant 0 : i32
    %c0_i32_2 = arith.constant 0 : i32
    return %c0_i32, %c0_i32_0, %c0_i32_1 : i32, i32, i32
  }
  func.func @transform_6(%arg0: i32) -> (i32, i32) {
    %c0_i32 = arith.constant 0 : i32
    %c0_i32_0 = arith.constant 0 : i32
    %c0_i32_1 = arith.constant 0 : i32
    return %c0_i32, %c0_i32_0 : i32, i32
  }
}

</mosaic_0001>

<llo_original>
// kernel: _lambda_.2
$region0: #{_lambda_.2}
  #allocation0 [shape = 'u32[]', space=smem, size = 0x4, offset = 0x4, fixed_abs, tag = 'smem constant byte address 0x4 - core index']
  #allocation1 [shape = 'u32[144,128]{1,0:T(1,128)}', space=vmem, size = 0x12000, scoped, tag = 'internal scratch']
  %s0 = inlined_call_operand.vmem [shape: f32[4,28,28], index: 0, kind: input, shape index: {}]
  %s1 = inlined_call_operand.hbm [shape: bf16[5,28,384], index: 1, kind: input, shape index: {}]
  %s2 = inlined_call_operand.hbm [shape: bf16[5,28,384], index: 2, kind: input, shape index: {}]
  %s3 = inlined_call_operand.hbm [shape: f32[1,384], index: 3, kind: input, shape index: {}]
  %s4 = inlined_call_operand.hbm [shape: bf16[5,384,256], index: 4, kind: input, shape index: {}]
  %s5 = inlined_call_operand.hbm [shape: bf16[5,384,256], index: 5, kind: input, shape index: {}]
  %s6 = inlined_call_operand.hbm [shape: f32[1,256], index: 6, kind: input, shape index: {}]
  %s7 = inlined_call_operand.vmem [shape: f32[4,4,256], index: 7, kind: output, shape index: {}]
  %s8 = sld [smem:[#allocation0]]
  $region85: #{_lambda_.2} parent=0
    _
  %s10 = ssub.s32 1, %s8
  %s11 = scalar_select 0, %s10, %s8
  $region1: #{_lambda_.2} parent=0
    #allocation2 [shape = 'u8[122880]{0}', space=vmem, size = 0x1e000, scoped, tag = 'input window, operand 1, single buffered']
    #allocation3 [shape = 's32[2]{0}', space=sflag, size = 0x8, scoped, tag = 'scoped memory for _lambda_.2']
    #allocation4 [shape = 'u8[122880]{0}', space=vmem, size = 0x1e000, scoped, tag = 'input window, operand 2, single buffered']
    #allocation5 [shape = 's32[1]{0}', space=sflag, size = 0x4, scoped, tag = 'scoped memory for _lambda_.2']
    #allocation6 [shape = 'u8[1536]{0}', space=vmem, size = 0x800, scoped, tag = 'input window, operand 3, single buffered']
    #allocation7 [shape = 'u8[983040]{0}', space=vmem, size = 0xf0000, scoped, tag = 'input window, operand 4, single buffered']
    #allocation8 [shape = 's32[1]{0}', space=sflag, size = 0x4, scoped, tag = 'scoped memory for _lambda_.2']
    #allocation9 [shape = 'u8[983040]{0}', space=vmem, size = 0xf0000, scoped, tag = 'input window, operand 5, single buffered']
    #allocation10 [shape = 'u8[1024]{0}', space=vmem, size = 0x400, scoped, tag = 'input window, operand 6, single buffered']
    #allocation11 [shape = 's32[1]{0}', space=sflag, size = 0x4, scoped, tag = 'scoped memory for _lambda_.2']
    %12 = vsyncpa [#allocation3], 0
    %13 = vsyncpa [#allocation5], 0
    %14 = vsyncpa [#allocation8], 0
    %15 = vsyncpa [#allocation11], 0
    loop: start=0, step=1, limit=6
    $region2: #{_lambda_.2} parent=1 // loop_pre_header
      _
    $region3: #{_lambda_.2} parent=1 // loop_header
      %s17 = sphi 0, %s21
      %p18 = scmp.ge.s32.totalorder %s17, 6
      %s27 = sphi 0, %s29
      %s30 = sphi 0, %s27
      %s31 = sphi 0, %s30
      %s47 = sphi 0, %s31
      %s51 = sphi 0, %s51
      %s53 = sphi 0, %s51
      %s54 = sphi 0, %s53
      %s68 = sphi 0, %s54
      %s72 = sphi 0, %s72
      %s74 = sphi 0, %s72
      %s75 = sphi 0, %s74
      %s89 = sphi 0, %s75
      %s93 = sphi 0, %s93
      %s95 = sphi 0, %s93
      %s96 = sphi 0, %s95
      %s110 = sphi 0, %s96
      %s114 = sphi 0, %s114
      %s116 = sphi 0, %s114
      %s117 = sphi 0, %s116
      %s131 = sphi 0, %s117
      %s135 = sphi 0, %s135
      %s137 = sphi 0, %s135
      %s138 = sphi 0, %s137
      %s152 = sphi 0, %s138
      %s156 = sphi 0, %s156
      %s158 = sphi 0, %s156
      %s159 = sphi 0, %s158
      %s173 = sphi 0, %s159
      %s179 = sphi 0, %s181
      %s182 = sphi 0, %s179
      %s183 = sphi 0, %s182
      %s199 = sphi 0, %s183
    $region4: #{_lambda_.2} parent=1 // loop_header_branch
      %20 = sbr.rel (%p18) target = $region8
    $region5: #{_lambda_.2} parent=1 // loop_body
      %s22 = ssub.s32 %s17, 1
      %s23 = ssub.s32 %s17, 2
      %s24 = sadd.s32 %s17, 1
      %s25 = ssub.s32 %s17, %s24
      %p26 = scmp.eq.s32.totalorder %s25, 0
      %s28 = sadd.s32 %s27, 1
      %s29 = scalar_select %p26, %s27, %s28
      %p32 = pneg %p26
      %p33 = scmp.eq.s32.totalorder %s17, 3
      %p34 = por %p32, %p33
      %p35 = scmp.ne.s32.totalorder %s27, %s30
      %p36 = scmp.eq.s32.totalorder %s17, 0
      %p37 = por %p35, %p36
      %p38 = scmp.ne.s32.totalorder %s27, %s30
      %p39 = scmp.eq.s32.totalorder %s22, 3
      %p40 = por %p38, %p39
      %p41 = scmp.ne.s32.totalorder %s30, %s31
      %p42 = scmp.eq.s32.totalorder %s22, 0
      %p43 = por %p41, %p42
      %p44 = scmp.ne.s32.totalorder %s30, %s31
      %p45 = scmp.eq.s32.totalorder %s23, 3
      %p46 = por %p44, %p45
      %p48 = scmp.ne.s32.totalorder %s31, %s47
      %p49 = scmp.eq.s32.totalorder %s23, 0
      %p50 = por %p48, %p49
      %s52 = sadd.s32 %s51, 1
      %p55 = scmp.eq.s32.totalorder %s17, 3
      %p56 = scmp.ne.s32.totalorder %s51, %s53
      %p57 = scmp.eq.s32.totalorder %s17, 0
      %p58 = por %p56, %p57
      %p59 = scmp.ne.s32.totalorder %s51, %s53
      %p60 = scmp.eq.s32.totalorder %s22, 3
      %p61 = por %p59, %p60
      %p62 = scmp.ne.s32.totalorder %s53, %s54
      %p63 = scmp.eq.s32.totalorder %s22, 0
      %p64 = por %p62, %p63
      %p65 = scmp.ne.s32.totalorder %s53, %s54
      %p66 = scmp.eq.s32.totalorder %s23, 3
      %p67 = por %p65, %p66
      %p69 = scmp.ne.s32.totalorder %s54, %s68
      %p70 = scmp.eq.s32.totalorder %s23, 0
      %p71 = por %p69, %p70
      %s73 = sadd.s32 %s72, 1
      %p76 = scmp.eq.s32.totalorder %s17, 3
      %p77 = scmp.ne.s32.totalorder %s72, %s74
      %p78 = scmp.eq.s32.totalorder %s17, 0
      %p79 = por %p77, %p78
      %p80 = scmp.ne.s32.totalorder %s72, %s74
      %p81 = scmp.eq.s32.totalorder %s22, 3
      %p82 = por %p80, %p81
      %p83 = scmp.ne.s32.totalorder %s74, %s75
      %p84 = scmp.eq.s32.totalorder %s22, 0
      %p85 = por %p83, %p84
      %p86 = scmp.ne.s32.totalorder %s74, %s75
      %p87 = scmp.eq.s32.totalorder %s23, 3
      %p88 = por %p86, %p87
      %p90 = scmp.ne.s32.totalorder %s75, %s89
      %p91 = scmp.eq.s32.totalorder %s23, 0
      %p92 = por %p90, %p91
      %s94 = sadd.s32 %s93, 1
      %p97 = scmp.eq.s32.totalorder %s17, 3
      %p98 = scmp.ne.s32.totalorder %s93, %s95
      %p99 = scmp.eq.s32.totalorder %s17, 0
      %p100 = por %p98, %p99
      %p101 = scmp.ne.s32.totalorder %s93, %s95
      %p102 = scmp.eq.s32.totalorder %s22, 3
      %p103 = por %p101, %p102
      %p104 = scmp.ne.s32.totalorder %s95, %s96
      %p105 = scmp.eq.s32.totalorder %s22, 0
      %p106 = por %p104, %p105
      %p107 = scmp.ne.s32.totalorder %s95, %s96
      %p108 = scmp.eq.s32.totalorder %s23, 3
      %p109 = por %p107, %p108
      %p111 = scmp.ne.s32.totalorder %s96, %s110
      %p112 = scmp.eq.s32.totalorder %s23, 0
      %p113 = por %p111, %p112
      %s115 = sadd.s32 %s114, 1
      %p118 = scmp.eq.s32.totalorder %s17, 3
      %p119 = scmp.ne.s32.totalorder %s114, %s116
      %p120 = scmp.eq.s32.totalorder %s17, 0
      %p121 = por %p119, %p120
      %p122 = scmp.ne.s32.totalorder %s114, %s116
      %p123 = scmp.eq.s32.totalorder %s22, 3
      %p124 = por %p122, %p123
      %p125 = scmp.ne.s32.totalorder %s116, %s117
      %p126 = scmp.eq.s32.totalorder %s22, 0
      %p127 = por %p125, %p126
      %p128 = scmp.ne.s32.totalorder %s116, %s117
      %p129 = scmp.eq.s32.totalorder %s23, 3
      %p130 = por %p128, %p129
      %p132 = scmp.ne.s32.totalorder %s117, %s131
      %p133 = scmp.eq.s32.totalorder %s23, 0
      %p134 = por %p132, %p133
      %s136 = sadd.s32 %s135, 1
      %p139 = scmp.eq.s32.totalorder %s17, 3
      %p140 = scmp.ne.s32.totalorder %s135, %s137
      %p141 = scmp.eq.s32.totalorder %s17, 0
      %p142 = por %p140, %p141
      %p143 = scmp.ne.s32.totalorder %s135, %s137
      %p144 = scmp.eq.s32.totalorder %s22, 3
      %p145 = por %p143, %p144
      %p146 = scmp.ne.s32.totalorder %s137, %s138
      %p147 = scmp.eq.s32.totalorder %s22, 0
      %p148 = por %p146, %p147
      %p149 = scmp.ne.s32.totalorder %s137, %s138
      %p150 = scmp.eq.s32.totalorder %s23, 3
      %p151 = por %p149, %p150
      %p153 = scmp.ne.s32.totalorder %s138, %s152
      %p154 = scmp.eq.s32.totalorder %s23, 0
      %p155 = por %p153, %p154
      %s157 = sadd.s32 %s156, 1
      %p160 = scmp.eq.s32.totalorder %s17, 3
      %p161 = scmp.ne.s32.totalorder %s156, %s158
      %p162 = scmp.eq.s32.totalorder %s17, 0
      %p163 = por %p161, %p162
      %p164 = scmp.ne.s32.totalorder %s156, %s158
      %p165 = scmp.eq.s32.totalorder %s22, 3
      %p166 = por %p164, %p165
      %p167 = scmp.ne.s32.totalorder %s158, %s159
      %p168 = scmp.eq.s32.totalorder %s22, 0
      %p169 = por %p167, %p168
      %p170 = scmp.ne.s32.totalorder %s158, %s159
      %p171 = scmp.eq.s32.totalorder %s23, 3
      %p172 = por %p170, %p171
      %p174 = scmp.ne.s32.totalorder %s159, %s173
      %p175 = scmp.eq.s32.totalorder %s23, 0
      %p176 = por %p174, %p175
      %s177 = ssub.s32 %s17, %s24
      %p178 = scmp.eq.s32.totalorder %s177, 0
      %s180 = sadd.s32 %s179, 1
      %s181 = scalar_select %p178, %s179, %s180
      %p184 = pneg %p178
      %p185 = scmp.eq.s32.totalorder %s17, 3
      %p186 = por %p184, %p185
      %p187 = scmp.ne.s32.totalorder %s179, %s182
      %p188 = scmp.eq.s32.totalorder %s17, 0
      %p189 = por %p187, %p188
      %p190 = scmp.ne.s32.totalorder %s179, %s182
      %p191 = scmp.eq.s32.totalorder %s22, 3
      %p192 = por %p190, %p191
      %p193 = scmp.ne.s32.totalorder %s182, %s183
      %p194 = scmp.eq.s32.totalorder %s22, 0
      %p195 = por %p193, %p194
      %p196 = scmp.ne.s32.totalorder %s182, %s183
      %p197 = scmp.eq.s32.totalorder %s23, 3
      %p198 = por %p196, %p197
      %p200 = scmp.ne.s32.totalorder %s183, %s199
      %p201 = scmp.eq.s32.totalorder %s23, 0
      %p202 = por %p200, %p201
      %p203 = scmp.le.s32.totalorder 1, %s17
      %p204 = scmp.lt.s32.totalorder %s17, 5
      %p205 = pnand %p203, %p204
      %p206 = pneg %p205
      // Predicated region
      $region9: #{_lambda_.2} parent=5 // pred_check
        _
      $region10: #{_lambda_.2} parent=5 // pred_check_branch
        %208 = sbr.rel (%p205) target = $region12
      $region11: #{_lambda_.2} parent=5 // pred_region
        %s209 = ssub.s32 %s17, 1
        // Predicated region
        $region13: #{_lambda_.2} parent=11 // pred_check
          %p210 = pneg %p64
        $region14: #{_lambda_.2} parent=11 // pred_check_branch
          %212 = sbr.rel (%p210) target = $region16
        $region15: #{_lambda_.2} parent=11 // pred_region
          %s214 = ssub.s32 3840, 3840
          %215 = vsyncadd [#allocation3], %s214
          %s216 = sshll.u32 [#allocation2], 4
          %s217 = int_to_ptr.vmem [resolvable:$true] %s216
          %222 = dma.hbm_to_vmem [thread:$0]  %s1, 3840, %s217, [#allocation3], 192, 192, 12
        $region16: #{_lambda_.2} parent=11 // pred_fallthru
          _
        // Predicated region
        $region17: #{_lambda_.2} parent=11 // pred_check
          %p223 = pneg %p85
        $region18: #{_lambda_.2} parent=11 // pred_check_branch
          %225 = sbr.rel (%p223) target = $region20
        $region19: #{_lambda_.2} parent=11 // pred_region
          %s227 = ssub.s32 3840, 3840
          %228 = vsyncadd [#allocation5], %s227
          %s229 = sshll.u32 [#allocation4], 4
          %s230 = int_to_ptr.vmem [resolvable:$true] %s229
          %235 = dma.hbm_to_vmem [thread:$0]  %s2, 3840, %s230, [#allocation5], 192, 192, 12
        $region20: #{_lambda_.2} parent=11 // pred_fallthru
          _
        // Predicated region
        $region21: #{_lambda_.2} parent=11 // pred_check
          %p236 = pneg %p106
        $region22: #{_lambda_.2} parent=11 // pred_check_branch
          %238 = sbr.rel (%p236) target = $region24
        $region23: #{_lambda_.2} parent=11 // pred_region
          %s240 = ssub.s32 48, 48
          %241 = vsyncadd [#allocation5], %s240
          %s243 = sshll.u32 [#allocation6], 4
          %s244 = int_to_ptr.vmem [resolvable:$true] %s243
          %246 = dma.hbm_to_vmem [thread:$0]  %s3, 48, %s244, [#allocation5]
        $region24: #{_lambda_.2} parent=11 // pred_fallthru
          _
        // Predicated region
        $region25: #{_lambda_.2} parent=11 // pred_check
          %p247 = pneg %p127
        $region26: #{_lambda_.2} parent=11 // pred_check_branch
          %249 = sbr.rel (%p247) target = $region28
        $region27: #{_lambda_.2} parent=11 // pred_region
          %s251 = ssub.s32 30720, 30720
          %252 = vsyncadd [#allocation8], %s251
          %s253 = sshll.u32 [#allocation7], 4
          %s254 = int_to_ptr.vmem [resolvable:$true] %s253
          %259 = dma.hbm_to_vmem [thread:$0]  %s4, 30720, %s254, [#allocation8], 128, 128, 8
        $region28: #{_lambda_.2} parent=11 // pred_fallthru
          _
        // Predicated region
        $region29: #{_lambda_.2} parent=11 // pred_check
          %p260 = pneg %p148
        $region30: #{_lambda_.2} parent=11 // pred_check_branch
          %262 = sbr.rel (%p260) target = $region32
        $region31: #{_lambda_.2} parent=11 // pred_region
          %s264 = ssub.s32 30720, 30720
          %265 = vsyncadd [#allocation8], %s264
          %s266 = sshll.u32 [#allocation9], 4
          %s267 = int_to_ptr.vmem [resolvable:$true] %s266
          %272 = dma.hbm_to_vmem [thread:$0]  %s5, 30720, %s267, [#allocation8], 128, 128, 8
        $region32: #{_lambda_.2} parent=11 // pred_fallthru
          _
        // Predicated region
        $region33: #{_lambda_.2} parent=11 // pred_check
          %p273 = pneg %p169
        $region34: #{_lambda_.2} parent=11 // pred_check_branch
          %275 = sbr.rel (%p273) target = $region36
        $region35: #{_lambda_.2} parent=11 // pred_region
          %s277 = ssub.s32 32, 32
          %278 = vsyncadd [#allocation11], %s277
          %s280 = sshll.u32 [#allocation10], 4
          %s281 = int_to_ptr.vmem [resolvable:$true] %s280
          %283 = dma.hbm_to_vmem [thread:$0]  %s6, 32, %s281, [#allocation11]
        $region36: #{_lambda_.2} parent=11 // pred_fallthru
          _
      $region12: #{_lambda_.2} parent=5 // pred_fallthru
        _
      %p284 = scmp.lt.s32.totalorder %s17, 4
      // Predicated region
      $region37: #{_lambda_.2} parent=5 // pred_check
        %p285 = pneg %p284
      $region38: #{_lambda_.2} parent=5 // pred_check_branch
        %287 = sbr.rel (%p285) target = $region40
      $region39: #{_lambda_.2} parent=5 // pred_region
        // Predicated region
        $region41: #{_lambda_.2} parent=39 // pred_check
          %p288 = pneg %p37
        $region42: #{_lambda_.2} parent=39 // pred_check_branch
          %290 = sbr.rel (%p288) target = $region44
        $region43: #{_lambda_.2} parent=39 // pred_region
          %p291 = scmp.lt.s32.totalorder %s17, 3
          %s292 = scalar_select %p291, %s17, 3
          %s293 = smul.addr %s292, 4
          %s294 = smul.addr %s293, 8
          %s295 = scalar_lea.vmem %s0, %s294
        $region44: #{_lambda_.2} parent=39 // pred_fallthru
          _
      $region40: #{_lambda_.2} parent=5 // pred_fallthru
        _
      %p296 = scmp.le.s32.totalorder 1, %s17
      %p297 = scmp.lt.s32.totalorder %s17, 5
      %p298 = pnand %p296, %p297
      %p299 = pneg %p298
      // Predicated region
      $region45: #{_lambda_.2} parent=5 // pred_check
        _
      $region46: #{_lambda_.2} parent=5 // pred_check_branch
        %301 = sbr.rel (%p298) target = $region48
      $region47: #{_lambda_.2} parent=5 // pred_region
        %s302 = ssub.s32 %s17, 1
        // Predicated region
        $region49: #{_lambda_.2} parent=47 // pred_check
          %p303 = pneg %p64
        $region50: #{_lambda_.2} parent=47 // pred_check_branch
          %305 = sbr.rel (%p303) target = $region52
        $region51: #{_lambda_.2} parent=47 // pred_region
          %306 = dma.done [#allocation3], 3840
        $region52: #{_lambda_.2} parent=47 // pred_fallthru
          _
        // Predicated region
        $region53: #{_lambda_.2} parent=47 // pred_check
          %p307 = pneg %p85
        $region54: #{_lambda_.2} parent=47 // pred_check_branch
          %309 = sbr.rel (%p307) target = $region56
        $region55: #{_lambda_.2} parent=47 // pred_region
          %310 = dma.done [#allocation5], 3840
        $region56: #{_lambda_.2} parent=47 // pred_fallthru
          _
        // Predicated region
        $region57: #{_lambda_.2} parent=47 // pred_check
          %p311 = pneg %p106
        $region58: #{_lambda_.2} parent=47 // pred_check_branch
          %313 = sbr.rel (%p311) target = $region60
        $region59: #{_lambda_.2} parent=47 // pred_region
          %314 = dma.done [#allocation5], 48
        $region60: #{_lambda_.2} parent=47 // pred_fallthru
          _
        // Predicated region
        $region61: #{_lambda_.2} parent=47 // pred_check
          %p315 = pneg %p127
        $region62: #{_lambda_.2} parent=47 // pred_check_branch
          %317 = sbr.rel (%p315) target = $region64
        $region63: #{_lambda_.2} parent=47 // pred_region
          %318 = dma.done [#allocation8], 30720
        $region64: #{_lambda_.2} parent=47 // pred_fallthru
          _
        // Predicated region
        $region65: #{_lambda_.2} parent=47 // pred_check
          %p319 = pneg %p148
        $region66: #{_lambda_.2} parent=47 // pred_check_branch
          %321 = sbr.rel (%p319) target = $region68
        $region67: #{_lambda_.2} parent=47 // pred_region
          %322 = dma.done [#allocation8], 30720
        $region68: #{_lambda_.2} parent=47 // pred_fallthru
          _
        // Predicated region
        $region69: #{_lambda_.2} parent=47 // pred_check
          %p323 = pneg %p169
        $region70: #{_lambda_.2} parent=47 // pred_check_branch
          %325 = sbr.rel (%p323) target = $region72
        $region71: #{_lambda_.2} parent=47 // pred_region
          %326 = dma.done [#allocation11], 32
        $region72: #{_lambda_.2} parent=47 // pred_fallthru
          _
        %p327 = scmp.lt.s32.totalorder %s22, 3
        %s328 = scalar_select %p327, %s22, 3
        %s329 = smul.addr %s328, 4
        %s330 = smul.addr %s329, 8
        %s331 = scalar_lea.vmem %s0, %s330
        %p332 = pneg %p43
        %p333 = pneg %p40
        %p334 = pneg %p64
        %p335 = pneg %p61
        %p336 = pneg %p85
        %p337 = pneg %p82
        %p338 = pneg %p106
        %p339 = pneg %p103
        %p340 = pneg %p127
        %p341 = pneg %p124
        %p342 = pneg %p148
        %p343 = pneg %p145
        %p344 = pneg %p169
        %p345 = pneg %p166
        %p346 = pneg %p195
        %p347 = pneg %p192
        %p348 = scmp.lt.s32.totalorder %s22, 3
        %s349 = scalar_select %p348, %s22, 3
        %s350 = smul.addr %s349, 2
        %s351 = smul.addr %s350, 4
        %s352 = scalar_lea.vmem %s7, %s351
        %p353 = scmp.lt.s32.totalorder %s22, 3
        %s354 = scalar_select %p353, %s22, 3
        %s355 = smul.addr %s354, 4
        %s356 = smul.addr %s355, 8
        %s357 = scalar_lea.vmem %s0, %s356
        %p358 = scmp.lt.s32.totalorder %s22, 3
        %s359 = scalar_select %p358, %s22, 3
        %s360 = smul.addr %s359, 2
        %s361 = smul.addr %s360, 4
        %s362 = scalar_lea.vmem %s7, %s361
        %v364 = vld [vmem:[%s357] sm:$0xff]
        %v365 = vld [vmem:[%s357 + $0x8] sm:$0xff]
        %v366 = vld [vmem:[%s357 + $0x10] sm:$0xff]
        %v367 = vld [vmem:[%s357 + $0x18] sm:$0xf]
        %v368 = vpack.c.bf16 %v365, %v364
        %v369 = vpack.c.bf16 %v366, %v366
        %v370 = vld [vmem:[#allocation2] sm:$0xff]
        %v371 = vld [vmem:[#allocation2 + $0x8] sm:$0xf]
        %v372 = vld [vmem:[#allocation2 + $0xc] sm:$0xff]
        %v373 = vld [vmem:[#allocation2 + $0x14] sm:$0xf]
        %v374 = vld [vmem:[#allocation2 + $0x18] sm:$0xff]
        %v375 = vld [vmem:[#allocation2 + $0x20] sm:$0xf]
        %v376 = vld [vmem:[#allocation2 + $0x24] sm:$0x33]
        %v377 = vld [vmem:[#allocation2 + $0x2c] sm:$0x3]
        %v378 = vld [vmem:[#allocation4] sm:$0xff]
        %v379 = vld [vmem:[#allocation4 + $0x8] sm:$0xf]
        %v380 = vld [vmem:[#allocation4 + $0xc] sm:$0xff]
        %v381 = vld [vmem:[#allocation4 + $0x14] sm:$0xf]
        %v382 = vld [vmem:[#allocation4 + $0x18] sm:$0xff]
        %v383 = vld [vmem:[#allocation4 + $0x20] sm:$0xf]
        %v384 = vld [vmem:[#allocation4 + $0x24] sm:$0x33]
        %v385 = vld [vmem:[#allocation4 + $0x2c] sm:$0x3]
        %v386 = vpack.c.bf16 %v367, %v366
        %s387 = scalar_lea.vmem [#allocation2], 48
        %v388 = vld [vmem:[%s387] sm:$0xff]
        %v389 = vld [vmem:[%s387 + $0x8] sm:$0xf]
        %v390 = vld [vmem:[%s387 + $0xc] sm:$0xff]
        %v391 = vld [vmem:[%s387 + $0x14] sm:$0xf]
        %v392 = vld [vmem:[%s387 + $0x18] sm:$0xff]
        %v393 = vld [vmem:[%s387 + $0x20] sm:$0xf]
        %v394 = vld [vmem:[%s387 + $0x24] sm:$0x33]
        %v395 = vld [vmem:[%s387 + $0x2c] sm:$0x3]
        %vm396 = vsmask.f32 7424
        %v398 = vshrl.u32 %v368, 16
        %v400 = vshll.u32 %v368, 16
        %v402 = vrot.slane %v400, 1
        %v403 = vor.u32 %v398, %v402
        %v405 = vshll.u32 %v386, 16
        %v407 = vrot.slane %v405, 1
        %v408 = vsel %vm396, %v403, %v407
        %v409 = vshrl.u32 %v386, 16
        %v411 = vor.u32 %v409, %v407
        %v420 = vunpack.c.l.b16 %v388
        %v421 = vunpack.c.h.b16 %v388
        %v422 = vunpack.c.l.b16 %v389
        %v423 = vunpack.c.l.b16 %v390
        %v424 = vunpack.c.h.b16 %v390
        %v425 = vunpack.c.l.b16 %v391
        %v426 = vunpack.c.l.b16 %v392
        %v427 = vunpack.c.h.b16 %v392
        %v428 = vunpack.c.l.b16 %v393
        %v429 = vunpack.c.l.b16 %v394
        %v430 = vunpack.c.h.b16 %v394
        %v431 = vunpack.c.l.b16 %v395
        %v432 = vpack.c.b16 %v423, %v420
        %v433 = vpack.c.b16 %v424, %v421
        %v434 = vpack.c.b16 %v425, %v422
        %v435 = vpack.c.b16 %v429, %v426
        %v436 = vpack.c.b16 %v430, %v427
        %v437 = vpack.c.b16 %v431, %v428
        %vm441 = vcmask 228352
        %v443 = vsel %vm441, %v408, 0
        %v446 = vsel %vm441, %v411, 0
        %vm448 = vcmask 1045504
        %v450 = vsel %vm448, %v435, 0
        %v453 = vsel %vm448, %v436, 0
        %v456 = vsel %vm448, %v437, 0
        %458 = vmatprep.subr.bf16.mxu0 %v433
        %459 = vmatpush1.bf16.msra.mxu0 %v432
        %460 = vmatprep.subr.bf16.mxu0 %v453
        %461 = vmatpush1.bf16.msra.mxu0 %v450
        %462 = vmatprep.subr.bf16.mxu0 0
        %463 = vmatpush1.bf16.msra.mxu0 0
        %464 = vmatprep.subr.bf16.mxu0 0
        %465 = vmatpush1.bf16.msra.mxu0 0
        %466 = vmatprep.subr.bf16.mxu0 0
        %467 = vmatpush1.bf16.msra.mxu0 0
        %468 = vmatprep.subr.bf16.mxu0 0
        %469 = vmatpush1.bf16.msra.mxu0 0
        %470 = vmatprep.subr.bf16.mxu0 0
        %471 = vmatpush1.bf16.msra.mxu0 0
        %472 = vmatprep.subr.bf16.mxu0 0
        %473 = vmatpush1.bf16.msra.mxu0 0
        %474 = vmatprep.subr.bf16.mxu0 0
        %475 = vmatpush1.bf16.msra.mxu0 0
        %476 = vmatprep.subr.bf16.mxu0 0
        %477 = vmatpush1.bf16.msra.mxu0 0
        %478 = vmatprep.subr.bf16.mxu0 0
        %479 = vmatpush1.bf16.msra.mxu0 0
        %480 = vmatprep.subr.bf16.mxu0 0
        %481 = vmatpush1.bf16.msra.mxu0 0
        %482 = vmatprep.subr.bf16.mxu0 0
        %483 = vmatpush1.bf16.msra.mxu0 0
        %484 = vmatprep.subr.bf16.mxu0 0
        %485 = vmatpush1.bf16.msra.mxu0 0
        %486 = vmatprep.subr.bf16.mxu0 0
        %487 = vmatpush1.bf16.msra.mxu0 0
        %488 = vmatprep.subr.bf16.mxu0 0
        %489 = vmatpush1.bf16.msra.mxu0 0
        %490 = vmatprep.mubr.bf16.mxu0 0
        %491 = vmatmul.mubr.bf16.gmra.mrb[0].mxu0 %v443
        %v492 = vpop.f32.mrb[0].mxu0
        %v493 = vadd.f32 0.0, %v492
        %v494 = vpop.f32.mrb[0].mxu0
        %v495 = vadd.f32 0.0, %v494
        %v496 = vpop.f32.mrb[0].mxu0
        %v497 = vadd.f32 0.0, %v496
        %v498 = vpop.f32.mrb[0].mxu0
        %v499 = vadd.f32 0.0, %v498
        %500 = vmatprep.mubr.bf16.mxu0 0
        %501 = vmatmul.mubr.bf16.gmra.mrb[0].mxu0 %v446
        %v502 = vpop.f32.mrb[0].mxu0
        %v503 = vadd.f32 0.0, %v502
        %v504 = vpop.f32.mrb[0].mxu0
        %v505 = vadd.f32 0.0, %v504
        %v506 = vpop.f32.mrb[0].mxu0
        %v507 = vpop.f32.mrb[0].mxu0
        %508 = vdwg.mxu0
        %509 = vmatprep.subr.bf16.mxu0 0
        %510 = vmatpush1.bf16.msra.mxu0 %v434
        %511 = vmatprep.subr.bf16.mxu0 0
        %512 = vmatpush1.bf16.msra.mxu0 %v456
        %513 = vmatprep.subr.bf16.mxu0 0
        %514 = vmatpush1.bf16.msra.mxu0 0
        %515 = vmatprep.subr.bf16.mxu0 0
        %516 = vmatpush1.bf16.msra.mxu0 0
        %517 = vmatprep.subr.bf16.mxu0 0
        %518 = vmatpush1.bf16.msra.mxu0 0
        %519 = vmatprep.subr.bf16.mxu0 0
        %520 = vmatpush1.bf16.msra.mxu0 0
        %521 = vmatprep.subr.bf16.mxu0 0
        %522 = vmatpush1.bf16.msra.mxu0 0
        %523 = vmatprep.subr.bf16.mxu0 0
        %524 = vmatpush1.bf16.msra.mxu0 0
        %525 = vmatprep.subr.bf16.mxu0 0
        %526 = vmatpush1.bf16.msra.mxu0 0
        %527 = vmatprep.subr.bf16.mxu0 0
        %528 = vmatpush1.bf16.msra.mxu0 0
        %529 = vmatprep.subr.bf16.mxu0 0
        %530 = vmatpush1.bf16.msra.mxu0 0
        %531 = vmatprep.subr.bf16.mxu0 0
        %532 = vmatpush1.bf16.msra.mxu0 0
        %533 = vmatprep.subr.bf16.mxu0 0
        %534 = vmatpush1.bf16.msra.mxu0 0
        %535 = vmatprep.subr.bf16.mxu0 0
        %536 = vmatpush1.bf16.msra.mxu0 0
        %537 = vmatprep.subr.bf16.mxu0 0
        %538 = vmatpush1.bf16.msra.mxu0 0
        %539 = vmatprep.subr.bf16.mxu0 0
        %540 = vmatpush1.bf16.msra.mxu0 0
        %541 = vmatprep.mubr.bf16.mxu0 0
        %542 = vmatmul.mubr.bf16.gmra.mrb[0].mxu0 %v443
        %v543 = vpop.f32.mrb[0].mxu0
        %v544 = vadd.f32 0.0, %v543
        %v545 = vpop.f32.mrb[0].mxu0
        %v546 = vpop.f32.mrb[0].mxu0
        %v547 = vadd.f32 0.0, %v546
        %v548 = vpop.f32.mrb[0].mxu0
        %549 = vmatprep.mubr.bf16.mxu0 0
        %550 = vmatmul.mubr.bf16.gmra.mrb[0].mxu0 %v446
        %v551 = vpop.f32.mrb[0].mxu0
        %v552 = vadd.f32 0.0, %v551
        %v553 = vpop.f32.mrb[0].mxu0
        %v554 = vpop.f32.mrb[0].mxu0
        %v555 = vpop.f32.mrb[0].mxu0
        %556 = vdwg.mxu0
        %v565 = vunpack.c.l.b16 %v370
        %v566 = vunpack.c.h.b16 %v370
        %v567 = vunpack.c.l.b16 %v371
        %v568 = vunpack.c.l.b16 %v372
        %v569 = vunpack.c.h.b16 %v372
        %v570 = vunpack.c.l.b16 %v373
        %v571 = vunpack.c.l.b16 %v374
        %v572 = vunpack.c.h.b16 %v374
        %v573 = vunpack.c.l.b16 %v375
        %v574 = vunpack.c.l.b16 %v376
        %v575 = vunpack.c.h.b16 %v376
        %v576 = vunpack.c.l.b16 %v377
        %v577 = vpack.c.b16 %v568, %v565
        %v578 = vpack.c.b16 %v569, %v566
        %v579 = vpack.c.b16 %v570, %v567
        %v580 = vpack.c.b16 %v574, %v571
        %v581 = vpack.c.b16 %v575, %v572
        %v582 = vpack.c.b16 %v576, %v573
        %v586 = vsel %vm441, %v368, 0
        %v589 = vsel %vm441, %v369, 0
        %v592 = vsel %vm448, %v580, 0
        %v595 = vsel %vm448, %v581, 0
        %v598 = vsel %vm448, %v582, 0
        %600 = vmatprep.subr.bf16.mxu0 %v578
        %601 = vmatpush1.bf16.msra.mxu0 %v577
        %602 = vmatprep.subr.bf16.mxu0 %v595
        %603 = vmatpush1.bf16.msra.mxu0 %v592
        %604 = vmatprep.subr.bf16.mxu0 0
        %605 = vmatpush1.bf16.msra.mxu0 0
        %606 = vmatprep.subr.bf16.mxu0 0
        %607 = vmatpush1.bf16.msra.mxu0 0
        %608 = vmatprep.subr.bf16.mxu0 0
        %609 = vmatpush1.bf16.msra.mxu0 0
        %610 = vmatprep.subr.bf16.mxu0 0
        %611 = vmatpush1.bf16.msra.mxu0 0
        %612 = vmatprep.subr.bf16.mxu0 0
        %613 = vmatpush1.bf16.msra.mxu0 0
        %614 = vmatprep.subr.bf16.mxu0 0
        %615 = vmatpush1.bf16.msra.mxu0 0
        %616 = vmatprep.subr.bf16.mxu0 0
        %617 = vmatpush1.bf16.msra.mxu0 0
        %618 = vmatprep.subr.bf16.mxu0 0
        %619 = vmatpush1.bf16.msra.mxu0 0
        %620 = vmatprep.subr.bf16.mxu0 0
        %621 = vmatpush1.bf16.msra.mxu0 0
        %622 = vmatprep.subr.bf16.mxu0 0
        %623 = vmatpush1.bf16.msra.mxu0 0
        %624 = vmatprep.subr.bf16.mxu0 0
        %625 = vmatpush1.bf16.msra.mxu0 0
        %626 = vmatprep.subr.bf16.mxu0 0
        %627 = vmatpush1.bf16.msra.mxu0 0
        %628 = vmatprep.subr.bf16.mxu0 0
        %629 = vmatpush1.bf16.msra.mxu0 0
        %630 = vmatprep.subr.bf16.mxu0 0
        %631 = vmatpush1.bf16.msra.mxu0 0
        %632 = vmatprep.mubr.bf16.mxu0 0
        %633 = vmatmul.mubr.bf16.gmra.mrb[0].mxu0 %v586
        %v634 = vpop.f32.mrb[0].mxu0
        %v635 = vadd.f32 %v493, %v634
        %v636 = vpop.f32.mrb[0].mxu0
        %v637 = vadd.f32 %v495, %v636
        %v638 = vpop.f32.mrb[0].mxu0
        %v639 = vadd.f32 %v497, %v638
        %v640 = vpop.f32.mrb[0].mxu0
        %v641 = vadd.f32 %v499, %v640
        %642 = vmatprep.mubr.bf16.mxu0 0
        %643 = vmatmul.mubr.bf16.gmra.mrb[0].mxu0 %v589
        %v644 = vpop.f32.mrb[0].mxu0
        %v645 = vadd.f32 %v503, %v644
        %v646 = vpop.f32.mrb[0].mxu0
        %v647 = vadd.f32 %v505, %v646
        %v648 = vpop.f32.mrb[0].mxu0
        %v649 = vpop.f32.mrb[0].mxu0
        %650 = vdwg.mxu0
        %651 = vmatprep.subr.bf16.mxu0 0
        %652 = vmatpush1.bf16.msra.mxu0 %v579
        %653 = vmatprep.subr.bf16.mxu0 0
        %654 = vmatpush1.bf16.msra.mxu0 %v598
        %655 = vmatprep.subr.bf16.mxu0 0
        %656 = vmatpush1.bf16.msra.mxu0 0
        %657 = vmatprep.subr.bf16.mxu0 0
        %658 = vmatpush1.bf16.msra.mxu0 0
        %659 = vmatprep.subr.bf16.mxu0 0
        %660 = vmatpush1.bf16.msra.mxu0 0
        %661 = vmatprep.subr.bf16.mxu0 0
        %662 = vmatpush1.bf16.msra.mxu0 0
        %663 = vmatprep.subr.bf16.mxu0 0
        %664 = vmatpush1.bf16.msra.mxu0 0
        %665 = vmatprep.subr.bf16.mxu0 0
        %666 = vmatpush1.bf16.msra.mxu0 0
        %667 = vmatprep.subr.bf16.mxu0 0
        %668 = vmatpush1.bf16.msra.mxu0 0
        %669 = vmatprep.subr.bf16.mxu0 0
        %670 = vmatpush1.bf16.msra.mxu0 0
        %671 = vmatprep.subr.bf16.mxu0 0
        %672 = vmatpush1.bf16.msra.mxu0 0
        %673 = vmatprep.subr.bf16.mxu0 0
        %674 = vmatpush1.bf16.msra.mxu0 0
        %675 = vmatprep.subr.bf16.mxu0 0
        %676 = vmatpush1.bf16.msra.mxu0 0
        %677 = vmatprep.subr.bf16.mxu0 0
        %678 = vmatpush1.bf16.msra.mxu0 0
        %679 = vmatprep.subr.bf16.mxu0 0
        %680 = vmatpush1.bf16.msra.mxu0 0
        %681 = vmatprep.subr.bf16.mxu0 0
        %682 = vmatpush1.bf16.msra.mxu0 0
        %683 = vmatprep.mubr.bf16.mxu0 0
        %684 = vmatmul.mubr.bf16.gmra.mrb[0].mxu0 %v586
        %v685 = vpop.f32.mrb[0].mxu0
        %v686 = vadd.f32 %v544, %v685
        %v687 = vpop.f32.mrb[0].mxu0
        %v688 = vpop.f32.mrb[0].mxu0
        %v689 = vadd.f32 %v547, %v688
        %v690 = vpop.f32.mrb[0].mxu0
        %691 = vmatprep.mubr.bf16.mxu0 0
        %692 = vmatmul.mubr.bf16.gmra.mrb[0].mxu0 %v589
        %v693 = vpop.f32.mrb[0].mxu0
        %v694 = vadd.f32 %v552, %v693
        %v695 = vpop.f32.mrb[0].mxu0
        %v696 = vpop.f32.mrb[0].mxu0
        %v697 = vpop.f32.mrb[0].mxu0
        %698 = vdwg.mxu0
        %s699 = scalar_lea.vmem [#allocation4], 48
        %v700 = vld [vmem:[%s699] sm:$0xff]
        %v701 = vld [vmem:[%s699 + $0x8] sm:$0xf]
        %v702 = vld [vmem:[%s699 + $0xc] sm:$0xff]
        %v703 = vld [vmem:[%s699 + $0x14] sm:$0xf]
        %v704 = vld [vmem:[%s699 + $0x18] sm:$0xff]
        %v705 = vld [vmem:[%s699 + $0x20] sm:$0xf]
        %v706 = vld [vmem:[%s699 + $0x24] sm:$0x33]
        %v707 = vld [vmem:[%s699 + $0x2c] sm:$0x3]
        %v716 = vunpack.c.l.b16 %v700
        %v717 = vunpack.c.h.b16 %v700
        %v718 = vunpack.c.l.b16 %v701
        %v719 = vunpack.c.l.b16 %v702
        %v720 = vunpack.c.h.b16 %v702
        %v721 = vunpack.c.l.b16 %v703
        %v722 = vunpack.c.l.b16 %v704
        %v723 = vunpack.c.h.b16 %v704
        %v724 = vunpack.c.l.b16 %v705
        %v725 = vunpack.c.l.b16 %v706
        %v726 = vunpack.c.h.b16 %v706
        %v727 = vunpack.c.l.b16 %v707
        %v728 = vpack.c.b16 %v719, %v716
        %v729 = vpack.c.b16 %v720, %v717
        %v730 = vpack.c.b16 %v721, %v718
        %v731 = vpack.c.b16 %v725, %v722
        %v732 = vpack.c.b16 %v726, %v723
        %v733 = vpack.c.b16 %v727, %v724
        %v738 = vsel %vm448, %v731, 0
        %v741 = vsel %vm448, %v732, 0
        %v744 = vsel %vm448, %v733, 0
        %746 = vmatprep.subr.bf16.mxu0 %v729
        %747 = vmatpush1.bf16.msra.mxu0 %v728
        %748 = vmatprep.subr.bf16.mxu0 %v741
        %749 = vmatpush1.bf16.msra.mxu0 %v738
        %750 = vmatprep.subr.bf16.mxu0 0
        %751 = vmatpush1.bf16.msra.mxu0 0
        %752 = vmatprep.subr.bf16.mxu0 0
        %753 = vmatpush1.bf16.msra.mxu0 0
        %754 = vmatprep.subr.bf16.mxu0 0
        %755 = vmatpush1.bf16.msra.mxu0 0
        %756 = vmatprep.subr.bf16.mxu0 0
        %757 = vmatpush1.bf16.msra.mxu0 0
        %758 = vmatprep.subr.bf16.mxu0 0
        %759 = vmatpush1.bf16.msra.mxu0 0
        %760 = vmatprep.subr.bf16.mxu0 0
        %761 = vmatpush1.bf16.msra.mxu0 0
        %762 = vmatprep.subr.bf16.mxu0 0
        %763 = vmatpush1.bf16.msra.mxu0 0
        %764 = vmatprep.subr.bf16.mxu0 0
        %765 = vmatpush1.bf16.msra.mxu0 0
        %766 = vmatprep.subr.bf16.mxu0 0
        %767 = vmatpush1.bf16.msra.mxu0 0
        %768 = vmatprep.subr.bf16.mxu0 0
        %769 = vmatpush1.bf16.msra.mxu0 0
        %770 = vmatprep.subr.bf16.mxu0 0
        %771 = vmatpush1.bf16.msra.mxu0 0
        %772 = vmatprep.subr.bf16.mxu0 0
        %773 = vmatpush1.bf16.msra.mxu0 0
        %774 = vmatprep.subr.bf16.mxu0 0
        %775 = vmatpush1.bf16.msra.mxu0 0
        %776 = vmatprep.subr.bf16.mxu0 0
        %777 = vmatpush1.bf16.msra.mxu0 0
        %778 = vmatprep.mubr.bf16.mxu0 0
        %779 = vmatmul.mubr.bf16.gmra.mrb[0].mxu0 %v443
        %v780 = vpop.f32.mrb[0].mxu0
        %v781 = vadd.f32 0.0, %v780
        %v782 = vpop.f32.mrb[0].mxu0
        %v783 = vadd.f32 0.0, %v782
        %v784 = vpop.f32.mrb[0].mxu0
        %v785 = vadd.f32 0.0, %v784
        %v786 = vpop.f32.mrb[0].mxu0
        %v787 = vadd.f32 0.0, %v786
        %788 = vmatprep.mubr.bf16.mxu0 0
        %789 = vmatmul.mubr.bf16.gmra.mrb[0].mxu0 %v446
        %v790 = vpop.f32.mrb[0].mxu0
        %v791 = vadd.f32 0.0, %v790
        %v792 = vpop.f32.mrb[0].mxu0
        %v793 = vadd.f32 0.0, %v792
        %v794 = vpop.f32.mrb[0].mxu0
        %v795 = vpop.f32.mrb[0].mxu0
        %796 = vdwg.mxu0
        %797 = vmatprep.subr.bf16.mxu0 0
        %798 = vmatpush1.bf16.msra.mxu0 %v730
        %799 = vmatprep.subr.bf16.mxu0 0
        %800 = vmatpush1.bf16.msra.mxu0 %v744
        %801 = vmatprep.subr.bf16.mxu0 0
        %802 = vmatpush1.bf16.msra.mxu0 0
        %803 = vmatprep.subr.bf16.mxu0 0
        %804 = vmatpush1.bf16.msra.mxu0 0
        %805 = vmatprep.subr.bf16.mxu0 0
        %806 = vmatpush1.bf16.msra.mxu0 0
        %807 = vmatprep.subr.bf16.mxu0 0
        %808 = vmatpush1.bf16.msra.mxu0 0
        %809 = vmatprep.subr.bf16.mxu0 0
        %810 = vmatpush1.bf16.msra.mxu0 0
        %811 = vmatprep.subr.bf16.mxu0 0
        %812 = vmatpush1.bf16.msra.mxu0 0
        %813 = vmatprep.subr.bf16.mxu0 0
        %814 = vmatpush1.bf16.msra.mxu0 0
        %815 = vmatprep.subr.bf16.mxu0 0
        %816 = vmatpush1.bf16.msra.mxu0 0
        %817 = vmatprep.subr.bf16.mxu0 0
        %818 = vmatpush1.bf16.msra.mxu0 0
        %819 = vmatprep.subr.bf16.mxu0 0
        %820 = vmatpush1.bf16.msra.mxu0 0
        %821 = vmatprep.subr.bf16.mxu0 0
        %822 = vmatpush1.bf16.msra.mxu0 0
        %823 = vmatprep.subr.bf16.mxu0 0
        %824 = vmatpush1.bf16.msra.mxu0 0
        %825 = vmatprep.subr.bf16.mxu0 0
        %826 = vmatpush1.bf16.msra.mxu0 0
        %827 = vmatprep.subr.bf16.mxu0 0
        %828 = vmatpush1.bf16.msra.mxu0 0
        %829 = vmatprep.mubr.bf16.mxu0 0
        %830 = vmatmul.mubr.bf16.gmra.mrb[0].mxu0 %v443
        %v831 = vpop.f32.mrb[0].mxu0
        %v832 = vadd.f32 0.0, %v831
        %v833 = vpop.f32.mrb[0].mxu0
        %v834 = vpop.f32.mrb[0].mxu0
        %v835 = vadd.f32 0.0, %v834
        %v836 = vpop.f32.mrb[0].mxu0
        %837 = vmatprep.mubr.bf16.mxu0 0
        %838 = vmatmul.mubr.bf16.gmra.mrb[0].mxu0 %v446
        %v839 = vpop.f32.mrb[0].mxu0
        %v840 = vadd.f32 0.0, %v839
        %v841 = vpop.f32.mrb[0].mxu0
        %v842 = vpop.f32.mrb[0].mxu0
        %v843 = vpop.f32.mrb[0].mxu0
        %844 = vdwg.mxu0
        %v853 = vunpack.c.l.b16 %v378
        %v854 = vunpack.c.h.b16 %v378
        %v855 = vunpack.c.l.b16 %v379
        %v856 = vunpack.c.l.b16 %v380
        %v857 = vunpack.c.h.b16 %v380
        %v858 = vunpack.c.l.b16 %v381
        %v859 = vunpack.c.l.b16 %v382
        %v860 = vunpack.c.h.b16 %v382
        %v861 = vunpack.c.l.b16 %v383
        %v862 = vunpack.c.l.b16 %v384
        %v863 = vunpack.c.h.b16 %v384
        %v864 = vunpack.c.l.b16 %v385
        %v865 = vpack.c.b16 %v856, %v853
        %v866 = vpack.c.b16 %v857, %v854
        %v867 = vpack.c.b16 %v858, %v855
        %v868 = vpack.c.b16 %v862, %v859
        %v869 = vpack.c.b16 %v863, %v860
        %v870 = vpack.c.b16 %v864, %v861
        %v875 = vsel %vm448, %v868, 0
        %v878 = vsel %vm448, %v869, 0
        %v881 = vsel %vm448, %v870, 0
        %883 = vmatprep.subr.bf16.mxu0 %v866
        %884 = vmatpush1.bf16.msra.mxu0 %v865
        %885 = vmatprep.subr.bf16.mxu0 %v878
        %886 = vmatpush1.bf16.msra.mxu0 %v875
        %887 = vmatprep.subr.bf16.mxu0 0
        %888 = vmatpush1.bf16.msra.mxu0 0
        %889 = vmatprep.subr.bf16.mxu0 0
        %890 = vmatpush1.bf16.msra.mxu0 0
        %891 = vmatprep.subr.bf16.mxu0 0
        %892 = vmatpush1.bf16.msra.mxu0 0
        %893 = vmatprep.subr.bf16.mxu0 0
        %894 = vmatpush1.bf16.msra.mxu0 0
        %895 = vmatprep.subr.bf16.mxu0 0
        %896 = vmatpush1.bf16.msra.mxu0 0
        %897 = vmatprep.subr.bf16.mxu0 0
        %898 = vmatpush1.bf16.msra.mxu0 0
        %899 = vmatprep.subr.bf16.mxu0 0
        %900 = vmatpush1.bf16.msra.mxu0 0
        %901 = vmatprep.subr.bf16.mxu0 0
        %902 = vmatpush1.bf16.msra.mxu0 0
        %903 = vmatprep.subr.bf16.mxu0 0
        %904 = vmatpush1.bf16.msra.mxu0 0
        %905 = vmatprep.subr.bf16.mxu0 0
        %906 = vmatpush1.bf16.msra.mxu0 0
        %907 = vmatprep.subr.bf16.mxu0 0
        %908 = vmatpush1.bf16.msra.mxu0 0
        %909 = vmatprep.subr.bf16.mxu0 0
        %910 = vmatpush1.bf16.msra.mxu0 0
        %911 = vmatprep.subr.bf16.mxu0 0
        %912 = vmatpush1.bf16.msra.mxu0 0
        %913 = vmatprep.subr.bf16.mxu0 0
        %914 = vmatpush1.bf16.msra.mxu0 0
        %915 = vmatprep.mubr.bf16.mxu0 0
        %916 = vmatmul.mubr.bf16.gmra.mrb[0].mxu0 %v586
        %v917 = vpop.f32.mrb[0].mxu0
        %v918 = vadd.f32 %v781, %v917
        %v919 = vpop.f32.mrb[0].mxu0
        %v920 = vadd.f32 %v783, %v919
        %v921 = vpop.f32.mrb[0].mxu0
        %v922 = vadd.f32 %v785, %v921
        %v923 = vpop.f32.mrb[0].mxu0
        %v924 = vadd.f32 %v787, %v923
        %925 = vmatprep.mubr.bf16.mxu0 0
        %926 = vmatmul.mubr.bf16.gmra.mrb[0].mxu0 %v589
        %v927 = vpop.f32.mrb[0].mxu0
        %v928 = vadd.f32 %v791, %v927
        %v929 = vpop.f32.mrb[0].mxu0
        %v930 = vadd.f32 %v793, %v929
        %v931 = vpop.f32.mrb[0].mxu0
        %v932 = vpop.f32.mrb[0].mxu0
        %933 = vdwg.mxu0
        %934 = vmatprep.subr.bf16.mxu0 0
        %935 = vmatpush1.bf16.msra.mxu0 %v867
        %936 = vmatprep.subr.bf16.mxu0 0
        %937 = vmatpush1.bf16.msra.mxu0 %v881
        %938 = vmatprep.subr.bf16.mxu0 0
        %939 = vmatpush1.bf16.msra.mxu0 0
        %940 = vmatprep.subr.bf16.mxu0 0
        %941 = vmatpush1.bf16.msra.mxu0 0
        %942 = vmatprep.subr.bf16.mxu0 0
        %943 = vmatpush1.bf16.msra.mxu0 0
        %944 = vmatprep.subr.bf16.mxu0 0
        %945 = vmatpush1.bf16.msra.mxu0 0
        %946 = vmatprep.subr.bf16.mxu0 0
        %947 = vmatpush1.bf16.msra.mxu0 0
        %948 = vmatprep.subr.bf16.mxu0 0
        %949 = vmatpush1.bf16.msra.mxu0 0
        %950 = vmatprep.subr.bf16.mxu0 0
        %951 = vmatpush1.bf16.msra.mxu0 0
        %952 = vmatprep.subr.bf16.mxu0 0
        %953 = vmatpush1.bf16.msra.mxu0 0
        %954 = vmatprep.subr.bf16.mxu0 0
        %955 = vmatpush1.bf16.msra.mxu0 0
        %956 = vmatprep.subr.bf16.mxu0 0
        %957 = vmatpush1.bf16.msra.mxu0 0
        %958 = vmatprep.subr.bf16.mxu0 0
        %959 = vmatpush1.bf16.msra.mxu0 0
        %960 = vmatprep.subr.bf16.mxu0 0
        %961 = vmatpush1.bf16.msra.mxu0 0
        %962 = vmatprep.subr.bf16.mxu0 0
        %963 = vmatpush1.bf16.msra.mxu0 0
        %964 = vmatprep.subr.bf16.mxu0 0
        %965 = vmatpush1.bf16.msra.mxu0 0
        %966 = vmatprep.mubr.bf16.mxu0 0
        %967 = vmatmul.mubr.bf16.gmra.mrb[0].mxu0 %v586
        %v968 = vpop.f32.mrb[0].mxu0
        %v969 = vadd.f32 %v832, %v968
        %v970 = vpop.f32.mrb[0].mxu0
        %v971 = vpop.f32.mrb[0].mxu0
        %v972 = vadd.f32 %v835, %v971
        %v973 = vpop.f32.mrb[0].mxu0
        %974 = vmatprep.mubr.bf16.mxu0 0
        %975 = vmatmul.mubr.bf16.gmra.mrb[0].mxu0 %v589
        %v976 = vpop.f32.mrb[0].mxu0
        %v977 = vadd.f32 %v840, %v976
        %v978 = vpop.f32.mrb[0].mxu0
        %v979 = vpop.f32.mrb[0].mxu0
        %v980 = vpop.f32.mrb[0].mxu0
        %981 = vdwg.mxu0
        %s982 = scalar_lea.vmem [#allocation2], 96
        %v983 = vld [vmem:[%s982] sm:$0xff]
        %v984 = vld [vmem:[%s982 + $0x8] sm:$0xf]
        %v985 = vld [vmem:[%s982 + $0xc] sm:$0xff]
        %v986 = vld [vmem:[%s982 + $0x14] sm:$0xf]
        %v987 = vld [vmem:[%s982 + $0x18] sm:$0xff]
        %v988 = vld [vmem:[%s982 + $0x20] sm:$0xf]
        %v989 = vld [vmem:[%s982 + $0x24] sm:$0x33]
        %v990 = vld [vmem:[%s982 + $0x2c] sm:$0x3]
        %vm993 = vcmask 1046528
        %v994 = vrot.slane %v368, 1
        %v995 = vrot.slane %v386, 1
        %v996 = vsel %vm993, %v994, %v995
        %v1005 = vunpack.c.l.b16 %v983
        %v1006 = vunpack.c.h.b16 %v983
        %v1007 = vunpack.c.l.b16 %v984
        %v1008 = vunpack.c.l.b16 %v985
        %v1009 = vunpack.c.h.b16 %v985
        %v1010 = vunpack.c.l.b16 %v986
        %v1011 = vunpack.c.l.b16 %v987
        %v1012 = vunpack.c.h.b16 %v987
        %v1013 = vunpack.c.l.b16 %v988
        %v1014 = vunpack.c.l.b16 %v989
        %v1015 = vunpack.c.h.b16 %v989
        %v1016 = vunpack.c.l.b16 %v990
        %v1017 = vpack.c.b16 %v1008, %v1005
        %v1018 = vpack.c.b16 %v1009, %v1006
        %v1019 = vpack.c.b16 %v1010, %v1007
        %v1020 = vpack.c.b16 %v1014, %v1011
        %v1021 = vpack.c.b16 %v1015, %v1012
        %v1022 = vpack.c.b16 %v1016, %v1013
        %v1027 = vsel %vm441, %v996, 0
        %v1030 = vsel %vm441, %v995, 0
        %v1033 = vsel %vm448, %v1020, 0
        %v1036 = vsel %vm448, %v1021, 0
        %v1039 = vsel %vm448, %v1022, 0
        %1041 = vmatprep.subr.bf16.mxu0 %v1018
        %1042 = vmatpush1.bf16.msra.mxu0 %v1017
        %1043 = vmatprep.subr.bf16.mxu0 %v1036
        %1044 = vmatpush1.bf16.msra.mxu0 %v1033
        %1045 = vmatprep.subr.bf16.mxu0 0
        %1046 = vmatpush1.bf16.msra.mxu0 0
        %1047 = vmatprep.subr.bf16.mxu0 0
        %1048 = vmatpush1.bf16.msra.mxu0 0
        %1049 = vmatprep.subr.bf16.mxu0 0
        %1050 = vmatpush1.bf16.msra.mxu0 0
        %1051 = vmatprep.subr.bf16.mxu0 0
        %1052 = vmatpush1.bf16.msra.mxu0 0
        %1053 = vmatprep.subr.bf16.mxu0 0
        %1054 = vmatpush1.bf16.msra.mxu0 0
        %1055 = vmatprep.subr.bf16.mxu0 0
        %1056 = vmatpush1.bf16.msra.mxu0 0
        %1057 = vmatprep.subr.bf16.mxu0 0
        %1058 = vmatpush1.bf16.msra.mxu0 0
        %1059 = vmatprep.subr.bf16.mxu0 0
        %1060 = vmatpush1.bf16.msra.mxu0 0
        %1061 = vmatprep.subr.bf16.mxu0 0
        %1062 = vmatpush1.bf16.msra.mxu0 0
        %1063 = vmatprep.subr.bf16.mxu0 0
        %1064 = vmatpush1.bf16.msra.mxu0 0
        %1065 = vmatprep.subr.bf16.mxu0 0
        %1066 = vmatpush1.bf16.msra.mxu0 0
        %1067 = vmatprep.subr.bf16.mxu0 0
        %1068 = vmatpush1.bf16.msra.mxu0 0
        %1069 = vmatprep.subr.bf16.mxu0 0
        %1070 = vmatpush1.bf16.msra.mxu0 0
        %1071 = vmatprep.subr.bf16.mxu0 0
        %1072 = vmatpush1.bf16.msra.mxu0 0
        %1073 = vmatprep.mubr.bf16.mxu0 0
        %1074 = vmatmul.mubr.bf16.gmra.mrb[0].mxu0 %v1027
        %v1075 = vpop.f32.mrb[0].mxu0
        %v1076 = vadd.f32 0.0, %v1075
        %v1077 = vpop.f32.mrb[0].mxu0
        %v1078 = vadd.f32 0.0, %v1077
        %v1079 = vpop.f32.mrb[0].mxu0
        %v1080 = vadd.f32 0.0, %v1079
        %v1081 = vpop.f32.mrb[0].mxu0
        %v1082 = vadd.f32 0.0, %v1081
        %1083 = vmatprep.mubr.bf16.mxu0 0
        %1084 = vmatmul.mubr.bf16.gmra.mrb[0].mxu0 %v1030
        %v1085 = vpop.f32.mrb[0].mxu0
        %v1086 = vadd.f32 0.0, %v1085
        %v1087 = vpop.f32.mrb[0].mxu0
        %v1088 = vadd.f32 0.0, %v1087
        %v1089 = vpop.f32.mrb[0].mxu0
        %v1090 = vpop.f32.mrb[0].mxu0
        %1091 = vdwg.mxu0
        %1092 = vmatprep.subr.bf16.mxu0 0
        %1093 = vmatpush1.bf16.msra.mxu0 %v1019
        %1094 = vmatprep.subr.bf16.mxu0 0
        %1095 = vmatpush1.bf16.msra.mxu0 %v1039
        %1096 = vmatprep.subr.bf16.mxu0 0
        %1097 = vmatpush1.bf16.msra.mxu0 0
        %1098 = vmatprep.subr.bf16.mxu0 0
        %1099 = vmatpush1.bf16.msra.mxu0 0
        %1100 = vmatprep.subr.bf16.mxu0 0
        %1101 = vmatpush1.bf16.msra.mxu0 0
        %1102 = vmatprep.subr.bf16.mxu0 0
        %1103 = vmatpush1.bf16.msra.mxu0 0
        %1104 = vmatprep.subr.bf16.mxu0 0
        %1105 = vmatpush1.bf16.msra.mxu0 0
        %1106 = vmatprep.subr.bf16.mxu0 0
        %1107 = vmatpush1.bf16.msra.mxu0 0
        %1108 = vmatprep.subr.bf16.mxu0 0
        %1109 = vmatpush1.bf16.msra.mxu0 0
        %1110 = vmatprep.subr.bf16.mxu0 0
        %1111 = vmatpush1.bf16.msra.mxu0 0
        %1112 = vmatprep.subr.bf16.mxu0 0
        %1113 = vmatpush1.bf16.msra.mxu0 0
        %1114 = vmatprep.subr.bf16.mxu0 0
        %1115 = vmatpush1.bf16.msra.mxu0 0
        %1116 = vmatprep.subr.bf16.mxu0 0
        %1117 = vmatpush1.bf16.msra.mxu0 0
        %1118 = vmatprep.subr.bf16.mxu0 0
        %1119 = vmatpush1.bf16.msra.mxu0 0
        %1120 = vmatprep.subr.bf16.mxu0 0
        %1121 = vmatpush1.bf16.msra.mxu0 0
        %1122 = vmatprep.subr.bf16.mxu0 0
        %1123 = vmatpush1.bf16.msra.mxu0 0
        %1124 = vmatprep.mubr.bf16.mxu0 0
        %1125 = vmatmul.mubr.bf16.gmra.mrb[0].mxu0 %v1027
        %v1126 = vpop.f32.mrb[0].mxu0
        %v1127 = vadd.f32 0.0, %v1126
        %v1128 = vpop.f32.mrb[0].mxu0
        %v1129 = vpop.f32.mrb[0].mxu0
        %v1130 = vadd.f32 0.0, %v1129
        %v1131 = vpop.f32.mrb[0].mxu0
        %1132 = vmatprep.mubr.bf16.mxu0 0
        %1133 = vmatmul.mubr.bf16.gmra.mrb[0].mxu0 %v1030
        %v1134 = vpop.f32.mrb[0].mxu0
        %v1135 = vadd.f32 0.0, %v1134
        %v1136 = vpop.f32.mrb[0].mxu0
        %v1137 = vpop.f32.mrb[0].mxu0
        %v1138 = vpop.f32.mrb[0].mxu0
        %1139 = vdwg.mxu0
        %v1140 = vadd.f32 %v635, %v1076
        %v1141 = vadd.f32 %v637, %v1078
        %v1142 = vadd.f32 %v686, %v1127
        %v1143 = vadd.f32 %v639, %v1080
        %v1144 = vadd.f32 %v641, %v1082
        %v1145 = vadd.f32 %v689, %v1130
        %v1146 = vadd.f32 %v645, %v1086
        %v1147 = vadd.f32 %v647, %v1088
        %v1148 = vadd.f32 %v694, %v1135
        %s1149 = scalar_lea.vmem [#allocation4], 96
        %v1150 = vld [vmem:[%s1149] sm:$0xff]
        %v1151 = vld [vmem:[%s1149 + $0x8] sm:$0xf]
        %v1152 = vld [vmem:[%s1149 + $0xc] sm:$0xff]
        %v1153 = vld [vmem:[%s1149 + $0x14] sm:$0xf]
        %v1154 = vld [vmem:[%s1149 + $0x18] sm:$0xff]
        %v1155 = vld [vmem:[%s1149 + $0x20] sm:$0xf]
        %v1156 = vld [vmem:[%s1149 + $0x24] sm:$0x33]
        %v1157 = vld [vmem:[%s1149 + $0x2c] sm:$0x3]
        %v1166 = vunpack.c.l.b16 %v1150
        %v1167 = vunpack.c.h.b16 %v1150
        %v1168 = vunpack.c.l.b16 %v1151
        %v1169 = vunpack.c.l.b16 %v1152
        %v1170 = vunpack.c.h.b16 %v1152
        %v1171 = vunpack.c.l.b16 %v1153
        %v1172 = vunpack.c.l.b16 %v1154
        %v1173 = vunpack.c.h.b16 %v1154
        %v1174 = vunpack.c.l.b16 %v1155
        %v1175 = vunpack.c.l.b16 %v1156
        %v1176 = vunpack.c.h.b16 %v1156
        %v1177 = vunpack.c.l.b16 %v1157
        %v1178 = vpack.c.b16 %v1169, %v1166
        %v1179 = vpack.c.b16 %v1170, %v1167
        %v1180 = vpack.c.b16 %v1171, %v1168
        %v1181 = vpack.c.b16 %v1175, %v1172
        %v1182 = vpack.c.b16 %v1176, %v1173
        %v1183 = vpack.c.b16 %v1177, %v1174
        %v1188 = vsel %vm448, %v1181, 0
        %v1191 = vsel %vm448, %v1182, 0
        %v1194 = vsel %vm448, %v1183, 0
        %1196 = vmatprep.subr.bf16.mxu0 %v1179
        %1197 = vmatpush1.bf16.msra.mxu0 %v1178
        %1198 = vmatprep.subr.bf16.mxu0 %v1191
        %1199 = vmatpush1.bf16.msra.mxu0 %v1188
        %1200 = vmatprep.subr.bf16.mxu0 0
        %1201 = vmatpush1.bf16.msra.mxu0 0
        %1202 = vmatprep.subr.bf16.mxu0 0
        %1203 = vmatpush1.bf16.msra.mxu0 0
        %1204 = vmatprep.subr.bf16.mxu0 0
        %1205 = vmatpush1.bf16.msra.mxu0 0
        %1206 = vmatprep.subr.bf16.mxu0 0
        %1207 = vmatpush1.bf16.msra.mxu0 0
        %1208 = vmatprep.subr.bf16.mxu0 0
        %1209 = vmatpush1.bf16.msra.mxu0 0
        %1210 = vmatprep.subr.bf16.mxu0 0
        %1211 = vmatpush1.bf16.msra.mxu0 0
        %1212 = vmatprep.subr.bf16.mxu0 0
        %1213 = vmatpush1.bf16.msra.mxu0 0
        %1214 = vmatprep.subr.bf16.mxu0 0
        %1215 = vmatpush1.bf16.msra.mxu0 0
        %1216 = vmatprep.subr.bf16.mxu0 0
        %1217 = vmatpush1.bf16.msra.mxu0 0
        %1218 = vmatprep.subr.bf16.mxu0 0
        %1219 = vmatpush1.bf16.msra.mxu0 0
        %1220 = vmatprep.subr.bf16.mxu0 0
        %1221 = vmatpush1.bf16.msra.mxu0 0
        %1222 = vmatprep.subr.bf16.mxu0 0
        %1223 = vmatpush1.bf16.msra.mxu0 0
        %1224 = vmatprep.subr.bf16.mxu0 0
        %1225 = vmatpush1.bf16.msra.mxu0 0
        %1226 = vmatprep.subr.bf16.mxu0 0
        %1227 = vmatpush1.bf16.msra.mxu0 0
        %1228 = vmatprep.mubr.bf16.mxu0 0
        %1229 = vmatmul.mubr.bf16.gmra.mrb[0].mxu0 %v1027
        %v1230 = vpop.f32.mrb[0].mxu0
        %v1231 = vadd.f32 0.0, %v1230
        %v1232 = vpop.f32.mrb[0].mxu0
        %v1233 = vadd.f32 0.0, %v1232
        %v1234 = vpop.f32.mrb[0].mxu0
        %v1235 = vadd.f32 0.0, %v1234
        %v1236 = vpop.f32.mrb[0].mxu0
        %v1237 = vadd.f32 0.0, %v1236
        %1238 = vmatprep.mubr.bf16.mxu0 0
        %1239 = vmatmul.mubr.bf16.gmra.mrb[0].mxu0 %v1030
        %v1240 = vpop.f32.mrb[0].mxu0
        %v1241 = vadd.f32 0.0, %v1240
        %v1242 = vpop.f32.mrb[0].mxu0
        %v1243 = vadd.f32 0.0, %v1242
        %v1244 = vpop.f32.mrb[0].mxu0
        %v1245 = vpop.f32.mrb[0].mxu0
        %1246 = vdwg.mxu0
        %1247 = vmatprep.subr.bf16.mxu0 0
        %1248 = vmatpush1.bf16.msra.mxu0 %v1180
        %1249 = vmatprep.subr.bf16.mxu0 0
        %1250 = vmatpush1.bf16.msra.mxu0 %v1194
        %1251 = vmatprep.subr.bf16.mxu0 0
        %1252 = vmatpush1.bf16.msra.mxu0 0
        %1253 = vmatprep.subr.bf16.mxu0 0
        %1254 = vmatpush1.bf16.msra.mxu0 0
        %1255 = vmatprep.subr.bf16.mxu0 0
        %1256 = vmatpush1.bf16.msra.mxu0 0
        %1257 = vmatprep.subr.bf16.mxu0 0
        %1258 = vmatpush1.bf16.msra.mxu0 0
        %1259 = vmatprep.subr.bf16.mxu0 0
        %1260 = vmatpush1.bf16.msra.mxu0 0
        %1261 = vmatprep.subr.bf16.mxu0 0
        %1262 = vmatpush1.bf16.msra.mxu0 0
        %1263 = vmatprep.subr.bf16.mxu0 0
        %1264 = vmatpush1.bf16.msra.mxu0 0
        %1265 = vmatprep.subr.bf16.mxu0 0
        %1266 = vmatpush1.bf16.msra.mxu0 0
        %1267 = vmatprep.subr.bf16.mxu0 0
        %1268 = vmatpush1.bf16.msra.mxu0 0
        %1269 = vmatprep.subr.bf16.mxu0 0
        %1270 = vmatpush1.bf16.msra.mxu0 0
        %1271 = vmatprep.subr.bf16.mxu0 0
        %1272 = vmatpush1.bf16.msra.mxu0 0
        %1273 = vmatprep.subr.bf16.mxu0 0
        %1274 = vmatpush1.bf16.msra.mxu0 0
        %1275 = vmatprep.subr.bf16.mxu0 0
        %1276 = vmatpush1.bf16.msra.mxu0 0
        %1277 = vmatprep.subr.bf16.mxu0 0
        %1278 = vmatpush1.bf16.msra.mxu0 0
        %1279 = vmatprep.mubr.bf16.mxu0 0
        %1280 = vmatmul.mubr.bf16.gmra.mrb[0].mxu0 %v1027
        %v1281 = vpop.f32.mrb[0].mxu0
        %v1282 = vadd.f32 0.0, %v1281
        %v1283 = vpop.f32.mrb[0].mxu0
        %v1284 = vpop.f32.mrb[0].mxu0
        %v1285 = vadd.f32 0.0, %v1284
        %v1286 = vpop.f32.mrb[0].mxu0
        %1287 = vmatprep.mubr.bf16.mxu0 0
        %1288 = vmatmul.mubr.bf16.gmra.mrb[0].mxu0 %v1030
        %v1289 = vpop.f32.mrb[0].mxu0
        %v1290 = vadd.f32 0.0, %v1289
        %v1291 = vpop.f32.mrb[0].mxu0
        %v1292 = vpop.f32.mrb[0].mxu0
        %v1293 = vpop.f32.mrb[0].mxu0
        %1294 = vdwg.mxu0
        %v1295 = vadd.f32 %v918, %v1231
        %v1296 = vadd.f32 %v920, %v1233
        %v1297 = vadd.f32 %v969, %v1282
        %v1298 = vadd.f32 %v922, %v1235
        %v1299 = vadd.f32 %v924, %v1237
        %v1300 = vadd.f32 %v972, %v1285
        %v1301 = vadd.f32 %v928, %v1241
        %v1302 = vadd.f32 %v930, %v1243
        %v1303 = vadd.f32 %v977, %v1290
        %s1304 = scalar_lea.vmem [#allocation2], 144
        %v1305 = vld [vmem:[%s1304] sm:$0xff]
        %v1306 = vld [vmem:[%s1304 + $0x8] sm:$0xf]
        %v1307 = vld [vmem:[%s1304 + $0xc] sm:$0xff]
        %v1308 = vld [vmem:[%s1304 + $0x14] sm:$0xf]
        %v1309 = vld [vmem:[%s1304 + $0x18] sm:$0xff]
        %v1310 = vld [vmem:[%s1304 + $0x20] sm:$0xf]
        %v1311 = vld [vmem:[%s1304 + $0x24] sm:$0x33]
        %v1312 = vld [vmem:[%s1304 + $0x2c] sm:$0x3]
        %vm1313 = vsmask.f32 6400
        %v1314 = vrot.slane %v398, 1
        %v1315 = vrot.slane %v400, 2
        %v1316 = vor.u32 %v1314, %v1315
        %v1317 = vrot.slane %v409, 1
        %v1318 = vrot.slane %v405, 2
        %v1319 = vor.u32 %v1317, %v1318
        %v1320 = vsel %vm1313, %v1316, %v1319
        %v1329 = vunpack.c.l.b16 %v1305
        %v1330 = vunpack.c.h.b16 %v1305
        %v1331 = vunpack.c.l.b16 %v1306
        %v1332 = vunpack.c.l.b16 %v1307
        %v1333 = vunpack.c.h.b16 %v1307
        %v1334 = vunpack.c.l.b16 %v1308
        %v1335 = vunpack.c.l.b16 %v1309
        %v1336 = vunpack.c.h.b16 %v1309
        %v1337 = vunpack.c.l.b16 %v1310
        %v1338 = vunpack.c.l.b16 %v1311
        %v1339 = vunpack.c.h.b16 %v1311
        %v1340 = vunpack.c.l.b16 %v1312
        %v1341 = vpack.c.b16 %v1332, %v1329
        %v1342 = vpack.c.b16 %v1333, %v1330
        %v1343 = vpack.c.b16 %v1334, %v1331
        %v1344 = vpack.c.b16 %v1338, %v1335
        %v1345 = vpack.c.b16 %v1339, %v1336
        %v1346 = vpack.c.b16 %v1340, %v1337
        %v1351 = vsel %vm441, %v1320, 0
        %v1354 = vsel %vm441, %v1319, 0
        %v1357 = vsel %vm448, %v1344, 0
        %v1360 = vsel %vm448, %v1345, 0
        %v1363 = vsel %vm448, %v1346, 0
        %1365 = vmatprep.subr.bf16.mxu0 %v1342
        %1366 = vmatpush1.bf16.msra.mxu0 %v1341
        %1367 = vmatprep.subr.bf16.mxu0 %v1360
        %1368 = vmatpush1.bf16.msra.mxu0 %v1357
        %1369 = vmatprep.subr.bf16.mxu0 0
        %1370 = vmatpush1.bf16.msra.mxu0 0
        %1371 = vmatprep.subr.bf16.mxu0 0
        %1372 = vmatpush1.bf16.msra.mxu0 0
        %1373 = vmatprep.subr.bf16.mxu0 0
        %1374 = vmatpush1.bf16.msra.mxu0 0
        %1375 = vmatprep.subr.bf16.mxu0 0
        %1376 = vmatpush1.bf16.msra.mxu0 0
        %1377 = vmatprep.subr.bf16.mxu0 0
        %1378 = vmatpush1.bf16.msra.mxu0 0
        %1379 = vmatprep.subr.bf16.mxu0 0
        %1380 = vmatpush1.bf16.msra.mxu0 0
        %1381 = vmatprep.subr.bf16.mxu0 0
        %1382 = vmatpush1.bf16.msra.mxu0 0
        %1383 = vmatprep.subr.bf16.mxu0 0
        %1384 = vmatpush1.bf16.msra.mxu0 0
        %1385 = vmatprep.subr.bf16.mxu0 0
        %1386 = vmatpush1.bf16.msra.mxu0 0
        %1387 = vmatprep.subr.bf16.mxu0 0
        %1388 = vmatpush1.bf16.msra.mxu0 0
        %1389 = vmatprep.subr.bf16.mxu0 0
        %1390 = vmatpush1.bf16.msra.mxu0 0
        %1391 = vmatprep.subr.bf16.mxu0 0
        %1392 = vmatpush1.bf16.msra.mxu0 0
        %1393 = vmatprep.subr.bf16.mxu0 0
        %1394 = vmatpush1.bf16.msra.mxu0 0
        %1395 = vmatprep.subr.bf16.mxu0 0
        %1396 = vmatpush1.bf16.msra.mxu0 0
        %1397 = vmatprep.mubr.bf16.mxu0 0
        %1398 = vmatmul.mubr.bf16.gmra.mrb[0].mxu0 %v1351
        %v1399 = vpop.f32.mrb[0].mxu0
        %v1400 = vadd.f32 0.0, %v1399
        %v1401 = vpop.f32.mrb[0].mxu0
        %v1402 = vadd.f32 0.0, %v1401
        %v1403 = vpop.f32.mrb[0].mxu0
        %v1404 = vadd.f32 0.0, %v1403
        %v1405 = vpop.f32.mrb[0].mxu0
        %v1406 = vadd.f32 0.0, %v1405
        %1407 = vmatprep.mubr.bf16.mxu0 0
        %1408 = vmatmul.mubr.bf16.gmra.mrb[0].mxu0 %v1354
        %v1409 = vpop.f32.mrb[0].mxu0
        %v1410 = vadd.f32 0.0, %v1409
        %v1411 = vpop.f32.mrb[0].mxu0
        %v1412 = vadd.f32 0.0, %v1411
        %v1413 = vpop.f32.mrb[0].mxu0
        %v1414 = vpop.f32.mrb[0].mxu0
        %1415 = vdwg.mxu0
        %1416 = vmatprep.subr.bf16.mxu0 0
        %1417 = vmatpush1.bf16.msra.mxu0 %v1343
        %1418 = vmatprep.subr.bf16.mxu0 0
        %1419 = vmatpush1.bf16.msra.mxu0 %v1363
        %1420 = vmatprep.subr.bf16.mxu0 0
        %1421 = vmatpush1.bf16.msra.mxu0 0
        %1422 = vmatprep.subr.bf16.mxu0 0
        %1423 = vmatpush1.bf16.msra.mxu0 0
        %1424 = vmatprep.subr.bf16.mxu0 0
        %1425 = vmatpush1.bf16.msra.mxu0 0
        %1426 = vmatprep.subr.bf16.mxu0 0
        %1427 = vmatpush1.bf16.msra.mxu0 0
        %1428 = vmatprep.subr.bf16.mxu0 0
        %1429 = vmatpush1.bf16.msra.mxu0 0
        %1430 = vmatprep.subr.bf16.mxu0 0
        %1431 = vmatpush1.bf16.msra.mxu0 0
        %1432 = vmatprep.subr.bf16.mxu0 0
        %1433 = vmatpush1.bf16.msra.mxu0 0
        %1434 = vmatprep.subr.bf16.mxu0 0
        %1435 = vmatpush1.bf16.msra.mxu0 0
        %1436 = vmatprep.subr.bf16.mxu0 0
        %1437 = vmatpush1.bf16.msra.mxu0 0
        %1438 = vmatprep.subr.bf16.mxu0 0
        %1439 = vmatpush1.bf16.msra.mxu0 0
        %1440 = vmatprep.subr.bf16.mxu0 0
        %1441 = vmatpush1.bf16.msra.mxu0 0
        %1442 = vmatprep.subr.bf16.mxu0 0
        %1443 = vmatpush1.bf16.msra.mxu0 0
        %1444 = vmatprep.subr.bf16.mxu0 0
        %1445 = vmatpush1.bf16.msra.mxu0 0
        %1446 = vmatprep.subr.bf16.mxu0 0
        %1447 = vmatpush1.bf16.msra.mxu0 0
        %1448 = vmatprep.mubr.bf16.mxu0 0
        %1449 = vmatmul.mubr.bf16.gmra.mrb[0].mxu0 %v1351
        %v1450 = vpop.f32.mrb[0].mxu0
        %v1451 = vadd.f32 0.0, %v1450
        %v1452 = vpop.f32.mrb[0].mxu0
        %v1453 = vpop.f32.mrb[0].mxu0
        %v1454 = vadd.f32 0.0, %v1453
        %v1455 = vpop.f32.mrb[0].mxu0
        %1456 = vmatprep.mubr.bf16.mxu0 0
        %1457 = vmatmul.mubr.bf16.gmra.mrb[0].mxu0 %v1354
        %v1458 = vpop.f32.mrb[0].mxu0
        %v1459 = vadd.f32 0.0, %v1458
        %v1460 = vpop.f32.mrb[0].mxu0
        %v1461 = vpop.f32.mrb[0].mxu0
        %v1462 = vpop.f32.mrb[0].mxu0
        %1463 = vdwg.mxu0
        %v1464 = vadd.f32 %v1140, %v1400
        %v1465 = vadd.f32 %v1141, %v1402
        %v1466 = vadd.f32 %v1142, %v1451
        %v1467 = vadd.f32 %v1143, %v1404
        %v1468 = vadd.f32 %v1144, %v1406
        %v1469 = vadd.f32 %v1145, %v1454
        %v1470 = vadd.f32 %v1146, %v1410
        %v1471 = vadd.f32 %v1147, %v1412
        %v1472 = vadd.f32 %v1148, %v1459
        %s1473 = scalar_lea.vmem [#allocation4], 144
        %v1474 = vld [vmem:[%s1473] sm:$0xff]
        %v1475 = vld [vmem:[%s1473 + $0x8] sm:$0xf]
        %v1476 = vld [vmem:[%s1473 + $0xc] sm:$0xff]
        %v1477 = vld [vmem:[%s1473 + $0x14] sm:$0xf]
        %v1478 = vld [vmem:[%s1473 + $0x18] sm:$0xff]
        %v1479 = vld [vmem:[%s1473 + $0x20] sm:$0xf]
        %v1480 = vld [vmem:[%s1473 + $0x24] sm:$0x33]
        %v1481 = vld [vmem:[%s1473 + $0x2c] sm:$0x3]
        %v1490 = vunpack.c.l.b16 %v1474
        %v1491 = vunpack.c.h.b16 %v1474
        %v1492 = vunpack.c.l.b16 %v1475
        %v1493 = vunpack.c.l.b16 %v1476
        %v1494 = vunpack.c.h.b16 %v1476
        %v1495 = vunpack.c.l.b16 %v1477
        %v1496 = vunpack.c.l.b16 %v1478
        %v1497 = vunpack.c.h.b16 %v1478
        %v1498 = vunpack.c.l.b16 %v1479
        %v1499 = vunpack.c.l.b16 %v1480
        %v1500 = vunpack.c.h.b16 %v1480
        %v1501 = vunpack.c.l.b16 %v1481
        %v1502 = vpack.c.b16 %v1493, %v1490
        %v1503 = vpack.c.b16 %v1494, %v1491
        %v1504 = vpack.c.b16 %v1495, %v1492
        %v1505 = vpack.c.b16 %v1499, %v1496
        %v1506 = vpack.c.b16 %v1500, %v1497
        %v1507 = vpack.c.b16 %v1501, %v1498
        %v1512 = vsel %vm448, %v1505, 0
        %v1515 = vsel %vm448, %v1506, 0
        %v1518 = vsel %vm448, %v1507, 0
        %1520 = vmatprep.subr.bf16.mxu0 %v1503
        %1521 = vmatpush1.bf16.msra.mxu0 %v1502
        %1522 = vmatprep.subr.bf16.mxu0 %v1515
        %1523 = vmatpush1.bf16.msra.mxu0 %v1512
        %1524 = vmatprep.subr.bf16.mxu0 0
        %1525 = vmatpush1.bf16.msra.mxu0 0
        %1526 = vmatprep.subr.bf16.mxu0 0
        %1527 = vmatpush1.bf16.msra.mxu0 0
        %1528 = vmatprep.subr.bf16.mxu0 0
        %1529 = vmatpush1.bf16.msra.mxu0 0
        %1530 = vmatprep.subr.bf16.mxu0 0
        %1531 = vmatpush1.bf16.msra.mxu0 0
        %1532 = vmatprep.subr.bf16.mxu0 0
        %1533 = vmatpush1.bf16.msra.mxu0 0
        %1534 = vmatprep.subr.bf16.mxu0 0
        %1535 = vmatpush1.bf16.msra.mxu0 0
        %1536 = vmatprep.subr.bf16.mxu0 0
        %1537 = vmatpush1.bf16.msra.mxu0 0
        %1538 = vmatprep.subr.bf16.mxu0 0
        %1539 = vmatpush1.bf16.msra.mxu0 0
        %1540 = vmatprep.subr.bf16.mxu0 0
        %1541 = vmatpush1.bf16.msra.mxu0 0
        %1542 = vmatprep.subr.bf16.mxu0 0
        %1543 = vmatpush1.bf16.msra.mxu0 0
        %1544 = vmatprep.subr.bf16.mxu0 0
        %1545 = vmatpush1.bf16.msra.mxu0 0
        %1546 = vmatprep.subr.bf16.mxu0 0
        %1547 = vmatpush1.bf16.msra.mxu0 0
        %1548 = vmatprep.subr.bf16.mxu0 0
        %1549 = vmatpush1.bf16.msra.mxu0 0
        %1550 = vmatprep.subr.bf16.mxu0 0
        %1551 = vmatpush1.bf16.msra.mxu0 0
        %1552 = vmatprep.mubr.bf16.mxu0 0
        %1553 = vmatmul.mubr.bf16.gmra.mrb[0].mxu0 %v1351
        %v1554 = vpop.f32.mrb[0].mxu0
        %v1555 = vadd.f32 0.0, %v1554
        %v1556 = vpop.f32.mrb[0].mxu0
        %v1557 = vadd.f32 0.0, %v1556
        %v1558 = vpop.f32.mrb[0].mxu0
        %v1559 = vadd.f32 0.0, %v1558
        %v1560 = vpop.f32.mrb[0].mxu0
        %v1561 = vadd.f32 0.0, %v1560
        %1562 = vmatprep.mubr.bf16.mxu0 0
        %1563 = vmatmul.mubr.bf16.gmra.mrb[0].mxu0 %v1354
        %v1564 = vpop.f32.mrb[0].mxu0
        %v1565 = vadd.f32 0.0, %v1564
        %v1566 = vpop.f32.mrb[0].mxu0
        %v1567 = vadd.f32 0.0, %v1566
        %v1568 = vpop.f32.mrb[0].mxu0
        %v1569 = vpop.f32.mrb[0].mxu0
        %1570 = vdwg.mxu0
        %1571 = vmatprep.subr.bf16.mxu0 0
        %1572 = vmatpush1.bf16.msra.mxu0 %v1504
        %1573 = vmatprep.subr.bf16.mxu0 0
        %1574 = vmatpush1.bf16.msra.mxu0 %v1518
        %1575 = vmatprep.subr.bf16.mxu0 0
        %1576 = vmatpush1.bf16.msra.mxu0 0
        %1577 = vmatprep.subr.bf16.mxu0 0
        %1578 = vmatpush1.bf16.msra.mxu0 0
        %1579 = vmatprep.subr.bf16.mxu0 0
        %1580 = vmatpush1.bf16.msra.mxu0 0
        %1581 = vmatprep.subr.bf16.mxu0 0
        %1582 = vmatpush1.bf16.msra.mxu0 0
        %1583 = vmatprep.subr.bf16.mxu0 0
        %1584 = vmatpush1.bf16.msra.mxu0 0
        %1585 = vmatprep.subr.bf16.mxu0 0
        %1586 = vmatpush1.bf16.msra.mxu0 0
        %1587 = vmatprep.subr.bf16.mxu0 0
        %1588 = vmatpush1.bf16.msra.mxu0 0
        %1589 = vmatprep.subr.bf16.mxu0 0
        %1590 = vmatpush1.bf16.msra.mxu0 0
        %1591 = vmatprep.subr.bf16.mxu0 0
        %1592 = vmatpush1.bf16.msra.mxu0 0
        %1593 = vmatprep.subr.bf16.mxu0 0
        %1594 = vmatpush1.bf16.msra.mxu0 0
        %1595 = vmatprep.subr.bf16.mxu0 0
        %1596 = vmatpush1.bf16.msra.mxu0 0
        %1597 = vmatprep.subr.bf16.mxu0 0
        %1598 = vmatpush1.bf16.msra.mxu0 0
        %1599 = vmatprep.subr.bf16.mxu0 0
        %1600 = vmatpush1.bf16.msra.mxu0 0
        %1601 = vmatprep.subr.bf16.mxu0 0
        %1602 = vmatpush1.bf16.msra.mxu0 0
        %1603 = vmatprep.mubr.bf16.mxu0 0
        %1604 = vmatmul.mubr.bf16.gmra.mrb[0].mxu0 %v1351
        %v1605 = vpop.f32.mrb[0].mxu0
        %v1606 = vadd.f32 0.0, %v1605
        %v1607 = vpop.f32.mrb[0].mxu0
        %v1608 = vpop.f32.mrb[0].mxu0
        %v1609 = vadd.f32 0.0, %v1608
        %v1610 = vpop.f32.mrb[0].mxu0
        %1611 = vmatprep.mubr.bf16.mxu0 0
        %1612 = vmatmul.mubr.bf16.gmra.mrb[0].mxu0 %v1354
        %v1613 = vpop.f32.mrb[0].mxu0
        %v1614 = vadd.f32 0.0, %v1613
        %v1615 = vpop.f32.mrb[0].mxu0
        %v1616 = vpop.f32.mrb[0].mxu0
        %v1617 = vpop.f32.mrb[0].mxu0
        %1618 = vdwg.mxu0
        %v1619 = vadd.f32 %v1295, %v1555
        %v1620 = vadd.f32 %v1296, %v1557
        %v1621 = vadd.f32 %v1297, %v1606
        %v1622 = vadd.f32 %v1298, %v1559
        %v1623 = vadd.f32 %v1299, %v1561
        %v1624 = vadd.f32 %v1300, %v1609
        %v1625 = vadd.f32 %v1301, %v1565
        %v1626 = vadd.f32 %v1302, %v1567
        %v1627 = vadd.f32 %v1303, %v1614
        %s1628 = scalar_lea.vmem [#allocation2], 192
        %v1629 = vld [vmem:[%s1628] sm:$0xff]
        %v1630 = vld [vmem:[%s1628 + $0x8] sm:$0xf]
        %v1631 = vld [vmem:[%s1628 + $0xc] sm:$0xff]
        %v1632 = vld [vmem:[%s1628 + $0x14] sm:$0xf]
        %v1633 = vld [vmem:[%s1628 + $0x18] sm:$0xff]
        %v1634 = vld [vmem:[%s1628 + $0x20] sm:$0xf]
        %v1635 = vld [vmem:[%s1628 + $0x24] sm:$0x33]
        %v1636 = vld [vmem:[%s1628 + $0x2c] sm:$0x3]
        %vm1637 = vcmask 1045504
        %v1638 = vrot.slane %v368, 2
        %v1639 = vrot.slane %v386, 2
        %v1640 = vsel %vm1637, %v1638, %v1639
        %v1649 = vunpack.c.l.b16 %v1629
        %v1650 = vunpack.c.h.b16 %v1629
        %v1651 = vunpack.c.l.b16 %v1630
        %v1652 = vunpack.c.l.b16 %v1631
        %v1653 = vunpack.c.h.b16 %v1631
        %v1654 = vunpack.c.l.b16 %v1632
        %v1655 = vunpack.c.l.b16 %v1633
        %v1656 = vunpack.c.h.b16 %v1633
        %v1657 = vunpack.c.l.b16 %v1634
        %v1658 = vunpack.c.l.b16 %v1635
        %v1659 = vunpack.c.h.b16 %v1635
        %v1660 = vunpack.c.l.b16 %v1636
        %v1661 = vpack.c.b16 %v1652, %v1649
        %v1662 = vpack.c.b16 %v1653, %v1650
        %v1663 = vpack.c.b16 %v1654, %v1651
        %v1664 = vpack.c.b16 %v1658, %v1655
        %v1665 = vpack.c.b16 %v1659, %v1656
        %v1666 = vpack.c.b16 %v1660, %v1657
        %v1671 = vsel %vm441, %v1640, 0
        %v1674 = vsel %vm441, %v1639, 0
        %v1677 = vsel %vm448, %v1664, 0
        %v1680 = vsel %vm448, %v1665, 0
        %v1683 = vsel %vm448, %v1666, 0
        %1685 = vmatprep.subr.bf16.mxu0 %v1662
        %1686 = vmatpush1.bf16.msra.mxu0 %v1661
        %1687 = vmatprep.subr.bf16.mxu0 %v1680
        %1688 = vmatpush1.bf16.msra.mxu0 %v1677
        %1689 = vmatprep.subr.bf16.mxu0 0
        %1690 = vmatpush1.bf16.msra.mxu0 0
        %1691 = vmatprep.subr.bf16.mxu0 0
        %1692 = vmatpush1.bf16.msra.mxu0 0
        %1693 = vmatprep.subr.bf16.mxu0 0
        %1694 = vmatpush1.bf16.msra.mxu0 0
        %1695 = vmatprep.subr.bf16.mxu0 0
        %1696 = vmatpush1.bf16.msra.mxu0 0
        %1697 = vmatprep.subr.bf16.mxu0 0
        %1698 = vmatpush1.bf16.msra.mxu0 0
        %1699 = vmatprep.subr.bf16.mxu0 0
        %1700 = vmatpush1.bf16.msra.mxu0 0
        %1701 = vmatprep.subr.bf16.mxu0 0
        %1702 = vmatpush1.bf16.msra.mxu0 0
        %1703 = vmatprep.subr.bf16.mxu0 0
        %1704 = vmatpush1.bf16.msra.mxu0 0
        %1705 = vmatprep.subr.bf16.mxu0 0
        %1706 = vmatpush1.bf16.msra.mxu0 0
        %1707 = vmatprep.subr.bf16.mxu0 0
        %1708 = vmatpush1.bf16.msra.mxu0 0
        %1709 = vmatprep.subr.bf16.mxu0 0
        %1710 = vmatpush1.bf16.msra.mxu0 0
        %1711 = vmatprep.subr.bf16.mxu0 0
        %1712 = vmatpush1.bf16.msra.mxu0 0
        %1713 = vmatprep.subr.bf16.mxu0 0
        %1714 = vmatpush1.bf16.msra.mxu0 0
        %1715 = vmatprep.subr.bf16.mxu0 0
        %1716 = vmatpush1.bf16.msra.mxu0 0
        %1717 = vmatprep.mubr.bf16.mxu0 0
        %1718 = vmatmul.mubr.bf16.gmra.mrb[0].mxu0 %v1671
        %v1719 = vpop.f32.mrb[0].mxu0
        %v1720 = vadd.f32 0.0, %v1719
        %v1721 = vpop.f32.mrb[0].mxu0
        %v1722 = vadd.f32 0.0, %v1721
        %v1723 = vpop.f32.mrb[0].mxu0
        %v1724 = vadd.f32 0.0, %v1723
        %v1725 = vpop.f32.mrb[0].mxu0
        %v1726 = vadd.f32 0.0, %v1725
        %1727 = vmatprep.mubr.bf16.mxu0 0
        %1728 = vmatmul.mubr.bf16.gmra.mrb[0].mxu0 %v1674
        %v1729 = vpop.f32.mrb[0].mxu0
        %v1730 = vadd.f32 0.0, %v1729
        %v1731 = vpop.f32.mrb[0].mxu0
        %v1732 = vadd.f32 0.0, %v1731
        %v1733 = vpop.f32.mrb[0].mxu0
        %v1734 = vpop.f32.mrb[0].mxu0
        %1735 = vdwg.mxu0
        %1736 = vmatprep.subr.bf16.mxu0 0
        %1737 = vmatpush1.bf16.msra.mxu0 %v1663
        %1738 = vmatprep.subr.bf16.mxu0 0
        %1739 = vmatpush1.bf16.msra.mxu0 %v1683
        %1740 = vmatprep.subr.bf16.mxu0 0
        %1741 = vmatpush1.bf16.msra.mxu0 0
        %1742 = vmatprep.subr.bf16.mxu0 0
        %1743 = vmatpush1.bf16.msra.mxu0 0
        %1744 = vmatprep.subr.bf16.mxu0 0
        %1745 = vmatpush1.bf16.msra.mxu0 0
        %1746 = vmatprep.subr.bf16.mxu0 0
        %1747 = vmatpush1.bf16.msra.mxu0 0
        %1748 = vmatprep.subr.bf16.mxu0 0
        %1749 = vmatpush1.bf16.msra.mxu0 0
        %1750 = vmatprep.subr.bf16.mxu0 0
        %1751 = vmatpush1.bf16.msra.mxu0 0
        %1752 = vmatprep.subr.bf16.mxu0 0
        %1753 = vmatpush1.bf16.msra.mxu0 0
        %1754 = vmatprep.subr.bf16.mxu0 0
        %1755 = vmatpush1.bf16.msra.mxu0 0
        %1756 = vmatprep.subr.bf16.mxu0 0
        %1757 = vmatpush1.bf16.msra.mxu0 0
        %1758 = vmatprep.subr.bf16.mxu0 0
        %1759 = vmatpush1.bf16.msra.mxu0 0
        %1760 = vmatprep.subr.bf16.mxu0 0
        %1761 = vmatpush1.bf16.msra.mxu0 0
        %1762 = vmatprep.subr.bf16.mxu0 0
        %1763 = vmatpush1.bf16.msra.mxu0 0
        %1764 = vmatprep.subr.bf16.mxu0 0
        %1765 = vmatpush1.bf16.msra.mxu0 0
        %1766 = vmatprep.subr.bf16.mxu0 0
        %1767 = vmatpush1.bf16.msra.mxu0 0
        %1768 = vmatprep.mubr.bf16.mxu0 0
        %1769 = vmatmul.mubr.bf16.gmra.mrb[0].mxu0 %v1671
        %v1770 = vpop.f32.mrb[0].mxu0
        %v1771 = vadd.f32 0.0, %v1770
        %v1772 = vpop.f32.mrb[0].mxu0
        %v1773 = vpop.f32.mrb[0].mxu0
        %v1774 = vadd.f32 0.0, %v1773
        %v1775 = vpop.f32.mrb[0].mxu0
        %1776 = vmatprep.mubr.bf16.mxu0 0
        %1777 = vmatmul.mubr.bf16.gmra.mrb[0].mxu0 %v1674
        %v1778 = vpop.f32.mrb[0].mxu0
        %v1779 = vadd.f32 0.0, %v1778
        %v1780 = vpop.f32.mrb[0].mxu0
        %v1781 = vpop.f32.mrb[0].mxu0
        %v1782 = vpop.f32.mrb[0].mxu0
        %1783 = vdwg.mxu0
        %v1784 = vadd.f32 %v1464, %v1720
        %v1785 = vadd.f32 %v1465, %v1722
        %v1786 = vadd.f32 %v1466, %v1771
        %v1787 = vadd.f32 %v1467, %v1724
        %v1788 = vadd.f32 %v1468, %v1726
        %v1789 = vadd.f32 %v1469, %v1774
        %v1790 = vadd.f32 %v1470, %v1730
        %v1791 = vadd.f32 %v1471, %v1732
        %v1792 = vadd.f32 %v1472, %v1779
        %s1793 = scalar_lea.vmem [#allocation4], 192
        %v1794 = vld [vmem:[%s1793] sm:$0xff]
        %v1795 = vld [vmem:[%s1793 + $0x8] sm:$0xf]
        %v1796 = vld [vmem:[%s1793 + $0xc] sm:$0xff]
        %v1797 = vld [vmem:[%s1793 + $0x14] sm:$0xf]
        %v1798 = vld [vmem:[%s1793 + $0x18] sm:$0xff]
        %v1799 = vld [vmem:[%s1793 + $0x20] sm:$0xf]
        %v1800 = vld [vmem:[%s1793 + $0x24] sm:$0x33]
        %v1801 = vld [vmem:[%s1793 + $0x2c] sm:$0x3]
        %v1810 = vunpack.c.l.b16 %v1794
        %v1811 = vunpack.c.h.b16 %v1794
        %v1812 = vunpack.c.l.b16 %v1795
        %v1813 = vunpack.c.l.b16 %v1796
        %v1814 = vunpack.c.h.b16 %v1796
        %v1815 = vunpack.c.l.b16 %v1797
        %v1816 = vunpack.c.l.b16 %v1798
        %v1817 = vunpack.c.h.b16 %v1798
        %v1818 = vunpack.c.l.b16 %v1799
        %v1819 = vunpack.c.l.b16 %v1800
        %v1820 = vunpack.c.h.b16 %v1800
        %v1821 = vunpack.c.l.b16 %v1801
        %v1822 = vpack.c.b16 %v1813, %v1810
        %v1823 = vpack.c.b16 %v1814, %v1811
        %v1824 = vpack.c.b16 %v1815, %v1812
        %v1825 = vpack.c.b16 %v1819, %v1816
        %v1826 = vpack.c.b16 %v1820, %v1817
        %v1827 = vpack.c.b16 %v1821, %v1818
        %v1832 = vsel %vm448, %v1825, 0
        %v1835 = vsel %vm448, %v1826, 0
        %v1838 = vsel %vm448, %v1827, 0
        %1840 = vmatprep.subr.bf16.mxu0 %v1823
        %1841 = vmatpush1.bf16.msra.mxu0 %v1822
        %1842 = vmatprep.subr.bf16.mxu0 %v1835
        %1843 = vmatpush1.bf16.msra.mxu0 %v1832
        %1844 = vmatprep.subr.bf16.mxu0 0
        %1845 = vmatpush1.bf16.msra.mxu0 0
        %1846 = vmatprep.subr.bf16.mxu0 0
        %1847 = vmatpush1.bf16.msra.mxu0 0
        %1848 = vmatprep.subr.bf16.mxu0 0
        %1849 = vmatpush1.bf16.msra.mxu0 0
        %1850 = vmatprep.subr.bf16.mxu0 0
        %1851 = vmatpush1.bf16.msra.mxu0 0
        %1852 = vmatprep.subr.bf16.mxu0 0
        %1853 = vmatpush1.bf16.msra.mxu0 0
        %1854 = vmatprep.subr.bf16.mxu0 0
        %1855 = vmatpush1.bf16.msra.mxu0 0
        %1856 = vmatprep.subr.bf16.mxu0 0
        %1857 = vmatpush1.bf16.msra.mxu0 0
        %1858 = vmatprep.subr.bf16.mxu0 0
        %1859 = vmatpush1.bf16.msra.mxu0 0
        %1860 = vmatprep.subr.bf16.mxu0 0
        %1861 = vmatpush1.bf16.msra.mxu0 0
        %1862 = vmatprep.subr.bf16.mxu0 0
        %1863 = vmatpush1.bf16.msra.mxu0 0
        %1864 = vmatprep.subr.bf16.mxu0 0
        %1865 = vmatpush1.bf16.msra.mxu0 0
        %1866 = vmatprep.subr.bf16.mxu0 0
        %1867 = vmatpush1.bf16.msra.mxu0 0
        %1868 = vmatprep.subr.bf16.mxu0 0
        %1869 = vmatpush1.bf16.msra.mxu0 0
        %1870 = vmatprep.subr.bf16.mxu0 0
        %1871 = vmatpush1.bf16.msra.mxu0 0
        %1872 = vmatprep.mubr.bf16.mxu0 0
        %1873 = vmatmul.mubr.bf16.gmra.mrb[0].mxu0 %v1671
        %v1874 = vpop.f32.mrb[0].mxu0
        %v1875 = vadd.f32 0.0, %v1874
        %v1876 = vpop.f32.mrb[0].mxu0
        %v1877 = vadd.f32 0.0, %v1876
        %v1878 = vpop.f32.mrb[0].mxu0
        %v1879 = vadd.f32 0.0, %v1878
        %v1880 = vpop.f32.mrb[0].mxu0
        %v1881 = vadd.f32 0.0, %v1880
        %1882 = vmatprep.mubr.bf16.mxu0 0
        %1883 = vmatmul.mubr.bf16.gmra.mrb[0].mxu0 %v1674
        %v1884 = vpop.f32.mrb[0].mxu0
        %v1885 = vadd.f32 0.0, %v1884
        %v1886 = vpop.f32.mrb[0].mxu0
        %v1887 = vadd.f32 0.0, %v1886
        %v1888 = vpop.f32.mrb[0].mxu0
        %v1889 = vpop.f32.mrb[0].mxu0
        %1890 = vdwg.mxu0
        %1891 = vmatprep.subr.bf16.mxu0 0
        %1892 = vmatpush1.bf16.msra.mxu0 %v1824
        %1893 = vmatprep.subr.bf16.mxu0 0
        %1894 = vmatpush1.bf16.msra.mxu0 %v1838
        %1895 = vmatprep.subr.bf16.mxu0 0
        %1896 = vmatpush1.bf16.msra.mxu0 0
        %1897 = vmatprep.subr.bf16.mxu0 0
        %1898 = vmatpush1.bf16.msra.mxu0 0
        %1899 = vmatprep.subr.bf16.mxu0 0
        %1900 = vmatpush1.bf16.msra.mxu0 0
        %1901 = vmatprep.subr.bf16.mxu0 0
        %1902 = vmatpush1.bf16.msra.mxu0 0
        %1903 = vmatprep.subr.bf16.mxu0 0
        %1904 = vmatpush1.bf16.msra.mxu0 0
        %1905 = vmatprep.subr.bf16.mxu0 0
        %1906 = vmatpush1.bf16.msra.mxu0 0
        %1907 = vmatprep.subr.bf16.mxu0 0
        %1908 = vmatpush1.bf16.msra.mxu0 0
        %1909 = vmatprep.subr.bf16.mxu0 0
        %1910 = vmatpush1.bf16.msra.mxu0 0
        %1911 = vmatprep.subr.bf16.mxu0 0
        %1912 = vmatpush1.bf16.msra.mxu0 0
        %1913 = vmatprep.subr.bf16.mxu0 0
        %1914 = vmatpush1.bf16.msra.mxu0 0
        %1915 = vmatprep.subr.bf16.mxu0 0
        %1916 = vmatpush1.bf16.msra.mxu0 0
        %1917 = vmatprep.subr.bf16.mxu0 0
        %1918 = vmatpush1.bf16.msra.mxu0 0
        %1919 = vmatprep.subr.bf16.mxu0 0
        %1920 = vmatpush1.bf16.msra.mxu0 0
        %1921 = vmatprep.subr.bf16.mxu0 0
        %1922 = vmatpush1.bf16.msra.mxu0 0
        %1923 = vmatprep.mubr.bf16.mxu0 0
        %1924 = vmatmul.mubr.bf16.gmra.mrb[0].mxu0 %v1671
        %v1925 = vpop.f32.mrb[0].mxu0
        %v1926 = vadd.f32 0.0, %v1925
        %v1927 = vpop.f32.mrb[0].mxu0
        %v1928 = vpop.f32.mrb[0].mxu0
        %v1929 = vadd.f32 0.0, %v1928
        %v1930 = vpop.f32.mrb[0].mxu0
        %1931 = vmatprep.mubr.bf16.mxu0 0
        %1932 = vmatmul.mubr.bf16.gmra.mrb[0].mxu0 %v1674
        %v1933 = vpop.f32.mrb[0].mxu0
        %v1934 = vadd.f32 0.0, %v1933
        %v1935 = vpop.f32.mrb[0].mxu0
        %v1936 = vpop.f32.mrb[0].mxu0
        %v1937 = vpop.f32.mrb[0].mxu0
        %1938 = vdwg.mxu0
        %v1939 = vadd.f32 %v1619, %v1875
        %v1940 = vadd.f32 %v1620, %v1877
        %v1941 = vadd.f32 %v1621, %v1926
        %v1942 = vadd.f32 %v1622, %v1879
        %v1943 = vadd.f32 %v1623, %v1881
        %v1944 = vadd.f32 %v1624, %v1929
        %v1945 = vadd.f32 %v1625, %v1885
        %v1946 = vadd.f32 %v1626, %v1887
        %v1947 = vadd.f32 %v1627, %v1934
        %v1948 = vld [vmem:[#allocation6] sm:$0x7]
        %v1950 = vlaneseq
        %v1951 = vshrl.u32 %v1950, 7
        %v1952 = vsub.s32 0, %v1951
        %v1953 = vrot.slane %v1948, %v1952
        %v1954 = vlaneseq
        %v1955 = vshrl.u32 %v1954, 7
        %v1956 = vsub.s32 1, %v1955
        %v1957 = vrot.slane %v1948, %v1956
        %v1958 = vlaneseq
        %v1959 = vshrl.u32 %v1958, 7
        %v1960 = vsub.s32 2, %v1959
        %v1961 = vrot.slane %v1948, %v1960
        %v1965 = vadd.f32 %v1784, %v1953
        %v1966 = vadd.f32 %v1785, %v1957
        %v1967 = vadd.f32 %v1786, %v1961
        %v1968 = vadd.f32 %v1787, %v1953
        %v1969 = vadd.f32 %v1788, %v1957
        %v1970 = vadd.f32 %v1789, %v1961
        %v1971 = vadd.f32 %v1790, %v1953
        %v1972 = vadd.f32 %v1791, %v1957
        %v1973 = vadd.f32 %v1792, %v1961
        %v1974 = vadd.f32 %v1939, %v1953
        %v1975 = vadd.f32 %v1940, %v1957
        %v1976 = vadd.f32 %v1941, %v1961
        %v1977 = vadd.f32 %v1942, %v1953
        %v1978 = vadd.f32 %v1943, %v1957
        %v1979 = vadd.f32 %v1944, %v1961
        %v1980 = vadd.f32 %v1945, %v1953
        %v1981 = vadd.f32 %v1946, %v1957
        %v1982 = vadd.f32 %v1947, %v1961
        %v1983 = vmax.f32 %v1965, %v1974
        %v1984 = vmax.f32 %v1966, %v1975
        %v1985 = vmax.f32 %v1967, %v1976
        %v1986 = vmax.f32 %v1968, %v1977
        %v1987 = vmax.f32 %v1969, %v1978
        %v1988 = vmax.f32 %v1970, %v1979
        %v1989 = vmax.f32 %v1971, %v1980
        %v1990 = vmax.f32 %v1972, %v1981
        %v1991 = vmax.f32 %v1973, %v1982
        %v1992 = vlaneseq
        %v1993 = vshrl.u32 %v1992, 7
        %v1994 = vadd.s32 %v1993, 8
        %v1995 = vlaneseq
        %v1996 = vand.u32 %v1995, 127
        %v1997 = vmul.u32 %v1993, 2
        %v1998 = vmul.u32 %v1994, 2
        %vm1999 = vcmp.eq.s32.totalorder %v1996, %v1997
        %vm2000 = vcmp.eq.s32.totalorder %v1996, %v1998
        %v2001 = vsel %vm1999, 1, 0
        %v2002 = vsel %vm2000, 1, 0
        %v2003 = vcvt.s32.f32 %v2001
        %v2004 = vcvt.s32.f32 %v2002
        %v2005 = vadd.s32 %v1997, 1
        %v2006 = vadd.s32 %v1998, 1
        %vm2007 = vcmp.eq.s32.totalorder %v1996, %v2005
        %vm2008 = vcmp.eq.s32.totalorder %v1996, %v2006
        %v2009 = vsel %vm2007, 1, 0
        %v2010 = vsel %vm2008, 1, 0
        %v2011 = vcvt.s32.f32 %v2009
        %v2012 = vcvt.s32.f32 %v2010
        %vm2013 = vcmask 195584
        %v2015 = vsel %vm2013, %v2003, 0
        %v2018 = vsel %vm2013, %v2004, 0
        %2020 = vmatprep.subr.mxu0 %v1984
        %2021 = vmatpush1.msra.mxu0 %v1983
        %2022 = vmatprep.subr.mxu0 %v1987
        %2023 = vmatpush1.msra.mxu0 %v1986
        %2024 = vmatprep.subr.mxu0 %v1990
        %2025 = vmatpush1.msra.mxu0 %v1989
        %2026 = vmatprep.subr.mxu0 0.0
        %2027 = vmatpush1.msra.mxu0 0.0
        %2028 = vmatprep.subr.mxu0 0.0
        %2029 = vmatpush1.msra.mxu0 0.0
        %2030 = vmatprep.subr.mxu0 0.0
        %2031 = vmatpush1.msra.mxu0 0.0
        %2032 = vmatprep.subr.mxu0 0.0
        %2033 = vmatpush1.msra.mxu0 0.0
        %2034 = vmatprep.subr.mxu0 0.0
        %2035 = vmatpush1.msra.mxu0 0.0
        %2036 = vmatprep.subr.mxu0 0.0
        %2037 = vmatpush1.msra.mxu0 0.0
        %2038 = vmatprep.subr.mxu0 0.0
        %2039 = vmatpush1.msra.mxu0 0.0
        %2040 = vmatprep.subr.mxu0 0.0
        %2041 = vmatpush1.msra.mxu0 0.0
        %2042 = vmatprep.subr.mxu0 0.0
        %2043 = vmatpush1.msra.mxu0 0.0
        %2044 = vmatprep.subr.mxu0 0.0
        %2045 = vmatpush1.msra.mxu0 0.0
        %2046 = vmatprep.subr.mxu0 0.0
        %2047 = vmatpush1.msra.mxu0 0.0
        %2048 = vmatprep.subr.mxu0 0.0
        %2049 = vmatpush1.msra.mxu0 0.0
        %2050 = vmatprep.subr.mxu0 0.0
        %2051 = vmatpush1.msra.mxu0 0.0
        %2052 = vmatprep.subr.mxu0 0.0
        %2053 = vmatpush1.msra.mxu0 0.0
        %2054 = vmatprep.subr.mxu0 0.0
        %2055 = vmatpush1.msra.mxu0 0.0
        %2056 = vmatprep.subr.mxu0 0.0
        %2057 = vmatpush1.msra.mxu0 0.0
        %2058 = vmatprep.subr.mxu0 0.0
        %2059 = vmatpush1.msra.mxu0 0.0
        %2060 = vmatprep.subr.mxu0 0.0
        %2061 = vmatpush1.msra.mxu0 0.0
        %2062 = vmatprep.subr.mxu0 0.0
        %2063 = vmatpush1.msra.mxu0 0.0
        %2064 = vmatprep.subr.mxu0 0.0
        %2065 = vmatpush1.msra.mxu0 0.0
        %2066 = vmatprep.subr.mxu0 0.0
        %2067 = vmatpush1.msra.mxu0 0.0
        %2068 = vmatprep.subr.mxu0 0.0
        %2069 = vmatpush1.msra.mxu0 0.0
        %2070 = vmatprep.subr.mxu0 0.0
        %2071 = vmatpush1.msra.mxu0 0.0
        %2072 = vmatprep.subr.mxu0 0.0
        %2073 = vmatpush1.msra.mxu0 0.0
        %2074 = vmatprep.subr.mxu0 0.0
        %2075 = vmatpush1.msra.mxu0 0.0
        %2076 = vmatprep.subr.mxu0 0.0
        %2077 = vmatpush1.msra.mxu0 0.0
        %2078 = vmatprep.subr.mxu0 0.0
        %2079 = vmatpush1.msra.mxu0 0.0
        %2080 = vmatprep.subr.mxu0 0.0
        %2081 = vmatpush1.msra.mxu0 0.0
        %2082 = vmatprep.subr.mxu0 0.0
        %2083 = vmatpush1.msra.mxu0 0.0
        %2084 = vmatprep.mubr.f32.mxu0 0.0
        %2085 = vmatmul.mubr.f32.gmra.mrb[0].mxu0 %v2015
        %v2086 = vpop.f32.mrb[0].mxu0
        %v2087 = vadd.f32 0.0, %v2086
        %v2088 = vpop.f32.mrb[0].mxu0
        %v2089 = vadd.f32 0.0, %v2088
        %2090 = vmatprep.mubr.f32.mxu0 0.0
        %2091 = vmatmul.mubr.f32.gmra.mrb[0].mxu0 %v2018
        %v2092 = vpop.f32.mrb[0].mxu0
        %v2093 = vadd.f32 0.0, %v2092
        %v2094 = vpop.f32.mrb[0].mxu0
        %v2095 = vadd.f32 0.0, %v2094
        %2096 = vdwg.mxu0
        %2097 = vmatprep.subr.mxu0 0.0
        %2098 = vmatpush1.msra.mxu0 %v1985
        %2099 = vmatprep.subr.mxu0 0.0
        %2100 = vmatpush1.msra.mxu0 %v1988
        %2101 = vmatprep.subr.mxu0 0.0
        %2102 = vmatpush1.msra.mxu0 %v1991
        %2103 = vmatprep.subr.mxu0 0.0
        %2104 = vmatpush1.msra.mxu0 0.0
        %2105 = vmatprep.subr.mxu0 0.0
        %2106 = vmatpush1.msra.mxu0 0.0
        %2107 = vmatprep.subr.mxu0 0.0
        %2108 = vmatpush1.msra.mxu0 0.0
        %2109 = vmatprep.subr.mxu0 0.0
        %2110 = vmatpush1.msra.mxu0 0.0
        %2111 = vmatprep.subr.mxu0 0.0
        %2112 = vmatpush1.msra.mxu0 0.0
        %2113 = vmatprep.subr.mxu0 0.0
        %2114 = vmatpush1.msra.mxu0 0.0
        %2115 = vmatprep.subr.mxu0 0.0
        %2116 = vmatpush1.msra.mxu0 0.0
        %2117 = vmatprep.subr.mxu0 0.0
        %2118 = vmatpush1.msra.mxu0 0.0
        %2119 = vmatprep.subr.mxu0 0.0
        %2120 = vmatpush1.msra.mxu0 0.0
        %2121 = vmatprep.subr.mxu0 0.0
        %2122 = vmatpush1.msra.mxu0 0.0
        %2123 = vmatprep.subr.mxu0 0.0
        %2124 = vmatpush1.msra.mxu0 0.0
        %2125 = vmatprep.subr.mxu0 0.0
        %2126 = vmatpush1.msra.mxu0 0.0
        %2127 = vmatprep.subr.mxu0 0.0
        %2128 = vmatpush1.msra.mxu0 0.0
        %2129 = vmatprep.subr.mxu0 0.0
        %2130 = vmatpush1.msra.mxu0 0.0
        %2131 = vmatprep.subr.mxu0 0.0
        %2132 = vmatpush1.msra.mxu0 0.0
        %2133 = vmatprep.subr.mxu0 0.0
        %2134 = vmatpush1.msra.mxu0 0.0
        %2135 = vmatprep.subr.mxu0 0.0
        %2136 = vmatpush1.msra.mxu0 0.0
        %2137 = vmatprep.subr.mxu0 0.0
        %2138 = vmatpush1.msra.mxu0 0.0
        %2139 = vmatprep.subr.mxu0 0.0
        %2140 = vmatpush1.msra.mxu0 0.0
        %2141 = vmatprep.subr.mxu0 0.0
        %2142 = vmatpush1.msra.mxu0 0.0
        %2143 = vmatprep.subr.mxu0 0.0
        %2144 = vmatpush1.msra.mxu0 0.0
        %2145 = vmatprep.subr.mxu0 0.0
        %2146 = vmatpush1.msra.mxu0 0.0
        %2147 = vmatprep.subr.mxu0 0.0
        %2148 = vmatpush1.msra.mxu0 0.0
        %2149 = vmatprep.subr.mxu0 0.0
        %2150 = vmatpush1.msra.mxu0 0.0
        %2151 = vmatprep.subr.mxu0 0.0
        %2152 = vmatpush1.msra.mxu0 0.0
        %2153 = vmatprep.subr.mxu0 0.0
        %2154 = vmatpush1.msra.mxu0 0.0
        %2155 = vmatprep.subr.mxu0 0.0
        %2156 = vmatpush1.msra.mxu0 0.0
        %2157 = vmatprep.subr.mxu0 0.0
        %2158 = vmatpush1.msra.mxu0 0.0
        %2159 = vmatprep.subr.mxu0 0.0
        %2160 = vmatpush1.msra.mxu0 0.0
        %2161 = vmatprep.mubr.f32.mxu0 0.0
        %2162 = vmatmul.mubr.f32.gmra.mrb[0].mxu0 %v2015
        %v2163 = vpop.f32.mrb[0].mxu0
        %v2164 = vadd.f32 0.0, %v2163
        %v2165 = vpop.f32.mrb[0].mxu0
        %2166 = vmatprep.mubr.f32.mxu0 0.0
        %2167 = vmatmul.mubr.f32.gmra.mrb[0].mxu0 %v2018
        %v2168 = vpop.f32.mrb[0].mxu0
        %v2169 = vadd.f32 0.0, %v2168
        %v2170 = vpop.f32.mrb[0].mxu0
        %2171 = vdwg.mxu0
        %v2173 = vsel %vm2013, %v2011, 0
        %v2176 = vsel %vm2013, %v2012, 0
        %2178 = vmatprep.subr.mxu0 %v1984
        %2179 = vmatpush1.msra.mxu0 %v1983
        %2180 = vmatprep.subr.mxu0 %v1987
        %2181 = vmatpush1.msra.mxu0 %v1986
        %2182 = vmatprep.subr.mxu0 %v1990
        %2183 = vmatpush1.msra.mxu0 %v1989
        %2184 = vmatprep.subr.mxu0 0.0
        %2185 = vmatpush1.msra.mxu0 0.0
        %2186 = vmatprep.subr.mxu0 0.0
        %2187 = vmatpush1.msra.mxu0 0.0
        %2188 = vmatprep.subr.mxu0 0.0
        %2189 = vmatpush1.msra.mxu0 0.0
        %2190 = vmatprep.subr.mxu0 0.0
        %2191 = vmatpush1.msra.mxu0 0.0
        %2192 = vmatprep.subr.mxu0 0.0
        %2193 = vmatpush1.msra.mxu0 0.0
        %2194 = vmatprep.subr.mxu0 0.0
        %2195 = vmatpush1.msra.mxu0 0.0
        %2196 = vmatprep.subr.mxu0 0.0
        %2197 = vmatpush1.msra.mxu0 0.0
        %2198 = vmatprep.subr.mxu0 0.0
        %2199 = vmatpush1.msra.mxu0 0.0
        %2200 = vmatprep.subr.mxu0 0.0
        %2201 = vmatpush1.msra.mxu0 0.0
        %2202 = vmatprep.subr.mxu0 0.0
        %2203 = vmatpush1.msra.mxu0 0.0
        %2204 = vmatprep.subr.mxu0 0.0
        %2205 = vmatpush1.msra.mxu0 0.0
        %2206 = vmatprep.subr.mxu0 0.0
        %2207 = vmatpush1.msra.mxu0 0.0
        %2208 = vmatprep.subr.mxu0 0.0
        %2209 = vmatpush1.msra.mxu0 0.0
        %2210 = vmatprep.subr.mxu0 0.0
        %2211 = vmatpush1.msra.mxu0 0.0
        %2212 = vmatprep.subr.mxu0 0.0
        %2213 = vmatpush1.msra.mxu0 0.0
        %2214 = vmatprep.subr.mxu0 0.0
        %2215 = vmatpush1.msra.mxu0 0.0
        %2216 = vmatprep.subr.mxu0 0.0
        %2217 = vmatpush1.msra.mxu0 0.0
        %2218 = vmatprep.subr.mxu0 0.0
        %2219 = vmatpush1.msra.mxu0 0.0
        %2220 = vmatprep.subr.mxu0 0.0
        %2221 = vmatpush1.msra.mxu0 0.0
        %2222 = vmatprep.subr.mxu0 0.0
        %2223 = vmatpush1.msra.mxu0 0.0
        %2224 = vmatprep.subr.mxu0 0.0
        %2225 = vmatpush1.msra.mxu0 0.0
        %2226 = vmatprep.subr.mxu0 0.0
        %2227 = vmatpush1.msra.mxu0 0.0
        %2228 = vmatprep.subr.mxu0 0.0
        %2229 = vmatpush1.msra.mxu0 0.0
        %2230 = vmatprep.subr.mxu0 0.0
        %2231 = vmatpush1.msra.mxu0 0.0
        %2232 = vmatprep.subr.mxu0 0.0
        %2233 = vmatpush1.msra.mxu0 0.0
        %2234 = vmatprep.subr.mxu0 0.0
        %2235 = vmatpush1.msra.mxu0 0.0
        %2236 = vmatprep.subr.mxu0 0.0
        %2237 = vmatpush1.msra.mxu0 0.0
        %2238 = vmatprep.subr.mxu0 0.0
        %2239 = vmatpush1.msra.mxu0 0.0
        %2240 = vmatprep.subr.mxu0 0.0
        %2241 = vmatpush1.msra.mxu0 0.0
        %2242 = vmatprep.mubr.f32.mxu0 0.0
        %2243 = vmatmul.mubr.f32.gmra.mrb[0].mxu0 %v2173
        %v2244 = vpop.f32.mrb[0].mxu0
        %v2245 = vadd.f32 0.0, %v2244
        %v2246 = vpop.f32.mrb[0].mxu0
        %v2247 = vadd.f32 0.0, %v2246
        %2248 = vmatprep.mubr.f32.mxu0 0.0
        %2249 = vmatmul.mubr.f32.gmra.mrb[0].mxu0 %v2176
        %v2250 = vpop.f32.mrb[0].mxu0
        %v2251 = vadd.f32 0.0, %v2250
        %v2252 = vpop.f32.mrb[0].mxu0
        %v2253 = vadd.f32 0.0, %v2252
        %2254 = vdwg.mxu0
        %2255 = vmatprep.subr.mxu0 0.0
        %2256 = vmatpush1.msra.mxu0 %v1985
        %2257 = vmatprep.subr.mxu0 0.0
        %2258 = vmatpush1.msra.mxu0 %v1988
        %2259 = vmatprep.subr.mxu0 0.0
        %2260 = vmatpush1.msra.mxu0 %v1991
        %2261 = vmatprep.subr.mxu0 0.0
        %2262 = vmatpush1.msra.mxu0 0.0
        %2263 = vmatprep.subr.mxu0 0.0
        %2264 = vmatpush1.msra.mxu0 0.0
        %2265 = vmatprep.subr.mxu0 0.0
        %2266 = vmatpush1.msra.mxu0 0.0
        %2267 = vmatprep.subr.mxu0 0.0
        %2268 = vmatpush1.msra.mxu0 0.0
        %2269 = vmatprep.subr.mxu0 0.0
        %2270 = vmatpush1.msra.mxu0 0.0
        %2271 = vmatprep.subr.mxu0 0.0
        %2272 = vmatpush1.msra.mxu0 0.0
        %2273 = vmatprep.subr.mxu0 0.0
        %2274 = vmatpush1.msra.mxu0 0.0
        %2275 = vmatprep.subr.mxu0 0.0
        %2276 = vmatpush1.msra.mxu0 0.0
        %2277 = vmatprep.subr.mxu0 0.0
        %2278 = vmatpush1.msra.mxu0 0.0
        %2279 = vmatprep.subr.mxu0 0.0
        %2280 = vmatpush1.msra.mxu0 0.0
        %2281 = vmatprep.subr.mxu0 0.0
        %2282 = vmatpush1.msra.mxu0 0.0
        %2283 = vmatprep.subr.mxu0 0.0
        %2284 = vmatpush1.msra.mxu0 0.0
        %2285 = vmatprep.subr.mxu0 0.0
        %2286 = vmatpush1.msra.mxu0 0.0
        %2287 = vmatprep.subr.mxu0 0.0
        %2288 = vmatpush1.msra.mxu0 0.0
        %2289 = vmatprep.subr.mxu0 0.0
        %2290 = vmatpush1.msra.mxu0 0.0
        %2291 = vmatprep.subr.mxu0 0.0
        %2292 = vmatpush1.msra.mxu0 0.0
        %2293 = vmatprep.subr.mxu0 0.0
        %2294 = vmatpush1.msra.mxu0 0.0
        %2295 = vmatprep.subr.mxu0 0.0
        %2296 = vmatpush1.msra.mxu0 0.0
        %2297 = vmatprep.subr.mxu0 0.0
        %2298 = vmatpush1.msra.mxu0 0.0
        %2299 = vmatprep.subr.mxu0 0.0
        %2300 = vmatpush1.msra.mxu0 0.0
        %2301 = vmatprep.subr.mxu0 0.0
        %2302 = vmatpush1.msra.mxu0 0.0
        %2303 = vmatprep.subr.mxu0 0.0
        %2304 = vmatpush1.msra.mxu0 0.0
        %2305 = vmatprep.subr.mxu0 0.0
        %2306 = vmatpush1.msra.mxu0 0.0
        %2307 = vmatprep.subr.mxu0 0.0
        %2308 = vmatpush1.msra.mxu0 0.0
        %2309 = vmatprep.subr.mxu0 0.0
        %2310 = vmatpush1.msra.mxu0 0.0
        %2311 = vmatprep.subr.mxu0 0.0
        %2312 = vmatpush1.msra.mxu0 0.0
        %2313 = vmatprep.subr.mxu0 0.0
        %2314 = vmatpush1.msra.mxu0 0.0
        %2315 = vmatprep.subr.mxu0 0.0
        %2316 = vmatpush1.msra.mxu0 0.0
        %2317 = vmatprep.subr.mxu0 0.0
        %2318 = vmatpush1.msra.mxu0 0.0
        %2319 = vmatprep.mubr.f32.mxu0 0.0
        %2320 = vmatmul.mubr.f32.gmra.mrb[0].mxu0 %v2173
        %v2321 = vpop.f32.mrb[0].mxu0
        %v2322 = vadd.f32 0.0, %v2321
        %v2323 = vpop.f32.mrb[0].mxu0
        %2324 = vmatprep.mubr.f32.mxu0 0.0
        %2325 = vmatmul.mubr.f32.gmra.mrb[0].mxu0 %v2176
        %v2326 = vpop.f32.mrb[0].mxu0
        %v2327 = vadd.f32 0.0, %v2326
        %v2328 = vpop.f32.mrb[0].mxu0
        %2329 = vdwg.mxu0
        %v2330 = vmax.f32 %v2087, %v2245
        %v2331 = vmax.f32 %v2089, %v2247
        %v2332 = vmax.f32 %v2164, %v2322
        %v2333 = vmax.f32 %v2093, %v2251
        %v2334 = vmax.f32 %v2095, %v2253
        %v2335 = vmax.f32 %v2169, %v2327
        %v2336 = vpack.c.bf16 %v2330, %v2330
        %v2337 = vpack.c.bf16 %v2331, %v2331
        %v2338 = vpack.c.bf16 %v2332, %v2332
        %v2339 = vld [vmem:[#allocation7] sm:$0xff]
        %v2340 = vld [vmem:[#allocation7 + $0x8] sm:$0xff]
        %v2341 = vld [vmem:[#allocation7 + $0x10] sm:$0xff]
        %v2342 = vld [vmem:[#allocation7 + $0x18] sm:$0xff]
        %v2343 = vld [vmem:[#allocation7 + $0x20] sm:$0xff]
        %v2344 = vld [vmem:[#allocation7 + $0x28] sm:$0xff]
        %v2345 = vld [vmem:[#allocation7 + $0x30] sm:$0xff]
        %v2346 = vld [vmem:[#allocation7 + $0x38] sm:$0xff]
        %v2347 = vld [vmem:[#allocation7 + $0x40] sm:$0xff]
        %v2348 = vld [vmem:[#allocation7 + $0x48] sm:$0xff]
        %v2349 = vld [vmem:[#allocation7 + $0x50] sm:$0xff]
        %v2350 = vld [vmem:[#allocation7 + $0x58] sm:$0xff]
        %v2351 = vld [vmem:[#allocation7 + $0x60] sm:$0xff]
        %v2352 = vld [vmem:[#allocation7 + $0x68] sm:$0xff]
        %v2353 = vld [vmem:[#allocation7 + $0x70] sm:$0xff]
        %v2354 = vld [vmem:[#allocation7 + $0x78] sm:$0xff]
        %v2355 = vld [vmem:[#allocation7 + $0x80] sm:$0xff]
        %v2356 = vld [vmem:[#allocation7 + $0x88] sm:$0xff]
        %v2357 = vld [vmem:[#allocation7 + $0x90] sm:$0xff]
        %v2358 = vld [vmem:[#allocation7 + $0x98] sm:$0xff]
        %v2359 = vld [vmem:[#allocation7 + $0xa0] sm:$0xff]
        %v2360 = vld [vmem:[#allocation7 + $0xa8] sm:$0xff]
        %v2361 = vld [vmem:[#allocation7 + $0xb0] sm:$0xff]
        %v2362 = vld [vmem:[#allocation7 + $0xb8] sm:$0xff]
        %v2363 = vld [vmem:[#allocation7 + $0xc0] sm:$0xff]
        %v2364 = vld [vmem:[#allocation7 + $0xc8] sm:$0xff]
        %v2365 = vld [vmem:[#allocation7 + $0xd0] sm:$0xff]
        %v2366 = vld [vmem:[#allocation7 + $0xd8] sm:$0xff]
        %v2367 = vld [vmem:[#allocation7 + $0xe0] sm:$0xff]
        %v2368 = vld [vmem:[#allocation7 + $0xe8] sm:$0xff]
        %v2369 = vld [vmem:[#allocation7 + $0xf0] sm:$0xff]
        %v2370 = vld [vmem:[#allocation7 + $0xf8] sm:$0xff]
        %v2371 = vld [vmem:[#allocation7 + $0x100] sm:$0xff]
        %v2372 = vld [vmem:[#allocation7 + $0x108] sm:$0xff]
        %v2373 = vld [vmem:[#allocation7 + $0x110] sm:$0xff]
        %v2374 = vld [vmem:[#allocation7 + $0x118] sm:$0xff]
        %v2375 = vld [vmem:[#allocation7 + $0x120] sm:$0xff]
        %v2376 = vld [vmem:[#allocation7 + $0x128] sm:$0xff]
        %v2377 = vld [vmem:[#allocation7 + $0x130] sm:$0xff]
        %v2378 = vld [vmem:[#allocation7 + $0x138] sm:$0xff]
        %v2379 = vld [vmem:[#allocation7 + $0x140] sm:$0xff]
        %v2380 = vld [vmem:[#allocation7 + $0x148] sm:$0xff]
        %v2381 = vld [vmem:[#allocation7 + $0x150] sm:$0xff]
        %v2382 = vld [vmem:[#allocation7 + $0x158] sm:$0xff]
        %v2383 = vld [vmem:[#allocation7 + $0x160] sm:$0xff]
        %v2384 = vld [vmem:[#allocation7 + $0x168] sm:$0xff]
        %v2385 = vld [vmem:[#allocation7 + $0x170] sm:$0xff]
        %v2386 = vld [vmem:[#allocation7 + $0x178] sm:$0xff]
        %v2387 = vld [vmem:[#allocation9] sm:$0xff]
        %v2388 = vld [vmem:[#allocation9 + $0x8] sm:$0xff]
        %v2389 = vld [vmem:[#allocation9 + $0x10] sm:$0xff]
        %v2390 = vld [vmem:[#allocation9 + $0x18] sm:$0xff]
        %v2391 = vld [vmem:[#allocation9 + $0x20] sm:$0xff]
        %v2392 = vld [vmem:[#allocation9 + $0x28] sm:$0xff]
        %v2393 = vld [vmem:[#allocation9 + $0x30] sm:$0xff]
        %v2394 = vld [vmem:[#allocation9 + $0x38] sm:$0xff]
        %v2395 = vld [vmem:[#allocation9 + $0x40] sm:$0xff]
        %v2396 = vld [vmem:[#allocation9 + $0x48] sm:$0xff]
        %v2397 = vld [vmem:[#allocation9 + $0x50] sm:$0xff]
        %v2398 = vld [vmem:[#allocation9 + $0x58] sm:$0xff]
        %v2399 = vld [vmem:[#allocation9 + $0x60] sm:$0xff]
        %v2400 = vld [vmem:[#allocation9 + $0x68] sm:$0xff]
        %v2401 = vld [vmem:[#allocation9 + $0x70] sm:$0xff]
        %v2402 = vld [vmem:[#allocation9 + $0x78] sm:$0xff]
        %v2403 = vld [vmem:[#allocation9 + $0x80] sm:$0xff]
        %v2404 = vld [vmem:[#allocation9 + $0x88] sm:$0xff]
        %v2405 = vld [vmem:[#allocation9 + $0x90] sm:$0xff]
        %v2406 = vld [vmem:[#allocation9 + $0x98] sm:$0xff]
        %v2407 = vld [vmem:[#allocation9 + $0xa0] sm:$0xff]
        %v2408 = vld [vmem:[#allocation9 + $0xa8] sm:$0xff]
        %v2409 = vld [vmem:[#allocation9 + $0xb0] sm:$0xff]
        %v2410 = vld [vmem:[#allocation9 + $0xb8] sm:$0xff]
        %v2411 = vld [vmem:[#allocation9 + $0xc0] sm:$0xff]
        %v2412 = vld [vmem:[#allocation9 + $0xc8] sm:$0xff]
        %v2413 = vld [vmem:[#allocation9 + $0xd0] sm:$0xff]
        %v2414 = vld [vmem:[#allocation9 + $0xd8] sm:$0xff]
        %v2415 = vld [vmem:[#allocation9 + $0xe0] sm:$0xff]
        %v2416 = vld [vmem:[#allocation9 + $0xe8] sm:$0xff]
        %v2417 = vld [vmem:[#allocation9 + $0xf0] sm:$0xff]
        %v2418 = vld [vmem:[#allocation9 + $0xf8] sm:$0xff]
        %v2419 = vld [vmem:[#allocation9 + $0x100] sm:$0xff]
        %v2420 = vld [vmem:[#allocation9 + $0x108] sm:$0xff]
        %v2421 = vld [vmem:[#allocation9 + $0x110] sm:$0xff]
        %v2422 = vld [vmem:[#allocation9 + $0x118] sm:$0xff]
        %v2423 = vld [vmem:[#allocation9 + $0x120] sm:$0xff]
        %v2424 = vld [vmem:[#allocation9 + $0x128] sm:$0xff]
        %v2425 = vld [vmem:[#allocation9 + $0x130] sm:$0xff]
        %v2426 = vld [vmem:[#allocation9 + $0x138] sm:$0xff]
        %v2427 = vld [vmem:[#allocation9 + $0x140] sm:$0xff]
        %v2428 = vld [vmem:[#allocation9 + $0x148] sm:$0xff]
        %v2429 = vld [vmem:[#allocation9 + $0x150] sm:$0xff]
        %v2430 = vld [vmem:[#allocation9 + $0x158] sm:$0xff]
        %v2431 = vld [vmem:[#allocation9 + $0x160] sm:$0xff]
        %v2432 = vld [vmem:[#allocation9 + $0x168] sm:$0xff]
        %v2433 = vld [vmem:[#allocation9 + $0x170] sm:$0xff]
        %v2434 = vld [vmem:[#allocation9 + $0x178] sm:$0xff]
        %v2435 = vpack.c.bf16 %v2333, %v2330
        %v2436 = vpack.c.bf16 %v2334, %v2331
        %v2437 = vpack.c.bf16 %v2335, %v2332
        %s2438 = scalar_lea.vmem [#allocation7], 384
        %v2439 = vld [vmem:[%s2438] sm:$0xff]
        %v2440 = vld [vmem:[%s2438 + $0x8] sm:$0xff]
        %v2441 = vld [vmem:[%s2438 + $0x10] sm:$0xff]
        %v2442 = vld [vmem:[%s2438 + $0x18] sm:$0xff]
        %v2443 = vld [vmem:[%s2438 + $0x20] sm:$0xff]
        %v2444 = vld [vmem:[%s2438 + $0x28] sm:$0xff]
        %v2445 = vld [vmem:[%s2438 + $0x30] sm:$0xff]
        %v2446 = vld [vmem:[%s2438 + $0x38] sm:$0xff]
        %v2447 = vld [vmem:[%s2438 + $0x40] sm:$0xff]
        %v2448 = vld [vmem:[%s2438 + $0x48] sm:$0xff]
        %v2449 = vld [vmem:[%s2438 + $0x50] sm:$0xff]
        %v2450 = vld [vmem:[%s2438 + $0x58] sm:$0xff]
        %v2451 = vld [vmem:[%s2438 + $0x60] sm:$0xff]
        %v2452 = vld [vmem:[%s2438 + $0x68] sm:$0xff]
        %v2453 = vld [vmem:[%s2438 + $0x70] sm:$0xff]
        %v2454 = vld [vmem:[%s2438 + $0x78] sm:$0xff]
        %v2455 = vld [vmem:[%s2438 + $0x80] sm:$0xff]
        %v2456 = vld [vmem:[%s2438 + $0x88] sm:$0xff]
        %v2457 = vld [vmem:[%s2438 + $0x90] sm:$0xff]
        %v2458 = vld [vmem:[%s2438 + $0x98] sm:$0xff]
        %v2459 = vld [vmem:[%s2438 + $0xa0] sm:$0xff]
        %v2460 = vld [vmem:[%s2438 + $0xa8] sm:$0xff]
        %v2461 = vld [vmem:[%s2438 + $0xb0] sm:$0xff]
        %v2462 = vld [vmem:[%s2438 + $0xb8] sm:$0xff]
        %v2463 = vld [vmem:[%s2438 + $0xc0] sm:$0xff]
        %v2464 = vld [vmem:[%s2438 + $0xc8] sm:$0xff]
        %v2465 = vld [vmem:[%s2438 + $0xd0] sm:$0xff]
        %v2466 = vld [vmem:[%s2438 + $0xd8] sm:$0xff]
        %v2467 = vld [vmem:[%s2438 + $0xe0] sm:$0xff]
        %v2468 = vld [vmem:[%s2438 + $0xe8] sm:$0xff]
        %v2469 = vld [vmem:[%s2438 + $0xf0] sm:$0xff]
        %v2470 = vld [vmem:[%s2438 + $0xf8] sm:$0xff]
        %v2471 = vld [vmem:[%s2438 + $0x100] sm:$0xff]
        %v2472 = vld [vmem:[%s2438 + $0x108] sm:$0xff]
        %v2473 = vld [vmem:[%s2438 + $0x110] sm:$0xff]
        %v2474 = vld [vmem:[%s2438 + $0x118] sm:$0xff]
        %v2475 = vld [vmem:[%s2438 + $0x120] sm:$0xff]
        %v2476 = vld [vmem:[%s2438 + $0x128] sm:$0xff]
        %v2477 = vld [vmem:[%s2438 + $0x130] sm:$0xff]
        %v2478 = vld [vmem:[%s2438 + $0x138] sm:$0xff]
        %v2479 = vld [vmem:[%s2438 + $0x140] sm:$0xff]
        %v2480 = vld [vmem:[%s2438 + $0x148] sm:$0xff]
        %v2481 = vld [vmem:[%s2438 + $0x150] sm:$0xff]
        %v2482 = vld [vmem:[%s2438 + $0x158] sm:$0xff]
        %v2483 = vld [vmem:[%s2438 + $0x160] sm:$0xff]
        %v2484 = vld [vmem:[%s2438 + $0x168] sm:$0xff]
        %v2485 = vld [vmem:[%s2438 + $0x170] sm:$0xff]
        %v2486 = vld [vmem:[%s2438 + $0x178] sm:$0xff]
        %v2488 = vshrl.u32 %v2435, 16
        %v2490 = vshll.u32 %v2435, 16
        %v2492 = vrot.slane %v2490, 1
        %v2493 = vor.u32 %v2488, %v2492
        %v2495 = vshrl.u32 %v2436, 16
        %v2497 = vshll.u32 %v2436, 16
        %v2499 = vrot.slane %v2497, 1
        %v2500 = vor.u32 %v2495, %v2499
        %v2502 = vshrl.u32 %v2437, 16
        %v2504 = vshll.u32 %v2437, 16
        %v2506 = vrot.slane %v2504, 1
        %v2507 = vor.u32 %v2502, %v2506
        %v2559 = vunpack.c.l.b16 %v2439
        %v2560 = vunpack.c.h.b16 %v2439
        %v2561 = vunpack.c.l.b16 %v2440
        %v2562 = vunpack.c.h.b16 %v2440
        %v2563 = vunpack.c.l.b16 %v2441
        %v2564 = vunpack.c.h.b16 %v2441
        %v2565 = vunpack.c.l.b16 %v2442
        %v2566 = vunpack.c.h.b16 %v2442
        %v2567 = vunpack.c.l.b16 %v2443
        %v2568 = vunpack.c.h.b16 %v2443
        %v2569 = vunpack.c.l.b16 %v2444
        %v2570 = vunpack.c.h.b16 %v2444
        %v2571 = vunpack.c.l.b16 %v2445
        %v2572 = vunpack.c.h.b16 %v2445
        %v2573 = vunpack.c.l.b16 %v2446
        %v2574 = vunpack.c.h.b16 %v2446
        %v2575 = vunpack.c.l.b16 %v2447
        %v2576 = vunpack.c.h.b16 %v2447
        %v2577 = vunpack.c.l.b16 %v2448
        %v2578 = vunpack.c.h.b16 %v2448
        %v2579 = vunpack.c.l.b16 %v2449
        %v2580 = vunpack.c.h.b16 %v2449
        %v2581 = vunpack.c.l.b16 %v2450
        %v2582 = vunpack.c.h.b16 %v2450
        %v2583 = vunpack.c.l.b16 %v2451
        %v2584 = vunpack.c.h.b16 %v2451
        %v2585 = vunpack.c.l.b16 %v2452
        %v2586 = vunpack.c.h.b16 %v2452
        %v2587 = vunpack.c.l.b16 %v2453
        %v2588 = vunpack.c.h.b16 %v2453
        %v2589 = vunpack.c.l.b16 %v2454
        %v2590 = vunpack.c.h.b16 %v2454
        %v2591 = vunpack.c.l.b16 %v2455
        %v2592 = vunpack.c.h.b16 %v2455
        %v2593 = vunpack.c.l.b16 %v2456
        %v2594 = vunpack.c.h.b16 %v2456
        %v2595 = vunpack.c.l.b16 %v2457
        %v2596 = vunpack.c.h.b16 %v2457
        %v2597 = vunpack.c.l.b16 %v2458
        %v2598 = vunpack.c.h.b16 %v2458
        %v2599 = vunpack.c.l.b16 %v2459
        %v2600 = vunpack.c.h.b16 %v2459
        %v2601 = vunpack.c.l.b16 %v2460
        %v2602 = vunpack.c.h.b16 %v2460
        %v2603 = vunpack.c.l.b16 %v2461
        %v2604 = vunpack.c.h.b16 %v2461
        %v2605 = vunpack.c.l.b16 %v2462
        %v2606 = vunpack.c.h.b16 %v2462
        %v2607 = vunpack.c.l.b16 %v2463
        %v2608 = vunpack.c.h.b16 %v2463
        %v2609 = vunpack.c.l.b16 %v2464
        %v2610 = vunpack.c.h.b16 %v2464
        %v2611 = vunpack.c.l.b16 %v2465
        %v2612 = vunpack.c.h.b16 %v2465
        %v2613 = vunpack.c.l.b16 %v2466
        %v2614 = vunpack.c.h.b16 %v2466
        %v2615 = vunpack.c.l.b16 %v2467
        %v2616 = vunpack.c.h.b16 %v2467
        %v2617 = vunpack.c.l.b16 %v2468
        %v2618 = vunpack.c.h.b16 %v2468
        %v2619 = vunpack.c.l.b16 %v2469
        %v2620 = vunpack.c.h.b16 %v2469
        %v2621 = vunpack.c.l.b16 %v2470
        %v2622 = vunpack.c.h.b16 %v2470
        %v2623 = vunpack.c.l.b16 %v2471
        %v2624 = vunpack.c.h.b16 %v2471
        %v2625 = vunpack.c.l.b16 %v2472
        %v2626 = vunpack.c.h.b16 %v2472
        %v2627 = vunpack.c.l.b16 %v2473
        %v2628 = vunpack.c.h.b16 %v2473
        %v2629 = vunpack.c.l.b16 %v2474
        %v2630 = vunpack.c.h.b16 %v2474
        %v2631 = vunpack.c.l.b16 %v2475
        %v2632 = vunpack.c.h.b16 %v2475
        %v2633 = vunpack.c.l.b16 %v2476
        %v2634 = vunpack.c.h.b16 %v2476
        %v2635 = vunpack.c.l.b16 %v2477
        %v2636 = vunpack.c.h.b16 %v2477
        %v2637 = vunpack.c.l.b16 %v2478
        %v2638 = vunpack.c.h.b16 %v2478
        %v2639 = vunpack.c.l.b16 %v2479
        %v2640 = vunpack.c.h.b16 %v2479
        %v2641 = vunpack.c.l.b16 %v2480
        %v2642 = vunpack.c.h.b16 %v2480
        %v2643 = vunpack.c.l.b16 %v2481
        %v2644 = vunpack.c.h.b16 %v2481
        %v2645 = vunpack.c.l.b16 %v2482
        %v2646 = vunpack.c.h.b16 %v2482
        %v2647 = vunpack.c.l.b16 %v2483
        %v2648 = vunpack.c.h.b16 %v2483
        %v2649 = vunpack.c.l.b16 %v2484
        %v2650 = vunpack.c.h.b16 %v2484
        %v2651 = vunpack.c.l.b16 %v2485
        %v2652 = vunpack.c.h.b16 %v2485
        %v2653 = vunpack.c.l.b16 %v2486
        %v2654 = vunpack.c.h.b16 %v2486
        %v2655 = vpack.c.b16 %v2561, %v2559
        %v2656 = vpack.c.b16 %v2562, %v2560
        %v2657 = vpack.c.b16 %v2565, %v2563
        %v2658 = vpack.c.b16 %v2566, %v2564
        %v2659 = vpack.c.b16 %v2569, %v2567
        %v2660 = vpack.c.b16 %v2570, %v2568
        %v2661 = vpack.c.b16 %v2573, %v2571
        %v2662 = vpack.c.b16 %v2574, %v2572
        %v2663 = vpack.c.b16 %v2577, %v2575
        %v2664 = vpack.c.b16 %v2578, %v2576
        %v2665 = vpack.c.b16 %v2581, %v2579
        %v2666 = vpack.c.b16 %v2582, %v2580
        %v2667 = vpack.c.b16 %v2585, %v2583
        %v2668 = vpack.c.b16 %v2586, %v2584
        %v2669 = vpack.c.b16 %v2589, %v2587
        %v2670 = vpack.c.b16 %v2590, %v2588
        %v2671 = vpack.c.b16 %v2593, %v2591
        %v2672 = vpack.c.b16 %v2594, %v2592
        %v2673 = vpack.c.b16 %v2597, %v2595
        %v2674 = vpack.c.b16 %v2598, %v2596
        %v2675 = vpack.c.b16 %v2601, %v2599
        %v2676 = vpack.c.b16 %v2602, %v2600
        %v2677 = vpack.c.b16 %v2605, %v2603
        %v2678 = vpack.c.b16 %v2606, %v2604
        %v2679 = vpack.c.b16 %v2609, %v2607
        %v2680 = vpack.c.b16 %v2610, %v2608
        %v2681 = vpack.c.b16 %v2613, %v2611
        %v2682 = vpack.c.b16 %v2614, %v2612
        %v2683 = vpack.c.b16 %v2617, %v2615
        %v2684 = vpack.c.b16 %v2618, %v2616
        %v2685 = vpack.c.b16 %v2621, %v2619
        %v2686 = vpack.c.b16 %v2622, %v2620
        %v2687 = vpack.c.b16 %v2625, %v2623
        %v2688 = vpack.c.b16 %v2626, %v2624
        %v2689 = vpack.c.b16 %v2629, %v2627
        %v2690 = vpack.c.b16 %v2630, %v2628
        %v2691 = vpack.c.b16 %v2633, %v2631
        %v2692 = vpack.c.b16 %v2634, %v2632
        %v2693 = vpack.c.b16 %v2637, %v2635
        %v2694 = vpack.c.b16 %v2638, %v2636
        %v2695 = vpack.c.b16 %v2641, %v2639
        %v2696 = vpack.c.b16 %v2642, %v2640
        %v2697 = vpack.c.b16 %v2645, %v2643
        %v2698 = vpack.c.b16 %v2646, %v2644
        %v2699 = vpack.c.b16 %v2649, %v2647
        %v2700 = vpack.c.b16 %v2650, %v2648
        %v2701 = vpack.c.b16 %v2653, %v2651
        %v2702 = vpack.c.b16 %v2654, %v2652
        %2751 = vmatprep.subr.bf16.mxu0 %v2656
        %2752 = vmatpush1.bf16.msra.mxu0 %v2655
        %2753 = vmatprep.subr.bf16.mxu0 %v2658
        %2754 = vmatpush1.bf16.msra.mxu0 %v2657
        %2755 = vmatprep.subr.bf16.mxu0 %v2660
        %2756 = vmatpush1.bf16.msra.mxu0 %v2659
        %2757 = vmatprep.subr.bf16.mxu0 %v2662
        %2758 = vmatpush1.bf16.msra.mxu0 %v2661
        %2759 = vmatprep.subr.bf16.mxu0 %v2664
        %2760 = vmatpush1.bf16.msra.mxu0 %v2663
        %2761 = vmatprep.subr.bf16.mxu0 %v2666
        %2762 = vmatpush1.bf16.msra.mxu0 %v2665
        %2763 = vmatprep.subr.bf16.mxu0 %v2668
        %2764 = vmatpush1.bf16.msra.mxu0 %v2667
        %2765 = vmatprep.subr.bf16.mxu0 %v2670
        %2766 = vmatpush1.bf16.msra.mxu0 %v2669
        %2767 = vmatprep.subr.bf16.mxu0 %v2672
        %2768 = vmatpush1.bf16.msra.mxu0 %v2671
        %2769 = vmatprep.subr.bf16.mxu0 %v2674
        %2770 = vmatpush1.bf16.msra.mxu0 %v2673
        %2771 = vmatprep.subr.bf16.mxu0 %v2676
        %2772 = vmatpush1.bf16.msra.mxu0 %v2675
        %2773 = vmatprep.subr.bf16.mxu0 %v2678
        %2774 = vmatpush1.bf16.msra.mxu0 %v2677
        %2775 = vmatprep.subr.bf16.mxu0 %v2680
        %2776 = vmatpush1.bf16.msra.mxu0 %v2679
        %2777 = vmatprep.subr.bf16.mxu0 %v2682
        %2778 = vmatpush1.bf16.msra.mxu0 %v2681
        %2779 = vmatprep.subr.bf16.mxu0 %v2684
        %2780 = vmatpush1.bf16.msra.mxu0 %v2683
        %2781 = vmatprep.subr.bf16.mxu0 %v2686
        %2782 = vmatpush1.bf16.msra.mxu0 %v2685
        %2783 = vmatprep.mubr.bf16.mxu0 %v2500
        %2784 = vmatmul.mubr.bf16.gmra.mrb[0].mxu0 %v2493
        %v2785 = vpop.f32.mrb[0].mxu0
        %v2786 = vadd.f32 0.0, %v2785
        %v2787 = vpop.f32.mrb[0].mxu0
        %v2788 = vadd.f32 0.0, %v2787
        %v2789 = vpop.f32.mrb[0].mxu0
        %v2790 = vpop.f32.mrb[0].mxu0
        %2791 = vdwg.mxu0
        %2792 = vmatprep.subr.bf16.mxu0 %v2688
        %2793 = vmatpush1.bf16.msra.mxu0 %v2687
        %2794 = vmatprep.subr.bf16.mxu0 %v2690
        %2795 = vmatpush1.bf16.msra.mxu0 %v2689
        %2796 = vmatprep.subr.bf16.mxu0 %v2692
        %2797 = vmatpush1.bf16.msra.mxu0 %v2691
        %2798 = vmatprep.subr.bf16.mxu0 %v2694
        %2799 = vmatpush1.bf16.msra.mxu0 %v2693
        %2800 = vmatprep.subr.bf16.mxu0 %v2696
        %2801 = vmatpush1.bf16.msra.mxu0 %v2695
        %2802 = vmatprep.subr.bf16.mxu0 %v2698
        %2803 = vmatpush1.bf16.msra.mxu0 %v2697
        %2804 = vmatprep.subr.bf16.mxu0 %v2700
        %2805 = vmatpush1.bf16.msra.mxu0 %v2699
        %2806 = vmatprep.subr.bf16.mxu0 %v2702
        %2807 = vmatpush1.bf16.msra.mxu0 %v2701
        %2808 = vmatprep.subr.bf16.mxu0 0
        %2809 = vmatpush1.bf16.msra.mxu0 0
        %2810 = vmatprep.subr.bf16.mxu0 0
        %2811 = vmatpush1.bf16.msra.mxu0 0
        %2812 = vmatprep.subr.bf16.mxu0 0
        %2813 = vmatpush1.bf16.msra.mxu0 0
        %2814 = vmatprep.subr.bf16.mxu0 0
        %2815 = vmatpush1.bf16.msra.mxu0 0
        %2816 = vmatprep.subr.bf16.mxu0 0
        %2817 = vmatpush1.bf16.msra.mxu0 0
        %2818 = vmatprep.subr.bf16.mxu0 0
        %2819 = vmatpush1.bf16.msra.mxu0 0
        %2820 = vmatprep.subr.bf16.mxu0 0
        %2821 = vmatpush1.bf16.msra.mxu0 0
        %2822 = vmatprep.subr.bf16.mxu0 0
        %2823 = vmatpush1.bf16.msra.mxu0 0
        %2824 = vmatprep.mubr.bf16.mxu0 0
        %2825 = vmatmul.mubr.bf16.gmra.mrb[0].mxu0 %v2507
        %v2826 = vpop.f32.mrb[0].mxu0
        %v2827 = vadd.f32 %v2786, %v2826
        %v2828 = vpop.f32.mrb[0].mxu0
        %v2829 = vadd.f32 %v2788, %v2828
        %v2830 = vpop.f32.mrb[0].mxu0
        %v2831 = vpop.f32.mrb[0].mxu0
        %2832 = vdwg.mxu0
        %v2881 = vunpack.c.l.b16 %v2339
        %v2882 = vunpack.c.h.b16 %v2339
        %v2883 = vunpack.c.l.b16 %v2340
        %v2884 = vunpack.c.h.b16 %v2340
        %v2885 = vunpack.c.l.b16 %v2341
        %v2886 = vunpack.c.h.b16 %v2341
        %v2887 = vunpack.c.l.b16 %v2342
        %v2888 = vunpack.c.h.b16 %v2342
        %v2889 = vunpack.c.l.b16 %v2343
        %v2890 = vunpack.c.h.b16 %v2343
        %v2891 = vunpack.c.l.b16 %v2344
        %v2892 = vunpack.c.h.b16 %v2344
        %v2893 = vunpack.c.l.b16 %v2345
        %v2894 = vunpack.c.h.b16 %v2345
        %v2895 = vunpack.c.l.b16 %v2346
        %v2896 = vunpack.c.h.b16 %v2346
        %v2897 = vunpack.c.l.b16 %v2347
        %v2898 = vunpack.c.h.b16 %v2347
        %v2899 = vunpack.c.l.b16 %v2348
        %v2900 = vunpack.c.h.b16 %v2348
        %v2901 = vunpack.c.l.b16 %v2349
        %v2902 = vunpack.c.h.b16 %v2349
        %v2903 = vunpack.c.l.b16 %v2350
        %v2904 = vunpack.c.h.b16 %v2350
        %v2905 = vunpack.c.l.b16 %v2351
        %v2906 = vunpack.c.h.b16 %v2351
        %v2907 = vunpack.c.l.b16 %v2352
        %v2908 = vunpack.c.h.b16 %v2352
        %v2909 = vunpack.c.l.b16 %v2353
        %v2910 = vunpack.c.h.b16 %v2353
        %v2911 = vunpack.c.l.b16 %v2354
        %v2912 = vunpack.c.h.b16 %v2354
        %v2913 = vunpack.c.l.b16 %v2355
        %v2914 = vunpack.c.h.b16 %v2355
        %v2915 = vunpack.c.l.b16 %v2356
        %v2916 = vunpack.c.h.b16 %v2356
        %v2917 = vunpack.c.l.b16 %v2357
        %v2918 = vunpack.c.h.b16 %v2357
        %v2919 = vunpack.c.l.b16 %v2358
        %v2920 = vunpack.c.h.b16 %v2358
        %v2921 = vunpack.c.l.b16 %v2359
        %v2922 = vunpack.c.h.b16 %v2359
        %v2923 = vunpack.c.l.b16 %v2360
        %v2924 = vunpack.c.h.b16 %v2360
        %v2925 = vunpack.c.l.b16 %v2361
        %v2926 = vunpack.c.h.b16 %v2361
        %v2927 = vunpack.c.l.b16 %v2362
        %v2928 = vunpack.c.h.b16 %v2362
        %v2929 = vunpack.c.l.b16 %v2363
        %v2930 = vunpack.c.h.b16 %v2363
        %v2931 = vunpack.c.l.b16 %v2364
        %v2932 = vunpack.c.h.b16 %v2364
        %v2933 = vunpack.c.l.b16 %v2365
        %v2934 = vunpack.c.h.b16 %v2365
        %v2935 = vunpack.c.l.b16 %v2366
        %v2936 = vunpack.c.h.b16 %v2366
        %v2937 = vunpack.c.l.b16 %v2367
        %v2938 = vunpack.c.h.b16 %v2367
        %v2939 = vunpack.c.l.b16 %v2368
        %v2940 = vunpack.c.h.b16 %v2368
        %v2941 = vunpack.c.l.b16 %v2369
        %v2942 = vunpack.c.h.b16 %v2369
        %v2943 = vunpack.c.l.b16 %v2370
        %v2944 = vunpack.c.h.b16 %v2370
        %v2945 = vunpack.c.l.b16 %v2371
        %v2946 = vunpack.c.h.b16 %v2371
        %v2947 = vunpack.c.l.b16 %v2372
        %v2948 = vunpack.c.h.b16 %v2372
        %v2949 = vunpack.c.l.b16 %v2373
        %v2950 = vunpack.c.h.b16 %v2373
        %v2951 = vunpack.c.l.b16 %v2374
        %v2952 = vunpack.c.h.b16 %v2374
        %v2953 = vunpack.c.l.b16 %v2375
        %v2954 = vunpack.c.h.b16 %v2375
        %v2955 = vunpack.c.l.b16 %v2376
        %v2956 = vunpack.c.h.b16 %v2376
        %v2957 = vunpack.c.l.b16 %v2377
        %v2958 = vunpack.c.h.b16 %v2377
        %v2959 = vunpack.c.l.b16 %v2378
        %v2960 = vunpack.c.h.b16 %v2378
        %v2961 = vunpack.c.l.b16 %v2379
        %v2962 = vunpack.c.h.b16 %v2379
        %v2963 = vunpack.c.l.b16 %v2380
        %v2964 = vunpack.c.h.b16 %v2380
        %v2965 = vunpack.c.l.b16 %v2381
        %v2966 = vunpack.c.h.b16 %v2381
        %v2967 = vunpack.c.l.b16 %v2382
        %v2968 = vunpack.c.h.b16 %v2382
        %v2969 = vunpack.c.l.b16 %v2383
        %v2970 = vunpack.c.h.b16 %v2383
        %v2971 = vunpack.c.l.b16 %v2384
        %v2972 = vunpack.c.h.b16 %v2384
        %v2973 = vunpack.c.l.b16 %v2385
        %v2974 = vunpack.c.h.b16 %v2385
        %v2975 = vunpack.c.l.b16 %v2386
        %v2976 = vunpack.c.h.b16 %v2386
        %v2977 = vpack.c.b16 %v2883, %v2881
        %v2978 = vpack.c.b16 %v2884, %v2882
        %v2979 = vpack.c.b16 %v2887, %v2885
        %v2980 = vpack.c.b16 %v2888, %v2886
        %v2981 = vpack.c.b16 %v2891, %v2889
        %v2982 = vpack.c.b16 %v2892, %v2890
        %v2983 = vpack.c.b16 %v2895, %v2893
        %v2984 = vpack.c.b16 %v2896, %v2894
        %v2985 = vpack.c.b16 %v2899, %v2897
        %v2986 = vpack.c.b16 %v2900, %v2898
        %v2987 = vpack.c.b16 %v2903, %v2901
        %v2988 = vpack.c.b16 %v2904, %v2902
        %v2989 = vpack.c.b16 %v2907, %v2905
        %v2990 = vpack.c.b16 %v2908, %v2906
        %v2991 = vpack.c.b16 %v2911, %v2909
        %v2992 = vpack.c.b16 %v2912, %v2910
        %v2993 = vpack.c.b16 %v2915, %v2913
        %v2994 = vpack.c.b16 %v2916, %v2914
        %v2995 = vpack.c.b16 %v2919, %v2917
        %v2996 = vpack.c.b16 %v2920, %v2918
        %v2997 = vpack.c.b16 %v2923, %v2921
        %v2998 = vpack.c.b16 %v2924, %v2922
        %v2999 = vpack.c.b16 %v2927, %v2925
        %v3000 = vpack.c.b16 %v2928, %v2926
        %v3001 = vpack.c.b16 %v2931, %v2929
        %v3002 = vpack.c.b16 %v2932, %v2930
        %v3003 = vpack.c.b16 %v2935, %v2933
        %v3004 = vpack.c.b16 %v2936, %v2934
        %v3005 = vpack.c.b16 %v2939, %v2937
        %v3006 = vpack.c.b16 %v2940, %v2938
        %v3007 = vpack.c.b16 %v2943, %v2941
        %v3008 = vpack.c.b16 %v2944, %v2942
        %v3009 = vpack.c.b16 %v2947, %v2945
        %v3010 = vpack.c.b16 %v2948, %v2946
        %v3011 = vpack.c.b16 %v2951, %v2949
        %v3012 = vpack.c.b16 %v2952, %v2950
        %v3013 = vpack.c.b16 %v2955, %v2953
        %v3014 = vpack.c.b16 %v2956, %v2954
        %v3015 = vpack.c.b16 %v2959, %v2957
        %v3016 = vpack.c.b16 %v2960, %v2958
        %v3017 = vpack.c.b16 %v2963, %v2961
        %v3018 = vpack.c.b16 %v2964, %v2962
        %v3019 = vpack.c.b16 %v2967, %v2965
        %v3020 = vpack.c.b16 %v2968, %v2966
        %v3021 = vpack.c.b16 %v2971, %v2969
        %v3022 = vpack.c.b16 %v2972, %v2970
        %v3023 = vpack.c.b16 %v2975, %v2973
        %v3024 = vpack.c.b16 %v2976, %v2974
        %3073 = vmatprep.subr.bf16.mxu0 %v2978
        %3074 = vmatpush1.bf16.msra.mxu0 %v2977
        %3075 = vmatprep.subr.bf16.mxu0 %v2980
        %3076 = vmatpush1.bf16.msra.mxu0 %v2979
        %3077 = vmatprep.subr.bf16.mxu0 %v2982
        %3078 = vmatpush1.bf16.msra.mxu0 %v2981
        %3079 = vmatprep.subr.bf16.mxu0 %v2984
        %3080 = vmatpush1.bf16.msra.mxu0 %v2983
        %3081 = vmatprep.subr.bf16.mxu0 %v2986
        %3082 = vmatpush1.bf16.msra.mxu0 %v2985
        %3083 = vmatprep.subr.bf16.mxu0 %v2988
        %3084 = vmatpush1.bf16.msra.mxu0 %v2987
        %3085 = vmatprep.subr.bf16.mxu0 %v2990
        %3086 = vmatpush1.bf16.msra.mxu0 %v2989
        %3087 = vmatprep.subr.bf16.mxu0 %v2992
        %3088 = vmatpush1.bf16.msra.mxu0 %v2991
        %3089 = vmatprep.subr.bf16.mxu0 %v2994
        %3090 = vmatpush1.bf16.msra.mxu0 %v2993
        %3091 = vmatprep.subr.bf16.mxu0 %v2996
        %3092 = vmatpush1.bf16.msra.mxu0 %v2995
        %3093 = vmatprep.subr.bf16.mxu0 %v2998
        %3094 = vmatpush1.bf16.msra.mxu0 %v2997
        %3095 = vmatprep.subr.bf16.mxu0 %v3000
        %3096 = vmatpush1.bf16.msra.mxu0 %v2999
        %3097 = vmatprep.subr.bf16.mxu0 %v3002
        %3098 = vmatpush1.bf16.msra.mxu0 %v3001
        %3099 = vmatprep.subr.bf16.mxu0 %v3004
        %3100 = vmatpush1.bf16.msra.mxu0 %v3003
        %3101 = vmatprep.subr.bf16.mxu0 %v3006
        %3102 = vmatpush1.bf16.msra.mxu0 %v3005
        %3103 = vmatprep.subr.bf16.mxu0 %v3008
        %3104 = vmatpush1.bf16.msra.mxu0 %v3007
        %3105 = vmatprep.mubr.bf16.mxu0 %v2337
        %3106 = vmatmul.mubr.bf16.gmra.mrb[0].mxu0 %v2336
        %v3107 = vpop.f32.mrb[0].mxu0
        %v3108 = vadd.f32 %v2827, %v3107
        %v3109 = vpop.f32.mrb[0].mxu0
        %v3110 = vadd.f32 %v2829, %v3109
        %v3111 = vpop.f32.mrb[0].mxu0
        %v3112 = vpop.f32.mrb[0].mxu0
        %3113 = vdwg.mxu0
        %3114 = vmatprep.subr.bf16.mxu0 %v3010
        %3115 = vmatpush1.bf16.msra.mxu0 %v3009
        %3116 = vmatprep.subr.bf16.mxu0 %v3012
        %3117 = vmatpush1.bf16.msra.mxu0 %v3011
        %3118 = vmatprep.subr.bf16.mxu0 %v3014
        %3119 = vmatpush1.bf16.msra.mxu0 %v3013
        %3120 = vmatprep.subr.bf16.mxu0 %v3016
        %3121 = vmatpush1.bf16.msra.mxu0 %v3015
        %3122 = vmatprep.subr.bf16.mxu0 %v3018
        %3123 = vmatpush1.bf16.msra.mxu0 %v3017
        %3124 = vmatprep.subr.bf16.mxu0 %v3020
        %3125 = vmatpush1.bf16.msra.mxu0 %v3019
        %3126 = vmatprep.subr.bf16.mxu0 %v3022
        %3127 = vmatpush1.bf16.msra.mxu0 %v3021
        %3128 = vmatprep.subr.bf16.mxu0 %v3024
        %3129 = vmatpush1.bf16.msra.mxu0 %v3023
        %3130 = vmatprep.subr.bf16.mxu0 0
        %3131 = vmatpush1.bf16.msra.mxu0 0
        %3132 = vmatprep.subr.bf16.mxu0 0
        %3133 = vmatpush1.bf16.msra.mxu0 0
        %3134 = vmatprep.subr.bf16.mxu0 0
        %3135 = vmatpush1.bf16.msra.mxu0 0
        %3136 = vmatprep.subr.bf16.mxu0 0
        %3137 = vmatpush1.bf16.msra.mxu0 0
        %3138 = vmatprep.subr.bf16.mxu0 0
        %3139 = vmatpush1.bf16.msra.mxu0 0
        %3140 = vmatprep.subr.bf16.mxu0 0
        %3141 = vmatpush1.bf16.msra.mxu0 0
        %3142 = vmatprep.subr.bf16.mxu0 0
        %3143 = vmatpush1.bf16.msra.mxu0 0
        %3144 = vmatprep.subr.bf16.mxu0 0
        %3145 = vmatpush1.bf16.msra.mxu0 0
        %3146 = vmatprep.mubr.bf16.mxu0 0
        %3147 = vmatmul.mubr.bf16.gmra.mrb[0].mxu0 %v2338
        %v3148 = vpop.f32.mrb[0].mxu0
        %v3149 = vadd.f32 %v3108, %v3148
        %v3150 = vpop.f32.mrb[0].mxu0
        %v3151 = vadd.f32 %v3110, %v3150
        %v3152 = vpop.f32.mrb[0].mxu0
        %v3153 = vpop.f32.mrb[0].mxu0
        %3154 = vdwg.mxu0
        %s3155 = scalar_lea.vmem [#allocation9], 384
        %v3156 = vld [vmem:[%s3155] sm:$0xff]
        %v3157 = vld [vmem:[%s3155 + $0x8] sm:$0xff]
        %v3158 = vld [vmem:[%s3155 + $0x10] sm:$0xff]
        %v3159 = vld [vmem:[%s3155 + $0x18] sm:$0xff]
        %v3160 = vld [vmem:[%s3155 + $0x20] sm:$0xff]
        %v3161 = vld [vmem:[%s3155 + $0x28] sm:$0xff]
        %v3162 = vld [vmem:[%s3155 + $0x30] sm:$0xff]
        %v3163 = vld [vmem:[%s3155 + $0x38] sm:$0xff]
        %v3164 = vld [vmem:[%s3155 + $0x40] sm:$0xff]
        %v3165 = vld [vmem:[%s3155 + $0x48] sm:$0xff]
        %v3166 = vld [vmem:[%s3155 + $0x50] sm:$0xff]
        %v3167 = vld [vmem:[%s3155 + $0x58] sm:$0xff]
        %v3168 = vld [vmem:[%s3155 + $0x60] sm:$0xff]
        %v3169 = vld [vmem:[%s3155 + $0x68] sm:$0xff]
        %v3170 = vld [vmem:[%s3155 + $0x70] sm:$0xff]
        %v3171 = vld [vmem:[%s3155 + $0x78] sm:$0xff]
        %v3172 = vld [vmem:[%s3155 + $0x80] sm:$0xff]
        %v3173 = vld [vmem:[%s3155 + $0x88] sm:$0xff]
        %v3174 = vld [vmem:[%s3155 + $0x90] sm:$0xff]
        %v3175 = vld [vmem:[%s3155 + $0x98] sm:$0xff]
        %v3176 = vld [vmem:[%s3155 + $0xa0] sm:$0xff]
        %v3177 = vld [vmem:[%s3155 + $0xa8] sm:$0xff]
        %v3178 = vld [vmem:[%s3155 + $0xb0] sm:$0xff]
        %v3179 = vld [vmem:[%s3155 + $0xb8] sm:$0xff]
        %v3180 = vld [vmem:[%s3155 + $0xc0] sm:$0xff]
        %v3181 = vld [vmem:[%s3155 + $0xc8] sm:$0xff]
        %v3182 = vld [vmem:[%s3155 + $0xd0] sm:$0xff]
        %v3183 = vld [vmem:[%s3155 + $0xd8] sm:$0xff]
        %v3184 = vld [vmem:[%s3155 + $0xe0] sm:$0xff]
        %v3185 = vld [vmem:[%s3155 + $0xe8] sm:$0xff]
        %v3186 = vld [vmem:[%s3155 + $0xf0] sm:$0xff]
        %v3187 = vld [vmem:[%s3155 + $0xf8] sm:$0xff]
        %v3188 = vld [vmem:[%s3155 + $0x100] sm:$0xff]
        %v3189 = vld [vmem:[%s3155 + $0x108] sm:$0xff]
        %v3190 = vld [vmem:[%s3155 + $0x110] sm:$0xff]
        %v3191 = vld [vmem:[%s3155 + $0x118] sm:$0xff]
        %v3192 = vld [vmem:[%s3155 + $0x120] sm:$0xff]
        %v3193 = vld [vmem:[%s3155 + $0x128] sm:$0xff]
        %v3194 = vld [vmem:[%s3155 + $0x130] sm:$0xff]
        %v3195 = vld [vmem:[%s3155 + $0x138] sm:$0xff]
        %v3196 = vld [vmem:[%s3155 + $0x140] sm:$0xff]
        %v3197 = vld [vmem:[%s3155 + $0x148] sm:$0xff]
        %v3198 = vld [vmem:[%s3155 + $0x150] sm:$0xff]
        %v3199 = vld [vmem:[%s3155 + $0x158] sm:$0xff]
        %v3200 = vld [vmem:[%s3155 + $0x160] sm:$0xff]
        %v3201 = vld [vmem:[%s3155 + $0x168] sm:$0xff]
        %v3202 = vld [vmem:[%s3155 + $0x170] sm:$0xff]
        %v3203 = vld [vmem:[%s3155 + $0x178] sm:$0xff]
        %v3252 = vunpack.c.l.b16 %v3156
        %v3253 = vunpack.c.h.b16 %v3156
        %v3254 = vunpack.c.l.b16 %v3157
        %v3255 = vunpack.c.h.b16 %v3157
        %v3256 = vunpack.c.l.b16 %v3158
        %v3257 = vunpack.c.h.b16 %v3158
        %v3258 = vunpack.c.l.b16 %v3159
        %v3259 = vunpack.c.h.b16 %v3159
        %v3260 = vunpack.c.l.b16 %v3160
        %v3261 = vunpack.c.h.b16 %v3160
        %v3262 = vunpack.c.l.b16 %v3161
        %v3263 = vunpack.c.h.b16 %v3161
        %v3264 = vunpack.c.l.b16 %v3162
        %v3265 = vunpack.c.h.b16 %v3162
        %v3266 = vunpack.c.l.b16 %v3163
        %v3267 = vunpack.c.h.b16 %v3163
        %v3268 = vunpack.c.l.b16 %v3164
        %v3269 = vunpack.c.h.b16 %v3164
        %v3270 = vunpack.c.l.b16 %v3165
        %v3271 = vunpack.c.h.b16 %v3165
        %v3272 = vunpack.c.l.b16 %v3166
        %v3273 = vunpack.c.h.b16 %v3166
        %v3274 = vunpack.c.l.b16 %v3167
        %v3275 = vunpack.c.h.b16 %v3167
        %v3276 = vunpack.c.l.b16 %v3168
        %v3277 = vunpack.c.h.b16 %v3168
        %v3278 = vunpack.c.l.b16 %v3169
        %v3279 = vunpack.c.h.b16 %v3169
        %v3280 = vunpack.c.l.b16 %v3170
        %v3281 = vunpack.c.h.b16 %v3170
        %v3282 = vunpack.c.l.b16 %v3171
        %v3283 = vunpack.c.h.b16 %v3171
        %v3284 = vunpack.c.l.b16 %v3172
        %v3285 = vunpack.c.h.b16 %v3172
        %v3286 = vunpack.c.l.b16 %v3173
        %v3287 = vunpack.c.h.b16 %v3173
        %v3288 = vunpack.c.l.b16 %v3174
        %v3289 = vunpack.c.h.b16 %v3174
        %v3290 = vunpack.c.l.b16 %v3175
        %v3291 = vunpack.c.h.b16 %v3175
        %v3292 = vunpack.c.l.b16 %v3176
        %v3293 = vunpack.c.h.b16 %v3176
        %v3294 = vunpack.c.l.b16 %v3177
        %v3295 = vunpack.c.h.b16 %v3177
        %v3296 = vunpack.c.l.b16 %v3178
        %v3297 = vunpack.c.h.b16 %v3178
        %v3298 = vunpack.c.l.b16 %v3179
        %v3299 = vunpack.c.h.b16 %v3179
        %v3300 = vunpack.c.l.b16 %v3180
        %v3301 = vunpack.c.h.b16 %v3180
        %v3302 = vunpack.c.l.b16 %v3181
        %v3303 = vunpack.c.h.b16 %v3181
        %v3304 = vunpack.c.l.b16 %v3182
        %v3305 = vunpack.c.h.b16 %v3182
        %v3306 = vunpack.c.l.b16 %v3183
        %v3307 = vunpack.c.h.b16 %v3183
        %v3308 = vunpack.c.l.b16 %v3184
        %v3309 = vunpack.c.h.b16 %v3184
        %v3310 = vunpack.c.l.b16 %v3185
        %v3311 = vunpack.c.h.b16 %v3185
        %v3312 = vunpack.c.l.b16 %v3186
        %v3313 = vunpack.c.h.b16 %v3186
        %v3314 = vunpack.c.l.b16 %v3187
        %v3315 = vunpack.c.h.b16 %v3187
        %v3316 = vunpack.c.l.b16 %v3188
        %v3317 = vunpack.c.h.b16 %v3188
        %v3318 = vunpack.c.l.b16 %v3189
        %v3319 = vunpack.c.h.b16 %v3189
        %v3320 = vunpack.c.l.b16 %v3190
        %v3321 = vunpack.c.h.b16 %v3190
        %v3322 = vunpack.c.l.b16 %v3191
        %v3323 = vunpack.c.h.b16 %v3191
        %v3324 = vunpack.c.l.b16 %v3192
        %v3325 = vunpack.c.h.b16 %v3192
        %v3326 = vunpack.c.l.b16 %v3193
        %v3327 = vunpack.c.h.b16 %v3193
        %v3328 = vunpack.c.l.b16 %v3194
        %v3329 = vunpack.c.h.b16 %v3194
        %v3330 = vunpack.c.l.b16 %v3195
        %v3331 = vunpack.c.h.b16 %v3195
        %v3332 = vunpack.c.l.b16 %v3196
        %v3333 = vunpack.c.h.b16 %v3196
        %v3334 = vunpack.c.l.b16 %v3197
        %v3335 = vunpack.c.h.b16 %v3197
        %v3336 = vunpack.c.l.b16 %v3198
        %v3337 = vunpack.c.h.b16 %v3198
        %v3338 = vunpack.c.l.b16 %v3199
        %v3339 = vunpack.c.h.b16 %v3199
        %v3340 = vunpack.c.l.b16 %v3200
        %v3341 = vunpack.c.h.b16 %v3200
        %v3342 = vunpack.c.l.b16 %v3201
        %v3343 = vunpack.c.h.b16 %v3201
        %v3344 = vunpack.c.l.b16 %v3202
        %v3345 = vunpack.c.h.b16 %v3202
        %v3346 = vunpack.c.l.b16 %v3203
        %v3347 = vunpack.c.h.b16 %v3203
        %v3348 = vpack.c.b16 %v3254, %v3252
        %v3349 = vpack.c.b16 %v3255, %v3253
        %v3350 = vpack.c.b16 %v3258, %v3256
        %v3351 = vpack.c.b16 %v3259, %v3257
        %v3352 = vpack.c.b16 %v3262, %v3260
        %v3353 = vpack.c.b16 %v3263, %v3261
        %v3354 = vpack.c.b16 %v3266, %v3264
        %v3355 = vpack.c.b16 %v3267, %v3265
        %v3356 = vpack.c.b16 %v3270, %v3268
        %v3357 = vpack.c.b16 %v3271, %v3269
        %v3358 = vpack.c.b16 %v3274, %v3272
        %v3359 = vpack.c.b16 %v3275, %v3273
        %v3360 = vpack.c.b16 %v3278, %v3276
        %v3361 = vpack.c.b16 %v3279, %v3277
        %v3362 = vpack.c.b16 %v3282, %v3280
        %v3363 = vpack.c.b16 %v3283, %v3281
        %v3364 = vpack.c.b16 %v3286, %v3284
        %v3365 = vpack.c.b16 %v3287, %v3285
        %v3366 = vpack.c.b16 %v3290, %v3288
        %v3367 = vpack.c.b16 %v3291, %v3289
        %v3368 = vpack.c.b16 %v3294, %v3292
        %v3369 = vpack.c.b16 %v3295, %v3293
        %v3370 = vpack.c.b16 %v3298, %v3296
        %v3371 = vpack.c.b16 %v3299, %v3297
        %v3372 = vpack.c.b16 %v3302, %v3300
        %v3373 = vpack.c.b16 %v3303, %v3301
        %v3374 = vpack.c.b16 %v3306, %v3304
        %v3375 = vpack.c.b16 %v3307, %v3305
        %v3376 = vpack.c.b16 %v3310, %v3308
        %v3377 = vpack.c.b16 %v3311, %v3309
        %v3378 = vpack.c.b16 %v3314, %v3312
        %v3379 = vpack.c.b16 %v3315, %v3313
        %v3380 = vpack.c.b16 %v3318, %v3316
        %v3381 = vpack.c.b16 %v3319, %v3317
        %v3382 = vpack.c.b16 %v3322, %v3320
        %v3383 = vpack.c.b16 %v3323, %v3321
        %v3384 = vpack.c.b16 %v3326, %v3324
        %v3385 = vpack.c.b16 %v3327, %v3325
        %v3386 = vpack.c.b16 %v3330, %v3328
        %v3387 = vpack.c.b16 %v3331, %v3329
        %v3388 = vpack.c.b16 %v3334, %v3332
        %v3389 = vpack.c.b16 %v3335, %v3333
        %v3390 = vpack.c.b16 %v3338, %v3336
        %v3391 = vpack.c.b16 %v3339, %v3337
        %v3392 = vpack.c.b16 %v3342, %v3340
        %v3393 = vpack.c.b16 %v3343, %v3341
        %v3394 = vpack.c.b16 %v3346, %v3344
        %v3395 = vpack.c.b16 %v3347, %v3345
        %3444 = vmatprep.subr.bf16.mxu0 %v3349
        %3445 = vmatpush1.bf16.msra.mxu0 %v3348
        %3446 = vmatprep.subr.bf16.mxu0 %v3351
        %3447 = vmatpush1.bf16.msra.mxu0 %v3350
        %3448 = vmatprep.subr.bf16.mxu0 %v3353
        %3449 = vmatpush1.bf16.msra.mxu0 %v3352
        %3450 = vmatprep.subr.bf16.mxu0 %v3355
        %3451 = vmatpush1.bf16.msra.mxu0 %v3354
        %3452 = vmatprep.subr.bf16.mxu0 %v3357
        %3453 = vmatpush1.bf16.msra.mxu0 %v3356
        %3454 = vmatprep.subr.bf16.mxu0 %v3359
        %3455 = vmatpush1.bf16.msra.mxu0 %v3358
        %3456 = vmatprep.subr.bf16.mxu0 %v3361
        %3457 = vmatpush1.bf16.msra.mxu0 %v3360
        %3458 = vmatprep.subr.bf16.mxu0 %v3363
        %3459 = vmatpush1.bf16.msra.mxu0 %v3362
        %3460 = vmatprep.subr.bf16.mxu0 %v3365
        %3461 = vmatpush1.bf16.msra.mxu0 %v3364
        %3462 = vmatprep.subr.bf16.mxu0 %v3367
        %3463 = vmatpush1.bf16.msra.mxu0 %v3366
        %3464 = vmatprep.subr.bf16.mxu0 %v3369
        %3465 = vmatpush1.bf16.msra.mxu0 %v3368
        %3466 = vmatprep.subr.bf16.mxu0 %v3371
        %3467 = vmatpush1.bf16.msra.mxu0 %v3370
        %3468 = vmatprep.subr.bf16.mxu0 %v3373
        %3469 = vmatpush1.bf16.msra.mxu0 %v3372
        %3470 = vmatprep.subr.bf16.mxu0 %v3375
        %3471 = vmatpush1.bf16.msra.mxu0 %v3374
        %3472 = vmatprep.subr.bf16.mxu0 %v3377
        %3473 = vmatpush1.bf16.msra.mxu0 %v3376
        %3474 = vmatprep.subr.bf16.mxu0 %v3379
        %3475 = vmatpush1.bf16.msra.mxu0 %v3378
        %3476 = vmatprep.mubr.bf16.mxu0 %v2500
        %3477 = vmatmul.mubr.bf16.gmra.mrb[0].mxu0 %v2493
        %v3478 = vpop.f32.mrb[0].mxu0
        %v3479 = vadd.f32 0.0, %v3478
        %v3480 = vpop.f32.mrb[0].mxu0
        %v3481 = vadd.f32 0.0, %v3480
        %v3482 = vpop.f32.mrb[0].mxu0
        %v3483 = vpop.f32.mrb[0].mxu0
        %3484 = vdwg.mxu0
        %3485 = vmatprep.subr.bf16.mxu0 %v3381
        %3486 = vmatpush1.bf16.msra.mxu0 %v3380
        %3487 = vmatprep.subr.bf16.mxu0 %v3383
        %3488 = vmatpush1.bf16.msra.mxu0 %v3382
        %3489 = vmatprep.subr.bf16.mxu0 %v3385
        %3490 = vmatpush1.bf16.msra.mxu0 %v3384
        %3491 = vmatprep.subr.bf16.mxu0 %v3387
        %3492 = vmatpush1.bf16.msra.mxu0 %v3386
        %3493 = vmatprep.subr.bf16.mxu0 %v3389
        %3494 = vmatpush1.bf16.msra.mxu0 %v3388
        %3495 = vmatprep.subr.bf16.mxu0 %v3391
        %3496 = vmatpush1.bf16.msra.mxu0 %v3390
        %3497 = vmatprep.subr.bf16.mxu0 %v3393
        %3498 = vmatpush1.bf16.msra.mxu0 %v3392
        %3499 = vmatprep.subr.bf16.mxu0 %v3395
        %3500 = vmatpush1.bf16.msra.mxu0 %v3394
        %3501 = vmatprep.subr.bf16.mxu0 0
        %3502 = vmatpush1.bf16.msra.mxu0 0
        %3503 = vmatprep.subr.bf16.mxu0 0
        %3504 = vmatpush1.bf16.msra.mxu0 0
        %3505 = vmatprep.subr.bf16.mxu0 0
        %3506 = vmatpush1.bf16.msra.mxu0 0
        %3507 = vmatprep.subr.bf16.mxu0 0
        %3508 = vmatpush1.bf16.msra.mxu0 0
        %3509 = vmatprep.subr.bf16.mxu0 0
        %3510 = vmatpush1.bf16.msra.mxu0 0
        %3511 = vmatprep.subr.bf16.mxu0 0
        %3512 = vmatpush1.bf16.msra.mxu0 0
        %3513 = vmatprep.subr.bf16.mxu0 0
        %3514 = vmatpush1.bf16.msra.mxu0 0
        %3515 = vmatprep.subr.bf16.mxu0 0
        %3516 = vmatpush1.bf16.msra.mxu0 0
        %3517 = vmatprep.mubr.bf16.mxu0 0
        %3518 = vmatmul.mubr.bf16.gmra.mrb[0].mxu0 %v2507
        %v3519 = vpop.f32.mrb[0].mxu0
        %v3520 = vadd.f32 %v3479, %v3519
        %v3521 = vpop.f32.mrb[0].mxu0
        %v3522 = vadd.f32 %v3481, %v3521
        %v3523 = vpop.f32.mrb[0].mxu0
        %v3524 = vpop.f32.mrb[0].mxu0
        %3525 = vdwg.mxu0
        %v3574 = vunpack.c.l.b16 %v2387
        %v3575 = vunpack.c.h.b16 %v2387
        %v3576 = vunpack.c.l.b16 %v2388
        %v3577 = vunpack.c.h.b16 %v2388
        %v3578 = vunpack.c.l.b16 %v2389
        %v3579 = vunpack.c.h.b16 %v2389
        %v3580 = vunpack.c.l.b16 %v2390
        %v3581 = vunpack.c.h.b16 %v2390
        %v3582 = vunpack.c.l.b16 %v2391
        %v3583 = vunpack.c.h.b16 %v2391
        %v3584 = vunpack.c.l.b16 %v2392
        %v3585 = vunpack.c.h.b16 %v2392
        %v3586 = vunpack.c.l.b16 %v2393
        %v3587 = vunpack.c.h.b16 %v2393
        %v3588 = vunpack.c.l.b16 %v2394
        %v3589 = vunpack.c.h.b16 %v2394
        %v3590 = vunpack.c.l.b16 %v2395
        %v3591 = vunpack.c.h.b16 %v2395
        %v3592 = vunpack.c.l.b16 %v2396
        %v3593 = vunpack.c.h.b16 %v2396
        %v3594 = vunpack.c.l.b16 %v2397
        %v3595 = vunpack.c.h.b16 %v2397
        %v3596 = vunpack.c.l.b16 %v2398
        %v3597 = vunpack.c.h.b16 %v2398
        %v3598 = vunpack.c.l.b16 %v2399
        %v3599 = vunpack.c.h.b16 %v2399
        %v3600 = vunpack.c.l.b16 %v2400
        %v3601 = vunpack.c.h.b16 %v2400
        %v3602 = vunpack.c.l.b16 %v2401
        %v3603 = vunpack.c.h.b16 %v2401
        %v3604 = vunpack.c.l.b16 %v2402
        %v3605 = vunpack.c.h.b16 %v2402
        %v3606 = vunpack.c.l.b16 %v2403
        %v3607 = vunpack.c.h.b16 %v2403
        %v3608 = vunpack.c.l.b16 %v2404
        %v3609 = vunpack.c.h.b16 %v2404
        %v3610 = vunpack.c.l.b16 %v2405
        %v3611 = vunpack.c.h.b16 %v2405
        %v3612 = vunpack.c.l.b16 %v2406
        %v3613 = vunpack.c.h.b16 %v2406
        %v3614 = vunpack.c.l.b16 %v2407
        %v3615 = vunpack.c.h.b16 %v2407
        %v3616 = vunpack.c.l.b16 %v2408
        %v3617 = vunpack.c.h.b16 %v2408
        %v3618 = vunpack.c.l.b16 %v2409
        %v3619 = vunpack.c.h.b16 %v2409
        %v3620 = vunpack.c.l.b16 %v2410
        %v3621 = vunpack.c.h.b16 %v2410
        %v3622 = vunpack.c.l.b16 %v2411
        %v3623 = vunpack.c.h.b16 %v2411
        %v3624 = vunpack.c.l.b16 %v2412
        %v3625 = vunpack.c.h.b16 %v2412
        %v3626 = vunpack.c.l.b16 %v2413
        %v3627 = vunpack.c.h.b16 %v2413
        %v3628 = vunpack.c.l.b16 %v2414
        %v3629 = vunpack.c.h.b16 %v2414
        %v3630 = vunpack.c.l.b16 %v2415
        %v3631 = vunpack.c.h.b16 %v2415
        %v3632 = vunpack.c.l.b16 %v2416
        %v3633 = vunpack.c.h.b16 %v2416
        %v3634 = vunpack.c.l.b16 %v2417
        %v3635 = vunpack.c.h.b16 %v2417
        %v3636 = vunpack.c.l.b16 %v2418
        %v3637 = vunpack.c.h.b16 %v2418
        %v3638 = vunpack.c.l.b16 %v2419
        %v3639 = vunpack.c.h.b16 %v2419
        %v3640 = vunpack.c.l.b16 %v2420
        %v3641 = vunpack.c.h.b16 %v2420
        %v3642 = vunpack.c.l.b16 %v2421
        %v3643 = vunpack.c.h.b16 %v2421
        %v3644 = vunpack.c.l.b16 %v2422
        %v3645 = vunpack.c.h.b16 %v2422
        %v3646 = vunpack.c.l.b16 %v2423
        %v3647 = vunpack.c.h.b16 %v2423
        %v3648 = vunpack.c.l.b16 %v2424
        %v3649 = vunpack.c.h.b16 %v2424
        %v3650 = vunpack.c.l.b16 %v2425
        %v3651 = vunpack.c.h.b16 %v2425
        %v3652 = vunpack.c.l.b16 %v2426
        %v3653 = vunpack.c.h.b16 %v2426
        %v3654 = vunpack.c.l.b16 %v2427
        %v3655 = vunpack.c.h.b16 %v2427
        %v3656 = vunpack.c.l.b16 %v2428
        %v3657 = vunpack.c.h.b16 %v2428
        %v3658 = vunpack.c.l.b16 %v2429
        %v3659 = vunpack.c.h.b16 %v2429
        %v3660 = vunpack.c.l.b16 %v2430
        %v3661 = vunpack.c.h.b16 %v2430
        %v3662 = vunpack.c.l.b16 %v2431
        %v3663 = vunpack.c.h.b16 %v2431
        %v3664 = vunpack.c.l.b16 %v2432
        %v3665 = vunpack.c.h.b16 %v2432
        %v3666 = vunpack.c.l.b16 %v2433
        %v3667 = vunpack.c.h.b16 %v2433
        %v3668 = vunpack.c.l.b16 %v2434
        %v3669 = vunpack.c.h.b16 %v2434
        %v3670 = vpack.c.b16 %v3576, %v3574
        %v3671 = vpack.c.b16 %v3577, %v3575
        %v3672 = vpack.c.b16 %v3580, %v3578
        %v3673 = vpack.c.b16 %v3581, %v3579
        %v3674 = vpack.c.b16 %v3584, %v3582
        %v3675 = vpack.c.b16 %v3585, %v3583
        %v3676 = vpack.c.b16 %v3588, %v3586
        %v3677 = vpack.c.b16 %v3589, %v3587
        %v3678 = vpack.c.b16 %v3592, %v3590
        %v3679 = vpack.c.b16 %v3593, %v3591
        %v3680 = vpack.c.b16 %v3596, %v3594
        %v3681 = vpack.c.b16 %v3597, %v3595
        %v3682 = vpack.c.b16 %v3600, %v3598
        %v3683 = vpack.c.b16 %v3601, %v3599
        %v3684 = vpack.c.b16 %v3604, %v3602
        %v3685 = vpack.c.b16 %v3605, %v3603
        %v3686 = vpack.c.b16 %v3608, %v3606
        %v3687 = vpack.c.b16 %v3609, %v3607
        %v3688 = vpack.c.b16 %v3612, %v3610
        %v3689 = vpack.c.b16 %v3613, %v3611
        %v3690 = vpack.c.b16 %v3616, %v3614
        %v3691 = vpack.c.b16 %v3617, %v3615
        %v3692 = vpack.c.b16 %v3620, %v3618
        %v3693 = vpack.c.b16 %v3621, %v3619
        %v3694 = vpack.c.b16 %v3624, %v3622
        %v3695 = vpack.c.b16 %v3625, %v3623
        %v3696 = vpack.c.b16 %v3628, %v3626
        %v3697 = vpack.c.b16 %v3629, %v3627
        %v3698 = vpack.c.b16 %v3632, %v3630
        %v3699 = vpack.c.b16 %v3633, %v3631
        %v3700 = vpack.c.b16 %v3636, %v3634
        %v3701 = vpack.c.b16 %v3637, %v3635
        %v3702 = vpack.c.b16 %v3640, %v3638
        %v3703 = vpack.c.b16 %v3641, %v3639
        %v3704 = vpack.c.b16 %v3644, %v3642
        %v3705 = vpack.c.b16 %v3645, %v3643
        %v3706 = vpack.c.b16 %v3648, %v3646
        %v3707 = vpack.c.b16 %v3649, %v3647
        %v3708 = vpack.c.b16 %v3652, %v3650
        %v3709 = vpack.c.b16 %v3653, %v3651
        %v3710 = vpack.c.b16 %v3656, %v3654
        %v3711 = vpack.c.b16 %v3657, %v3655
        %v3712 = vpack.c.b16 %v3660, %v3658
        %v3713 = vpack.c.b16 %v3661, %v3659
        %v3714 = vpack.c.b16 %v3664, %v3662
        %v3715 = vpack.c.b16 %v3665, %v3663
        %v3716 = vpack.c.b16 %v3668, %v3666
        %v3717 = vpack.c.b16 %v3669, %v3667
        %3766 = vmatprep.subr.bf16.mxu0 %v3671
        %3767 = vmatpush1.bf16.msra.mxu0 %v3670
        %3768 = vmatprep.subr.bf16.mxu0 %v3673
        %3769 = vmatpush1.bf16.msra.mxu0 %v3672
        %3770 = vmatprep.subr.bf16.mxu0 %v3675
        %3771 = vmatpush1.bf16.msra.mxu0 %v3674
        %3772 = vmatprep.subr.bf16.mxu0 %v3677
        %3773 = vmatpush1.bf16.msra.mxu0 %v3676
        %3774 = vmatprep.subr.bf16.mxu0 %v3679
        %3775 = vmatpush1.bf16.msra.mxu0 %v3678
        %3776 = vmatprep.subr.bf16.mxu0 %v3681
        %3777 = vmatpush1.bf16.msra.mxu0 %v3680
        %3778 = vmatprep.subr.bf16.mxu0 %v3683
        %3779 = vmatpush1.bf16.msra.mxu0 %v3682
        %3780 = vmatprep.subr.bf16.mxu0 %v3685
        %3781 = vmatpush1.bf16.msra.mxu0 %v3684
        %3782 = vmatprep.subr.bf16.mxu0 %v3687
        %3783 = vmatpush1.bf16.msra.mxu0 %v3686
        %3784 = vmatprep.subr.bf16.mxu0 %v3689
        %3785 = vmatpush1.bf16.msra.mxu0 %v3688
        %3786 = vmatprep.subr.bf16.mxu0 %v3691
        %3787 = vmatpush1.bf16.msra.mxu0 %v3690
        %3788 = vmatprep.subr.bf16.mxu0 %v3693
        %3789 = vmatpush1.bf16.msra.mxu0 %v3692
        %3790 = vmatprep.subr.bf16.mxu0 %v3695
        %3791 = vmatpush1.bf16.msra.mxu0 %v3694
        %3792 = vmatprep.subr.bf16.mxu0 %v3697
        %3793 = vmatpush1.bf16.msra.mxu0 %v3696
        %3794 = vmatprep.subr.bf16.mxu0 %v3699
        %3795 = vmatpush1.bf16.msra.mxu0 %v3698
        %3796 = vmatprep.subr.bf16.mxu0 %v3701
        %3797 = vmatpush1.bf16.msra.mxu0 %v3700
        %3798 = vmatprep.mubr.bf16.mxu0 %v2337
        %3799 = vmatmul.mubr.bf16.gmra.mrb[0].mxu0 %v2336
        %v3800 = vpop.f32.mrb[0].mxu0
        %v3801 = vadd.f32 %v3520, %v3800
        %v3802 = vpop.f32.mrb[0].mxu0
        %v3803 = vadd.f32 %v3522, %v3802
        %v3804 = vpop.f32.mrb[0].mxu0
        %v3805 = vpop.f32.mrb[0].mxu0
        %3806 = vdwg.mxu0
        %3807 = vmatprep.subr.bf16.mxu0 %v3703
        %3808 = vmatpush1.bf16.msra.mxu0 %v3702
        %3809 = vmatprep.subr.bf16.mxu0 %v3705
        %3810 = vmatpush1.bf16.msra.mxu0 %v3704
        %3811 = vmatprep.subr.bf16.mxu0 %v3707
        %3812 = vmatpush1.bf16.msra.mxu0 %v3706
        %3813 = vmatprep.subr.bf16.mxu0 %v3709
        %3814 = vmatpush1.bf16.msra.mxu0 %v3708
        %3815 = vmatprep.subr.bf16.mxu0 %v3711
        %3816 = vmatpush1.bf16.msra.mxu0 %v3710
        %3817 = vmatprep.subr.bf16.mxu0 %v3713
        %3818 = vmatpush1.bf16.msra.mxu0 %v3712
        %3819 = vmatprep.subr.bf16.mxu0 %v3715
        %3820 = vmatpush1.bf16.msra.mxu0 %v3714
        %3821 = vmatprep.subr.bf16.mxu0 %v3717
        %3822 = vmatpush1.bf16.msra.mxu0 %v3716
        %3823 = vmatprep.subr.bf16.mxu0 0
        %3824 = vmatpush1.bf16.msra.mxu0 0
        %3825 = vmatprep.subr.bf16.mxu0 0
        %3826 = vmatpush1.bf16.msra.mxu0 0
        %3827 = vmatprep.subr.bf16.mxu0 0
        %3828 = vmatpush1.bf16.msra.mxu0 0
        %3829 = vmatprep.subr.bf16.mxu0 0
        %3830 = vmatpush1.bf16.msra.mxu0 0
        %3831 = vmatprep.subr.bf16.mxu0 0
        %3832 = vmatpush1.bf16.msra.mxu0 0
        %3833 = vmatprep.subr.bf16.mxu0 0
        %3834 = vmatpush1.bf16.msra.mxu0 0
        %3835 = vmatprep.subr.bf16.mxu0 0
        %3836 = vmatpush1.bf16.msra.mxu0 0
        %3837 = vmatprep.subr.bf16.mxu0 0
        %3838 = vmatpush1.bf16.msra.mxu0 0
        %3839 = vmatprep.mubr.bf16.mxu0 0
        %3840 = vmatmul.mubr.bf16.gmra.mrb[0].mxu0 %v2338
        %v3841 = vpop.f32.mrb[0].mxu0
        %v3842 = vadd.f32 %v3801, %v3841
        %v3843 = vpop.f32.mrb[0].mxu0
        %v3844 = vadd.f32 %v3803, %v3843
        %v3845 = vpop.f32.mrb[0].mxu0
        %v3846 = vpop.f32.mrb[0].mxu0
        %3847 = vdwg.mxu0
        %s3848 = scalar_lea.vmem [#allocation7], 768
        %v3849 = vld [vmem:[%s3848] sm:$0xff]
        %v3850 = vld [vmem:[%s3848 + $0x8] sm:$0xff]
        %v3851 = vld [vmem:[%s3848 + $0x10] sm:$0xff]
        %v3852 = vld [vmem:[%s3848 + $0x18] sm:$0xff]
        %v3853 = vld [vmem:[%s3848 + $0x20] sm:$0xff]
        %v3854 = vld [vmem:[%s3848 + $0x28] sm:$0xff]
        %v3855 = vld [vmem:[%s3848 + $0x30] sm:$0xff]
        %v3856 = vld [vmem:[%s3848 + $0x38] sm:$0xff]
        %v3857 = vld [vmem:[%s3848 + $0x40] sm:$0xff]
        %v3858 = vld [vmem:[%s3848 + $0x48] sm:$0xff]
        %v3859 = vld [vmem:[%s3848 + $0x50] sm:$0xff]
        %v3860 = vld [vmem:[%s3848 + $0x58] sm:$0xff]
        %v3861 = vld [vmem:[%s3848 + $0x60] sm:$0xff]
        %v3862 = vld [vmem:[%s3848 + $0x68] sm:$0xff]
        %v3863 = vld [vmem:[%s3848 + $0x70] sm:$0xff]
        %v3864 = vld [vmem:[%s3848 + $0x78] sm:$0xff]
        %v3865 = vld [vmem:[%s3848 + $0x80] sm:$0xff]
        %v3866 = vld [vmem:[%s3848 + $0x88] sm:$0xff]
        %v3867 = vld [vmem:[%s3848 + $0x90] sm:$0xff]
        %v3868 = vld [vmem:[%s3848 + $0x98] sm:$0xff]
        %v3869 = vld [vmem:[%s3848 + $0xa0] sm:$0xff]
        %v3870 = vld [vmem:[%s3848 + $0xa8] sm:$0xff]
        %v3871 = vld [vmem:[%s3848 + $0xb0] sm:$0xff]
        %v3872 = vld [vmem:[%s3848 + $0xb8] sm:$0xff]
        %v3873 = vld [vmem:[%s3848 + $0xc0] sm:$0xff]
        %v3874 = vld [vmem:[%s3848 + $0xc8] sm:$0xff]
        %v3875 = vld [vmem:[%s3848 + $0xd0] sm:$0xff]
        %v3876 = vld [vmem:[%s3848 + $0xd8] sm:$0xff]
        %v3877 = vld [vmem:[%s3848 + $0xe0] sm:$0xff]
        %v3878 = vld [vmem:[%s3848 + $0xe8] sm:$0xff]
        %v3879 = vld [vmem:[%s3848 + $0xf0] sm:$0xff]
        %v3880 = vld [vmem:[%s3848 + $0xf8] sm:$0xff]
        %v3881 = vld [vmem:[%s3848 + $0x100] sm:$0xff]
        %v3882 = vld [vmem:[%s3848 + $0x108] sm:$0xff]
        %v3883 = vld [vmem:[%s3848 + $0x110] sm:$0xff]
        %v3884 = vld [vmem:[%s3848 + $0x118] sm:$0xff]
        %v3885 = vld [vmem:[%s3848 + $0x120] sm:$0xff]
        %v3886 = vld [vmem:[%s3848 + $0x128] sm:$0xff]
        %v3887 = vld [vmem:[%s3848 + $0x130] sm:$0xff]
        %v3888 = vld [vmem:[%s3848 + $0x138] sm:$0xff]
        %v3889 = vld [vmem:[%s3848 + $0x140] sm:$0xff]
        %v3890 = vld [vmem:[%s3848 + $0x148] sm:$0xff]
        %v3891 = vld [vmem:[%s3848 + $0x150] sm:$0xff]
        %v3892 = vld [vmem:[%s3848 + $0x158] sm:$0xff]
        %v3893 = vld [vmem:[%s3848 + $0x160] sm:$0xff]
        %v3894 = vld [vmem:[%s3848 + $0x168] sm:$0xff]
        %v3895 = vld [vmem:[%s3848 + $0x170] sm:$0xff]
        %v3896 = vld [vmem:[%s3848 + $0x178] sm:$0xff]
        %v3900 = vrot.slane %v2435, 1
        %v3901 = vrot.slane %v2436, 1
        %v3902 = vrot.slane %v2437, 1
        %v3954 = vunpack.c.l.b16 %v3849
        %v3955 = vunpack.c.h.b16 %v3849
        %v3956 = vunpack.c.l.b16 %v3850
        %v3957 = vunpack.c.h.b16 %v3850
        %v3958 = vunpack.c.l.b16 %v3851
        %v3959 = vunpack.c.h.b16 %v3851
        %v3960 = vunpack.c.l.b16 %v3852
        %v3961 = vunpack.c.h.b16 %v3852
        %v3962 = vunpack.c.l.b16 %v3853
        %v3963 = vunpack.c.h.b16 %v3853
        %v3964 = vunpack.c.l.b16 %v3854
        %v3965 = vunpack.c.h.b16 %v3854
        %v3966 = vunpack.c.l.b16 %v3855
        %v3967 = vunpack.c.h.b16 %v3855
        %v3968 = vunpack.c.l.b16 %v3856
        %v3969 = vunpack.c.h.b16 %v3856
        %v3970 = vunpack.c.l.b16 %v3857
        %v3971 = vunpack.c.h.b16 %v3857
        %v3972 = vunpack.c.l.b16 %v3858
        %v3973 = vunpack.c.h.b16 %v3858
        %v3974 = vunpack.c.l.b16 %v3859
        %v3975 = vunpack.c.h.b16 %v3859
        %v3976 = vunpack.c.l.b16 %v3860
        %v3977 = vunpack.c.h.b16 %v3860
        %v3978 = vunpack.c.l.b16 %v3861
        %v3979 = vunpack.c.h.b16 %v3861
        %v3980 = vunpack.c.l.b16 %v3862
        %v3981 = vunpack.c.h.b16 %v3862
        %v3982 = vunpack.c.l.b16 %v3863
        %v3983 = vunpack.c.h.b16 %v3863
        %v3984 = vunpack.c.l.b16 %v3864
        %v3985 = vunpack.c.h.b16 %v3864
        %v3986 = vunpack.c.l.b16 %v3865
        %v3987 = vunpack.c.h.b16 %v3865
        %v3988 = vunpack.c.l.b16 %v3866
        %v3989 = vunpack.c.h.b16 %v3866
        %v3990 = vunpack.c.l.b16 %v3867
        %v3991 = vunpack.c.h.b16 %v3867
        %v3992 = vunpack.c.l.b16 %v3868
        %v3993 = vunpack.c.h.b16 %v3868
        %v3994 = vunpack.c.l.b16 %v3869
        %v3995 = vunpack.c.h.b16 %v3869
        %v3996 = vunpack.c.l.b16 %v3870
        %v3997 = vunpack.c.h.b16 %v3870
        %v3998 = vunpack.c.l.b16 %v3871
        %v3999 = vunpack.c.h.b16 %v3871
        %v4000 = vunpack.c.l.b16 %v3872
        %v4001 = vunpack.c.h.b16 %v3872
        %v4002 = vunpack.c.l.b16 %v3873
        %v4003 = vunpack.c.h.b16 %v3873
        %v4004 = vunpack.c.l.b16 %v3874
        %v4005 = vunpack.c.h.b16 %v3874
        %v4006 = vunpack.c.l.b16 %v3875
        %v4007 = vunpack.c.h.b16 %v3875
        %v4008 = vunpack.c.l.b16 %v3876
        %v4009 = vunpack.c.h.b16 %v3876
        %v4010 = vunpack.c.l.b16 %v3877
        %v4011 = vunpack.c.h.b16 %v3877
        %v4012 = vunpack.c.l.b16 %v3878
        %v4013 = vunpack.c.h.b16 %v3878
        %v4014 = vunpack.c.l.b16 %v3879
        %v4015 = vunpack.c.h.b16 %v3879
        %v4016 = vunpack.c.l.b16 %v3880
        %v4017 = vunpack.c.h.b16 %v3880
        %v4018 = vunpack.c.l.b16 %v3881
        %v4019 = vunpack.c.h.b16 %v3881
        %v4020 = vunpack.c.l.b16 %v3882
        %v4021 = vunpack.c.h.b16 %v3882
        %v4022 = vunpack.c.l.b16 %v3883
        %v4023 = vunpack.c.h.b16 %v3883
        %v4024 = vunpack.c.l.b16 %v3884
        %v4025 = vunpack.c.h.b16 %v3884
        %v4026 = vunpack.c.l.b16 %v3885
        %v4027 = vunpack.c.h.b16 %v3885
        %v4028 = vunpack.c.l.b16 %v3886
        %v4029 = vunpack.c.h.b16 %v3886
        %v4030 = vunpack.c.l.b16 %v3887
        %v4031 = vunpack.c.h.b16 %v3887
        %v4032 = vunpack.c.l.b16 %v3888
        %v4033 = vunpack.c.h.b16 %v3888
        %v4034 = vunpack.c.l.b16 %v3889
        %v4035 = vunpack.c.h.b16 %v3889
        %v4036 = vunpack.c.l.b16 %v3890
        %v4037 = vunpack.c.h.b16 %v3890
        %v4038 = vunpack.c.l.b16 %v3891
        %v4039 = vunpack.c.h.b16 %v3891
        %v4040 = vunpack.c.l.b16 %v3892
        %v4041 = vunpack.c.h.b16 %v3892
        %v4042 = vunpack.c.l.b16 %v3893
        %v4043 = vunpack.c.h.b16 %v3893
        %v4044 = vunpack.c.l.b16 %v3894
        %v4045 = vunpack.c.h.b16 %v3894
        %v4046 = vunpack.c.l.b16 %v3895
        %v4047 = vunpack.c.h.b16 %v3895
        %v4048 = vunpack.c.l.b16 %v3896
        %v4049 = vunpack.c.h.b16 %v3896
        %v4050 = vpack.c.b16 %v3956, %v3954
        %v4051 = vpack.c.b16 %v3957, %v3955
        %v4052 = vpack.c.b16 %v3960, %v3958
        %v4053 = vpack.c.b16 %v3961, %v3959
        %v4054 = vpack.c.b16 %v3964, %v3962
        %v4055 = vpack.c.b16 %v3965, %v3963
        %v4056 = vpack.c.b16 %v3968, %v3966
        %v4057 = vpack.c.b16 %v3969, %v3967
        %v4058 = vpack.c.b16 %v3972, %v3970
        %v4059 = vpack.c.b16 %v3973, %v3971
        %v4060 = vpack.c.b16 %v3976, %v3974
        %v4061 = vpack.c.b16 %v3977, %v3975
        %v4062 = vpack.c.b16 %v3980, %v3978
        %v4063 = vpack.c.b16 %v3981, %v3979
        %v4064 = vpack.c.b16 %v3984, %v3982
        %v4065 = vpack.c.b16 %v3985, %v3983
        %v4066 = vpack.c.b16 %v3988, %v3986
        %v4067 = vpack.c.b16 %v3989, %v3987
        %v4068 = vpack.c.b16 %v3992, %v3990
        %v4069 = vpack.c.b16 %v3993, %v3991
        %v4070 = vpack.c.b16 %v3996, %v3994
        %v4071 = vpack.c.b16 %v3997, %v3995
        %v4072 = vpack.c.b16 %v4000, %v3998
        %v4073 = vpack.c.b16 %v4001, %v3999
        %v4074 = vpack.c.b16 %v4004, %v4002
        %v4075 = vpack.c.b16 %v4005, %v4003
        %v4076 = vpack.c.b16 %v4008, %v4006
        %v4077 = vpack.c.b16 %v4009, %v4007
        %v4078 = vpack.c.b16 %v4012, %v4010
        %v4079 = vpack.c.b16 %v4013, %v4011
        %v4080 = vpack.c.b16 %v4016, %v4014
        %v4081 = vpack.c.b16 %v4017, %v4015
        %v4082 = vpack.c.b16 %v4020, %v4018
        %v4083 = vpack.c.b16 %v4021, %v4019
        %v4084 = vpack.c.b16 %v4024, %v4022
        %v4085 = vpack.c.b16 %v4025, %v4023
        %v4086 = vpack.c.b16 %v4028, %v4026
        %v4087 = vpack.c.b16 %v4029, %v4027
        %v4088 = vpack.c.b16 %v4032, %v4030
        %v4089 = vpack.c.b16 %v4033, %v4031
        %v4090 = vpack.c.b16 %v4036, %v4034
        %v4091 = vpack.c.b16 %v4037, %v4035
        %v4092 = vpack.c.b16 %v4040, %v4038
        %v4093 = vpack.c.b16 %v4041, %v4039
        %v4094 = vpack.c.b16 %v4044, %v4042
        %v4095 = vpack.c.b16 %v4045, %v4043
        %v4096 = vpack.c.b16 %v4048, %v4046
        %v4097 = vpack.c.b16 %v4049, %v4047
        %4146 = vmatprep.subr.bf16.mxu0 %v4051
        %4147 = vmatpush1.bf16.msra.mxu0 %v4050
        %4148 = vmatprep.subr.bf16.mxu0 %v4053
        %4149 = vmatpush1.bf16.msra.mxu0 %v4052
        %4150 = vmatprep.subr.bf16.mxu0 %v4055
        %4151 = vmatpush1.bf16.msra.mxu0 %v4054
        %4152 = vmatprep.subr.bf16.mxu0 %v4057
        %4153 = vmatpush1.bf16.msra.mxu0 %v4056
        %4154 = vmatprep.subr.bf16.mxu0 %v4059
        %4155 = vmatpush1.bf16.msra.mxu0 %v4058
        %4156 = vmatprep.subr.bf16.mxu0 %v4061
        %4157 = vmatpush1.bf16.msra.mxu0 %v4060
        %4158 = vmatprep.subr.bf16.mxu0 %v4063
        %4159 = vmatpush1.bf16.msra.mxu0 %v4062
        %4160 = vmatprep.subr.bf16.mxu0 %v4065
        %4161 = vmatpush1.bf16.msra.mxu0 %v4064
        %4162 = vmatprep.subr.bf16.mxu0 %v4067
        %4163 = vmatpush1.bf16.msra.mxu0 %v4066
        %4164 = vmatprep.subr.bf16.mxu0 %v4069
        %4165 = vmatpush1.bf16.msra.mxu0 %v4068
        %4166 = vmatprep.subr.bf16.mxu0 %v4071
        %4167 = vmatpush1.bf16.msra.mxu0 %v4070
        %4168 = vmatprep.subr.bf16.mxu0 %v4073
        %4169 = vmatpush1.bf16.msra.mxu0 %v4072
        %4170 = vmatprep.subr.bf16.mxu0 %v4075
        %4171 = vmatpush1.bf16.msra.mxu0 %v4074
        %4172 = vmatprep.subr.bf16.mxu0 %v4077
        %4173 = vmatpush1.bf16.msra.mxu0 %v4076
        %4174 = vmatprep.subr.bf16.mxu0 %v4079
        %4175 = vmatpush1.bf16.msra.mxu0 %v4078
        %4176 = vmatprep.subr.bf16.mxu0 %v4081
        %4177 = vmatpush1.bf16.msra.mxu0 %v4080
        %4178 = vmatprep.mubr.bf16.mxu0 %v3901
        %4179 = vmatmul.mubr.bf16.gmra.mrb[0].mxu0 %v3900
        %v4180 = vpop.f32.mrb[0].mxu0
        %v4181 = vadd.f32 0.0, %v4180
        %v4182 = vpop.f32.mrb[0].mxu0
        %v4183 = vadd.f32 0.0, %v4182
        %v4184 = vpop.f32.mrb[0].mxu0
        %v4185 = vpop.f32.mrb[0].mxu0
        %4186 = vdwg.mxu0
        %4187 = vmatprep.subr.bf16.mxu0 %v4083
        %4188 = vmatpush1.bf16.msra.mxu0 %v4082
        %4189 = vmatprep.subr.bf16.mxu0 %v4085
        %4190 = vmatpush1.bf16.msra.mxu0 %v4084
        %4191 = vmatprep.subr.bf16.mxu0 %v4087
        %4192 = vmatpush1.bf16.msra.mxu0 %v4086
        %4193 = vmatprep.subr.bf16.mxu0 %v4089
        %4194 = vmatpush1.bf16.msra.mxu0 %v4088
        %4195 = vmatprep.subr.bf16.mxu0 %v4091
        %4196 = vmatpush1.bf16.msra.mxu0 %v4090
        %4197 = vmatprep.subr.bf16.mxu0 %v4093
        %4198 = vmatpush1.bf16.msra.mxu0 %v4092
        %4199 = vmatprep.subr.bf16.mxu0 %v4095
        %4200 = vmatpush1.bf16.msra.mxu0 %v4094
        %4201 = vmatprep.subr.bf16.mxu0 %v4097
        %4202 = vmatpush1.bf16.msra.mxu0 %v4096
        %4203 = vmatprep.subr.bf16.mxu0 0
        %4204 = vmatpush1.bf16.msra.mxu0 0
        %4205 = vmatprep.subr.bf16.mxu0 0
        %4206 = vmatpush1.bf16.msra.mxu0 0
        %4207 = vmatprep.subr.bf16.mxu0 0
        %4208 = vmatpush1.bf16.msra.mxu0 0
        %4209 = vmatprep.subr.bf16.mxu0 0
        %4210 = vmatpush1.bf16.msra.mxu0 0
        %4211 = vmatprep.subr.bf16.mxu0 0
        %4212 = vmatpush1.bf16.msra.mxu0 0
        %4213 = vmatprep.subr.bf16.mxu0 0
        %4214 = vmatpush1.bf16.msra.mxu0 0
        %4215 = vmatprep.subr.bf16.mxu0 0
        %4216 = vmatpush1.bf16.msra.mxu0 0
        %4217 = vmatprep.subr.bf16.mxu0 0
        %4218 = vmatpush1.bf16.msra.mxu0 0
        %4219 = vmatprep.mubr.bf16.mxu0 0
        %4220 = vmatmul.mubr.bf16.gmra.mrb[0].mxu0 %v3902
        %v4221 = vpop.f32.mrb[0].mxu0
        %v4222 = vadd.f32 %v4181, %v4221
        %v4223 = vpop.f32.mrb[0].mxu0
        %v4224 = vadd.f32 %v4183, %v4223
        %v4225 = vpop.f32.mrb[0].mxu0
        %v4226 = vpop.f32.mrb[0].mxu0
        %4227 = vdwg.mxu0
        %v4228 = vadd.f32 %v3149, %v4222
        %v4229 = vadd.f32 %v3151, %v4224
        %s4230 = scalar_lea.vmem [#allocation9], 768
        %v4231 = vld [vmem:[%s4230] sm:$0xff]
        %v4232 = vld [vmem:[%s4230 + $0x8] sm:$0xff]
        %v4233 = vld [vmem:[%s4230 + $0x10] sm:$0xff]
        %v4234 = vld [vmem:[%s4230 + $0x18] sm:$0xff]
        %v4235 = vld [vmem:[%s4230 + $0x20] sm:$0xff]
        %v4236 = vld [vmem:[%s4230 + $0x28] sm:$0xff]
        %v4237 = vld [vmem:[%s4230 + $0x30] sm:$0xff]
        %v4238 = vld [vmem:[%s4230 + $0x38] sm:$0xff]
        %v4239 = vld [vmem:[%s4230 + $0x40] sm:$0xff]
        %v4240 = vld [vmem:[%s4230 + $0x48] sm:$0xff]
        %v4241 = vld [vmem:[%s4230 + $0x50] sm:$0xff]
        %v4242 = vld [vmem:[%s4230 + $0x58] sm:$0xff]
        %v4243 = vld [vmem:[%s4230 + $0x60] sm:$0xff]
        %v4244 = vld [vmem:[%s4230 + $0x68] sm:$0xff]
        %v4245 = vld [vmem:[%s4230 + $0x70] sm:$0xff]
        %v4246 = vld [vmem:[%s4230 + $0x78] sm:$0xff]
        %v4247 = vld [vmem:[%s4230 + $0x80] sm:$0xff]
        %v4248 = vld [vmem:[%s4230 + $0x88] sm:$0xff]
        %v4249 = vld [vmem:[%s4230 + $0x90] sm:$0xff]
        %v4250 = vld [vmem:[%s4230 + $0x98] sm:$0xff]
        %v4251 = vld [vmem:[%s4230 + $0xa0] sm:$0xff]
        %v4252 = vld [vmem:[%s4230 + $0xa8] sm:$0xff]
        %v4253 = vld [vmem:[%s4230 + $0xb0] sm:$0xff]
        %v4254 = vld [vmem:[%s4230 + $0xb8] sm:$0xff]
        %v4255 = vld [vmem:[%s4230 + $0xc0] sm:$0xff]
        %v4256 = vld [vmem:[%s4230 + $0xc8] sm:$0xff]
        %v4257 = vld [vmem:[%s4230 + $0xd0] sm:$0xff]
        %v4258 = vld [vmem:[%s4230 + $0xd8] sm:$0xff]
        %v4259 = vld [vmem:[%s4230 + $0xe0] sm:$0xff]
        %v4260 = vld [vmem:[%s4230 + $0xe8] sm:$0xff]
        %v4261 = vld [vmem:[%s4230 + $0xf0] sm:$0xff]
        %v4262 = vld [vmem:[%s4230 + $0xf8] sm:$0xff]
        %v4263 = vld [vmem:[%s4230 + $0x100] sm:$0xff]
        %v4264 = vld [vmem:[%s4230 + $0x108] sm:$0xff]
        %v4265 = vld [vmem:[%s4230 + $0x110] sm:$0xff]
        %v4266 = vld [vmem:[%s4230 + $0x118] sm:$0xff]
        %v4267 = vld [vmem:[%s4230 + $0x120] sm:$0xff]
        %v4268 = vld [vmem:[%s4230 + $0x128] sm:$0xff]
        %v4269 = vld [vmem:[%s4230 + $0x130] sm:$0xff]
        %v4270 = vld [vmem:[%s4230 + $0x138] sm:$0xff]
        %v4271 = vld [vmem:[%s4230 + $0x140] sm:$0xff]
        %v4272 = vld [vmem:[%s4230 + $0x148] sm:$0xff]
        %v4273 = vld [vmem:[%s4230 + $0x150] sm:$0xff]
        %v4274 = vld [vmem:[%s4230 + $0x158] sm:$0xff]
        %v4275 = vld [vmem:[%s4230 + $0x160] sm:$0xff]
        %v4276 = vld [vmem:[%s4230 + $0x168] sm:$0xff]
        %v4277 = vld [vmem:[%s4230 + $0x170] sm:$0xff]
        %v4278 = vld [vmem:[%s4230 + $0x178] sm:$0xff]
        %v4327 = vunpack.c.l.b16 %v4231
        %v4328 = vunpack.c.h.b16 %v4231
        %v4329 = vunpack.c.l.b16 %v4232
        %v4330 = vunpack.c.h.b16 %v4232
        %v4331 = vunpack.c.l.b16 %v4233
        %v4332 = vunpack.c.h.b16 %v4233
        %v4333 = vunpack.c.l.b16 %v4234
        %v4334 = vunpack.c.h.b16 %v4234
        %v4335 = vunpack.c.l.b16 %v4235
        %v4336 = vunpack.c.h.b16 %v4235
        %v4337 = vunpack.c.l.b16 %v4236
        %v4338 = vunpack.c.h.b16 %v4236
        %v4339 = vunpack.c.l.b16 %v4237
        %v4340 = vunpack.c.h.b16 %v4237
        %v4341 = vunpack.c.l.b16 %v4238
        %v4342 = vunpack.c.h.b16 %v4238
        %v4343 = vunpack.c.l.b16 %v4239
        %v4344 = vunpack.c.h.b16 %v4239
        %v4345 = vunpack.c.l.b16 %v4240
        %v4346 = vunpack.c.h.b16 %v4240
        %v4347 = vunpack.c.l.b16 %v4241
        %v4348 = vunpack.c.h.b16 %v4241
        %v4349 = vunpack.c.l.b16 %v4242
        %v4350 = vunpack.c.h.b16 %v4242
        %v4351 = vunpack.c.l.b16 %v4243
        %v4352 = vunpack.c.h.b16 %v4243
        %v4353 = vunpack.c.l.b16 %v4244
        %v4354 = vunpack.c.h.b16 %v4244
        %v4355 = vunpack.c.l.b16 %v4245
        %v4356 = vunpack.c.h.b16 %v4245
        %v4357 = vunpack.c.l.b16 %v4246
        %v4358 = vunpack.c.h.b16 %v4246
        %v4359 = vunpack.c.l.b16 %v4247
        %v4360 = vunpack.c.h.b16 %v4247
        %v4361 = vunpack.c.l.b16 %v4248
        %v4362 = vunpack.c.h.b16 %v4248
        %v4363 = vunpack.c.l.b16 %v4249
        %v4364 = vunpack.c.h.b16 %v4249
        %v4365 = vunpack.c.l.b16 %v4250
        %v4366 = vunpack.c.h.b16 %v4250
        %v4367 = vunpack.c.l.b16 %v4251
        %v4368 = vunpack.c.h.b16 %v4251
        %v4369 = vunpack.c.l.b16 %v4252
        %v4370 = vunpack.c.h.b16 %v4252
        %v4371 = vunpack.c.l.b16 %v4253
        %v4372 = vunpack.c.h.b16 %v4253
        %v4373 = vunpack.c.l.b16 %v4254
        %v4374 = vunpack.c.h.b16 %v4254
        %v4375 = vunpack.c.l.b16 %v4255
        %v4376 = vunpack.c.h.b16 %v4255
        %v4377 = vunpack.c.l.b16 %v4256
        %v4378 = vunpack.c.h.b16 %v4256
        %v4379 = vunpack.c.l.b16 %v4257
        %v4380 = vunpack.c.h.b16 %v4257
        %v4381 = vunpack.c.l.b16 %v4258
        %v4382 = vunpack.c.h.b16 %v4258
        %v4383 = vunpack.c.l.b16 %v4259
        %v4384 = vunpack.c.h.b16 %v4259
        %v4385 = vunpack.c.l.b16 %v4260
        %v4386 = vunpack.c.h.b16 %v4260
        %v4387 = vunpack.c.l.b16 %v4261
        %v4388 = vunpack.c.h.b16 %v4261
        %v4389 = vunpack.c.l.b16 %v4262
        %v4390 = vunpack.c.h.b16 %v4262
        %v4391 = vunpack.c.l.b16 %v4263
        %v4392 = vunpack.c.h.b16 %v4263
        %v4393 = vunpack.c.l.b16 %v4264
        %v4394 = vunpack.c.h.b16 %v4264
        %v4395 = vunpack.c.l.b16 %v4265
        %v4396 = vunpack.c.h.b16 %v4265
        %v4397 = vunpack.c.l.b16 %v4266
        %v4398 = vunpack.c.h.b16 %v4266
        %v4399 = vunpack.c.l.b16 %v4267
        %v4400 = vunpack.c.h.b16 %v4267
        %v4401 = vunpack.c.l.b16 %v4268
        %v4402 = vunpack.c.h.b16 %v4268
        %v4403 = vunpack.c.l.b16 %v4269
        %v4404 = vunpack.c.h.b16 %v4269
        %v4405 = vunpack.c.l.b16 %v4270
        %v4406 = vunpack.c.h.b16 %v4270
        %v4407 = vunpack.c.l.b16 %v4271
        %v4408 = vunpack.c.h.b16 %v4271
        %v4409 = vunpack.c.l.b16 %v4272
        %v4410 = vunpack.c.h.b16 %v4272
        %v4411 = vunpack.c.l.b16 %v4273
        %v4412 = vunpack.c.h.b16 %v4273
        %v4413 = vunpack.c.l.b16 %v4274
        %v4414 = vunpack.c.h.b16 %v4274
        %v4415 = vunpack.c.l.b16 %v4275
        %v4416 = vunpack.c.h.b16 %v4275
        %v4417 = vunpack.c.l.b16 %v4276
        %v4418 = vunpack.c.h.b16 %v4276
        %v4419 = vunpack.c.l.b16 %v4277
        %v4420 = vunpack.c.h.b16 %v4277
        %v4421 = vunpack.c.l.b16 %v4278
        %v4422 = vunpack.c.h.b16 %v4278
        %v4423 = vpack.c.b16 %v4329, %v4327
        %v4424 = vpack.c.b16 %v4330, %v4328
        %v4425 = vpack.c.b16 %v4333, %v4331
        %v4426 = vpack.c.b16 %v4334, %v4332
        %v4427 = vpack.c.b16 %v4337, %v4335
        %v4428 = vpack.c.b16 %v4338, %v4336
        %v4429 = vpack.c.b16 %v4341, %v4339
        %v4430 = vpack.c.b16 %v4342, %v4340
        %v4431 = vpack.c.b16 %v4345, %v4343
        %v4432 = vpack.c.b16 %v4346, %v4344
        %v4433 = vpack.c.b16 %v4349, %v4347
        %v4434 = vpack.c.b16 %v4350, %v4348
        %v4435 = vpack.c.b16 %v4353, %v4351
        %v4436 = vpack.c.b16 %v4354, %v4352
        %v4437 = vpack.c.b16 %v4357, %v4355
        %v4438 = vpack.c.b16 %v4358, %v4356
        %v4439 = vpack.c.b16 %v4361, %v4359
        %v4440 = vpack.c.b16 %v4362, %v4360
        %v4441 = vpack.c.b16 %v4365, %v4363
        %v4442 = vpack.c.b16 %v4366, %v4364
        %v4443 = vpack.c.b16 %v4369, %v4367
        %v4444 = vpack.c.b16 %v4370, %v4368
        %v4445 = vpack.c.b16 %v4373, %v4371
        %v4446 = vpack.c.b16 %v4374, %v4372
        %v4447 = vpack.c.b16 %v4377, %v4375
        %v4448 = vpack.c.b16 %v4378, %v4376
        %v4449 = vpack.c.b16 %v4381, %v4379
        %v4450 = vpack.c.b16 %v4382, %v4380
        %v4451 = vpack.c.b16 %v4385, %v4383
        %v4452 = vpack.c.b16 %v4386, %v4384
        %v4453 = vpack.c.b16 %v4389, %v4387
        %v4454 = vpack.c.b16 %v4390, %v4388
        %v4455 = vpack.c.b16 %v4393, %v4391
        %v4456 = vpack.c.b16 %v4394, %v4392
        %v4457 = vpack.c.b16 %v4397, %v4395
        %v4458 = vpack.c.b16 %v4398, %v4396
        %v4459 = vpack.c.b16 %v4401, %v4399
        %v4460 = vpack.c.b16 %v4402, %v4400
        %v4461 = vpack.c.b16 %v4405, %v4403
        %v4462 = vpack.c.b16 %v4406, %v4404
        %v4463 = vpack.c.b16 %v4409, %v4407
        %v4464 = vpack.c.b16 %v4410, %v4408
        %v4465 = vpack.c.b16 %v4413, %v4411
        %v4466 = vpack.c.b16 %v4414, %v4412
        %v4467 = vpack.c.b16 %v4417, %v4415
        %v4468 = vpack.c.b16 %v4418, %v4416
        %v4469 = vpack.c.b16 %v4421, %v4419
        %v4470 = vpack.c.b16 %v4422, %v4420
        %4519 = vmatprep.subr.bf16.mxu0 %v4424
        %4520 = vmatpush1.bf16.msra.mxu0 %v4423
        %4521 = vmatprep.subr.bf16.mxu0 %v4426
        %4522 = vmatpush1.bf16.msra.mxu0 %v4425
        %4523 = vmatprep.subr.bf16.mxu0 %v4428
        %4524 = vmatpush1.bf16.msra.mxu0 %v4427
        %4525 = vmatprep.subr.bf16.mxu0 %v4430
        %4526 = vmatpush1.bf16.msra.mxu0 %v4429
        %4527 = vmatprep.subr.bf16.mxu0 %v4432
        %4528 = vmatpush1.bf16.msra.mxu0 %v4431
        %4529 = vmatprep.subr.bf16.mxu0 %v4434
        %4530 = vmatpush1.bf16.msra.mxu0 %v4433
        %4531 = vmatprep.subr.bf16.mxu0 %v4436
        %4532 = vmatpush1.bf16.msra.mxu0 %v4435
        %4533 = vmatprep.subr.bf16.mxu0 %v4438
        %4534 = vmatpush1.bf16.msra.mxu0 %v4437
        %4535 = vmatprep.subr.bf16.mxu0 %v4440
        %4536 = vmatpush1.bf16.msra.mxu0 %v4439
        %4537 = vmatprep.subr.bf16.mxu0 %v4442
        %4538 = vmatpush1.bf16.msra.mxu0 %v4441
        %4539 = vmatprep.subr.bf16.mxu0 %v4444
        %4540 = vmatpush1.bf16.msra.mxu0 %v4443
        %4541 = vmatprep.subr.bf16.mxu0 %v4446
        %4542 = vmatpush1.bf16.msra.mxu0 %v4445
        %4543 = vmatprep.subr.bf16.mxu0 %v4448
        %4544 = vmatpush1.bf16.msra.mxu0 %v4447
        %4545 = vmatprep.subr.bf16.mxu0 %v4450
        %4546 = vmatpush1.bf16.msra.mxu0 %v4449
        %4547 = vmatprep.subr.bf16.mxu0 %v4452
        %4548 = vmatpush1.bf16.msra.mxu0 %v4451
        %4549 = vmatprep.subr.bf16.mxu0 %v4454
        %4550 = vmatpush1.bf16.msra.mxu0 %v4453
        %4551 = vmatprep.mubr.bf16.mxu0 %v3901
        %4552 = vmatmul.mubr.bf16.gmra.mrb[0].mxu0 %v3900
        %v4553 = vpop.f32.mrb[0].mxu0
        %v4554 = vadd.f32 0.0, %v4553
        %v4555 = vpop.f32.mrb[0].mxu0
        %v4556 = vadd.f32 0.0, %v4555
        %v4557 = vpop.f32.mrb[0].mxu0
        %v4558 = vpop.f32.mrb[0].mxu0
        %4559 = vdwg.mxu0
        %4560 = vmatprep.subr.bf16.mxu0 %v4456
        %4561 = vmatpush1.bf16.msra.mxu0 %v4455
        %4562 = vmatprep.subr.bf16.mxu0 %v4458
        %4563 = vmatpush1.bf16.msra.mxu0 %v4457
        %4564 = vmatprep.subr.bf16.mxu0 %v4460
        %4565 = vmatpush1.bf16.msra.mxu0 %v4459
        %4566 = vmatprep.subr.bf16.mxu0 %v4462
        %4567 = vmatpush1.bf16.msra.mxu0 %v4461
        %4568 = vmatprep.subr.bf16.mxu0 %v4464
        %4569 = vmatpush1.bf16.msra.mxu0 %v4463
        %4570 = vmatprep.subr.bf16.mxu0 %v4466
        %4571 = vmatpush1.bf16.msra.mxu0 %v4465
        %4572 = vmatprep.subr.bf16.mxu0 %v4468
        %4573 = vmatpush1.bf16.msra.mxu0 %v4467
        %4574 = vmatprep.subr.bf16.mxu0 %v4470
        %4575 = vmatpush1.bf16.msra.mxu0 %v4469
        %4576 = vmatprep.subr.bf16.mxu0 0
        %4577 = vmatpush1.bf16.msra.mxu0 0
        %4578 = vmatprep.subr.bf16.mxu0 0
        %4579 = vmatpush1.bf16.msra.mxu0 0
        %4580 = vmatprep.subr.bf16.mxu0 0
        %4581 = vmatpush1.bf16.msra.mxu0 0
        %4582 = vmatprep.subr.bf16.mxu0 0
        %4583 = vmatpush1.bf16.msra.mxu0 0
        %4584 = vmatprep.subr.bf16.mxu0 0
        %4585 = vmatpush1.bf16.msra.mxu0 0
        %4586 = vmatprep.subr.bf16.mxu0 0
        %4587 = vmatpush1.bf16.msra.mxu0 0
        %4588 = vmatprep.subr.bf16.mxu0 0
        %4589 = vmatpush1.bf16.msra.mxu0 0
        %4590 = vmatprep.subr.bf16.mxu0 0
        %4591 = vmatpush1.bf16.msra.mxu0 0
        %4592 = vmatprep.mubr.bf16.mxu0 0
        %4593 = vmatmul.mubr.bf16.gmra.mrb[0].mxu0 %v3902
        %v4594 = vpop.f32.mrb[0].mxu0
        %v4595 = vadd.f32 %v4554, %v4594
        %v4596 = vpop.f32.mrb[0].mxu0
        %v4597 = vadd.f32 %v4556, %v4596
        %v4598 = vpop.f32.mrb[0].mxu0
        %v4599 = vpop.f32.mrb[0].mxu0
        %4600 = vdwg.mxu0
        %v4601 = vadd.f32 %v3842, %v4595
        %v4602 = vadd.f32 %v3844, %v4597
        %s4603 = scalar_lea.vmem [#allocation7], 1152
        %v4604 = vld [vmem:[%s4603] sm:$0xff]
        %v4605 = vld [vmem:[%s4603 + $0x8] sm:$0xff]
        %v4606 = vld [vmem:[%s4603 + $0x10] sm:$0xff]
        %v4607 = vld [vmem:[%s4603 + $0x18] sm:$0xff]
        %v4608 = vld [vmem:[%s4603 + $0x20] sm:$0xff]
        %v4609 = vld [vmem:[%s4603 + $0x28] sm:$0xff]
        %v4610 = vld [vmem:[%s4603 + $0x30] sm:$0xff]
        %v4611 = vld [vmem:[%s4603 + $0x38] sm:$0xff]
        %v4612 = vld [vmem:[%s4603 + $0x40] sm:$0xff]
        %v4613 = vld [vmem:[%s4603 + $0x48] sm:$0xff]
        %v4614 = vld [vmem:[%s4603 + $0x50] sm:$0xff]
        %v4615 = vld [vmem:[%s4603 + $0x58] sm:$0xff]
        %v4616 = vld [vmem:[%s4603 + $0x60] sm:$0xff]
        %v4617 = vld [vmem:[%s4603 + $0x68] sm:$0xff]
        %v4618 = vld [vmem:[%s4603 + $0x70] sm:$0xff]
        %v4619 = vld [vmem:[%s4603 + $0x78] sm:$0xff]
        %v4620 = vld [vmem:[%s4603 + $0x80] sm:$0xff]
        %v4621 = vld [vmem:[%s4603 + $0x88] sm:$0xff]
        %v4622 = vld [vmem:[%s4603 + $0x90] sm:$0xff]
        %v4623 = vld [vmem:[%s4603 + $0x98] sm:$0xff]
        %v4624 = vld [vmem:[%s4603 + $0xa0] sm:$0xff]
        %v4625 = vld [vmem:[%s4603 + $0xa8] sm:$0xff]
        %v4626 = vld [vmem:[%s4603 + $0xb0] sm:$0xff]
        %v4627 = vld [vmem:[%s4603 + $0xb8] sm:$0xff]
        %v4628 = vld [vmem:[%s4603 + $0xc0] sm:$0xff]
        %v4629 = vld [vmem:[%s4603 + $0xc8] sm:$0xff]
        %v4630 = vld [vmem:[%s4603 + $0xd0] sm:$0xff]
        %v4631 = vld [vmem:[%s4603 + $0xd8] sm:$0xff]
        %v4632 = vld [vmem:[%s4603 + $0xe0] sm:$0xff]
        %v4633 = vld [vmem:[%s4603 + $0xe8] sm:$0xff]
        %v4634 = vld [vmem:[%s4603 + $0xf0] sm:$0xff]
        %v4635 = vld [vmem:[%s4603 + $0xf8] sm:$0xff]
        %v4636 = vld [vmem:[%s4603 + $0x100] sm:$0xff]
        %v4637 = vld [vmem:[%s4603 + $0x108] sm:$0xff]
        %v4638 = vld [vmem:[%s4603 + $0x110] sm:$0xff]
        %v4639 = vld [vmem:[%s4603 + $0x118] sm:$0xff]
        %v4640 = vld [vmem:[%s4603 + $0x120] sm:$0xff]
        %v4641 = vld [vmem:[%s4603 + $0x128] sm:$0xff]
        %v4642 = vld [vmem:[%s4603 + $0x130] sm:$0xff]
        %v4643 = vld [vmem:[%s4603 + $0x138] sm:$0xff]
        %v4644 = vld [vmem:[%s4603 + $0x140] sm:$0xff]
        %v4645 = vld [vmem:[%s4603 + $0x148] sm:$0xff]
        %v4646 = vld [vmem:[%s4603 + $0x150] sm:$0xff]
        %v4647 = vld [vmem:[%s4603 + $0x158] sm:$0xff]
        %v4648 = vld [vmem:[%s4603 + $0x160] sm:$0xff]
        %v4649 = vld [vmem:[%s4603 + $0x168] sm:$0xff]
        %v4650 = vld [vmem:[%s4603 + $0x170] sm:$0xff]
        %v4651 = vld [vmem:[%s4603 + $0x178] sm:$0xff]
        %v4652 = vrot.slane %v2488, 1
        %v4653 = vrot.slane %v2490, 2
        %v4654 = vor.u32 %v4652, %v4653
        %v4655 = vrot.slane %v2495, 1
        %v4656 = vrot.slane %v2497, 2
        %v4657 = vor.u32 %v4655, %v4656
        %v4658 = vrot.slane %v2502, 1
        %v4659 = vrot.slane %v2504, 2
        %v4660 = vor.u32 %v4658, %v4659
        %v4712 = vunpack.c.l.b16 %v4604
        %v4713 = vunpack.c.h.b16 %v4604
        %v4714 = vunpack.c.l.b16 %v4605
        %v4715 = vunpack.c.h.b16 %v4605
        %v4716 = vunpack.c.l.b16 %v4606
        %v4717 = vunpack.c.h.b16 %v4606
        %v4718 = vunpack.c.l.b16 %v4607
        %v4719 = vunpack.c.h.b16 %v4607
        %v4720 = vunpack.c.l.b16 %v4608
        %v4721 = vunpack.c.h.b16 %v4608
        %v4722 = vunpack.c.l.b16 %v4609
        %v4723 = vunpack.c.h.b16 %v4609
        %v4724 = vunpack.c.l.b16 %v4610
        %v4725 = vunpack.c.h.b16 %v4610
        %v4726 = vunpack.c.l.b16 %v4611
        %v4727 = vunpack.c.h.b16 %v4611
        %v4728 = vunpack.c.l.b16 %v4612
        %v4729 = vunpack.c.h.b16 %v4612
        %v4730 = vunpack.c.l.b16 %v4613
        %v4731 = vunpack.c.h.b16 %v4613
        %v4732 = vunpack.c.l.b16 %v4614
        %v4733 = vunpack.c.h.b16 %v4614
        %v4734 = vunpack.c.l.b16 %v4615
        %v4735 = vunpack.c.h.b16 %v4615
        %v4736 = vunpack.c.l.b16 %v4616
        %v4737 = vunpack.c.h.b16 %v4616
        %v4738 = vunpack.c.l.b16 %v4617
        %v4739 = vunpack.c.h.b16 %v4617
        %v4740 = vunpack.c.l.b16 %v4618
        %v4741 = vunpack.c.h.b16 %v4618
        %v4742 = vunpack.c.l.b16 %v4619
        %v4743 = vunpack.c.h.b16 %v4619
        %v4744 = vunpack.c.l.b16 %v4620
        %v4745 = vunpack.c.h.b16 %v4620
        %v4746 = vunpack.c.l.b16 %v4621
        %v4747 = vunpack.c.h.b16 %v4621
        %v4748 = vunpack.c.l.b16 %v4622
        %v4749 = vunpack.c.h.b16 %v4622
        %v4750 = vunpack.c.l.b16 %v4623
        %v4751 = vunpack.c.h.b16 %v4623
        %v4752 = vunpack.c.l.b16 %v4624
        %v4753 = vunpack.c.h.b16 %v4624
        %v4754 = vunpack.c.l.b16 %v4625
        %v4755 = vunpack.c.h.b16 %v4625
        %v4756 = vunpack.c.l.b16 %v4626
        %v4757 = vunpack.c.h.b16 %v4626
        %v4758 = vunpack.c.l.b16 %v4627
        %v4759 = vunpack.c.h.b16 %v4627
        %v4760 = vunpack.c.l.b16 %v4628
        %v4761 = vunpack.c.h.b16 %v4628
        %v4762 = vunpack.c.l.b16 %v4629
        %v4763 = vunpack.c.h.b16 %v4629
        %v4764 = vunpack.c.l.b16 %v4630
        %v4765 = vunpack.c.h.b16 %v4630
        %v4766 = vunpack.c.l.b16 %v4631
        %v4767 = vunpack.c.h.b16 %v4631
        %v4768 = vunpack.c.l.b16 %v4632
        %v4769 = vunpack.c.h.b16 %v4632
        %v4770 = vunpack.c.l.b16 %v4633
        %v4771 = vunpack.c.h.b16 %v4633
        %v4772 = vunpack.c.l.b16 %v4634
        %v4773 = vunpack.c.h.b16 %v4634
        %v4774 = vunpack.c.l.b16 %v4635
        %v4775 = vunpack.c.h.b16 %v4635
        %v4776 = vunpack.c.l.b16 %v4636
        %v4777 = vunpack.c.h.b16 %v4636
        %v4778 = vunpack.c.l.b16 %v4637
        %v4779 = vunpack.c.h.b16 %v4637
        %v4780 = vunpack.c.l.b16 %v4638
        %v4781 = vunpack.c.h.b16 %v4638
        %v4782 = vunpack.c.l.b16 %v4639
        %v4783 = vunpack.c.h.b16 %v4639
        %v4784 = vunpack.c.l.b16 %v4640
        %v4785 = vunpack.c.h.b16 %v4640
        %v4786 = vunpack.c.l.b16 %v4641
        %v4787 = vunpack.c.h.b16 %v4641
        %v4788 = vunpack.c.l.b16 %v4642
        %v4789 = vunpack.c.h.b16 %v4642
        %v4790 = vunpack.c.l.b16 %v4643
        %v4791 = vunpack.c.h.b16 %v4643
        %v4792 = vunpack.c.l.b16 %v4644
        %v4793 = vunpack.c.h.b16 %v4644
        %v4794 = vunpack.c.l.b16 %v4645
        %v4795 = vunpack.c.h.b16 %v4645
        %v4796 = vunpack.c.l.b16 %v4646
        %v4797 = vunpack.c.h.b16 %v4646
        %v4798 = vunpack.c.l.b16 %v4647
        %v4799 = vunpack.c.h.b16 %v4647
        %v4800 = vunpack.c.l.b16 %v4648
        %v4801 = vunpack.c.h.b16 %v4648
        %v4802 = vunpack.c.l.b16 %v4649
        %v4803 = vunpack.c.h.b16 %v4649
        %v4804 = vunpack.c.l.b16 %v4650
        %v4805 = vunpack.c.h.b16 %v4650
        %v4806 = vunpack.c.l.b16 %v4651
        %v4807 = vunpack.c.h.b16 %v4651
        %v4808 = vpack.c.b16 %v4714, %v4712
        %v4809 = vpack.c.b16 %v4715, %v4713
        %v4810 = vpack.c.b16 %v4718, %v4716
        %v4811 = vpack.c.b16 %v4719, %v4717
        %v4812 = vpack.c.b16 %v4722, %v4720
        %v4813 = vpack.c.b16 %v4723, %v4721
        %v4814 = vpack.c.b16 %v4726, %v4724
        %v4815 = vpack.c.b16 %v4727, %v4725
        %v4816 = vpack.c.b16 %v4730, %v4728
        %v4817 = vpack.c.b16 %v4731, %v4729
        %v4818 = vpack.c.b16 %v4734, %v4732
        %v4819 = vpack.c.b16 %v4735, %v4733
        %v4820 = vpack.c.b16 %v4738, %v4736
        %v4821 = vpack.c.b16 %v4739, %v4737
        %v4822 = vpack.c.b16 %v4742, %v4740
        %v4823 = vpack.c.b16 %v4743, %v4741
        %v4824 = vpack.c.b16 %v4746, %v4744
        %v4825 = vpack.c.b16 %v4747, %v4745
        %v4826 = vpack.c.b16 %v4750, %v4748
        %v4827 = vpack.c.b16 %v4751, %v4749
        %v4828 = vpack.c.b16 %v4754, %v4752
        %v4829 = vpack.c.b16 %v4755, %v4753
        %v4830 = vpack.c.b16 %v4758, %v4756
        %v4831 = vpack.c.b16 %v4759, %v4757
        %v4832 = vpack.c.b16 %v4762, %v4760
        %v4833 = vpack.c.b16 %v4763, %v4761
        %v4834 = vpack.c.b16 %v4766, %v4764
        %v4835 = vpack.c.b16 %v4767, %v4765
        %v4836 = vpack.c.b16 %v4770, %v4768
        %v4837 = vpack.c.b16 %v4771, %v4769
        %v4838 = vpack.c.b16 %v4774, %v4772
        %v4839 = vpack.c.b16 %v4775, %v4773
        %v4840 = vpack.c.b16 %v4778, %v4776
        %v4841 = vpack.c.b16 %v4779, %v4777
        %v4842 = vpack.c.b16 %v4782, %v4780
        %v4843 = vpack.c.b16 %v4783, %v4781
        %v4844 = vpack.c.b16 %v4786, %v4784
        %v4845 = vpack.c.b16 %v4787, %v4785
        %v4846 = vpack.c.b16 %v4790, %v4788
        %v4847 = vpack.c.b16 %v4791, %v4789
        %v4848 = vpack.c.b16 %v4794, %v4792
        %v4849 = vpack.c.b16 %v4795, %v4793
        %v4850 = vpack.c.b16 %v4798, %v4796
        %v4851 = vpack.c.b16 %v4799, %v4797
        %v4852 = vpack.c.b16 %v4802, %v4800
        %v4853 = vpack.c.b16 %v4803, %v4801
        %v4854 = vpack.c.b16 %v4806, %v4804
        %v4855 = vpack.c.b16 %v4807, %v4805
        %4904 = vmatprep.subr.bf16.mxu0 %v4809
        %4905 = vmatpush1.bf16.msra.mxu0 %v4808
        %4906 = vmatprep.subr.bf16.mxu0 %v4811
        %4907 = vmatpush1.bf16.msra.mxu0 %v4810
        %4908 = vmatprep.subr.bf16.mxu0 %v4813
        %4909 = vmatpush1.bf16.msra.mxu0 %v4812
        %4910 = vmatprep.subr.bf16.mxu0 %v4815
        %4911 = vmatpush1.bf16.msra.mxu0 %v4814
        %4912 = vmatprep.subr.bf16.mxu0 %v4817
        %4913 = vmatpush1.bf16.msra.mxu0 %v4816
        %4914 = vmatprep.subr.bf16.mxu0 %v4819
        %4915 = vmatpush1.bf16.msra.mxu0 %v4818
        %4916 = vmatprep.subr.bf16.mxu0 %v4821
        %4917 = vmatpush1.bf16.msra.mxu0 %v4820
        %4918 = vmatprep.subr.bf16.mxu0 %v4823
        %4919 = vmatpush1.bf16.msra.mxu0 %v4822
        %4920 = vmatprep.subr.bf16.mxu0 %v4825
        %4921 = vmatpush1.bf16.msra.mxu0 %v4824
        %4922 = vmatprep.subr.bf16.mxu0 %v4827
        %4923 = vmatpush1.bf16.msra.mxu0 %v4826
        %4924 = vmatprep.subr.bf16.mxu0 %v4829
        %4925 = vmatpush1.bf16.msra.mxu0 %v4828
        %4926 = vmatprep.subr.bf16.mxu0 %v4831
        %4927 = vmatpush1.bf16.msra.mxu0 %v4830
        %4928 = vmatprep.subr.bf16.mxu0 %v4833
        %4929 = vmatpush1.bf16.msra.mxu0 %v4832
        %4930 = vmatprep.subr.bf16.mxu0 %v4835
        %4931 = vmatpush1.bf16.msra.mxu0 %v4834
        %4932 = vmatprep.subr.bf16.mxu0 %v4837
        %4933 = vmatpush1.bf16.msra.mxu0 %v4836
        %4934 = vmatprep.subr.bf16.mxu0 %v4839
        %4935 = vmatpush1.bf16.msra.mxu0 %v4838
        %4936 = vmatprep.mubr.bf16.mxu0 %v4657
        %4937 = vmatmul.mubr.bf16.gmra.mrb[0].mxu0 %v4654
        %v4938 = vpop.f32.mrb[0].mxu0
        %v4939 = vadd.f32 0.0, %v4938
        %v4940 = vpop.f32.mrb[0].mxu0
        %v4941 = vadd.f32 0.0, %v4940
        %v4942 = vpop.f32.mrb[0].mxu0
        %v4943 = vpop.f32.mrb[0].mxu0
        %4944 = vdwg.mxu0
        %4945 = vmatprep.subr.bf16.mxu0 %v4841
        %4946 = vmatpush1.bf16.msra.mxu0 %v4840
        %4947 = vmatprep.subr.bf16.mxu0 %v4843
        %4948 = vmatpush1.bf16.msra.mxu0 %v4842
        %4949 = vmatprep.subr.bf16.mxu0 %v4845
        %4950 = vmatpush1.bf16.msra.mxu0 %v4844
        %4951 = vmatprep.subr.bf16.mxu0 %v4847
        %4952 = vmatpush1.bf16.msra.mxu0 %v4846
        %4953 = vmatprep.subr.bf16.mxu0 %v4849
        %4954 = vmatpush1.bf16.msra.mxu0 %v4848
        %4955 = vmatprep.subr.bf16.mxu0 %v4851
        %4956 = vmatpush1.bf16.msra.mxu0 %v4850
        %4957 = vmatprep.subr.bf16.mxu0 %v4853
        %4958 = vmatpush1.bf16.msra.mxu0 %v4852
        %4959 = vmatprep.subr.bf16.mxu0 %v4855
        %4960 = vmatpush1.bf16.msra.mxu0 %v4854
        %4961 = vmatprep.subr.bf16.mxu0 0
        %4962 = vmatpush1.bf16.msra.mxu0 0
        %4963 = vmatprep.subr.bf16.mxu0 0
        %4964 = vmatpush1.bf16.msra.mxu0 0
        %4965 = vmatprep.subr.bf16.mxu0 0
        %4966 = vmatpush1.bf16.msra.mxu0 0
        %4967 = vmatprep.subr.bf16.mxu0 0
        %4968 = vmatpush1.bf16.msra.mxu0 0
        %4969 = vmatprep.subr.bf16.mxu0 0
        %4970 = vmatpush1.bf16.msra.mxu0 0
        %4971 = vmatprep.subr.bf16.mxu0 0
        %4972 = vmatpush1.bf16.msra.mxu0 0
        %4973 = vmatprep.subr.bf16.mxu0 0
        %4974 = vmatpush1.bf16.msra.mxu0 0
        %4975 = vmatprep.subr.bf16.mxu0 0
        %4976 = vmatpush1.bf16.msra.mxu0 0
        %4977 = vmatprep.mubr.bf16.mxu0 0
        %4978 = vmatmul.mubr.bf16.gmra.mrb[0].mxu0 %v4660
        %v4979 = vpop.f32.mrb[0].mxu0
        %v4980 = vadd.f32 %v4939, %v4979
        %v4981 = vpop.f32.mrb[0].mxu0
        %v4982 = vadd.f32 %v4941, %v4981
        %v4983 = vpop.f32.mrb[0].mxu0
        %v4984 = vpop.f32.mrb[0].mxu0
        %4985 = vdwg.mxu0
        %v4986 = vadd.f32 %v4228, %v4980
        %v4987 = vadd.f32 %v4229, %v4982
        %s4988 = scalar_lea.vmem [#allocation9], 1152
        %v4989 = vld [vmem:[%s4988] sm:$0xff]
        %v4990 = vld [vmem:[%s4988 + $0x8] sm:$0xff]
        %v4991 = vld [vmem:[%s4988 + $0x10] sm:$0xff]
        %v4992 = vld [vmem:[%s4988 + $0x18] sm:$0xff]
        %v4993 = vld [vmem:[%s4988 + $0x20] sm:$0xff]
        %v4994 = vld [vmem:[%s4988 + $0x28] sm:$0xff]
        %v4995 = vld [vmem:[%s4988 + $0x30] sm:$0xff]
        %v4996 = vld [vmem:[%s4988 + $0x38] sm:$0xff]
        %v4997 = vld [vmem:[%s4988 + $0x40] sm:$0xff]
        %v4998 = vld [vmem:[%s4988 + $0x48] sm:$0xff]
        %v4999 = vld [vmem:[%s4988 + $0x50] sm:$0xff]
        %v5000 = vld [vmem:[%s4988 + $0x58] sm:$0xff]
        %v5001 = vld [vmem:[%s4988 + $0x60] sm:$0xff]
        %v5002 = vld [vmem:[%s4988 + $0x68] sm:$0xff]
        %v5003 = vld [vmem:[%s4988 + $0x70] sm:$0xff]
        %v5004 = vld [vmem:[%s4988 + $0x78] sm:$0xff]
        %v5005 = vld [vmem:[%s4988 + $0x80] sm:$0xff]
        %v5006 = vld [vmem:[%s4988 + $0x88] sm:$0xff]
        %v5007 = vld [vmem:[%s4988 + $0x90] sm:$0xff]
        %v5008 = vld [vmem:[%s4988 + $0x98] sm:$0xff]
        %v5009 = vld [vmem:[%s4988 + $0xa0] sm:$0xff]
        %v5010 = vld [vmem:[%s4988 + $0xa8] sm:$0xff]
        %v5011 = vld [vmem:[%s4988 + $0xb0] sm:$0xff]
        %v5012 = vld [vmem:[%s4988 + $0xb8] sm:$0xff]
        %v5013 = vld [vmem:[%s4988 + $0xc0] sm:$0xff]
        %v5014 = vld [vmem:[%s4988 + $0xc8] sm:$0xff]
        %v5015 = vld [vmem:[%s4988 + $0xd0] sm:$0xff]
        %v5016 = vld [vmem:[%s4988 + $0xd8] sm:$0xff]
        %v5017 = vld [vmem:[%s4988 + $0xe0] sm:$0xff]
        %v5018 = vld [vmem:[%s4988 + $0xe8] sm:$0xff]
        %v5019 = vld [vmem:[%s4988 + $0xf0] sm:$0xff]
        %v5020 = vld [vmem:[%s4988 + $0xf8] sm:$0xff]
        %v5021 = vld [vmem:[%s4988 + $0x100] sm:$0xff]
        %v5022 = vld [vmem:[%s4988 + $0x108] sm:$0xff]
        %v5023 = vld [vmem:[%s4988 + $0x110] sm:$0xff]
        %v5024 = vld [vmem:[%s4988 + $0x118] sm:$0xff]
        %v5025 = vld [vmem:[%s4988 + $0x120] sm:$0xff]
        %v5026 = vld [vmem:[%s4988 + $0x128] sm:$0xff]
        %v5027 = vld [vmem:[%s4988 + $0x130] sm:$0xff]
        %v5028 = vld [vmem:[%s4988 + $0x138] sm:$0xff]
        %v5029 = vld [vmem:[%s4988 + $0x140] sm:$0xff]
        %v5030 = vld [vmem:[%s4988 + $0x148] sm:$0xff]
        %v5031 = vld [vmem:[%s4988 + $0x150] sm:$0xff]
        %v5032 = vld [vmem:[%s4988 + $0x158] sm:$0xff]
        %v5033 = vld [vmem:[%s4988 + $0x160] sm:$0xff]
        %v5034 = vld [vmem:[%s4988 + $0x168] sm:$0xff]
        %v5035 = vld [vmem:[%s4988 + $0x170] sm:$0xff]
        %v5036 = vld [vmem:[%s4988 + $0x178] sm:$0xff]
        %v5085 = vunpack.c.l.b16 %v4989
        %v5086 = vunpack.c.h.b16 %v4989
        %v5087 = vunpack.c.l.b16 %v4990
        %v5088 = vunpack.c.h.b16 %v4990
        %v5089 = vunpack.c.l.b16 %v4991
        %v5090 = vunpack.c.h.b16 %v4991
        %v5091 = vunpack.c.l.b16 %v4992
        %v5092 = vunpack.c.h.b16 %v4992
        %v5093 = vunpack.c.l.b16 %v4993
        %v5094 = vunpack.c.h.b16 %v4993
        %v5095 = vunpack.c.l.b16 %v4994
        %v5096 = vunpack.c.h.b16 %v4994
        %v5097 = vunpack.c.l.b16 %v4995
        %v5098 = vunpack.c.h.b16 %v4995
        %v5099 = vunpack.c.l.b16 %v4996
        %v5100 = vunpack.c.h.b16 %v4996
        %v5101 = vunpack.c.l.b16 %v4997
        %v5102 = vunpack.c.h.b16 %v4997
        %v5103 = vunpack.c.l.b16 %v4998
        %v5104 = vunpack.c.h.b16 %v4998
        %v5105 = vunpack.c.l.b16 %v4999
        %v5106 = vunpack.c.h.b16 %v4999
        %v5107 = vunpack.c.l.b16 %v5000
        %v5108 = vunpack.c.h.b16 %v5000
        %v5109 = vunpack.c.l.b16 %v5001
        %v5110 = vunpack.c.h.b16 %v5001
        %v5111 = vunpack.c.l.b16 %v5002
        %v5112 = vunpack.c.h.b16 %v5002
        %v5113 = vunpack.c.l.b16 %v5003
        %v5114 = vunpack.c.h.b16 %v5003
        %v5115 = vunpack.c.l.b16 %v5004
        %v5116 = vunpack.c.h.b16 %v5004
        %v5117 = vunpack.c.l.b16 %v5005
        %v5118 = vunpack.c.h.b16 %v5005
        %v5119 = vunpack.c.l.b16 %v5006
        %v5120 = vunpack.c.h.b16 %v5006
        %v5121 = vunpack.c.l.b16 %v5007
        %v5122 = vunpack.c.h.b16 %v5007
        %v5123 = vunpack.c.l.b16 %v5008
        %v5124 = vunpack.c.h.b16 %v5008
        %v5125 = vunpack.c.l.b16 %v5009
        %v5126 = vunpack.c.h.b16 %v5009
        %v5127 = vunpack.c.l.b16 %v5010
        %v5128 = vunpack.c.h.b16 %v5010
        %v5129 = vunpack.c.l.b16 %v5011
        %v5130 = vunpack.c.h.b16 %v5011
        %v5131 = vunpack.c.l.b16 %v5012
        %v5132 = vunpack.c.h.b16 %v5012
        %v5133 = vunpack.c.l.b16 %v5013
        %v5134 = vunpack.c.h.b16 %v5013
        %v5135 = vunpack.c.l.b16 %v5014
        %v5136 = vunpack.c.h.b16 %v5014
        %v5137 = vunpack.c.l.b16 %v5015
        %v5138 = vunpack.c.h.b16 %v5015
        %v5139 = vunpack.c.l.b16 %v5016
        %v5140 = vunpack.c.h.b16 %v5016
        %v5141 = vunpack.c.l.b16 %v5017
        %v5142 = vunpack.c.h.b16 %v5017
        %v5143 = vunpack.c.l.b16 %v5018
        %v5144 = vunpack.c.h.b16 %v5018
        %v5145 = vunpack.c.l.b16 %v5019
        %v5146 = vunpack.c.h.b16 %v5019
        %v5147 = vunpack.c.l.b16 %v5020
        %v5148 = vunpack.c.h.b16 %v5020
        %v5149 = vunpack.c.l.b16 %v5021
        %v5150 = vunpack.c.h.b16 %v5021
        %v5151 = vunpack.c.l.b16 %v5022
        %v5152 = vunpack.c.h.b16 %v5022
        %v5153 = vunpack.c.l.b16 %v5023
        %v5154 = vunpack.c.h.b16 %v5023
        %v5155 = vunpack.c.l.b16 %v5024
        %v5156 = vunpack.c.h.b16 %v5024
        %v5157 = vunpack.c.l.b16 %v5025
        %v5158 = vunpack.c.h.b16 %v5025
        %v5159 = vunpack.c.l.b16 %v5026
        %v5160 = vunpack.c.h.b16 %v5026
        %v5161 = vunpack.c.l.b16 %v5027
        %v5162 = vunpack.c.h.b16 %v5027
        %v5163 = vunpack.c.l.b16 %v5028
        %v5164 = vunpack.c.h.b16 %v5028
        %v5165 = vunpack.c.l.b16 %v5029
        %v5166 = vunpack.c.h.b16 %v5029
        %v5167 = vunpack.c.l.b16 %v5030
        %v5168 = vunpack.c.h.b16 %v5030
        %v5169 = vunpack.c.l.b16 %v5031
        %v5170 = vunpack.c.h.b16 %v5031
        %v5171 = vunpack.c.l.b16 %v5032
        %v5172 = vunpack.c.h.b16 %v5032
        %v5173 = vunpack.c.l.b16 %v5033
        %v5174 = vunpack.c.h.b16 %v5033
        %v5175 = vunpack.c.l.b16 %v5034
        %v5176 = vunpack.c.h.b16 %v5034
        %v5177 = vunpack.c.l.b16 %v5035
        %v5178 = vunpack.c.h.b16 %v5035
        %v5179 = vunpack.c.l.b16 %v5036
        %v5180 = vunpack.c.h.b16 %v5036
        %v5181 = vpack.c.b16 %v5087, %v5085
        %v5182 = vpack.c.b16 %v5088, %v5086
        %v5183 = vpack.c.b16 %v5091, %v5089
        %v5184 = vpack.c.b16 %v5092, %v5090
        %v5185 = vpack.c.b16 %v5095, %v5093
        %v5186 = vpack.c.b16 %v5096, %v5094
        %v5187 = vpack.c.b16 %v5099, %v5097
        %v5188 = vpack.c.b16 %v5100, %v5098
        %v5189 = vpack.c.b16 %v5103, %v5101
        %v5190 = vpack.c.b16 %v5104, %v5102
        %v5191 = vpack.c.b16 %v5107, %v5105
        %v5192 = vpack.c.b16 %v5108, %v5106
        %v5193 = vpack.c.b16 %v5111, %v5109
        %v5194 = vpack.c.b16 %v5112, %v5110
        %v5195 = vpack.c.b16 %v5115, %v5113
        %v5196 = vpack.c.b16 %v5116, %v5114
        %v5197 = vpack.c.b16 %v5119, %v5117
        %v5198 = vpack.c.b16 %v5120, %v5118
        %v5199 = vpack.c.b16 %v5123, %v5121
        %v5200 = vpack.c.b16 %v5124, %v5122
        %v5201 = vpack.c.b16 %v5127, %v5125
        %v5202 = vpack.c.b16 %v5128, %v5126
        %v5203 = vpack.c.b16 %v5131, %v5129
        %v5204 = vpack.c.b16 %v5132, %v5130
        %v5205 = vpack.c.b16 %v5135, %v5133
        %v5206 = vpack.c.b16 %v5136, %v5134
        %v5207 = vpack.c.b16 %v5139, %v5137
        %v5208 = vpack.c.b16 %v5140, %v5138
        %v5209 = vpack.c.b16 %v5143, %v5141
        %v5210 = vpack.c.b16 %v5144, %v5142
        %v5211 = vpack.c.b16 %v5147, %v5145
        %v5212 = vpack.c.b16 %v5148, %v5146
        %v5213 = vpack.c.b16 %v5151, %v5149
        %v5214 = vpack.c.b16 %v5152, %v5150
        %v5215 = vpack.c.b16 %v5155, %v5153
        %v5216 = vpack.c.b16 %v5156, %v5154
        %v5217 = vpack.c.b16 %v5159, %v5157
        %v5218 = vpack.c.b16 %v5160, %v5158
        %v5219 = vpack.c.b16 %v5163, %v5161
        %v5220 = vpack.c.b16 %v5164, %v5162
        %v5221 = vpack.c.b16 %v5167, %v5165
        %v5222 = vpack.c.b16 %v5168, %v5166
        %v5223 = vpack.c.b16 %v5171, %v5169
        %v5224 = vpack.c.b16 %v5172, %v5170
        %v5225 = vpack.c.b16 %v5175, %v5173
        %v5226 = vpack.c.b16 %v5176, %v5174
        %v5227 = vpack.c.b16 %v5179, %v5177
        %v5228 = vpack.c.b16 %v5180, %v5178
        %5277 = vmatprep.subr.bf16.mxu0 %v5182
        %5278 = vmatpush1.bf16.msra.mxu0 %v5181
        %5279 = vmatprep.subr.bf16.mxu0 %v5184
        %5280 = vmatpush1.bf16.msra.mxu0 %v5183
        %5281 = vmatprep.subr.bf16.mxu0 %v5186
        %5282 = vmatpush1.bf16.msra.mxu0 %v5185
        %5283 = vmatprep.subr.bf16.mxu0 %v5188
        %5284 = vmatpush1.bf16.msra.mxu0 %v5187
        %5285 = vmatprep.subr.bf16.mxu0 %v5190
        %5286 = vmatpush1.bf16.msra.mxu0 %v5189
        %5287 = vmatprep.subr.bf16.mxu0 %v5192
        %5288 = vmatpush1.bf16.msra.mxu0 %v5191
        %5289 = vmatprep.subr.bf16.mxu0 %v5194
        %5290 = vmatpush1.bf16.msra.mxu0 %v5193
        %5291 = vmatprep.subr.bf16.mxu0 %v5196
        %5292 = vmatpush1.bf16.msra.mxu0 %v5195
        %5293 = vmatprep.subr.bf16.mxu0 %v5198
        %5294 = vmatpush1.bf16.msra.mxu0 %v5197
        %5295 = vmatprep.subr.bf16.mxu0 %v5200
        %5296 = vmatpush1.bf16.msra.mxu0 %v5199
        %5297 = vmatprep.subr.bf16.mxu0 %v5202
        %5298 = vmatpush1.bf16.msra.mxu0 %v5201
        %5299 = vmatprep.subr.bf16.mxu0 %v5204
        %5300 = vmatpush1.bf16.msra.mxu0 %v5203
        %5301 = vmatprep.subr.bf16.mxu0 %v5206
        %5302 = vmatpush1.bf16.msra.mxu0 %v5205
        %5303 = vmatprep.subr.bf16.mxu0 %v5208
        %5304 = vmatpush1.bf16.msra.mxu0 %v5207
        %5305 = vmatprep.subr.bf16.mxu0 %v5210
        %5306 = vmatpush1.bf16.msra.mxu0 %v5209
        %5307 = vmatprep.subr.bf16.mxu0 %v5212
        %5308 = vmatpush1.bf16.msra.mxu0 %v5211
        %5309 = vmatprep.mubr.bf16.mxu0 %v4657
        %5310 = vmatmul.mubr.bf16.gmra.mrb[0].mxu0 %v4654
        %v5311 = vpop.f32.mrb[0].mxu0
        %v5312 = vadd.f32 0.0, %v5311
        %v5313 = vpop.f32.mrb[0].mxu0
        %v5314 = vadd.f32 0.0, %v5313
        %v5315 = vpop.f32.mrb[0].mxu0
        %v5316 = vpop.f32.mrb[0].mxu0
        %5317 = vdwg.mxu0
        %5318 = vmatprep.subr.bf16.mxu0 %v5214
        %5319 = vmatpush1.bf16.msra.mxu0 %v5213
        %5320 = vmatprep.subr.bf16.mxu0 %v5216
        %5321 = vmatpush1.bf16.msra.mxu0 %v5215
        %5322 = vmatprep.subr.bf16.mxu0 %v5218
        %5323 = vmatpush1.bf16.msra.mxu0 %v5217
        %5324 = vmatprep.subr.bf16.mxu0 %v5220
        %5325 = vmatpush1.bf16.msra.mxu0 %v5219
        %5326 = vmatprep.subr.bf16.mxu0 %v5222
        %5327 = vmatpush1.bf16.msra.mxu0 %v5221
        %5328 = vmatprep.subr.bf16.mxu0 %v5224
        %5329 = vmatpush1.bf16.msra.mxu0 %v5223
        %5330 = vmatprep.subr.bf16.mxu0 %v5226
        %5331 = vmatpush1.bf16.msra.mxu0 %v5225
        %5332 = vmatprep.subr.bf16.mxu0 %v5228
        %5333 = vmatpush1.bf16.msra.mxu0 %v5227
        %5334 = vmatprep.subr.bf16.mxu0 0
        %5335 = vmatpush1.bf16.msra.mxu0 0
        %5336 = vmatprep.subr.bf16.mxu0 0
        %5337 = vmatpush1.bf16.msra.mxu0 0
        %5338 = vmatprep.subr.bf16.mxu0 0
        %5339 = vmatpush1.bf16.msra.mxu0 0
        %5340 = vmatprep.subr.bf16.mxu0 0
        %5341 = vmatpush1.bf16.msra.mxu0 0
        %5342 = vmatprep.subr.bf16.mxu0 0
        %5343 = vmatpush1.bf16.msra.mxu0 0
        %5344 = vmatprep.subr.bf16.mxu0 0
        %5345 = vmatpush1.bf16.msra.mxu0 0
        %5346 = vmatprep.subr.bf16.mxu0 0
        %5347 = vmatpush1.bf16.msra.mxu0 0
        %5348 = vmatprep.subr.bf16.mxu0 0
        %5349 = vmatpush1.bf16.msra.mxu0 0
        %5350 = vmatprep.mubr.bf16.mxu0 0
        %5351 = vmatmul.mubr.bf16.gmra.mrb[0].mxu0 %v4660
        %v5352 = vpop.f32.mrb[0].mxu0
        %v5353 = vadd.f32 %v5312, %v5352
        %v5354 = vpop.f32.mrb[0].mxu0
        %v5355 = vadd.f32 %v5314, %v5354
        %v5356 = vpop.f32.mrb[0].mxu0
        %v5357 = vpop.f32.mrb[0].mxu0
        %5358 = vdwg.mxu0
        %v5359 = vadd.f32 %v4601, %v5353
        %v5360 = vadd.f32 %v4602, %v5355
        %s5361 = scalar_lea.vmem [#allocation7], 1536
        %v5362 = vld [vmem:[%s5361] sm:$0xff]
        %v5363 = vld [vmem:[%s5361 + $0x8] sm:$0xff]
        %v5364 = vld [vmem:[%s5361 + $0x10] sm:$0xff]
        %v5365 = vld [vmem:[%s5361 + $0x18] sm:$0xff]
        %v5366 = vld [vmem:[%s5361 + $0x20] sm:$0xff]
        %v5367 = vld [vmem:[%s5361 + $0x28] sm:$0xff]
        %v5368 = vld [vmem:[%s5361 + $0x30] sm:$0xff]
        %v5369 = vld [vmem:[%s5361 + $0x38] sm:$0xff]
        %v5370 = vld [vmem:[%s5361 + $0x40] sm:$0xff]
        %v5371 = vld [vmem:[%s5361 + $0x48] sm:$0xff]
        %v5372 = vld [vmem:[%s5361 + $0x50] sm:$0xff]
        %v5373 = vld [vmem:[%s5361 + $0x58] sm:$0xff]
        %v5374 = vld [vmem:[%s5361 + $0x60] sm:$0xff]
        %v5375 = vld [vmem:[%s5361 + $0x68] sm:$0xff]
        %v5376 = vld [vmem:[%s5361 + $0x70] sm:$0xff]
        %v5377 = vld [vmem:[%s5361 + $0x78] sm:$0xff]
        %v5378 = vld [vmem:[%s5361 + $0x80] sm:$0xff]
        %v5379 = vld [vmem:[%s5361 + $0x88] sm:$0xff]
        %v5380 = vld [vmem:[%s5361 + $0x90] sm:$0xff]
        %v5381 = vld [vmem:[%s5361 + $0x98] sm:$0xff]
        %v5382 = vld [vmem:[%s5361 + $0xa0] sm:$0xff]
        %v5383 = vld [vmem:[%s5361 + $0xa8] sm:$0xff]
        %v5384 = vld [vmem:[%s5361 + $0xb0] sm:$0xff]
        %v5385 = vld [vmem:[%s5361 + $0xb8] sm:$0xff]
        %v5386 = vld [vmem:[%s5361 + $0xc0] sm:$0xff]
        %v5387 = vld [vmem:[%s5361 + $0xc8] sm:$0xff]
        %v5388 = vld [vmem:[%s5361 + $0xd0] sm:$0xff]
        %v5389 = vld [vmem:[%s5361 + $0xd8] sm:$0xff]
        %v5390 = vld [vmem:[%s5361 + $0xe0] sm:$0xff]
        %v5391 = vld [vmem:[%s5361 + $0xe8] sm:$0xff]
        %v5392 = vld [vmem:[%s5361 + $0xf0] sm:$0xff]
        %v5393 = vld [vmem:[%s5361 + $0xf8] sm:$0xff]
        %v5394 = vld [vmem:[%s5361 + $0x100] sm:$0xff]
        %v5395 = vld [vmem:[%s5361 + $0x108] sm:$0xff]
        %v5396 = vld [vmem:[%s5361 + $0x110] sm:$0xff]
        %v5397 = vld [vmem:[%s5361 + $0x118] sm:$0xff]
        %v5398 = vld [vmem:[%s5361 + $0x120] sm:$0xff]
        %v5399 = vld [vmem:[%s5361 + $0x128] sm:$0xff]
        %v5400 = vld [vmem:[%s5361 + $0x130] sm:$0xff]
        %v5401 = vld [vmem:[%s5361 + $0x138] sm:$0xff]
        %v5402 = vld [vmem:[%s5361 + $0x140] sm:$0xff]
        %v5403 = vld [vmem:[%s5361 + $0x148] sm:$0xff]
        %v5404 = vld [vmem:[%s5361 + $0x150] sm:$0xff]
        %v5405 = vld [vmem:[%s5361 + $0x158] sm:$0xff]
        %v5406 = vld [vmem:[%s5361 + $0x160] sm:$0xff]
        %v5407 = vld [vmem:[%s5361 + $0x168] sm:$0xff]
        %v5408 = vld [vmem:[%s5361 + $0x170] sm:$0xff]
        %v5409 = vld [vmem:[%s5361 + $0x178] sm:$0xff]
        %v5410 = vrot.slane %v2435, 2
        %v5411 = vrot.slane %v2436, 2
        %v5412 = vrot.slane %v2437, 2
        %v5464 = vunpack.c.l.b16 %v5362
        %v5465 = vunpack.c.h.b16 %v5362
        %v5466 = vunpack.c.l.b16 %v5363
        %v5467 = vunpack.c.h.b16 %v5363
        %v5468 = vunpack.c.l.b16 %v5364
        %v5469 = vunpack.c.h.b16 %v5364
        %v5470 = vunpack.c.l.b16 %v5365
        %v5471 = vunpack.c.h.b16 %v5365
        %v5472 = vunpack.c.l.b16 %v5366
        %v5473 = vunpack.c.h.b16 %v5366
        %v5474 = vunpack.c.l.b16 %v5367
        %v5475 = vunpack.c.h.b16 %v5367
        %v5476 = vunpack.c.l.b16 %v5368
        %v5477 = vunpack.c.h.b16 %v5368
        %v5478 = vunpack.c.l.b16 %v5369
        %v5479 = vunpack.c.h.b16 %v5369
        %v5480 = vunpack.c.l.b16 %v5370
        %v5481 = vunpack.c.h.b16 %v5370
        %v5482 = vunpack.c.l.b16 %v5371
        %v5483 = vunpack.c.h.b16 %v5371
        %v5484 = vunpack.c.l.b16 %v5372
        %v5485 = vunpack.c.h.b16 %v5372
        %v5486 = vunpack.c.l.b16 %v5373
        %v5487 = vunpack.c.h.b16 %v5373
        %v5488 = vunpack.c.l.b16 %v5374
        %v5489 = vunpack.c.h.b16 %v5374
        %v5490 = vunpack.c.l.b16 %v5375
        %v5491 = vunpack.c.h.b16 %v5375
        %v5492 = vunpack.c.l.b16 %v5376
        %v5493 = vunpack.c.h.b16 %v5376
        %v5494 = vunpack.c.l.b16 %v5377
        %v5495 = vunpack.c.h.b16 %v5377
        %v5496 = vunpack.c.l.b16 %v5378
        %v5497 = vunpack.c.h.b16 %v5378
        %v5498 = vunpack.c.l.b16 %v5379
        %v5499 = vunpack.c.h.b16 %v5379
        %v5500 = vunpack.c.l.b16 %v5380
        %v5501 = vunpack.c.h.b16 %v5380
        %v5502 = vunpack.c.l.b16 %v5381
        %v5503 = vunpack.c.h.b16 %v5381
        %v5504 = vunpack.c.l.b16 %v5382
        %v5505 = vunpack.c.h.b16 %v5382
        %v5506 = vunpack.c.l.b16 %v5383
        %v5507 = vunpack.c.h.b16 %v5383
        %v5508 = vunpack.c.l.b16 %v5384
        %v5509 = vunpack.c.h.b16 %v5384
        %v5510 = vunpack.c.l.b16 %v5385
        %v5511 = vunpack.c.h.b16 %v5385
        %v5512 = vunpack.c.l.b16 %v5386
        %v5513 = vunpack.c.h.b16 %v5386
        %v5514 = vunpack.c.l.b16 %v5387
        %v5515 = vunpack.c.h.b16 %v5387
        %v5516 = vunpack.c.l.b16 %v5388
        %v5517 = vunpack.c.h.b16 %v5388
        %v5518 = vunpack.c.l.b16 %v5389
        %v5519 = vunpack.c.h.b16 %v5389
        %v5520 = vunpack.c.l.b16 %v5390
        %v5521 = vunpack.c.h.b16 %v5390
        %v5522 = vunpack.c.l.b16 %v5391
        %v5523 = vunpack.c.h.b16 %v5391
        %v5524 = vunpack.c.l.b16 %v5392
        %v5525 = vunpack.c.h.b16 %v5392
        %v5526 = vunpack.c.l.b16 %v5393
        %v5527 = vunpack.c.h.b16 %v5393
        %v5528 = vunpack.c.l.b16 %v5394
        %v5529 = vunpack.c.h.b16 %v5394
        %v5530 = vunpack.c.l.b16 %v5395
        %v5531 = vunpack.c.h.b16 %v5395
        %v5532 = vunpack.c.l.b16 %v5396
        %v5533 = vunpack.c.h.b16 %v5396
        %v5534 = vunpack.c.l.b16 %v5397
        %v5535 = vunpack.c.h.b16 %v5397
        %v5536 = vunpack.c.l.b16 %v5398
        %v5537 = vunpack.c.h.b16 %v5398
        %v5538 = vunpack.c.l.b16 %v5399
        %v5539 = vunpack.c.h.b16 %v5399
        %v5540 = vunpack.c.l.b16 %v5400
        %v5541 = vunpack.c.h.b16 %v5400
        %v5542 = vunpack.c.l.b16 %v5401
        %v5543 = vunpack.c.h.b16 %v5401
        %v5544 = vunpack.c.l.b16 %v5402
        %v5545 = vunpack.c.h.b16 %v5402
        %v5546 = vunpack.c.l.b16 %v5403
        %v5547 = vunpack.c.h.b16 %v5403
        %v5548 = vunpack.c.l.b16 %v5404
        %v5549 = vunpack.c.h.b16 %v5404
        %v5550 = vunpack.c.l.b16 %v5405
        %v5551 = vunpack.c.h.b16 %v5405
        %v5552 = vunpack.c.l.b16 %v5406
        %v5553 = vunpack.c.h.b16 %v5406
        %v5554 = vunpack.c.l.b16 %v5407
        %v5555 = vunpack.c.h.b16 %v5407
        %v5556 = vunpack.c.l.b16 %v5408
        %v5557 = vunpack.c.h.b16 %v5408
        %v5558 = vunpack.c.l.b16 %v5409
        %v5559 = vunpack.c.h.b16 %v5409
        %v5560 = vpack.c.b16 %v5466, %v5464
        %v5561 = vpack.c.b16 %v5467, %v5465
        %v5562 = vpack.c.b16 %v5470, %v5468
        %v5563 = vpack.c.b16 %v5471, %v5469
        %v5564 = vpack.c.b16 %v5474, %v5472
        %v5565 = vpack.c.b16 %v5475, %v5473
        %v5566 = vpack.c.b16 %v5478, %v5476
        %v5567 = vpack.c.b16 %v5479, %v5477
        %v5568 = vpack.c.b16 %v5482, %v5480
        %v5569 = vpack.c.b16 %v5483, %v5481
        %v5570 = vpack.c.b16 %v5486, %v5484
        %v5571 = vpack.c.b16 %v5487, %v5485
        %v5572 = vpack.c.b16 %v5490, %v5488
        %v5573 = vpack.c.b16 %v5491, %v5489
        %v5574 = vpack.c.b16 %v5494, %v5492
        %v5575 = vpack.c.b16 %v5495, %v5493
        %v5576 = vpack.c.b16 %v5498, %v5496
        %v5577 = vpack.c.b16 %v5499, %v5497
        %v5578 = vpack.c.b16 %v5502, %v5500
        %v5579 = vpack.c.b16 %v5503, %v5501
        %v5580 = vpack.c.b16 %v5506, %v5504
        %v5581 = vpack.c.b16 %v5507, %v5505
        %v5582 = vpack.c.b16 %v5510, %v5508
        %v5583 = vpack.c.b16 %v5511, %v5509
        %v5584 = vpack.c.b16 %v5514, %v5512
        %v5585 = vpack.c.b16 %v5515, %v5513
        %v5586 = vpack.c.b16 %v5518, %v5516
        %v5587 = vpack.c.b16 %v5519, %v5517
        %v5588 = vpack.c.b16 %v5522, %v5520
        %v5589 = vpack.c.b16 %v5523, %v5521
        %v5590 = vpack.c.b16 %v5526, %v5524
        %v5591 = vpack.c.b16 %v5527, %v5525
        %v5592 = vpack.c.b16 %v5530, %v5528
        %v5593 = vpack.c.b16 %v5531, %v5529
        %v5594 = vpack.c.b16 %v5534, %v5532
        %v5595 = vpack.c.b16 %v5535, %v5533
        %v5596 = vpack.c.b16 %v5538, %v5536
        %v5597 = vpack.c.b16 %v5539, %v5537
        %v5598 = vpack.c.b16 %v5542, %v5540
        %v5599 = vpack.c.b16 %v5543, %v5541
        %v5600 = vpack.c.b16 %v5546, %v5544
        %v5601 = vpack.c.b16 %v5547, %v5545
        %v5602 = vpack.c.b16 %v5550, %v5548
        %v5603 = vpack.c.b16 %v5551, %v5549
        %v5604 = vpack.c.b16 %v5554, %v5552
        %v5605 = vpack.c.b16 %v5555, %v5553
        %v5606 = vpack.c.b16 %v5558, %v5556
        %v5607 = vpack.c.b16 %v5559, %v5557
        %5656 = vmatprep.subr.bf16.mxu0 %v5561
        %5657 = vmatpush1.bf16.msra.mxu0 %v5560
        %5658 = vmatprep.subr.bf16.mxu0 %v5563
        %5659 = vmatpush1.bf16.msra.mxu0 %v5562
        %5660 = vmatprep.subr.bf16.mxu0 %v5565
        %5661 = vmatpush1.bf16.msra.mxu0 %v5564
        %5662 = vmatprep.subr.bf16.mxu0 %v5567
        %5663 = vmatpush1.bf16.msra.mxu0 %v5566
        %5664 = vmatprep.subr.bf16.mxu0 %v5569
        %5665 = vmatpush1.bf16.msra.mxu0 %v5568
        %5666 = vmatprep.subr.bf16.mxu0 %v5571
        %5667 = vmatpush1.bf16.msra.mxu0 %v5570
        %5668 = vmatprep.subr.bf16.mxu0 %v5573
        %5669 = vmatpush1.bf16.msra.mxu0 %v5572
        %5670 = vmatprep.subr.bf16.mxu0 %v5575
        %5671 = vmatpush1.bf16.msra.mxu0 %v5574
        %5672 = vmatprep.subr.bf16.mxu0 %v5577
        %5673 = vmatpush1.bf16.msra.mxu0 %v5576
        %5674 = vmatprep.subr.bf16.mxu0 %v5579
        %5675 = vmatpush1.bf16.msra.mxu0 %v5578
        %5676 = vmatprep.subr.bf16.mxu0 %v5581
        %5677 = vmatpush1.bf16.msra.mxu0 %v5580
        %5678 = vmatprep.subr.bf16.mxu0 %v5583
        %5679 = vmatpush1.bf16.msra.mxu0 %v5582
        %5680 = vmatprep.subr.bf16.mxu0 %v5585
        %5681 = vmatpush1.bf16.msra.mxu0 %v5584
        %5682 = vmatprep.subr.bf16.mxu0 %v5587
        %5683 = vmatpush1.bf16.msra.mxu0 %v5586
        %5684 = vmatprep.subr.bf16.mxu0 %v5589
        %5685 = vmatpush1.bf16.msra.mxu0 %v5588
        %5686 = vmatprep.subr.bf16.mxu0 %v5591
        %5687 = vmatpush1.bf16.msra.mxu0 %v5590
        %5688 = vmatprep.mubr.bf16.mxu0 %v5411
        %5689 = vmatmul.mubr.bf16.gmra.mrb[0].mxu0 %v5410
        %v5690 = vpop.f32.mrb[0].mxu0
        %v5691 = vadd.f32 0.0, %v5690
        %v5692 = vpop.f32.mrb[0].mxu0
        %v5693 = vadd.f32 0.0, %v5692
        %v5694 = vpop.f32.mrb[0].mxu0
        %v5695 = vpop.f32.mrb[0].mxu0
        %5696 = vdwg.mxu0
        %5697 = vmatprep.subr.bf16.mxu0 %v5593
        %5698 = vmatpush1.bf16.msra.mxu0 %v5592
        %5699 = vmatprep.subr.bf16.mxu0 %v5595
        %5700 = vmatpush1.bf16.msra.mxu0 %v5594
        %5701 = vmatprep.subr.bf16.mxu0 %v5597
        %5702 = vmatpush1.bf16.msra.mxu0 %v5596
        %5703 = vmatprep.subr.bf16.mxu0 %v5599
        %5704 = vmatpush1.bf16.msra.mxu0 %v5598
        %5705 = vmatprep.subr.bf16.mxu0 %v5601
        %5706 = vmatpush1.bf16.msra.mxu0 %v5600
        %5707 = vmatprep.subr.bf16.mxu0 %v5603
        %5708 = vmatpush1.bf16.msra.mxu0 %v5602
        %5709 = vmatprep.subr.bf16.mxu0 %v5605
        %5710 = vmatpush1.bf16.msra.mxu0 %v5604
        %5711 = vmatprep.subr.bf16.mxu0 %v5607
        %5712 = vmatpush1.bf16.msra.mxu0 %v5606
        %5713 = vmatprep.subr.bf16.mxu0 0
        %5714 = vmatpush1.bf16.msra.mxu0 0
        %5715 = vmatprep.subr.bf16.mxu0 0
        %5716 = vmatpush1.bf16.msra.mxu0 0
        %5717 = vmatprep.subr.bf16.mxu0 0
        %5718 = vmatpush1.bf16.msra.mxu0 0
        %5719 = vmatprep.subr.bf16.mxu0 0
        %5720 = vmatpush1.bf16.msra.mxu0 0
        %5721 = vmatprep.subr.bf16.mxu0 0
        %5722 = vmatpush1.bf16.msra.mxu0 0
        %5723 = vmatprep.subr.bf16.mxu0 0
        %5724 = vmatpush1.bf16.msra.mxu0 0
        %5725 = vmatprep.subr.bf16.mxu0 0
        %5726 = vmatpush1.bf16.msra.mxu0 0
        %5727 = vmatprep.subr.bf16.mxu0 0
        %5728 = vmatpush1.bf16.msra.mxu0 0
        %5729 = vmatprep.mubr.bf16.mxu0 0
        %5730 = vmatmul.mubr.bf16.gmra.mrb[0].mxu0 %v5412
        %v5731 = vpop.f32.mrb[0].mxu0
        %v5732 = vadd.f32 %v5691, %v5731
        %v5733 = vpop.f32.mrb[0].mxu0
        %v5734 = vadd.f32 %v5693, %v5733
        %v5735 = vpop.f32.mrb[0].mxu0
        %v5736 = vpop.f32.mrb[0].mxu0
        %5737 = vdwg.mxu0
        %v5738 = vadd.f32 %v4986, %v5732
        %v5739 = vadd.f32 %v4987, %v5734
        %s5740 = scalar_lea.vmem [#allocation9], 1536
        %v5741 = vld [vmem:[%s5740] sm:$0xff]
        %v5742 = vld [vmem:[%s5740 + $0x8] sm:$0xff]
        %v5743 = vld [vmem:[%s5740 + $0x10] sm:$0xff]
        %v5744 = vld [vmem:[%s5740 + $0x18] sm:$0xff]
        %v5745 = vld [vmem:[%s5740 + $0x20] sm:$0xff]
        %v5746 = vld [vmem:[%s5740 + $0x28] sm:$0xff]
        %v5747 = vld [vmem:[%s5740 + $0x30] sm:$0xff]
        %v5748 = vld [vmem:[%s5740 + $0x38] sm:$0xff]
        %v5749 = vld [vmem:[%s5740 + $0x40] sm:$0xff]
        %v5750 = vld [vmem:[%s5740 + $0x48] sm:$0xff]
        %v5751 = vld [vmem:[%s5740 + $0x50] sm:$0xff]
        %v5752 = vld [vmem:[%s5740 + $0x58] sm:$0xff]
        %v5753 = vld [vmem:[%s5740 + $0x60] sm:$0xff]
        %v5754 = vld [vmem:[%s5740 + $0x68] sm:$0xff]
        %v5755 = vld [vmem:[%s5740 + $0x70] sm:$0xff]
        %v5756 = vld [vmem:[%s5740 + $0x78] sm:$0xff]
        %v5757 = vld [vmem:[%s5740 + $0x80] sm:$0xff]
        %v5758 = vld [vmem:[%s5740 + $0x88] sm:$0xff]
        %v5759 = vld [vmem:[%s5740 + $0x90] sm:$0xff]
        %v5760 = vld [vmem:[%s5740 + $0x98] sm:$0xff]
        %v5761 = vld [vmem:[%s5740 + $0xa0] sm:$0xff]
        %v5762 = vld [vmem:[%s5740 + $0xa8] sm:$0xff]
        %v5763 = vld [vmem:[%s5740 + $0xb0] sm:$0xff]
        %v5764 = vld [vmem:[%s5740 + $0xb8] sm:$0xff]
        %v5765 = vld [vmem:[%s5740 + $0xc0] sm:$0xff]
        %v5766 = vld [vmem:[%s5740 + $0xc8] sm:$0xff]
        %v5767 = vld [vmem:[%s5740 + $0xd0] sm:$0xff]
        %v5768 = vld [vmem:[%s5740 + $0xd8] sm:$0xff]
        %v5769 = vld [vmem:[%s5740 + $0xe0] sm:$0xff]
        %v5770 = vld [vmem:[%s5740 + $0xe8] sm:$0xff]
        %v5771 = vld [vmem:[%s5740 + $0xf0] sm:$0xff]
        %v5772 = vld [vmem:[%s5740 + $0xf8] sm:$0xff]
        %v5773 = vld [vmem:[%s5740 + $0x100] sm:$0xff]
        %v5774 = vld [vmem:[%s5740 + $0x108] sm:$0xff]
        %v5775 = vld [vmem:[%s5740 + $0x110] sm:$0xff]
        %v5776 = vld [vmem:[%s5740 + $0x118] sm:$0xff]
        %v5777 = vld [vmem:[%s5740 + $0x120] sm:$0xff]
        %v5778 = vld [vmem:[%s5740 + $0x128] sm:$0xff]
        %v5779 = vld [vmem:[%s5740 + $0x130] sm:$0xff]
        %v5780 = vld [vmem:[%s5740 + $0x138] sm:$0xff]
        %v5781 = vld [vmem:[%s5740 + $0x140] sm:$0xff]
        %v5782 = vld [vmem:[%s5740 + $0x148] sm:$0xff]
        %v5783 = vld [vmem:[%s5740 + $0x150] sm:$0xff]
        %v5784 = vld [vmem:[%s5740 + $0x158] sm:$0xff]
        %v5785 = vld [vmem:[%s5740 + $0x160] sm:$0xff]
        %v5786 = vld [vmem:[%s5740 + $0x168] sm:$0xff]
        %v5787 = vld [vmem:[%s5740 + $0x170] sm:$0xff]
        %v5788 = vld [vmem:[%s5740 + $0x178] sm:$0xff]
        %v5837 = vunpack.c.l.b16 %v5741
        %v5838 = vunpack.c.h.b16 %v5741
        %v5839 = vunpack.c.l.b16 %v5742
        %v5840 = vunpack.c.h.b16 %v5742
        %v5841 = vunpack.c.l.b16 %v5743
        %v5842 = vunpack.c.h.b16 %v5743
        %v5843 = vunpack.c.l.b16 %v5744
        %v5844 = vunpack.c.h.b16 %v5744
        %v5845 = vunpack.c.l.b16 %v5745
        %v5846 = vunpack.c.h.b16 %v5745
        %v5847 = vunpack.c.l.b16 %v5746
        %v5848 = vunpack.c.h.b16 %v5746
        %v5849 = vunpack.c.l.b16 %v5747
        %v5850 = vunpack.c.h.b16 %v5747
        %v5851 = vunpack.c.l.b16 %v5748
        %v5852 = vunpack.c.h.b16 %v5748
        %v5853 = vunpack.c.l.b16 %v5749
        %v5854 = vunpack.c.h.b16 %v5749
        %v5855 = vunpack.c.l.b16 %v5750
        %v5856 = vunpack.c.h.b16 %v5750
        %v5857 = vunpack.c.l.b16 %v5751
        %v5858 = vunpack.c.h.b16 %v5751
        %v5859 = vunpack.c.l.b16 %v5752
        %v5860 = vunpack.c.h.b16 %v5752
        %v5861 = vunpack.c.l.b16 %v5753
        %v5862 = vunpack.c.h.b16 %v5753
        %v5863 = vunpack.c.l.b16 %v5754
        %v5864 = vunpack.c.h.b16 %v5754
        %v5865 = vunpack.c.l.b16 %v5755
        %v5866 = vunpack.c.h.b16 %v5755
        %v5867 = vunpack.c.l.b16 %v5756
        %v5868 = vunpack.c.h.b16 %v5756
        %v5869 = vunpack.c.l.b16 %v5757
        %v5870 = vunpack.c.h.b16 %v5757
        %v5871 = vunpack.c.l.b16 %v5758
        %v5872 = vunpack.c.h.b16 %v5758
        %v5873 = vunpack.c.l.b16 %v5759
        %v5874 = vunpack.c.h.b16 %v5759
        %v5875 = vunpack.c.l.b16 %v5760
        %v5876 = vunpack.c.h.b16 %v5760
        %v5877 = vunpack.c.l.b16 %v5761
        %v5878 = vunpack.c.h.b16 %v5761
        %v5879 = vunpack.c.l.b16 %v5762
        %v5880 = vunpack.c.h.b16 %v5762
        %v5881 = vunpack.c.l.b16 %v5763
        %v5882 = vunpack.c.h.b16 %v5763
        %v5883 = vunpack.c.l.b16 %v5764
        %v5884 = vunpack.c.h.b16 %v5764
        %v5885 = vunpack.c.l.b16 %v5765
        %v5886 = vunpack.c.h.b16 %v5765
        %v5887 = vunpack.c.l.b16 %v5766
        %v5888 = vunpack.c.h.b16 %v5766
        %v5889 = vunpack.c.l.b16 %v5767
        %v5890 = vunpack.c.h.b16 %v5767
        %v5891 = vunpack.c.l.b16 %v5768
        %v5892 = vunpack.c.h.b16 %v5768
        %v5893 = vunpack.c.l.b16 %v5769
        %v5894 = vunpack.c.h.b16 %v5769
        %v5895 = vunpack.c.l.b16 %v5770
        %v5896 = vunpack.c.h.b16 %v5770
        %v5897 = vunpack.c.l.b16 %v5771
        %v5898 = vunpack.c.h.b16 %v5771
        %v5899 = vunpack.c.l.b16 %v5772
        %v5900 = vunpack.c.h.b16 %v5772
        %v5901 = vunpack.c.l.b16 %v5773
        %v5902 = vunpack.c.h.b16 %v5773
        %v5903 = vunpack.c.l.b16 %v5774
        %v5904 = vunpack.c.h.b16 %v5774
        %v5905 = vunpack.c.l.b16 %v5775
        %v5906 = vunpack.c.h.b16 %v5775
        %v5907 = vunpack.c.l.b16 %v5776
        %v5908 = vunpack.c.h.b16 %v5776
        %v5909 = vunpack.c.l.b16 %v5777
        %v5910 = vunpack.c.h.b16 %v5777
        %v5911 = vunpack.c.l.b16 %v5778
        %v5912 = vunpack.c.h.b16 %v5778
        %v5913 = vunpack.c.l.b16 %v5779
        %v5914 = vunpack.c.h.b16 %v5779
        %v5915 = vunpack.c.l.b16 %v5780
        %v5916 = vunpack.c.h.b16 %v5780
        %v5917 = vunpack.c.l.b16 %v5781
        %v5918 = vunpack.c.h.b16 %v5781
        %v5919 = vunpack.c.l.b16 %v5782
        %v5920 = vunpack.c.h.b16 %v5782
        %v5921 = vunpack.c.l.b16 %v5783
        %v5922 = vunpack.c.h.b16 %v5783
        %v5923 = vunpack.c.l.b16 %v5784
        %v5924 = vunpack.c.h.b16 %v5784
        %v5925 = vunpack.c.l.b16 %v5785
        %v5926 = vunpack.c.h.b16 %v5785
        %v5927 = vunpack.c.l.b16 %v5786
        %v5928 = vunpack.c.h.b16 %v5786
        %v5929 = vunpack.c.l.b16 %v5787
        %v5930 = vunpack.c.h.b16 %v5787
        %v5931 = vunpack.c.l.b16 %v5788
        %v5932 = vunpack.c.h.b16 %v5788
        %v5933 = vpack.c.b16 %v5839, %v5837
        %v5934 = vpack.c.b16 %v5840, %v5838
        %v5935 = vpack.c.b16 %v5843, %v5841
        %v5936 = vpack.c.b16 %v5844, %v5842
        %v5937 = vpack.c.b16 %v5847, %v5845
        %v5938 = vpack.c.b16 %v5848, %v5846
        %v5939 = vpack.c.b16 %v5851, %v5849
        %v5940 = vpack.c.b16 %v5852, %v5850
        %v5941 = vpack.c.b16 %v5855, %v5853
        %v5942 = vpack.c.b16 %v5856, %v5854
        %v5943 = vpack.c.b16 %v5859, %v5857
        %v5944 = vpack.c.b16 %v5860, %v5858
        %v5945 = vpack.c.b16 %v5863, %v5861
        %v5946 = vpack.c.b16 %v5864, %v5862
        %v5947 = vpack.c.b16 %v5867, %v5865
        %v5948 = vpack.c.b16 %v5868, %v5866
        %v5949 = vpack.c.b16 %v5871, %v5869
        %v5950 = vpack.c.b16 %v5872, %v5870
        %v5951 = vpack.c.b16 %v5875, %v5873
        %v5952 = vpack.c.b16 %v5876, %v5874
        %v5953 = vpack.c.b16 %v5879, %v5877
        %v5954 = vpack.c.b16 %v5880, %v5878
        %v5955 = vpack.c.b16 %v5883, %v5881
        %v5956 = vpack.c.b16 %v5884, %v5882
        %v5957 = vpack.c.b16 %v5887, %v5885
        %v5958 = vpack.c.b16 %v5888, %v5886
        %v5959 = vpack.c.b16 %v5891, %v5889
        %v5960 = vpack.c.b16 %v5892, %v5890
        %v5961 = vpack.c.b16 %v5895, %v5893
        %v5962 = vpack.c.b16 %v5896, %v5894
        %v5963 = vpack.c.b16 %v5899, %v5897
        %v5964 = vpack.c.b16 %v5900, %v5898
        %v5965 = vpack.c.b16 %v5903, %v5901
        %v5966 = vpack.c.b16 %v5904, %v5902
        %v5967 = vpack.c.b16 %v5907, %v5905
        %v5968 = vpack.c.b16 %v5908, %v5906
        %v5969 = vpack.c.b16 %v5911, %v5909
        %v5970 = vpack.c.b16 %v5912, %v5910
        %v5971 = vpack.c.b16 %v5915, %v5913
        %v5972 = vpack.c.b16 %v5916, %v5914
        %v5973 = vpack.c.b16 %v5919, %v5917
        %v5974 = vpack.c.b16 %v5920, %v5918
        %v5975 = vpack.c.b16 %v5923, %v5921
        %v5976 = vpack.c.b16 %v5924, %v5922
        %v5977 = vpack.c.b16 %v5927, %v5925
        %v5978 = vpack.c.b16 %v5928, %v5926
        %v5979 = vpack.c.b16 %v5931, %v5929
        %v5980 = vpack.c.b16 %v5932, %v5930
        %6029 = vmatprep.subr.bf16.mxu0 %v5934
        %6030 = vmatpush1.bf16.msra.mxu0 %v5933
        %6031 = vmatprep.subr.bf16.mxu0 %v5936
        %6032 = vmatpush1.bf16.msra.mxu0 %v5935
        %6033 = vmatprep.subr.bf16.mxu0 %v5938
        %6034 = vmatpush1.bf16.msra.mxu0 %v5937
        %6035 = vmatprep.subr.bf16.mxu0 %v5940
        %6036 = vmatpush1.bf16.msra.mxu0 %v5939
        %6037 = vmatprep.subr.bf16.mxu0 %v5942
        %6038 = vmatpush1.bf16.msra.mxu0 %v5941
        %6039 = vmatprep.subr.bf16.mxu0 %v5944
        %6040 = vmatpush1.bf16.msra.mxu0 %v5943
        %6041 = vmatprep.subr.bf16.mxu0 %v5946
        %6042 = vmatpush1.bf16.msra.mxu0 %v5945
        %6043 = vmatprep.subr.bf16.mxu0 %v5948
        %6044 = vmatpush1.bf16.msra.mxu0 %v5947
        %6045 = vmatprep.subr.bf16.mxu0 %v5950
        %6046 = vmatpush1.bf16.msra.mxu0 %v5949
        %6047 = vmatprep.subr.bf16.mxu0 %v5952
        %6048 = vmatpush1.bf16.msra.mxu0 %v5951
        %6049 = vmatprep.subr.bf16.mxu0 %v5954
        %6050 = vmatpush1.bf16.msra.mxu0 %v5953
        %6051 = vmatprep.subr.bf16.mxu0 %v5956
        %6052 = vmatpush1.bf16.msra.mxu0 %v5955
        %6053 = vmatprep.subr.bf16.mxu0 %v5958
        %6054 = vmatpush1.bf16.msra.mxu0 %v5957
        %6055 = vmatprep.subr.bf16.mxu0 %v5960
        %6056 = vmatpush1.bf16.msra.mxu0 %v5959
        %6057 = vmatprep.subr.bf16.mxu0 %v5962
        %6058 = vmatpush1.bf16.msra.mxu0 %v5961
        %6059 = vmatprep.subr.bf16.mxu0 %v5964
        %6060 = vmatpush1.bf16.msra.mxu0 %v5963
        %6061 = vmatprep.mubr.bf16.mxu0 %v5411
        %6062 = vmatmul.mubr.bf16.gmra.mrb[0].mxu0 %v5410
        %v6063 = vpop.f32.mrb[0].mxu0
        %v6064 = vadd.f32 0.0, %v6063
        %v6065 = vpop.f32.mrb[0].mxu0
        %v6066 = vadd.f32 0.0, %v6065
        %v6067 = vpop.f32.mrb[0].mxu0
        %v6068 = vpop.f32.mrb[0].mxu0
        %6069 = vdwg.mxu0
        %6070 = vmatprep.subr.bf16.mxu0 %v5966
        %6071 = vmatpush1.bf16.msra.mxu0 %v5965
        %6072 = vmatprep.subr.bf16.mxu0 %v5968
        %6073 = vmatpush1.bf16.msra.mxu0 %v5967
        %6074 = vmatprep.subr.bf16.mxu0 %v5970
        %6075 = vmatpush1.bf16.msra.mxu0 %v5969
        %6076 = vmatprep.subr.bf16.mxu0 %v5972
        %6077 = vmatpush1.bf16.msra.mxu0 %v5971
        %6078 = vmatprep.subr.bf16.mxu0 %v5974
        %6079 = vmatpush1.bf16.msra.mxu0 %v5973
        %6080 = vmatprep.subr.bf16.mxu0 %v5976
        %6081 = vmatpush1.bf16.msra.mxu0 %v5975
        %6082 = vmatprep.subr.bf16.mxu0 %v5978
        %6083 = vmatpush1.bf16.msra.mxu0 %v5977
        %6084 = vmatprep.subr.bf16.mxu0 %v5980
        %6085 = vmatpush1.bf16.msra.mxu0 %v5979
        %6086 = vmatprep.subr.bf16.mxu0 0
        %6087 = vmatpush1.bf16.msra.mxu0 0
        %6088 = vmatprep.subr.bf16.mxu0 0
        %6089 = vmatpush1.bf16.msra.mxu0 0
        %6090 = vmatprep.subr.bf16.mxu0 0
        %6091 = vmatpush1.bf16.msra.mxu0 0
        %6092 = vmatprep.subr.bf16.mxu0 0
        %6093 = vmatpush1.bf16.msra.mxu0 0
        %6094 = vmatprep.subr.bf16.mxu0 0
        %6095 = vmatpush1.bf16.msra.mxu0 0
        %6096 = vmatprep.subr.bf16.mxu0 0
        %6097 = vmatpush1.bf16.msra.mxu0 0
        %6098 = vmatprep.subr.bf16.mxu0 0
        %6099 = vmatpush1.bf16.msra.mxu0 0
        %6100 = vmatprep.subr.bf16.mxu0 0
        %6101 = vmatpush1.bf16.msra.mxu0 0
        %6102 = vmatprep.mubr.bf16.mxu0 0
        %6103 = vmatmul.mubr.bf16.gmra.mrb[0].mxu0 %v5412
        %v6104 = vpop.f32.mrb[0].mxu0
        %v6105 = vadd.f32 %v6064, %v6104
        %v6106 = vpop.f32.mrb[0].mxu0
        %v6107 = vadd.f32 %v6066, %v6106
        %v6108 = vpop.f32.mrb[0].mxu0
        %v6109 = vpop.f32.mrb[0].mxu0
        %6110 = vdwg.mxu0
        %v6111 = vadd.f32 %v5359, %v6105
        %v6112 = vadd.f32 %v5360, %v6107
        %v6113 = vld [vmem:[#allocation10] sm:$0x3]
        %v6115 = vlaneseq
        %v6116 = vshrl.u32 %v6115, 7
        %v6117 = vsub.s32 0, %v6116
        %v6118 = vrot.slane %v6113, %v6117
        %v6119 = vlaneseq
        %v6120 = vshrl.u32 %v6119, 7
        %v6121 = vsub.s32 1, %v6120
        %v6122 = vrot.slane %v6113, %v6121
        %v6125 = vadd.f32 %v5738, %v6118
        %v6126 = vadd.f32 %v5739, %v6122
        %v6127 = vadd.f32 %v6111, %v6118
        %v6128 = vadd.f32 %v6112, %v6122
        %v6129 = vmax.f32 %v6125, %v6127
        %v6130 = vmax.f32 %v6126, %v6128
        %vm6131 = vcmask 64512
        %v6132 = vsel %vm6131, %v2003, 0
        %6134 = vmatprep.subr.mxu0 %v6130
        %6135 = vmatpush1.msra.mxu0 %v6129
        %6136 = vmatprep.subr.mxu0 0.0
        %6137 = vmatpush1.msra.mxu0 0.0
        %6138 = vmatprep.subr.mxu0 0.0
        %6139 = vmatpush1.msra.mxu0 0.0
        %6140 = vmatprep.subr.mxu0 0.0
        %6141 = vmatpush1.msra.mxu0 0.0
        %6142 = vmatprep.subr.mxu0 0.0
        %6143 = vmatpush1.msra.mxu0 0.0
        %6144 = vmatprep.subr.mxu0 0.0
        %6145 = vmatpush1.msra.mxu0 0.0
        %6146 = vmatprep.subr.mxu0 0.0
        %6147 = vmatpush1.msra.mxu0 0.0
        %6148 = vmatprep.subr.mxu0 0.0
        %6149 = vmatpush1.msra.mxu0 0.0
        %6150 = vmatprep.subr.mxu0 0.0
        %6151 = vmatpush1.msra.mxu0 0.0
        %6152 = vmatprep.subr.mxu0 0.0
        %6153 = vmatpush1.msra.mxu0 0.0
        %6154 = vmatprep.subr.mxu0 0.0
        %6155 = vmatpush1.msra.mxu0 0.0
        %6156 = vmatprep.subr.mxu0 0.0
        %6157 = vmatpush1.msra.mxu0 0.0
        %6158 = vmatprep.subr.mxu0 0.0
        %6159 = vmatpush1.msra.mxu0 0.0
        %6160 = vmatprep.subr.mxu0 0.0
        %6161 = vmatpush1.msra.mxu0 0.0
        %6162 = vmatprep.subr.mxu0 0.0
        %6163 = vmatpush1.msra.mxu0 0.0
        %6164 = vmatprep.subr.mxu0 0.0
        %6165 = vmatpush1.msra.mxu0 0.0
        %6166 = vmatprep.subr.mxu0 0.0
        %6167 = vmatpush1.msra.mxu0 0.0
        %6168 = vmatprep.subr.mxu0 0.0
        %6169 = vmatpush1.msra.mxu0 0.0
        %6170 = vmatprep.subr.mxu0 0.0
        %6171 = vmatpush1.msra.mxu0 0.0
        %6172 = vmatprep.subr.mxu0 0.0
        %6173 = vmatpush1.msra.mxu0 0.0
        %6174 = vmatprep.subr.mxu0 0.0
        %6175 = vmatpush1.msra.mxu0 0.0
        %6176 = vmatprep.subr.mxu0 0.0
        %6177 = vmatpush1.msra.mxu0 0.0
        %6178 = vmatprep.subr.mxu0 0.0
        %6179 = vmatpush1.msra.mxu0 0.0
        %6180 = vmatprep.subr.mxu0 0.0
        %6181 = vmatpush1.msra.mxu0 0.0
        %6182 = vmatprep.subr.mxu0 0.0
        %6183 = vmatpush1.msra.mxu0 0.0
        %6184 = vmatprep.subr.mxu0 0.0
        %6185 = vmatpush1.msra.mxu0 0.0
        %6186 = vmatprep.subr.mxu0 0.0
        %6187 = vmatpush1.msra.mxu0 0.0
        %6188 = vmatprep.subr.mxu0 0.0
        %6189 = vmatpush1.msra.mxu0 0.0
        %6190 = vmatprep.subr.mxu0 0.0
        %6191 = vmatpush1.msra.mxu0 0.0
        %6192 = vmatprep.subr.mxu0 0.0
        %6193 = vmatpush1.msra.mxu0 0.0
        %6194 = vmatprep.subr.mxu0 0.0
        %6195 = vmatpush1.msra.mxu0 0.0
        %6196 = vmatprep.subr.mxu0 0.0
        %6197 = vmatpush1.msra.mxu0 0.0
        %6198 = vmatprep.mubr.f32.mxu0 0.0
        %6199 = vmatmul.mubr.f32.gmra.mrb[0].mxu0 %v6132
        %v6200 = vpop.f32.mrb[0].mxu0
        %v6201 = vadd.f32 0.0, %v6200
        %v6202 = vpop.f32.mrb[0].mxu0
        %v6203 = vadd.f32 0.0, %v6202
        %6204 = vdwg.mxu0
        %v6205 = vsel %vm6131, %v2011, 0
        %6207 = vmatprep.subr.mxu0 %v6130
        %6208 = vmatpush1.msra.mxu0 %v6129
        %6209 = vmatprep.subr.mxu0 0.0
        %6210 = vmatpush1.msra.mxu0 0.0
        %6211 = vmatprep.subr.mxu0 0.0
        %6212 = vmatpush1.msra.mxu0 0.0
        %6213 = vmatprep.subr.mxu0 0.0
        %6214 = vmatpush1.msra.mxu0 0.0
        %6215 = vmatprep.subr.mxu0 0.0
        %6216 = vmatpush1.msra.mxu0 0.0
        %6217 = vmatprep.subr.mxu0 0.0
        %6218 = vmatpush1.msra.mxu0 0.0
        %6219 = vmatprep.subr.mxu0 0.0
        %6220 = vmatpush1.msra.mxu0 0.0
        %6221 = vmatprep.subr.mxu0 0.0
        %6222 = vmatpush1.msra.mxu0 0.0
        %6223 = vmatprep.subr.mxu0 0.0
        %6224 = vmatpush1.msra.mxu0 0.0
        %6225 = vmatprep.subr.mxu0 0.0
        %6226 = vmatpush1.msra.mxu0 0.0
        %6227 = vmatprep.subr.mxu0 0.0
        %6228 = vmatpush1.msra.mxu0 0.0
        %6229 = vmatprep.subr.mxu0 0.0
        %6230 = vmatpush1.msra.mxu0 0.0
        %6231 = vmatprep.subr.mxu0 0.0
        %6232 = vmatpush1.msra.mxu0 0.0
        %6233 = vmatprep.subr.mxu0 0.0
        %6234 = vmatpush1.msra.mxu0 0.0
        %6235 = vmatprep.subr.mxu0 0.0
        %6236 = vmatpush1.msra.mxu0 0.0
        %6237 = vmatprep.subr.mxu0 0.0
        %6238 = vmatpush1.msra.mxu0 0.0
        %6239 = vmatprep.subr.mxu0 0.0
        %6240 = vmatpush1.msra.mxu0 0.0
        %6241 = vmatprep.subr.mxu0 0.0
        %6242 = vmatpush1.msra.mxu0 0.0
        %6243 = vmatprep.subr.mxu0 0.0
        %6244 = vmatpush1.msra.mxu0 0.0
        %6245 = vmatprep.subr.mxu0 0.0
        %6246 = vmatpush1.msra.mxu0 0.0
        %6247 = vmatprep.subr.mxu0 0.0
        %6248 = vmatpush1.msra.mxu0 0.0
        %6249 = vmatprep.subr.mxu0 0.0
        %6250 = vmatpush1.msra.mxu0 0.0
        %6251 = vmatprep.subr.mxu0 0.0
        %6252 = vmatpush1.msra.mxu0 0.0
        %6253 = vmatprep.subr.mxu0 0.0
        %6254 = vmatpush1.msra.mxu0 0.0
        %6255 = vmatprep.subr.mxu0 0.0
        %6256 = vmatpush1.msra.mxu0 0.0
        %6257 = vmatprep.subr.mxu0 0.0
        %6258 = vmatpush1.msra.mxu0 0.0
        %6259 = vmatprep.subr.mxu0 0.0
        %6260 = vmatpush1.msra.mxu0 0.0
        %6261 = vmatprep.subr.mxu0 0.0
        %6262 = vmatpush1.msra.mxu0 0.0
        %6263 = vmatprep.subr.mxu0 0.0
        %6264 = vmatpush1.msra.mxu0 0.0
        %6265 = vmatprep.subr.mxu0 0.0
        %6266 = vmatpush1.msra.mxu0 0.0
        %6267 = vmatprep.subr.mxu0 0.0
        %6268 = vmatpush1.msra.mxu0 0.0
        %6269 = vmatprep.subr.mxu0 0.0
        %6270 = vmatpush1.msra.mxu0 0.0
        %6271 = vmatprep.mubr.f32.mxu0 0.0
        %6272 = vmatmul.mubr.f32.gmra.mrb[0].mxu0 %v6205
        %v6273 = vpop.f32.mrb[0].mxu0
        %v6274 = vadd.f32 0.0, %v6273
        %v6275 = vpop.f32.mrb[0].mxu0
        %v6276 = vadd.f32 0.0, %v6275
        %6277 = vdwg.mxu0
        %v6278 = vmax.f32 %v6201, %v6274
        %v6279 = vmax.f32 %v6203, %v6276
        %v6282 = vcombine.low %v6278, %v6279
        %6284 = vst [vmem:[%s362] sm:$0xff] %v6282
        %p6285 = scmp.lt.s32.totalorder %s22, 3
        %s6286 = scalar_select %p6285, %s22, 3
        %s6287 = smul.addr %s6286, 2
        %s6288 = smul.addr %s6287, 4
        %s6289 = scalar_lea.vmem %s7, %s6288
        // Predicated region
        $region73: #{_lambda_.2} parent=47 // pred_check
          %p6290 = pneg %p192
        $region74: #{_lambda_.2} parent=47 // pred_check_branch
          %6292 = sbr.rel (%p6290) target = $region76
        $region75: #{_lambda_.2} parent=47 // pred_region
          _
        $region76: #{_lambda_.2} parent=47 // pred_fallthru
          _
      $region48: #{_lambda_.2} parent=5 // pred_fallthru
        _
      %p6293 = scmp.le.s32.totalorder 2, %s17
      // Predicated region
      $region77: #{_lambda_.2} parent=5 // pred_check
        %p6294 = pneg %p6293
      $region78: #{_lambda_.2} parent=5 // pred_check_branch
        %6296 = sbr.rel (%p6294) target = $region80
      $region79: #{_lambda_.2} parent=5 // pred_region
        %s6297 = ssub.s32 %s17, 2
        // Predicated region
        $region81: #{_lambda_.2} parent=79 // pred_check
          %p6298 = pneg %p198
        $region82: #{_lambda_.2} parent=79 // pred_check_branch
          %6300 = sbr.rel (%p6298) target = $region84
        $region83: #{_lambda_.2} parent=79 // pred_region
          %p6301 = scmp.lt.s32.totalorder %s23, 3
          %s6302 = scalar_select %p6301, %s23, 3
          %s6303 = smul.addr %s6302, 2
          %s6304 = smul.addr %s6303, 4
          %s6305 = scalar_lea.vmem %s7, %s6304
        $region84: #{_lambda_.2} parent=79 // pred_fallthru
          _
      $region80: #{_lambda_.2} parent=5 // pred_fallthru
        _
    $region6: #{_lambda_.2} parent=1 // loop_footer
      %s21 = sadd.s32 1, %s17
    $region7: #{_lambda_.2} parent=1 // loop_footer_branch
      %16 = sbr.rel target = $region3
    $region8: #{_lambda_.2} parent=1 // loop_exit
      _
    %6306 = vsyncpa [#allocation3], 1
    %s6307 = scalar_lea.sflag [#allocation3], 1
    %6308 = vsyncpa %s6307, 1
    %6309 = vsyncpa [#allocation5], 1
    %6310 = vsyncpa [#allocation8], 1
    %6311 = vsyncpa [#allocation11], 1

// kernel: _lambda_.3
$region0: #{_lambda_.3}
  #allocation0 [shape = 'u32[]', space=smem, size = 0x4, offset = 0x4, fixed_abs, tag = 'smem constant byte address 0x4 - core index']
  #allocation1 [shape = 'u32[144,128]{1,0:T(1,128)}', space=vmem, size = 0x12000, scoped, tag = 'internal scratch']
  %s0 = inlined_call_operand.vmem [shape: f32[4,4,256], index: 0, kind: input, shape index: {}]
  %s1 = inlined_call_operand.vmem [shape: bf16[4,256,1024], index: 1, kind: input, shape index: {}]
  %s2 = inlined_call_operand.vmem [shape: f32[1,1024], index: 2, kind: input, shape index: {}]
  %s3 = inlined_call_operand.vmem [shape: bf16[1024,10], index: 3, kind: input, shape index: {}]
  %s4 = inlined_call_operand.vmem [shape: f32[1,10], index: 4, kind: input, shape index: {}]
  %s5 = inlined_call_operand.vmem [shape: f32[10,10,82], index: 5, kind: input, shape index: {}]
  %s6 = inlined_call_operand.hbm [shape: f32[2,82], index: 6, kind: output, shape index: {}]
  %s7 = sld [smem:[#allocation0]]
  $region34: #{_lambda_.3} parent=0
    _
  %s9 = ssub.s32 1, %s7
  %s10 = scalar_select 0, %s9, %s7
  $region1: #{_lambda_.3} parent=0
    #allocation2 [shape = 'u8[1024]{0}', space=vmem, size = 0x400, scoped, tag = 'output window, operand 0, single buffered']
    #allocation3 [shape = 's32[1]{0}', space=sflag, size = 0x4, scoped, tag = 'scoped memory for _lambda_.3']
    %11 = vsyncpa [#allocation3], 0
    // Predicated region
    $region2: #{_lambda_.3} parent=1 // pred_check
      _
    $region3: #{_lambda_.3} parent=1 // pred_check_branch
      %13 = sbr.rel (0) target = $region5
    $region4: #{_lambda_.3} parent=1 // pred_region
      _
    $region5: #{_lambda_.3} parent=1 // pred_fallthru
      _
    // Predicated region
    $region6: #{_lambda_.3} parent=1 // pred_check
      _
    $region7: #{_lambda_.3} parent=1 // pred_check_branch
      %15 = sbr.rel (0) target = $region9
    $region8: #{_lambda_.3} parent=1 // pred_region
      _
    $region9: #{_lambda_.3} parent=1 // pred_fallthru
      _
    // Predicated region
    $region10: #{_lambda_.3} parent=1 // pred_check
      _
    $region11: #{_lambda_.3} parent=1 // pred_check_branch
      %17 = sbr.rel (0) target = $region13
    $region12: #{_lambda_.3} parent=1 // pred_region
      _
    $region13: #{_lambda_.3} parent=1 // pred_fallthru
      _
    // Predicated region
    $region14: #{_lambda_.3} parent=1 // pred_check
      _
    $region15: #{_lambda_.3} parent=1 // pred_check_branch
      %19 = sbr.rel (0) target = $region17
    $region16: #{_lambda_.3} parent=1 // pred_region
      _
    $region17: #{_lambda_.3} parent=1 // pred_fallthru
      _
    // Predicated region
    $region18: #{_lambda_.3} parent=1 // pred_check
      _
    $region19: #{_lambda_.3} parent=1 // pred_check_branch
      %21 = sbr.rel (0) target = $region21
    $region20: #{_lambda_.3} parent=1 // pred_region
      _
    $region21: #{_lambda_.3} parent=1 // pred_fallthru
      _
    // Predicated region
    $region22: #{_lambda_.3} parent=1 // pred_check
      _
    $region23: #{_lambda_.3} parent=1 // pred_check_branch
      %23 = sbr.rel (0) target = $region25
    $region24: #{_lambda_.3} parent=1 // pred_region
      _
    $region25: #{_lambda_.3} parent=1 // pred_fallthru
      _
    %v25 = vld [vmem:[%s0] ss:$4 sm:$0x3]
    %s26 = scalar_lea.vmem %s0, 8
    %v27 = vld [vmem:[%s26] ss:$4 sm:$0x3]
    %s28 = scalar_lea.vmem %s0, 16
    %v29 = vld [vmem:[%s28] ss:$4 sm:$0x3]
    %s30 = scalar_lea.vmem %s0, 24
    %v31 = vld [vmem:[%s30] ss:$4 sm:$0x3]
    %v36 = vlaneseq
    %v37 = vshrl.u32 %v36, 7
    %v38 = vsub.s32 0, %v37
    %v39 = vrot.slane %v25, %v38
    %v40 = vlaneseq
    %v41 = vshrl.u32 %v40, 7
    %v42 = vsub.s32 1, %v41
    %v43 = vrot.slane %v25, %v42
    %v44 = vlaneseq
    %v45 = vshrl.u32 %v44, 7
    %v46 = vsub.s32 0, %v45
    %v47 = vrot.slane %v27, %v46
    %v48 = vlaneseq
    %v49 = vshrl.u32 %v48, 7
    %v50 = vsub.s32 1, %v49
    %v51 = vrot.slane %v27, %v50
    %v52 = vlaneseq
    %v53 = vshrl.u32 %v52, 7
    %v54 = vsub.s32 0, %v53
    %v55 = vrot.slane %v29, %v54
    %v56 = vlaneseq
    %v57 = vshrl.u32 %v56, 7
    %v58 = vsub.s32 1, %v57
    %v59 = vrot.slane %v29, %v58
    %v60 = vlaneseq
    %v61 = vshrl.u32 %v60, 7
    %v62 = vsub.s32 0, %v61
    %v63 = vrot.slane %v31, %v62
    %v64 = vlaneseq
    %v65 = vshrl.u32 %v64, 7
    %v66 = vsub.s32 1, %v65
    %v67 = vrot.slane %v31, %v66
    %v76 = vpack.c.bf16 %v39, %v39
    %v77 = vpack.c.bf16 %v43, %v43
    %v78 = vpack.c.bf16 %v47, %v47
    %v79 = vpack.c.bf16 %v51, %v51
    %v80 = vpack.c.bf16 %v55, %v55
    %v81 = vpack.c.bf16 %v59, %v59
    %v82 = vpack.c.bf16 %v63, %v63
    %v83 = vpack.c.bf16 %v67, %v67
    %v84 = vld [vmem:[%s1] sm:$0xff]
    %v85 = vld [vmem:[%s1 + $0x8] sm:$0xff]
    %v86 = vld [vmem:[%s1 + $0x10] sm:$0xff]
    %v87 = vld [vmem:[%s1 + $0x18] sm:$0xff]
    %v88 = vld [vmem:[%s1 + $0x20] sm:$0xff]
    %v89 = vld [vmem:[%s1 + $0x28] sm:$0xff]
    %v90 = vld [vmem:[%s1 + $0x30] sm:$0xff]
    %v91 = vld [vmem:[%s1 + $0x38] sm:$0xff]
    %v92 = vld [vmem:[%s1 + $0x40] sm:$0xff]
    %v93 = vld [vmem:[%s1 + $0x48] sm:$0xff]
    %v94 = vld [vmem:[%s1 + $0x50] sm:$0xff]
    %v95 = vld [vmem:[%s1 + $0x58] sm:$0xff]
    %v96 = vld [vmem:[%s1 + $0x60] sm:$0xff]
    %v97 = vld [vmem:[%s1 + $0x68] sm:$0xff]
    %v98 = vld [vmem:[%s1 + $0x70] sm:$0xff]
    %v99 = vld [vmem:[%s1 + $0x78] sm:$0xff]
    %v100 = vld [vmem:[%s1 + $0x80] sm:$0xff]
    %v101 = vld [vmem:[%s1 + $0x88] sm:$0xff]
    %v102 = vld [vmem:[%s1 + $0x90] sm:$0xff]
    %v103 = vld [vmem:[%s1 + $0x98] sm:$0xff]
    %v104 = vld [vmem:[%s1 + $0xa0] sm:$0xff]
    %v105 = vld [vmem:[%s1 + $0xa8] sm:$0xff]
    %v106 = vld [vmem:[%s1 + $0xb0] sm:$0xff]
    %v107 = vld [vmem:[%s1 + $0xb8] sm:$0xff]
    %v108 = vld [vmem:[%s1 + $0xc0] sm:$0xff]
    %v109 = vld [vmem:[%s1 + $0xc8] sm:$0xff]
    %v110 = vld [vmem:[%s1 + $0xd0] sm:$0xff]
    %v111 = vld [vmem:[%s1 + $0xd8] sm:$0xff]
    %v112 = vld [vmem:[%s1 + $0xe0] sm:$0xff]
    %v113 = vld [vmem:[%s1 + $0xe8] sm:$0xff]
    %v114 = vld [vmem:[%s1 + $0xf0] sm:$0xff]
    %v115 = vld [vmem:[%s1 + $0xf8] sm:$0xff]
    %v116 = vld [vmem:[%s1 + $0x100] sm:$0xff]
    %v117 = vld [vmem:[%s1 + $0x108] sm:$0xff]
    %v118 = vld [vmem:[%s1 + $0x110] sm:$0xff]
    %v119 = vld [vmem:[%s1 + $0x118] sm:$0xff]
    %v120 = vld [vmem:[%s1 + $0x120] sm:$0xff]
    %v121 = vld [vmem:[%s1 + $0x128] sm:$0xff]
    %v122 = vld [vmem:[%s1 + $0x130] sm:$0xff]
    %v123 = vld [vmem:[%s1 + $0x138] sm:$0xff]
    %v124 = vld [vmem:[%s1 + $0x140] sm:$0xff]
    %v125 = vld [vmem:[%s1 + $0x148] sm:$0xff]
    %v126 = vld [vmem:[%s1 + $0x150] sm:$0xff]
    %v127 = vld [vmem:[%s1 + $0x158] sm:$0xff]
    %v128 = vld [vmem:[%s1 + $0x160] sm:$0xff]
    %v129 = vld [vmem:[%s1 + $0x168] sm:$0xff]
    %v130 = vld [vmem:[%s1 + $0x170] sm:$0xff]
    %v131 = vld [vmem:[%s1 + $0x178] sm:$0xff]
    %v132 = vld [vmem:[%s1 + $0x180] sm:$0xff]
    %v133 = vld [vmem:[%s1 + $0x188] sm:$0xff]
    %v134 = vld [vmem:[%s1 + $0x190] sm:$0xff]
    %v135 = vld [vmem:[%s1 + $0x198] sm:$0xff]
    %v136 = vld [vmem:[%s1 + $0x1a0] sm:$0xff]
    %v137 = vld [vmem:[%s1 + $0x1a8] sm:$0xff]
    %v138 = vld [vmem:[%s1 + $0x1b0] sm:$0xff]
    %v139 = vld [vmem:[%s1 + $0x1b8] sm:$0xff]
    %v140 = vld [vmem:[%s1 + $0x1c0] sm:$0xff]
    %v141 = vld [vmem:[%s1 + $0x1c8] sm:$0xff]
    %v142 = vld [vmem:[%s1 + $0x1d0] sm:$0xff]
    %v143 = vld [vmem:[%s1 + $0x1d8] sm:$0xff]
    %v144 = vld [vmem:[%s1 + $0x1e0] sm:$0xff]
    %v145 = vld [vmem:[%s1 + $0x1e8] sm:$0xff]
    %v146 = vld [vmem:[%s1 + $0x1f0] sm:$0xff]
    %v147 = vld [vmem:[%s1 + $0x1f8] sm:$0xff]
    %v148 = vld [vmem:[%s1 + $0x200] sm:$0xff]
    %v149 = vld [vmem:[%s1 + $0x208] sm:$0xff]
    %v150 = vld [vmem:[%s1 + $0x210] sm:$0xff]
    %v151 = vld [vmem:[%s1 + $0x218] sm:$0xff]
    %v152 = vld [vmem:[%s1 + $0x220] sm:$0xff]
    %v153 = vld [vmem:[%s1 + $0x228] sm:$0xff]
    %v154 = vld [vmem:[%s1 + $0x230] sm:$0xff]
    %v155 = vld [vmem:[%s1 + $0x238] sm:$0xff]
    %v156 = vld [vmem:[%s1 + $0x240] sm:$0xff]
    %v157 = vld [vmem:[%s1 + $0x248] sm:$0xff]
    %v158 = vld [vmem:[%s1 + $0x250] sm:$0xff]
    %v159 = vld [vmem:[%s1 + $0x258] sm:$0xff]
    %v160 = vld [vmem:[%s1 + $0x260] sm:$0xff]
    %v161 = vld [vmem:[%s1 + $0x268] sm:$0xff]
    %v162 = vld [vmem:[%s1 + $0x270] sm:$0xff]
    %v163 = vld [vmem:[%s1 + $0x278] sm:$0xff]
    %v164 = vld [vmem:[%s1 + $0x280] sm:$0xff]
    %v165 = vld [vmem:[%s1 + $0x288] sm:$0xff]
    %v166 = vld [vmem:[%s1 + $0x290] sm:$0xff]
    %v167 = vld [vmem:[%s1 + $0x298] sm:$0xff]
    %v168 = vld [vmem:[%s1 + $0x2a0] sm:$0xff]
    %v169 = vld [vmem:[%s1 + $0x2a8] sm:$0xff]
    %v170 = vld [vmem:[%s1 + $0x2b0] sm:$0xff]
    %v171 = vld [vmem:[%s1 + $0x2b8] sm:$0xff]
    %v172 = vld [vmem:[%s1 + $0x2c0] sm:$0xff]
    %v173 = vld [vmem:[%s1 + $0x2c8] sm:$0xff]
    %v174 = vld [vmem:[%s1 + $0x2d0] sm:$0xff]
    %v175 = vld [vmem:[%s1 + $0x2d8] sm:$0xff]
    %v176 = vld [vmem:[%s1 + $0x2e0] sm:$0xff]
    %v177 = vld [vmem:[%s1 + $0x2e8] sm:$0xff]
    %v178 = vld [vmem:[%s1 + $0x2f0] sm:$0xff]
    %v179 = vld [vmem:[%s1 + $0x2f8] sm:$0xff]
    %v180 = vld [vmem:[%s1 + $0x300] sm:$0xff]
    %v181 = vld [vmem:[%s1 + $0x308] sm:$0xff]
    %v182 = vld [vmem:[%s1 + $0x310] sm:$0xff]
    %v183 = vld [vmem:[%s1 + $0x318] sm:$0xff]
    %v184 = vld [vmem:[%s1 + $0x320] sm:$0xff]
    %v185 = vld [vmem:[%s1 + $0x328] sm:$0xff]
    %v186 = vld [vmem:[%s1 + $0x330] sm:$0xff]
    %v187 = vld [vmem:[%s1 + $0x338] sm:$0xff]
    %v188 = vld [vmem:[%s1 + $0x340] sm:$0xff]
    %v189 = vld [vmem:[%s1 + $0x348] sm:$0xff]
    %v190 = vld [vmem:[%s1 + $0x350] sm:$0xff]
    %v191 = vld [vmem:[%s1 + $0x358] sm:$0xff]
    %v192 = vld [vmem:[%s1 + $0x360] sm:$0xff]
    %v193 = vld [vmem:[%s1 + $0x368] sm:$0xff]
    %v194 = vld [vmem:[%s1 + $0x370] sm:$0xff]
    %v195 = vld [vmem:[%s1 + $0x378] sm:$0xff]
    %v196 = vld [vmem:[%s1 + $0x380] sm:$0xff]
    %v197 = vld [vmem:[%s1 + $0x388] sm:$0xff]
    %v198 = vld [vmem:[%s1 + $0x390] sm:$0xff]
    %v199 = vld [vmem:[%s1 + $0x398] sm:$0xff]
    %v200 = vld [vmem:[%s1 + $0x3a0] sm:$0xff]
    %v201 = vld [vmem:[%s1 + $0x3a8] sm:$0xff]
    %v202 = vld [vmem:[%s1 + $0x3b0] sm:$0xff]
    %v203 = vld [vmem:[%s1 + $0x3b8] sm:$0xff]
    %v204 = vld [vmem:[%s1 + $0x3c0] sm:$0xff]
    %v205 = vld [vmem:[%s1 + $0x3c8] sm:$0xff]
    %v206 = vld [vmem:[%s1 + $0x3d0] sm:$0xff]
    %v207 = vld [vmem:[%s1 + $0x3d8] sm:$0xff]
    %v208 = vld [vmem:[%s1 + $0x3e0] sm:$0xff]
    %v209 = vld [vmem:[%s1 + $0x3e8] sm:$0xff]
    %v210 = vld [vmem:[%s1 + $0x3f0] sm:$0xff]
    %v211 = vld [vmem:[%s1 + $0x3f8] sm:$0xff]
    %s212 = scalar_lea.vmem %s0, 1
    %v213 = vld [vmem:[%s212] ss:$4 sm:$0x3]
    %s214 = scalar_lea.vmem %s0, 9
    %v215 = vld [vmem:[%s214] ss:$4 sm:$0x3]
    %s216 = scalar_lea.vmem %s0, 17
    %v217 = vld [vmem:[%s216] ss:$4 sm:$0x3]
    %s218 = scalar_lea.vmem %s0, 25
    %v219 = vld [vmem:[%s218] ss:$4 sm:$0x3]
    %v224 = vlaneseq
    %v225 = vshrl.u32 %v224, 7
    %v226 = vsub.s32 0, %v225
    %v227 = vrot.slane %v213, %v226
    %v228 = vlaneseq
    %v229 = vshrl.u32 %v228, 7
    %v230 = vsub.s32 1, %v229
    %v231 = vrot.slane %v213, %v230
    %v232 = vlaneseq
    %v233 = vshrl.u32 %v232, 7
    %v234 = vsub.s32 0, %v233
    %v235 = vrot.slane %v215, %v234
    %v236 = vlaneseq
    %v237 = vshrl.u32 %v236, 7
    %v238 = vsub.s32 1, %v237
    %v239 = vrot.slane %v215, %v238
    %v240 = vlaneseq
    %v241 = vshrl.u32 %v240, 7
    %v242 = vsub.s32 0, %v241
    %v243 = vrot.slane %v217, %v242
    %v244 = vlaneseq
    %v245 = vshrl.u32 %v244, 7
    %v246 = vsub.s32 1, %v245
    %v247 = vrot.slane %v217, %v246
    %v248 = vlaneseq
    %v249 = vshrl.u32 %v248, 7
    %v250 = vsub.s32 0, %v249
    %v251 = vrot.slane %v219, %v250
    %v252 = vlaneseq
    %v253 = vshrl.u32 %v252, 7
    %v254 = vsub.s32 1, %v253
    %v255 = vrot.slane %v219, %v254
    %v264 = vpack.c.bf16 %v227, %v227
    %v265 = vpack.c.bf16 %v231, %v231
    %v266 = vpack.c.bf16 %v235, %v235
    %v267 = vpack.c.bf16 %v239, %v239
    %v268 = vpack.c.bf16 %v243, %v243
    %v269 = vpack.c.bf16 %v247, %v247
    %v270 = vpack.c.bf16 %v251, %v251
    %v271 = vpack.c.bf16 %v255, %v255
    %s272 = scalar_lea.vmem %s1, 1024
    %v273 = vld [vmem:[%s272] sm:$0xff]
    %v274 = vld [vmem:[%s272 + $0x8] sm:$0xff]
    %v275 = vld [vmem:[%s272 + $0x10] sm:$0xff]
    %v276 = vld [vmem:[%s272 + $0x18] sm:$0xff]
    %v277 = vld [vmem:[%s272 + $0x20] sm:$0xff]
    %v278 = vld [vmem:[%s272 + $0x28] sm:$0xff]
    %v279 = vld [vmem:[%s272 + $0x30] sm:$0xff]
    %v280 = vld [vmem:[%s272 + $0x38] sm:$0xff]
    %v281 = vld [vmem:[%s272 + $0x40] sm:$0xff]
    %v282 = vld [vmem:[%s272 + $0x48] sm:$0xff]
    %v283 = vld [vmem:[%s272 + $0x50] sm:$0xff]
    %v284 = vld [vmem:[%s272 + $0x58] sm:$0xff]
    %v285 = vld [vmem:[%s272 + $0x60] sm:$0xff]
    %v286 = vld [vmem:[%s272 + $0x68] sm:$0xff]
    %v287 = vld [vmem:[%s272 + $0x70] sm:$0xff]
    %v288 = vld [vmem:[%s272 + $0x78] sm:$0xff]
    %v289 = vld [vmem:[%s272 + $0x80] sm:$0xff]
    %v290 = vld [vmem:[%s272 + $0x88] sm:$0xff]
    %v291 = vld [vmem:[%s272 + $0x90] sm:$0xff]
    %v292 = vld [vmem:[%s272 + $0x98] sm:$0xff]
    %v293 = vld [vmem:[%s272 + $0xa0] sm:$0xff]
    %v294 = vld [vmem:[%s272 + $0xa8] sm:$0xff]
    %v295 = vld [vmem:[%s272 + $0xb0] sm:$0xff]
    %v296 = vld [vmem:[%s272 + $0xb8] sm:$0xff]
    %v297 = vld [vmem:[%s272 + $0xc0] sm:$0xff]
    %v298 = vld [vmem:[%s272 + $0xc8] sm:$0xff]
    %v299 = vld [vmem:[%s272 + $0xd0] sm:$0xff]
    %v300 = vld [vmem:[%s272 + $0xd8] sm:$0xff]
    %v301 = vld [vmem:[%s272 + $0xe0] sm:$0xff]
    %v302 = vld [vmem:[%s272 + $0xe8] sm:$0xff]
    %v303 = vld [vmem:[%s272 + $0xf0] sm:$0xff]
    %v304 = vld [vmem:[%s272 + $0xf8] sm:$0xff]
    %v305 = vld [vmem:[%s272 + $0x100] sm:$0xff]
    %v306 = vld [vmem:[%s272 + $0x108] sm:$0xff]
    %v307 = vld [vmem:[%s272 + $0x110] sm:$0xff]
    %v308 = vld [vmem:[%s272 + $0x118] sm:$0xff]
    %v309 = vld [vmem:[%s272 + $0x120] sm:$0xff]
    %v310 = vld [vmem:[%s272 + $0x128] sm:$0xff]
    %v311 = vld [vmem:[%s272 + $0x130] sm:$0xff]
    %v312 = vld [vmem:[%s272 + $0x138] sm:$0xff]
    %v313 = vld [vmem:[%s272 + $0x140] sm:$0xff]
    %v314 = vld [vmem:[%s272 + $0x148] sm:$0xff]
    %v315 = vld [vmem:[%s272 + $0x150] sm:$0xff]
    %v316 = vld [vmem:[%s272 + $0x158] sm:$0xff]
    %v317 = vld [vmem:[%s272 + $0x160] sm:$0xff]
    %v318 = vld [vmem:[%s272 + $0x168] sm:$0xff]
    %v319 = vld [vmem:[%s272 + $0x170] sm:$0xff]
    %v320 = vld [vmem:[%s272 + $0x178] sm:$0xff]
    %v321 = vld [vmem:[%s272 + $0x180] sm:$0xff]
    %v322 = vld [vmem:[%s272 + $0x188] sm:$0xff]
    %v323 = vld [vmem:[%s272 + $0x190] sm:$0xff]
    %v324 = vld [vmem:[%s272 + $0x198] sm:$0xff]
    %v325 = vld [vmem:[%s272 + $0x1a0] sm:$0xff]
    %v326 = vld [vmem:[%s272 + $0x1a8] sm:$0xff]
    %v327 = vld [vmem:[%s272 + $0x1b0] sm:$0xff]
    %v328 = vld [vmem:[%s272 + $0x1b8] sm:$0xff]
    %v329 = vld [vmem:[%s272 + $0x1c0] sm:$0xff]
    %v330 = vld [vmem:[%s272 + $0x1c8] sm:$0xff]
    %v331 = vld [vmem:[%s272 + $0x1d0] sm:$0xff]
    %v332 = vld [vmem:[%s272 + $0x1d8] sm:$0xff]
    %v333 = vld [vmem:[%s272 + $0x1e0] sm:$0xff]
    %v334 = vld [vmem:[%s272 + $0x1e8] sm:$0xff]
    %v335 = vld [vmem:[%s272 + $0x1f0] sm:$0xff]
    %v336 = vld [vmem:[%s272 + $0x1f8] sm:$0xff]
    %v337 = vld [vmem:[%s272 + $0x200] sm:$0xff]
    %v338 = vld [vmem:[%s272 + $0x208] sm:$0xff]
    %v339 = vld [vmem:[%s272 + $0x210] sm:$0xff]
    %v340 = vld [vmem:[%s272 + $0x218] sm:$0xff]
    %v341 = vld [vmem:[%s272 + $0x220] sm:$0xff]
    %v342 = vld [vmem:[%s272 + $0x228] sm:$0xff]
    %v343 = vld [vmem:[%s272 + $0x230] sm:$0xff]
    %v344 = vld [vmem:[%s272 + $0x238] sm:$0xff]
    %v345 = vld [vmem:[%s272 + $0x240] sm:$0xff]
    %v346 = vld [vmem:[%s272 + $0x248] sm:$0xff]
    %v347 = vld [vmem:[%s272 + $0x250] sm:$0xff]
    %v348 = vld [vmem:[%s272 + $0x258] sm:$0xff]
    %v349 = vld [vmem:[%s272 + $0x260] sm:$0xff]
    %v350 = vld [vmem:[%s272 + $0x268] sm:$0xff]
    %v351 = vld [vmem:[%s272 + $0x270] sm:$0xff]
    %v352 = vld [vmem:[%s272 + $0x278] sm:$0xff]
    %v353 = vld [vmem:[%s272 + $0x280] sm:$0xff]
    %v354 = vld [vmem:[%s272 + $0x288] sm:$0xff]
    %v355 = vld [vmem:[%s272 + $0x290] sm:$0xff]
    %v356 = vld [vmem:[%s272 + $0x298] sm:$0xff]
    %v357 = vld [vmem:[%s272 + $0x2a0] sm:$0xff]
    %v358 = vld [vmem:[%s272 + $0x2a8] sm:$0xff]
    %v359 = vld [vmem:[%s272 + $0x2b0] sm:$0xff]
    %v360 = vld [vmem:[%s272 + $0x2b8] sm:$0xff]
    %v361 = vld [vmem:[%s272 + $0x2c0] sm:$0xff]
    %v362 = vld [vmem:[%s272 + $0x2c8] sm:$0xff]
    %v363 = vld [vmem:[%s272 + $0x2d0] sm:$0xff]
    %v364 = vld [vmem:[%s272 + $0x2d8] sm:$0xff]
    %v365 = vld [vmem:[%s272 + $0x2e0] sm:$0xff]
    %v366 = vld [vmem:[%s272 + $0x2e8] sm:$0xff]
    %v367 = vld [vmem:[%s272 + $0x2f0] sm:$0xff]
    %v368 = vld [vmem:[%s272 + $0x2f8] sm:$0xff]
    %v369 = vld [vmem:[%s272 + $0x300] sm:$0xff]
    %v370 = vld [vmem:[%s272 + $0x308] sm:$0xff]
    %v371 = vld [vmem:[%s272 + $0x310] sm:$0xff]
    %v372 = vld [vmem:[%s272 + $0x318] sm:$0xff]
    %v373 = vld [vmem:[%s272 + $0x320] sm:$0xff]
    %v374 = vld [vmem:[%s272 + $0x328] sm:$0xff]
    %v375 = vld [vmem:[%s272 + $0x330] sm:$0xff]
    %v376 = vld [vmem:[%s272 + $0x338] sm:$0xff]
    %v377 = vld [vmem:[%s272 + $0x340] sm:$0xff]
    %v378 = vld [vmem:[%s272 + $0x348] sm:$0xff]
    %v379 = vld [vmem:[%s272 + $0x350] sm:$0xff]
    %v380 = vld [vmem:[%s272 + $0x358] sm:$0xff]
    %v381 = vld [vmem:[%s272 + $0x360] sm:$0xff]
    %v382 = vld [vmem:[%s272 + $0x368] sm:$0xff]
    %v383 = vld [vmem:[%s272 + $0x370] sm:$0xff]
    %v384 = vld [vmem:[%s272 + $0x378] sm:$0xff]
    %v385 = vld [vmem:[%s272 + $0x380] sm:$0xff]
    %v386 = vld [vmem:[%s272 + $0x388] sm:$0xff]
    %v387 = vld [vmem:[%s272 + $0x390] sm:$0xff]
    %v388 = vld [vmem:[%s272 + $0x398] sm:$0xff]
    %v389 = vld [vmem:[%s272 + $0x3a0] sm:$0xff]
    %v390 = vld [vmem:[%s272 + $0x3a8] sm:$0xff]
    %v391 = vld [vmem:[%s272 + $0x3b0] sm:$0xff]
    %v392 = vld [vmem:[%s272 + $0x3b8] sm:$0xff]
    %v393 = vld [vmem:[%s272 + $0x3c0] sm:$0xff]
    %v394 = vld [vmem:[%s272 + $0x3c8] sm:$0xff]
    %v395 = vld [vmem:[%s272 + $0x3d0] sm:$0xff]
    %v396 = vld [vmem:[%s272 + $0x3d8] sm:$0xff]
    %v397 = vld [vmem:[%s272 + $0x3e0] sm:$0xff]
    %v398 = vld [vmem:[%s272 + $0x3e8] sm:$0xff]
    %v399 = vld [vmem:[%s272 + $0x3f0] sm:$0xff]
    %v400 = vld [vmem:[%s272 + $0x3f8] sm:$0xff]
    %v409 = vunpack.c.l.b16 %v264
    %v410 = vunpack.c.l.b16 %v265
    %v411 = vunpack.c.l.b16 %v266
    %v412 = vunpack.c.l.b16 %v267
    %v413 = vunpack.c.l.b16 %v268
    %v414 = vunpack.c.l.b16 %v269
    %v415 = vunpack.c.l.b16 %v270
    %v416 = vunpack.c.l.b16 %v271
    %v417 = vrot.slane %v411, 7
    %vm418 = vcmask 1041409
    %v419 = vsel %vm418, %v417, %v409
    %v420 = vrot.slane %v413, 6
    %vm421 = vcmask 1042434
    %v422 = vsel %vm421, %v420, %v419
    %v423 = vrot.slane %v415, 5
    %vm424 = vcmask 1043459
    %v425 = vsel %vm424, %v423, %v422
    %v426 = vrot.slane %v412, 7
    %v427 = vsel %vm418, %v426, %v410
    %v428 = vrot.slane %v414, 6
    %v429 = vsel %vm421, %v428, %v427
    %v430 = vrot.slane %v416, 5
    %v431 = vsel %vm424, %v430, %v429
    %v432 = vpack.c.b16 %v425, %v425
    %v433 = vpack.c.b16 %v431, %v431
    %v564 = vunpack.c.l.b16 %v273
    %v565 = vunpack.c.h.b16 %v273
    %v566 = vunpack.c.l.b16 %v274
    %v567 = vunpack.c.h.b16 %v274
    %v568 = vunpack.c.l.b16 %v275
    %v569 = vunpack.c.h.b16 %v275
    %v570 = vunpack.c.l.b16 %v276
    %v571 = vunpack.c.h.b16 %v276
    %v572 = vunpack.c.l.b16 %v277
    %v573 = vunpack.c.h.b16 %v277
    %v574 = vunpack.c.l.b16 %v278
    %v575 = vunpack.c.h.b16 %v278
    %v576 = vunpack.c.l.b16 %v279
    %v577 = vunpack.c.h.b16 %v279
    %v578 = vunpack.c.l.b16 %v280
    %v579 = vunpack.c.h.b16 %v280
    %v580 = vunpack.c.l.b16 %v281
    %v581 = vunpack.c.h.b16 %v281
    %v582 = vunpack.c.l.b16 %v282
    %v583 = vunpack.c.h.b16 %v282
    %v584 = vunpack.c.l.b16 %v283
    %v585 = vunpack.c.h.b16 %v283
    %v586 = vunpack.c.l.b16 %v284
    %v587 = vunpack.c.h.b16 %v284
    %v588 = vunpack.c.l.b16 %v285
    %v589 = vunpack.c.h.b16 %v285
    %v590 = vunpack.c.l.b16 %v286
    %v591 = vunpack.c.h.b16 %v286
    %v592 = vunpack.c.l.b16 %v287
    %v593 = vunpack.c.h.b16 %v287
    %v594 = vunpack.c.l.b16 %v288
    %v595 = vunpack.c.h.b16 %v288
    %v596 = vunpack.c.l.b16 %v289
    %v597 = vunpack.c.h.b16 %v289
    %v598 = vunpack.c.l.b16 %v290
    %v599 = vunpack.c.h.b16 %v290
    %v600 = vunpack.c.l.b16 %v291
    %v601 = vunpack.c.h.b16 %v291
    %v602 = vunpack.c.l.b16 %v292
    %v603 = vunpack.c.h.b16 %v292
    %v604 = vunpack.c.l.b16 %v293
    %v605 = vunpack.c.h.b16 %v293
    %v606 = vunpack.c.l.b16 %v294
    %v607 = vunpack.c.h.b16 %v294
    %v608 = vunpack.c.l.b16 %v295
    %v609 = vunpack.c.h.b16 %v295
    %v610 = vunpack.c.l.b16 %v296
    %v611 = vunpack.c.h.b16 %v296
    %v612 = vunpack.c.l.b16 %v297
    %v613 = vunpack.c.h.b16 %v297
    %v614 = vunpack.c.l.b16 %v298
    %v615 = vunpack.c.h.b16 %v298
    %v616 = vunpack.c.l.b16 %v299
    %v617 = vunpack.c.h.b16 %v299
    %v618 = vunpack.c.l.b16 %v300
    %v619 = vunpack.c.h.b16 %v300
    %v620 = vunpack.c.l.b16 %v301
    %v621 = vunpack.c.h.b16 %v301
    %v622 = vunpack.c.l.b16 %v302
    %v623 = vunpack.c.h.b16 %v302
    %v624 = vunpack.c.l.b16 %v303
    %v625 = vunpack.c.h.b16 %v303
    %v626 = vunpack.c.l.b16 %v304
    %v627 = vunpack.c.h.b16 %v304
    %v628 = vunpack.c.l.b16 %v305
    %v629 = vunpack.c.h.b16 %v305
    %v630 = vunpack.c.l.b16 %v306
    %v631 = vunpack.c.h.b16 %v306
    %v632 = vunpack.c.l.b16 %v307
    %v633 = vunpack.c.h.b16 %v307
    %v634 = vunpack.c.l.b16 %v308
    %v635 = vunpack.c.h.b16 %v308
    %v636 = vunpack.c.l.b16 %v309
    %v637 = vunpack.c.h.b16 %v309
    %v638 = vunpack.c.l.b16 %v310
    %v639 = vunpack.c.h.b16 %v310
    %v640 = vunpack.c.l.b16 %v311
    %v641 = vunpack.c.h.b16 %v311
    %v642 = vunpack.c.l.b16 %v312
    %v643 = vunpack.c.h.b16 %v312
    %v644 = vunpack.c.l.b16 %v313
    %v645 = vunpack.c.h.b16 %v313
    %v646 = vunpack.c.l.b16 %v314
    %v647 = vunpack.c.h.b16 %v314
    %v648 = vunpack.c.l.b16 %v315
    %v649 = vunpack.c.h.b16 %v315
    %v650 = vunpack.c.l.b16 %v316
    %v651 = vunpack.c.h.b16 %v316
    %v652 = vunpack.c.l.b16 %v317
    %v653 = vunpack.c.h.b16 %v317
    %v654 = vunpack.c.l.b16 %v318
    %v655 = vunpack.c.h.b16 %v318
    %v656 = vunpack.c.l.b16 %v319
    %v657 = vunpack.c.h.b16 %v319
    %v658 = vunpack.c.l.b16 %v320
    %v659 = vunpack.c.h.b16 %v320
    %v660 = vunpack.c.l.b16 %v321
    %v661 = vunpack.c.h.b16 %v321
    %v662 = vunpack.c.l.b16 %v322
    %v663 = vunpack.c.h.b16 %v322
    %v664 = vunpack.c.l.b16 %v323
    %v665 = vunpack.c.h.b16 %v323
    %v666 = vunpack.c.l.b16 %v324
    %v667 = vunpack.c.h.b16 %v324
    %v668 = vunpack.c.l.b16 %v325
    %v669 = vunpack.c.h.b16 %v325
    %v670 = vunpack.c.l.b16 %v326
    %v671 = vunpack.c.h.b16 %v326
    %v672 = vunpack.c.l.b16 %v327
    %v673 = vunpack.c.h.b16 %v327
    %v674 = vunpack.c.l.b16 %v328
    %v675 = vunpack.c.h.b16 %v328
    %v676 = vunpack.c.l.b16 %v329
    %v677 = vunpack.c.h.b16 %v329
    %v678 = vunpack.c.l.b16 %v330
    %v679 = vunpack.c.h.b16 %v330
    %v680 = vunpack.c.l.b16 %v331
    %v681 = vunpack.c.h.b16 %v331
    %v682 = vunpack.c.l.b16 %v332
    %v683 = vunpack.c.h.b16 %v332
    %v684 = vunpack.c.l.b16 %v333
    %v685 = vunpack.c.h.b16 %v333
    %v686 = vunpack.c.l.b16 %v334
    %v687 = vunpack.c.h.b16 %v334
    %v688 = vunpack.c.l.b16 %v335
    %v689 = vunpack.c.h.b16 %v335
    %v690 = vunpack.c.l.b16 %v336
    %v691 = vunpack.c.h.b16 %v336
    %v692 = vunpack.c.l.b16 %v337
    %v693 = vunpack.c.h.b16 %v337
    %v694 = vunpack.c.l.b16 %v338
    %v695 = vunpack.c.h.b16 %v338
    %v696 = vunpack.c.l.b16 %v339
    %v697 = vunpack.c.h.b16 %v339
    %v698 = vunpack.c.l.b16 %v340
    %v699 = vunpack.c.h.b16 %v340
    %v700 = vunpack.c.l.b16 %v341
    %v701 = vunpack.c.h.b16 %v341
    %v702 = vunpack.c.l.b16 %v342
    %v703 = vunpack.c.h.b16 %v342
    %v704 = vunpack.c.l.b16 %v343
    %v705 = vunpack.c.h.b16 %v343
    %v706 = vunpack.c.l.b16 %v344
    %v707 = vunpack.c.h.b16 %v344
    %v708 = vunpack.c.l.b16 %v345
    %v709 = vunpack.c.h.b16 %v345
    %v710 = vunpack.c.l.b16 %v346
    %v711 = vunpack.c.h.b16 %v346
    %v712 = vunpack.c.l.b16 %v347
    %v713 = vunpack.c.h.b16 %v347
    %v714 = vunpack.c.l.b16 %v348
    %v715 = vunpack.c.h.b16 %v348
    %v716 = vunpack.c.l.b16 %v349
    %v717 = vunpack.c.h.b16 %v349
    %v718 = vunpack.c.l.b16 %v350
    %v719 = vunpack.c.h.b16 %v350
    %v720 = vunpack.c.l.b16 %v351
    %v721 = vunpack.c.h.b16 %v351
    %v722 = vunpack.c.l.b16 %v352
    %v723 = vunpack.c.h.b16 %v352
    %v724 = vunpack.c.l.b16 %v353
    %v725 = vunpack.c.h.b16 %v353
    %v726 = vunpack.c.l.b16 %v354
    %v727 = vunpack.c.h.b16 %v354
    %v728 = vunpack.c.l.b16 %v355
    %v729 = vunpack.c.h.b16 %v355
    %v730 = vunpack.c.l.b16 %v356
    %v731 = vunpack.c.h.b16 %v356
    %v732 = vunpack.c.l.b16 %v357
    %v733 = vunpack.c.h.b16 %v357
    %v734 = vunpack.c.l.b16 %v358
    %v735 = vunpack.c.h.b16 %v358
    %v736 = vunpack.c.l.b16 %v359
    %v737 = vunpack.c.h.b16 %v359
    %v738 = vunpack.c.l.b16 %v360
    %v739 = vunpack.c.h.b16 %v360
    %v740 = vunpack.c.l.b16 %v361
    %v741 = vunpack.c.h.b16 %v361
    %v742 = vunpack.c.l.b16 %v362
    %v743 = vunpack.c.h.b16 %v362
    %v744 = vunpack.c.l.b16 %v363
    %v745 = vunpack.c.h.b16 %v363
    %v746 = vunpack.c.l.b16 %v364
    %v747 = vunpack.c.h.b16 %v364
    %v748 = vunpack.c.l.b16 %v365
    %v749 = vunpack.c.h.b16 %v365
    %v750 = vunpack.c.l.b16 %v366
    %v751 = vunpack.c.h.b16 %v366
    %v752 = vunpack.c.l.b16 %v367
    %v753 = vunpack.c.h.b16 %v367
    %v754 = vunpack.c.l.b16 %v368
    %v755 = vunpack.c.h.b16 %v368
    %v756 = vunpack.c.l.b16 %v369
    %v757 = vunpack.c.h.b16 %v369
    %v758 = vunpack.c.l.b16 %v370
    %v759 = vunpack.c.h.b16 %v370
    %v760 = vunpack.c.l.b16 %v371
    %v761 = vunpack.c.h.b16 %v371
    %v762 = vunpack.c.l.b16 %v372
    %v763 = vunpack.c.h.b16 %v372
    %v764 = vunpack.c.l.b16 %v373
    %v765 = vunpack.c.h.b16 %v373
    %v766 = vunpack.c.l.b16 %v374
    %v767 = vunpack.c.h.b16 %v374
    %v768 = vunpack.c.l.b16 %v375
    %v769 = vunpack.c.h.b16 %v375
    %v770 = vunpack.c.l.b16 %v376
    %v771 = vunpack.c.h.b16 %v376
    %v772 = vunpack.c.l.b16 %v377
    %v773 = vunpack.c.h.b16 %v377
    %v774 = vunpack.c.l.b16 %v378
    %v775 = vunpack.c.h.b16 %v378
    %v776 = vunpack.c.l.b16 %v379
    %v777 = vunpack.c.h.b16 %v379
    %v778 = vunpack.c.l.b16 %v380
    %v779 = vunpack.c.h.b16 %v380
    %v780 = vunpack.c.l.b16 %v381
    %v781 = vunpack.c.h.b16 %v381
    %v782 = vunpack.c.l.b16 %v382
    %v783 = vunpack.c.h.b16 %v382
    %v784 = vunpack.c.l.b16 %v383
    %v785 = vunpack.c.h.b16 %v383
    %v786 = vunpack.c.l.b16 %v384
    %v787 = vunpack.c.h.b16 %v384
    %v788 = vunpack.c.l.b16 %v385
    %v789 = vunpack.c.h.b16 %v385
    %v790 = vunpack.c.l.b16 %v386
    %v791 = vunpack.c.h.b16 %v386
    %v792 = vunpack.c.l.b16 %v387
    %v793 = vunpack.c.h.b16 %v387
    %v794 = vunpack.c.l.b16 %v388
    %v795 = vunpack.c.h.b16 %v388
    %v796 = vunpack.c.l.b16 %v389
    %v797 = vunpack.c.h.b16 %v389
    %v798 = vunpack.c.l.b16 %v390
    %v799 = vunpack.c.h.b16 %v390
    %v800 = vunpack.c.l.b16 %v391
    %v801 = vunpack.c.h.b16 %v391
    %v802 = vunpack.c.l.b16 %v392
    %v803 = vunpack.c.h.b16 %v392
    %v804 = vunpack.c.l.b16 %v393
    %v805 = vunpack.c.h.b16 %v393
    %v806 = vunpack.c.l.b16 %v394
    %v807 = vunpack.c.h.b16 %v394
    %v808 = vunpack.c.l.b16 %v395
    %v809 = vunpack.c.h.b16 %v395
    %v810 = vunpack.c.l.b16 %v396
    %v811 = vunpack.c.h.b16 %v396
    %v812 = vunpack.c.l.b16 %v397
    %v813 = vunpack.c.h.b16 %v397
    %v814 = vunpack.c.l.b16 %v398
    %v815 = vunpack.c.h.b16 %v398
    %v816 = vunpack.c.l.b16 %v399
    %v817 = vunpack.c.h.b16 %v399
    %v818 = vunpack.c.l.b16 %v400
    %v819 = vunpack.c.h.b16 %v400
    %v820 = vpack.c.b16 %v572, %v564
    %v821 = vpack.c.b16 %v573, %v565
    %v822 = vpack.c.b16 %v574, %v566
    %v823 = vpack.c.b16 %v575, %v567
    %v824 = vpack.c.b16 %v576, %v568
    %v825 = vpack.c.b16 %v577, %v569
    %v826 = vpack.c.b16 %v578, %v570
    %v827 = vpack.c.b16 %v579, %v571
    %v828 = vpack.c.b16 %v588, %v580
    %v829 = vpack.c.b16 %v589, %v581
    %v830 = vpack.c.b16 %v590, %v582
    %v831 = vpack.c.b16 %v591, %v583
    %v832 = vpack.c.b16 %v592, %v584
    %v833 = vpack.c.b16 %v593, %v585
    %v834 = vpack.c.b16 %v594, %v586
    %v835 = vpack.c.b16 %v595, %v587
    %v836 = vpack.c.b16 %v604, %v596
    %v837 = vpack.c.b16 %v605, %v597
    %v838 = vpack.c.b16 %v606, %v598
    %v839 = vpack.c.b16 %v607, %v599
    %v840 = vpack.c.b16 %v608, %v600
    %v841 = vpack.c.b16 %v609, %v601
    %v842 = vpack.c.b16 %v610, %v602
    %v843 = vpack.c.b16 %v611, %v603
    %v844 = vpack.c.b16 %v620, %v612
    %v845 = vpack.c.b16 %v621, %v613
    %v846 = vpack.c.b16 %v622, %v614
    %v847 = vpack.c.b16 %v623, %v615
    %v848 = vpack.c.b16 %v624, %v616
    %v849 = vpack.c.b16 %v625, %v617
    %v850 = vpack.c.b16 %v626, %v618
    %v851 = vpack.c.b16 %v627, %v619
    %v852 = vpack.c.b16 %v636, %v628
    %v853 = vpack.c.b16 %v637, %v629
    %v854 = vpack.c.b16 %v638, %v630
    %v855 = vpack.c.b16 %v639, %v631
    %v856 = vpack.c.b16 %v640, %v632
    %v857 = vpack.c.b16 %v641, %v633
    %v858 = vpack.c.b16 %v642, %v634
    %v859 = vpack.c.b16 %v643, %v635
    %v860 = vpack.c.b16 %v652, %v644
    %v861 = vpack.c.b16 %v653, %v645
    %v862 = vpack.c.b16 %v654, %v646
    %v863 = vpack.c.b16 %v655, %v647
    %v864 = vpack.c.b16 %v656, %v648
    %v865 = vpack.c.b16 %v657, %v649
    %v866 = vpack.c.b16 %v658, %v650
    %v867 = vpack.c.b16 %v659, %v651
    %v868 = vpack.c.b16 %v668, %v660
    %v869 = vpack.c.b16 %v669, %v661
    %v870 = vpack.c.b16 %v670, %v662
    %v871 = vpack.c.b16 %v671, %v663
    %v872 = vpack.c.b16 %v672, %v664
    %v873 = vpack.c.b16 %v673, %v665
    %v874 = vpack.c.b16 %v674, %v666
    %v875 = vpack.c.b16 %v675, %v667
    %v876 = vpack.c.b16 %v684, %v676
    %v877 = vpack.c.b16 %v685, %v677
    %v878 = vpack.c.b16 %v686, %v678
    %v879 = vpack.c.b16 %v687, %v679
    %v880 = vpack.c.b16 %v688, %v680
    %v881 = vpack.c.b16 %v689, %v681
    %v882 = vpack.c.b16 %v690, %v682
    %v883 = vpack.c.b16 %v691, %v683
    %v884 = vpack.c.b16 %v700, %v692
    %v885 = vpack.c.b16 %v701, %v693
    %v886 = vpack.c.b16 %v702, %v694
    %v887 = vpack.c.b16 %v703, %v695
    %v888 = vpack.c.b16 %v704, %v696
    %v889 = vpack.c.b16 %v705, %v697
    %v890 = vpack.c.b16 %v706, %v698
    %v891 = vpack.c.b16 %v707, %v699
    %v892 = vpack.c.b16 %v716, %v708
    %v893 = vpack.c.b16 %v717, %v709
    %v894 = vpack.c.b16 %v718, %v710
    %v895 = vpack.c.b16 %v719, %v711
    %v896 = vpack.c.b16 %v720, %v712
    %v897 = vpack.c.b16 %v721, %v713
    %v898 = vpack.c.b16 %v722, %v714
    %v899 = vpack.c.b16 %v723, %v715
    %v900 = vpack.c.b16 %v732, %v724
    %v901 = vpack.c.b16 %v733, %v725
    %v902 = vpack.c.b16 %v734, %v726
    %v903 = vpack.c.b16 %v735, %v727
    %v904 = vpack.c.b16 %v736, %v728
    %v905 = vpack.c.b16 %v737, %v729
    %v906 = vpack.c.b16 %v738, %v730
    %v907 = vpack.c.b16 %v739, %v731
    %v908 = vpack.c.b16 %v748, %v740
    %v909 = vpack.c.b16 %v749, %v741
    %v910 = vpack.c.b16 %v750, %v742
    %v911 = vpack.c.b16 %v751, %v743
    %v912 = vpack.c.b16 %v752, %v744
    %v913 = vpack.c.b16 %v753, %v745
    %v914 = vpack.c.b16 %v754, %v746
    %v915 = vpack.c.b16 %v755, %v747
    %v916 = vpack.c.b16 %v764, %v756
    %v917 = vpack.c.b16 %v765, %v757
    %v918 = vpack.c.b16 %v766, %v758
    %v919 = vpack.c.b16 %v767, %v759
    %v920 = vpack.c.b16 %v768, %v760
    %v921 = vpack.c.b16 %v769, %v761
    %v922 = vpack.c.b16 %v770, %v762
    %v923 = vpack.c.b16 %v771, %v763
    %v924 = vpack.c.b16 %v780, %v772
    %v925 = vpack.c.b16 %v781, %v773
    %v926 = vpack.c.b16 %v782, %v774
    %v927 = vpack.c.b16 %v783, %v775
    %v928 = vpack.c.b16 %v784, %v776
    %v929 = vpack.c.b16 %v785, %v777
    %v930 = vpack.c.b16 %v786, %v778
    %v931 = vpack.c.b16 %v787, %v779
    %v932 = vpack.c.b16 %v796, %v788
    %v933 = vpack.c.b16 %v797, %v789
    %v934 = vpack.c.b16 %v798, %v790
    %v935 = vpack.c.b16 %v799, %v791
    %v936 = vpack.c.b16 %v800, %v792
    %v937 = vpack.c.b16 %v801, %v793
    %v938 = vpack.c.b16 %v802, %v794
    %v939 = vpack.c.b16 %v803, %v795
    %v940 = vpack.c.b16 %v812, %v804
    %v941 = vpack.c.b16 %v813, %v805
    %v942 = vpack.c.b16 %v814, %v806
    %v943 = vpack.c.b16 %v815, %v807
    %v944 = vpack.c.b16 %v816, %v808
    %v945 = vpack.c.b16 %v817, %v809
    %v946 = vpack.c.b16 %v818, %v810
    %v947 = vpack.c.b16 %v819, %v811
    %1076 = vmatprep.subr.bf16.mxu0 %v821
    %1077 = vmatpush1.bf16.msra.mxu0 %v820
    %1078 = vmatprep.subr.bf16.mxu0 %v829
    %1079 = vmatpush1.bf16.msra.mxu0 %v828
    %1080 = vmatprep.subr.bf16.mxu0 %v837
    %1081 = vmatpush1.bf16.msra.mxu0 %v836
    %1082 = vmatprep.subr.bf16.mxu0 %v845
    %1083 = vmatpush1.bf16.msra.mxu0 %v844
    %1084 = vmatprep.subr.bf16.mxu0 %v853
    %1085 = vmatpush1.bf16.msra.mxu0 %v852
    %1086 = vmatprep.subr.bf16.mxu0 %v861
    %1087 = vmatpush1.bf16.msra.mxu0 %v860
    %1088 = vmatprep.subr.bf16.mxu0 %v869
    %1089 = vmatpush1.bf16.msra.mxu0 %v868
    %1090 = vmatprep.subr.bf16.mxu0 %v877
    %1091 = vmatpush1.bf16.msra.mxu0 %v876
    %1092 = vmatprep.subr.bf16.mxu0 %v885
    %1093 = vmatpush1.bf16.msra.mxu0 %v884
    %1094 = vmatprep.subr.bf16.mxu0 %v893
    %1095 = vmatpush1.bf16.msra.mxu0 %v892
    %1096 = vmatprep.subr.bf16.mxu0 %v901
    %1097 = vmatpush1.bf16.msra.mxu0 %v900
    %1098 = vmatprep.subr.bf16.mxu0 %v909
    %1099 = vmatpush1.bf16.msra.mxu0 %v908
    %1100 = vmatprep.subr.bf16.mxu0 %v917
    %1101 = vmatpush1.bf16.msra.mxu0 %v916
    %1102 = vmatprep.subr.bf16.mxu0 %v925
    %1103 = vmatpush1.bf16.msra.mxu0 %v924
    %1104 = vmatprep.subr.bf16.mxu0 %v933
    %1105 = vmatpush1.bf16.msra.mxu0 %v932
    %1106 = vmatprep.subr.bf16.mxu0 %v941
    %1107 = vmatpush1.bf16.msra.mxu0 %v940
    %1108 = vmatprep.mubr.bf16.mxu0 %v433
    %1109 = vmatmul.mubr.bf16.gmra.mrb[0].mxu0 %v432
    %v1110 = vpop.f32.mrb[0].mxu0
    %v1111 = vadd.f32 0.0, %v1110
    %v1112 = vpop.f32.mrb[0].mxu0
    %v1113 = vadd.f32 0.0, %v1112
    %v1114 = vpop.f32.mrb[0].mxu0
    %v1115 = vpop.f32.mrb[0].mxu0
    %1116 = vdwg.mxu0
    %1117 = vmatprep.subr.bf16.mxu0 %v823
    %1118 = vmatpush1.bf16.msra.mxu0 %v822
    %1119 = vmatprep.subr.bf16.mxu0 %v831
    %1120 = vmatpush1.bf16.msra.mxu0 %v830
    %1121 = vmatprep.subr.bf16.mxu0 %v839
    %1122 = vmatpush1.bf16.msra.mxu0 %v838
    %1123 = vmatprep.subr.bf16.mxu0 %v847
    %1124 = vmatpush1.bf16.msra.mxu0 %v846
    %1125 = vmatprep.subr.bf16.mxu0 %v855
    %1126 = vmatpush1.bf16.msra.mxu0 %v854
    %1127 = vmatprep.subr.bf16.mxu0 %v863
    %1128 = vmatpush1.bf16.msra.mxu0 %v862
    %1129 = vmatprep.subr.bf16.mxu0 %v871
    %1130 = vmatpush1.bf16.msra.mxu0 %v870
    %1131 = vmatprep.subr.bf16.mxu0 %v879
    %1132 = vmatpush1.bf16.msra.mxu0 %v878
    %1133 = vmatprep.subr.bf16.mxu0 %v887
    %1134 = vmatpush1.bf16.msra.mxu0 %v886
    %1135 = vmatprep.subr.bf16.mxu0 %v895
    %1136 = vmatpush1.bf16.msra.mxu0 %v894
    %1137 = vmatprep.subr.bf16.mxu0 %v903
    %1138 = vmatpush1.bf16.msra.mxu0 %v902
    %1139 = vmatprep.subr.bf16.mxu0 %v911
    %1140 = vmatpush1.bf16.msra.mxu0 %v910
    %1141 = vmatprep.subr.bf16.mxu0 %v919
    %1142 = vmatpush1.bf16.msra.mxu0 %v918
    %1143 = vmatprep.subr.bf16.mxu0 %v927
    %1144 = vmatpush1.bf16.msra.mxu0 %v926
    %1145 = vmatprep.subr.bf16.mxu0 %v935
    %1146 = vmatpush1.bf16.msra.mxu0 %v934
    %1147 = vmatprep.subr.bf16.mxu0 %v943
    %1148 = vmatpush1.bf16.msra.mxu0 %v942
    %1149 = vmatprep.mubr.bf16.mxu0 %v433
    %1150 = vmatmul.mubr.bf16.gmra.mrb[0].mxu0 %v432
    %v1151 = vpop.f32.mrb[0].mxu0
    %v1152 = vadd.f32 0.0, %v1151
    %v1153 = vpop.f32.mrb[0].mxu0
    %v1154 = vadd.f32 0.0, %v1153
    %v1155 = vpop.f32.mrb[0].mxu0
    %v1156 = vpop.f32.mrb[0].mxu0
    %1157 = vdwg.mxu0
    %1158 = vmatprep.subr.bf16.mxu0 %v825
    %1159 = vmatpush1.bf16.msra.mxu0 %v824
    %1160 = vmatprep.subr.bf16.mxu0 %v833
    %1161 = vmatpush1.bf16.msra.mxu0 %v832
    %1162 = vmatprep.subr.bf16.mxu0 %v841
    %1163 = vmatpush1.bf16.msra.mxu0 %v840
    %1164 = vmatprep.subr.bf16.mxu0 %v849
    %1165 = vmatpush1.bf16.msra.mxu0 %v848
    %1166 = vmatprep.subr.bf16.mxu0 %v857
    %1167 = vmatpush1.bf16.msra.mxu0 %v856
    %1168 = vmatprep.subr.bf16.mxu0 %v865
    %1169 = vmatpush1.bf16.msra.mxu0 %v864
    %1170 = vmatprep.subr.bf16.mxu0 %v873
    %1171 = vmatpush1.bf16.msra.mxu0 %v872
    %1172 = vmatprep.subr.bf16.mxu0 %v881
    %1173 = vmatpush1.bf16.msra.mxu0 %v880
    %1174 = vmatprep.subr.bf16.mxu0 %v889
    %1175 = vmatpush1.bf16.msra.mxu0 %v888
    %1176 = vmatprep.subr.bf16.mxu0 %v897
    %1177 = vmatpush1.bf16.msra.mxu0 %v896
    %1178 = vmatprep.subr.bf16.mxu0 %v905
    %1179 = vmatpush1.bf16.msra.mxu0 %v904
    %1180 = vmatprep.subr.bf16.mxu0 %v913
    %1181 = vmatpush1.bf16.msra.mxu0 %v912
    %1182 = vmatprep.subr.bf16.mxu0 %v921
    %1183 = vmatpush1.bf16.msra.mxu0 %v920
    %1184 = vmatprep.subr.bf16.mxu0 %v929
    %1185 = vmatpush1.bf16.msra.mxu0 %v928
    %1186 = vmatprep.subr.bf16.mxu0 %v937
    %1187 = vmatpush1.bf16.msra.mxu0 %v936
    %1188 = vmatprep.subr.bf16.mxu0 %v945
    %1189 = vmatpush1.bf16.msra.mxu0 %v944
    %1190 = vmatprep.mubr.bf16.mxu0 %v433
    %1191 = vmatmul.mubr.bf16.gmra.mrb[0].mxu0 %v432
    %v1192 = vpop.f32.mrb[0].mxu0
    %v1193 = vadd.f32 0.0, %v1192
    %v1194 = vpop.f32.mrb[0].mxu0
    %v1195 = vadd.f32 0.0, %v1194
    %v1196 = vpop.f32.mrb[0].mxu0
    %v1197 = vpop.f32.mrb[0].mxu0
    %1198 = vdwg.mxu0
    %1199 = vmatprep.subr.bf16.mxu0 %v827
    %1200 = vmatpush1.bf16.msra.mxu0 %v826
    %1201 = vmatprep.subr.bf16.mxu0 %v835
    %1202 = vmatpush1.bf16.msra.mxu0 %v834
    %1203 = vmatprep.subr.bf16.mxu0 %v843
    %1204 = vmatpush1.bf16.msra.mxu0 %v842
    %1205 = vmatprep.subr.bf16.mxu0 %v851
    %1206 = vmatpush1.bf16.msra.mxu0 %v850
    %1207 = vmatprep.subr.bf16.mxu0 %v859
    %1208 = vmatpush1.bf16.msra.mxu0 %v858
    %1209 = vmatprep.subr.bf16.mxu0 %v867
    %1210 = vmatpush1.bf16.msra.mxu0 %v866
    %1211 = vmatprep.subr.bf16.mxu0 %v875
    %1212 = vmatpush1.bf16.msra.mxu0 %v874
    %1213 = vmatprep.subr.bf16.mxu0 %v883
    %1214 = vmatpush1.bf16.msra.mxu0 %v882
    %1215 = vmatprep.subr.bf16.mxu0 %v891
    %1216 = vmatpush1.bf16.msra.mxu0 %v890
    %1217 = vmatprep.subr.bf16.mxu0 %v899
    %1218 = vmatpush1.bf16.msra.mxu0 %v898
    %1219 = vmatprep.subr.bf16.mxu0 %v907
    %1220 = vmatpush1.bf16.msra.mxu0 %v906
    %1221 = vmatprep.subr.bf16.mxu0 %v915
    %1222 = vmatpush1.bf16.msra.mxu0 %v914
    %1223 = vmatprep.subr.bf16.mxu0 %v923
    %1224 = vmatpush1.bf16.msra.mxu0 %v922
    %1225 = vmatprep.subr.bf16.mxu0 %v931
    %1226 = vmatpush1.bf16.msra.mxu0 %v930
    %1227 = vmatprep.subr.bf16.mxu0 %v939
    %1228 = vmatpush1.bf16.msra.mxu0 %v938
    %1229 = vmatprep.subr.bf16.mxu0 %v947
    %1230 = vmatpush1.bf16.msra.mxu0 %v946
    %1231 = vmatprep.mubr.bf16.mxu0 %v433
    %1232 = vmatmul.mubr.bf16.gmra.mrb[0].mxu0 %v432
    %v1233 = vpop.f32.mrb[0].mxu0
    %v1234 = vadd.f32 0.0, %v1233
    %v1235 = vpop.f32.mrb[0].mxu0
    %v1236 = vadd.f32 0.0, %v1235
    %v1237 = vpop.f32.mrb[0].mxu0
    %v1238 = vpop.f32.mrb[0].mxu0
    %1239 = vdwg.mxu0
    %v1248 = vunpack.c.l.b16 %v76
    %v1249 = vunpack.c.l.b16 %v77
    %v1250 = vunpack.c.l.b16 %v78
    %v1251 = vunpack.c.l.b16 %v79
    %v1252 = vunpack.c.l.b16 %v80
    %v1253 = vunpack.c.l.b16 %v81
    %v1254 = vunpack.c.l.b16 %v82
    %v1255 = vunpack.c.l.b16 %v83
    %v1256 = vrot.slane %v1250, 7
    %v1257 = vsel %vm418, %v1256, %v1248
    %v1258 = vrot.slane %v1252, 6
    %v1259 = vsel %vm421, %v1258, %v1257
    %v1260 = vrot.slane %v1254, 5
    %v1261 = vsel %vm424, %v1260, %v1259
    %v1262 = vrot.slane %v1251, 7
    %v1263 = vsel %vm418, %v1262, %v1249
    %v1264 = vrot.slane %v1253, 6
    %v1265 = vsel %vm421, %v1264, %v1263
    %v1266 = vrot.slane %v1255, 5
    %v1267 = vsel %vm424, %v1266, %v1265
    %v1268 = vpack.c.b16 %v1261, %v1261
    %v1269 = vpack.c.b16 %v1267, %v1267
    %v1400 = vunpack.c.l.b16 %v84
    %v1401 = vunpack.c.h.b16 %v84
    %v1402 = vunpack.c.l.b16 %v85
    %v1403 = vunpack.c.h.b16 %v85
    %v1404 = vunpack.c.l.b16 %v86
    %v1405 = vunpack.c.h.b16 %v86
    %v1406 = vunpack.c.l.b16 %v87
    %v1407 = vunpack.c.h.b16 %v87
    %v1408 = vunpack.c.l.b16 %v88
    %v1409 = vunpack.c.h.b16 %v88
    %v1410 = vunpack.c.l.b16 %v89
    %v1411 = vunpack.c.h.b16 %v89
    %v1412 = vunpack.c.l.b16 %v90
    %v1413 = vunpack.c.h.b16 %v90
    %v1414 = vunpack.c.l.b16 %v91
    %v1415 = vunpack.c.h.b16 %v91
    %v1416 = vunpack.c.l.b16 %v92
    %v1417 = vunpack.c.h.b16 %v92
    %v1418 = vunpack.c.l.b16 %v93
    %v1419 = vunpack.c.h.b16 %v93
    %v1420 = vunpack.c.l.b16 %v94
    %v1421 = vunpack.c.h.b16 %v94
    %v1422 = vunpack.c.l.b16 %v95
    %v1423 = vunpack.c.h.b16 %v95
    %v1424 = vunpack.c.l.b16 %v96
    %v1425 = vunpack.c.h.b16 %v96
    %v1426 = vunpack.c.l.b16 %v97
    %v1427 = vunpack.c.h.b16 %v97
    %v1428 = vunpack.c.l.b16 %v98
    %v1429 = vunpack.c.h.b16 %v98
    %v1430 = vunpack.c.l.b16 %v99
    %v1431 = vunpack.c.h.b16 %v99
    %v1432 = vunpack.c.l.b16 %v100
    %v1433 = vunpack.c.h.b16 %v100
    %v1434 = vunpack.c.l.b16 %v101
    %v1435 = vunpack.c.h.b16 %v101
    %v1436 = vunpack.c.l.b16 %v102
    %v1437 = vunpack.c.h.b16 %v102
    %v1438 = vunpack.c.l.b16 %v103
    %v1439 = vunpack.c.h.b16 %v103
    %v1440 = vunpack.c.l.b16 %v104
    %v1441 = vunpack.c.h.b16 %v104
    %v1442 = vunpack.c.l.b16 %v105
    %v1443 = vunpack.c.h.b16 %v105
    %v1444 = vunpack.c.l.b16 %v106
    %v1445 = vunpack.c.h.b16 %v106
    %v1446 = vunpack.c.l.b16 %v107
    %v1447 = vunpack.c.h.b16 %v107
    %v1448 = vunpack.c.l.b16 %v108
    %v1449 = vunpack.c.h.b16 %v108
    %v1450 = vunpack.c.l.b16 %v109
    %v1451 = vunpack.c.h.b16 %v109
    %v1452 = vunpack.c.l.b16 %v110
    %v1453 = vunpack.c.h.b16 %v110
    %v1454 = vunpack.c.l.b16 %v111
    %v1455 = vunpack.c.h.b16 %v111
    %v1456 = vunpack.c.l.b16 %v112
    %v1457 = vunpack.c.h.b16 %v112
    %v1458 = vunpack.c.l.b16 %v113
    %v1459 = vunpack.c.h.b16 %v113
    %v1460 = vunpack.c.l.b16 %v114
    %v1461 = vunpack.c.h.b16 %v114
    %v1462 = vunpack.c.l.b16 %v115
    %v1463 = vunpack.c.h.b16 %v115
    %v1464 = vunpack.c.l.b16 %v116
    %v1465 = vunpack.c.h.b16 %v116
    %v1466 = vunpack.c.l.b16 %v117
    %v1467 = vunpack.c.h.b16 %v117
    %v1468 = vunpack.c.l.b16 %v118
    %v1469 = vunpack.c.h.b16 %v118
    %v1470 = vunpack.c.l.b16 %v119
    %v1471 = vunpack.c.h.b16 %v119
    %v1472 = vunpack.c.l.b16 %v120
    %v1473 = vunpack.c.h.b16 %v120
    %v1474 = vunpack.c.l.b16 %v121
    %v1475 = vunpack.c.h.b16 %v121
    %v1476 = vunpack.c.l.b16 %v122
    %v1477 = vunpack.c.h.b16 %v122
    %v1478 = vunpack.c.l.b16 %v123
    %v1479 = vunpack.c.h.b16 %v123
    %v1480 = vunpack.c.l.b16 %v124
    %v1481 = vunpack.c.h.b16 %v124
    %v1482 = vunpack.c.l.b16 %v125
    %v1483 = vunpack.c.h.b16 %v125
    %v1484 = vunpack.c.l.b16 %v126
    %v1485 = vunpack.c.h.b16 %v126
    %v1486 = vunpack.c.l.b16 %v127
    %v1487 = vunpack.c.h.b16 %v127
    %v1488 = vunpack.c.l.b16 %v128
    %v1489 = vunpack.c.h.b16 %v128
    %v1490 = vunpack.c.l.b16 %v129
    %v1491 = vunpack.c.h.b16 %v129
    %v1492 = vunpack.c.l.b16 %v130
    %v1493 = vunpack.c.h.b16 %v130
    %v1494 = vunpack.c.l.b16 %v131
    %v1495 = vunpack.c.h.b16 %v131
    %v1496 = vunpack.c.l.b16 %v132
    %v1497 = vunpack.c.h.b16 %v132
    %v1498 = vunpack.c.l.b16 %v133
    %v1499 = vunpack.c.h.b16 %v133
    %v1500 = vunpack.c.l.b16 %v134
    %v1501 = vunpack.c.h.b16 %v134
    %v1502 = vunpack.c.l.b16 %v135
    %v1503 = vunpack.c.h.b16 %v135
    %v1504 = vunpack.c.l.b16 %v136
    %v1505 = vunpack.c.h.b16 %v136
    %v1506 = vunpack.c.l.b16 %v137
    %v1507 = vunpack.c.h.b16 %v137
    %v1508 = vunpack.c.l.b16 %v138
    %v1509 = vunpack.c.h.b16 %v138
    %v1510 = vunpack.c.l.b16 %v139
    %v1511 = vunpack.c.h.b16 %v139
    %v1512 = vunpack.c.l.b16 %v140
    %v1513 = vunpack.c.h.b16 %v140
    %v1514 = vunpack.c.l.b16 %v141
    %v1515 = vunpack.c.h.b16 %v141
    %v1516 = vunpack.c.l.b16 %v142
    %v1517 = vunpack.c.h.b16 %v142
    %v1518 = vunpack.c.l.b16 %v143
    %v1519 = vunpack.c.h.b16 %v143
    %v1520 = vunpack.c.l.b16 %v144
    %v1521 = vunpack.c.h.b16 %v144
    %v1522 = vunpack.c.l.b16 %v145
    %v1523 = vunpack.c.h.b16 %v145
    %v1524 = vunpack.c.l.b16 %v146
    %v1525 = vunpack.c.h.b16 %v146
    %v1526 = vunpack.c.l.b16 %v147
    %v1527 = vunpack.c.h.b16 %v147
    %v1528 = vunpack.c.l.b16 %v148
    %v1529 = vunpack.c.h.b16 %v148
    %v1530 = vunpack.c.l.b16 %v149
    %v1531 = vunpack.c.h.b16 %v149
    %v1532 = vunpack.c.l.b16 %v150
    %v1533 = vunpack.c.h.b16 %v150
    %v1534 = vunpack.c.l.b16 %v151
    %v1535 = vunpack.c.h.b16 %v151
    %v1536 = vunpack.c.l.b16 %v152
    %v1537 = vunpack.c.h.b16 %v152
    %v1538 = vunpack.c.l.b16 %v153
    %v1539 = vunpack.c.h.b16 %v153
    %v1540 = vunpack.c.l.b16 %v154
    %v1541 = vunpack.c.h.b16 %v154
    %v1542 = vunpack.c.l.b16 %v155
    %v1543 = vunpack.c.h.b16 %v155
    %v1544 = vunpack.c.l.b16 %v156
    %v1545 = vunpack.c.h.b16 %v156
    %v1546 = vunpack.c.l.b16 %v157
    %v1547 = vunpack.c.h.b16 %v157
    %v1548 = vunpack.c.l.b16 %v158
    %v1549 = vunpack.c.h.b16 %v158
    %v1550 = vunpack.c.l.b16 %v159
    %v1551 = vunpack.c.h.b16 %v159
    %v1552 = vunpack.c.l.b16 %v160
    %v1553 = vunpack.c.h.b16 %v160
    %v1554 = vunpack.c.l.b16 %v161
    %v1555 = vunpack.c.h.b16 %v161
    %v1556 = vunpack.c.l.b16 %v162
    %v1557 = vunpack.c.h.b16 %v162
    %v1558 = vunpack.c.l.b16 %v163
    %v1559 = vunpack.c.h.b16 %v163
    %v1560 = vunpack.c.l.b16 %v164
    %v1561 = vunpack.c.h.b16 %v164
    %v1562 = vunpack.c.l.b16 %v165
    %v1563 = vunpack.c.h.b16 %v165
    %v1564 = vunpack.c.l.b16 %v166
    %v1565 = vunpack.c.h.b16 %v166
    %v1566 = vunpack.c.l.b16 %v167
    %v1567 = vunpack.c.h.b16 %v167
    %v1568 = vunpack.c.l.b16 %v168
    %v1569 = vunpack.c.h.b16 %v168
    %v1570 = vunpack.c.l.b16 %v169
    %v1571 = vunpack.c.h.b16 %v169
    %v1572 = vunpack.c.l.b16 %v170
    %v1573 = vunpack.c.h.b16 %v170
    %v1574 = vunpack.c.l.b16 %v171
    %v1575 = vunpack.c.h.b16 %v171
    %v1576 = vunpack.c.l.b16 %v172
    %v1577 = vunpack.c.h.b16 %v172
    %v1578 = vunpack.c.l.b16 %v173
    %v1579 = vunpack.c.h.b16 %v173
    %v1580 = vunpack.c.l.b16 %v174
    %v1581 = vunpack.c.h.b16 %v174
    %v1582 = vunpack.c.l.b16 %v175
    %v1583 = vunpack.c.h.b16 %v175
    %v1584 = vunpack.c.l.b16 %v176
    %v1585 = vunpack.c.h.b16 %v176
    %v1586 = vunpack.c.l.b16 %v177
    %v1587 = vunpack.c.h.b16 %v177
    %v1588 = vunpack.c.l.b16 %v178
    %v1589 = vunpack.c.h.b16 %v178
    %v1590 = vunpack.c.l.b16 %v179
    %v1591 = vunpack.c.h.b16 %v179
    %v1592 = vunpack.c.l.b16 %v180
    %v1593 = vunpack.c.h.b16 %v180
    %v1594 = vunpack.c.l.b16 %v181
    %v1595 = vunpack.c.h.b16 %v181
    %v1596 = vunpack.c.l.b16 %v182
    %v1597 = vunpack.c.h.b16 %v182
    %v1598 = vunpack.c.l.b16 %v183
    %v1599 = vunpack.c.h.b16 %v183
    %v1600 = vunpack.c.l.b16 %v184
    %v1601 = vunpack.c.h.b16 %v184
    %v1602 = vunpack.c.l.b16 %v185
    %v1603 = vunpack.c.h.b16 %v185
    %v1604 = vunpack.c.l.b16 %v186
    %v1605 = vunpack.c.h.b16 %v186
    %v1606 = vunpack.c.l.b16 %v187
    %v1607 = vunpack.c.h.b16 %v187
    %v1608 = vunpack.c.l.b16 %v188
    %v1609 = vunpack.c.h.b16 %v188
    %v1610 = vunpack.c.l.b16 %v189
    %v1611 = vunpack.c.h.b16 %v189
    %v1612 = vunpack.c.l.b16 %v190
    %v1613 = vunpack.c.h.b16 %v190
    %v1614 = vunpack.c.l.b16 %v191
    %v1615 = vunpack.c.h.b16 %v191
    %v1616 = vunpack.c.l.b16 %v192
    %v1617 = vunpack.c.h.b16 %v192
    %v1618 = vunpack.c.l.b16 %v193
    %v1619 = vunpack.c.h.b16 %v193
    %v1620 = vunpack.c.l.b16 %v194
    %v1621 = vunpack.c.h.b16 %v194
    %v1622 = vunpack.c.l.b16 %v195
    %v1623 = vunpack.c.h.b16 %v195
    %v1624 = vunpack.c.l.b16 %v196
    %v1625 = vunpack.c.h.b16 %v196
    %v1626 = vunpack.c.l.b16 %v197
    %v1627 = vunpack.c.h.b16 %v197
    %v1628 = vunpack.c.l.b16 %v198
    %v1629 = vunpack.c.h.b16 %v198
    %v1630 = vunpack.c.l.b16 %v199
    %v1631 = vunpack.c.h.b16 %v199
    %v1632 = vunpack.c.l.b16 %v200
    %v1633 = vunpack.c.h.b16 %v200
    %v1634 = vunpack.c.l.b16 %v201
    %v1635 = vunpack.c.h.b16 %v201
    %v1636 = vunpack.c.l.b16 %v202
    %v1637 = vunpack.c.h.b16 %v202
    %v1638 = vunpack.c.l.b16 %v203
    %v1639 = vunpack.c.h.b16 %v203
    %v1640 = vunpack.c.l.b16 %v204
    %v1641 = vunpack.c.h.b16 %v204
    %v1642 = vunpack.c.l.b16 %v205
    %v1643 = vunpack.c.h.b16 %v205
    %v1644 = vunpack.c.l.b16 %v206
    %v1645 = vunpack.c.h.b16 %v206
    %v1646 = vunpack.c.l.b16 %v207
    %v1647 = vunpack.c.h.b16 %v207
    %v1648 = vunpack.c.l.b16 %v208
    %v1649 = vunpack.c.h.b16 %v208
    %v1650 = vunpack.c.l.b16 %v209
    %v1651 = vunpack.c.h.b16 %v209
    %v1652 = vunpack.c.l.b16 %v210
    %v1653 = vunpack.c.h.b16 %v210
    %v1654 = vunpack.c.l.b16 %v211
    %v1655 = vunpack.c.h.b16 %v211
    %v1656 = vpack.c.b16 %v1408, %v1400
    %v1657 = vpack.c.b16 %v1409, %v1401
    %v1658 = vpack.c.b16 %v1410, %v1402
    %v1659 = vpack.c.b16 %v1411, %v1403
    %v1660 = vpack.c.b16 %v1412, %v1404
    %v1661 = vpack.c.b16 %v1413, %v1405
    %v1662 = vpack.c.b16 %v1414, %v1406
    %v1663 = vpack.c.b16 %v1415, %v1407
    %v1664 = vpack.c.b16 %v1424, %v1416
    %v1665 = vpack.c.b16 %v1425, %v1417
    %v1666 = vpack.c.b16 %v1426, %v1418
    %v1667 = vpack.c.b16 %v1427, %v1419
    %v1668 = vpack.c.b16 %v1428, %v1420
    %v1669 = vpack.c.b16 %v1429, %v1421
    %v1670 = vpack.c.b16 %v1430, %v1422
    %v1671 = vpack.c.b16 %v1431, %v1423
    %v1672 = vpack.c.b16 %v1440, %v1432
    %v1673 = vpack.c.b16 %v1441, %v1433
    %v1674 = vpack.c.b16 %v1442, %v1434
    %v1675 = vpack.c.b16 %v1443, %v1435
    %v1676 = vpack.c.b16 %v1444, %v1436
    %v1677 = vpack.c.b16 %v1445, %v1437
    %v1678 = vpack.c.b16 %v1446, %v1438
    %v1679 = vpack.c.b16 %v1447, %v1439
    %v1680 = vpack.c.b16 %v1456, %v1448
    %v1681 = vpack.c.b16 %v1457, %v1449
    %v1682 = vpack.c.b16 %v1458, %v1450
    %v1683 = vpack.c.b16 %v1459, %v1451
    %v1684 = vpack.c.b16 %v1460, %v1452
    %v1685 = vpack.c.b16 %v1461, %v1453
    %v1686 = vpack.c.b16 %v1462, %v1454
    %v1687 = vpack.c.b16 %v1463, %v1455
    %v1688 = vpack.c.b16 %v1472, %v1464
    %v1689 = vpack.c.b16 %v1473, %v1465
    %v1690 = vpack.c.b16 %v1474, %v1466
    %v1691 = vpack.c.b16 %v1475, %v1467
    %v1692 = vpack.c.b16 %v1476, %v1468
    %v1693 = vpack.c.b16 %v1477, %v1469
    %v1694 = vpack.c.b16 %v1478, %v1470
    %v1695 = vpack.c.b16 %v1479, %v1471
    %v1696 = vpack.c.b16 %v1488, %v1480
    %v1697 = vpack.c.b16 %v1489, %v1481
    %v1698 = vpack.c.b16 %v1490, %v1482
    %v1699 = vpack.c.b16 %v1491, %v1483
    %v1700 = vpack.c.b16 %v1492, %v1484
    %v1701 = vpack.c.b16 %v1493, %v1485
    %v1702 = vpack.c.b16 %v1494, %v1486
    %v1703 = vpack.c.b16 %v1495, %v1487
    %v1704 = vpack.c.b16 %v1504, %v1496
    %v1705 = vpack.c.b16 %v1505, %v1497
    %v1706 = vpack.c.b16 %v1506, %v1498
    %v1707 = vpack.c.b16 %v1507, %v1499
    %v1708 = vpack.c.b16 %v1508, %v1500
    %v1709 = vpack.c.b16 %v1509, %v1501
    %v1710 = vpack.c.b16 %v1510, %v1502
    %v1711 = vpack.c.b16 %v1511, %v1503
    %v1712 = vpack.c.b16 %v1520, %v1512
    %v1713 = vpack.c.b16 %v1521, %v1513
    %v1714 = vpack.c.b16 %v1522, %v1514
    %v1715 = vpack.c.b16 %v1523, %v1515
    %v1716 = vpack.c.b16 %v1524, %v1516
    %v1717 = vpack.c.b16 %v1525, %v1517
    %v1718 = vpack.c.b16 %v1526, %v1518
    %v1719 = vpack.c.b16 %v1527, %v1519
    %v1720 = vpack.c.b16 %v1536, %v1528
    %v1721 = vpack.c.b16 %v1537, %v1529
    %v1722 = vpack.c.b16 %v1538, %v1530
    %v1723 = vpack.c.b16 %v1539, %v1531
    %v1724 = vpack.c.b16 %v1540, %v1532
    %v1725 = vpack.c.b16 %v1541, %v1533
    %v1726 = vpack.c.b16 %v1542, %v1534
    %v1727 = vpack.c.b16 %v1543, %v1535
    %v1728 = vpack.c.b16 %v1552, %v1544
    %v1729 = vpack.c.b16 %v1553, %v1545
    %v1730 = vpack.c.b16 %v1554, %v1546
    %v1731 = vpack.c.b16 %v1555, %v1547
    %v1732 = vpack.c.b16 %v1556, %v1548
    %v1733 = vpack.c.b16 %v1557, %v1549
    %v1734 = vpack.c.b16 %v1558, %v1550
    %v1735 = vpack.c.b16 %v1559, %v1551
    %v1736 = vpack.c.b16 %v1568, %v1560
    %v1737 = vpack.c.b16 %v1569, %v1561
    %v1738 = vpack.c.b16 %v1570, %v1562
    %v1739 = vpack.c.b16 %v1571, %v1563
    %v1740 = vpack.c.b16 %v1572, %v1564
    %v1741 = vpack.c.b16 %v1573, %v1565
    %v1742 = vpack.c.b16 %v1574, %v1566
    %v1743 = vpack.c.b16 %v1575, %v1567
    %v1744 = vpack.c.b16 %v1584, %v1576
    %v1745 = vpack.c.b16 %v1585, %v1577
    %v1746 = vpack.c.b16 %v1586, %v1578
    %v1747 = vpack.c.b16 %v1587, %v1579
    %v1748 = vpack.c.b16 %v1588, %v1580
    %v1749 = vpack.c.b16 %v1589, %v1581
    %v1750 = vpack.c.b16 %v1590, %v1582
    %v1751 = vpack.c.b16 %v1591, %v1583
    %v1752 = vpack.c.b16 %v1600, %v1592
    %v1753 = vpack.c.b16 %v1601, %v1593
    %v1754 = vpack.c.b16 %v1602, %v1594
    %v1755 = vpack.c.b16 %v1603, %v1595
    %v1756 = vpack.c.b16 %v1604, %v1596
    %v1757 = vpack.c.b16 %v1605, %v1597
    %v1758 = vpack.c.b16 %v1606, %v1598
    %v1759 = vpack.c.b16 %v1607, %v1599
    %v1760 = vpack.c.b16 %v1616, %v1608
    %v1761 = vpack.c.b16 %v1617, %v1609
    %v1762 = vpack.c.b16 %v1618, %v1610
    %v1763 = vpack.c.b16 %v1619, %v1611
    %v1764 = vpack.c.b16 %v1620, %v1612
    %v1765 = vpack.c.b16 %v1621, %v1613
    %v1766 = vpack.c.b16 %v1622, %v1614
    %v1767 = vpack.c.b16 %v1623, %v1615
    %v1768 = vpack.c.b16 %v1632, %v1624
    %v1769 = vpack.c.b16 %v1633, %v1625
    %v1770 = vpack.c.b16 %v1634, %v1626
    %v1771 = vpack.c.b16 %v1635, %v1627
    %v1772 = vpack.c.b16 %v1636, %v1628
    %v1773 = vpack.c.b16 %v1637, %v1629
    %v1774 = vpack.c.b16 %v1638, %v1630
    %v1775 = vpack.c.b16 %v1639, %v1631
    %v1776 = vpack.c.b16 %v1648, %v1640
    %v1777 = vpack.c.b16 %v1649, %v1641
    %v1778 = vpack.c.b16 %v1650, %v1642
    %v1779 = vpack.c.b16 %v1651, %v1643
    %v1780 = vpack.c.b16 %v1652, %v1644
    %v1781 = vpack.c.b16 %v1653, %v1645
    %v1782 = vpack.c.b16 %v1654, %v1646
    %v1783 = vpack.c.b16 %v1655, %v1647
    %1912 = vmatprep.subr.bf16.mxu0 %v1657
    %1913 = vmatpush1.bf16.msra.mxu0 %v1656
    %1914 = vmatprep.subr.bf16.mxu0 %v1665
    %1915 = vmatpush1.bf16.msra.mxu0 %v1664
    %1916 = vmatprep.subr.bf16.mxu0 %v1673
    %1917 = vmatpush1.bf16.msra.mxu0 %v1672
    %1918 = vmatprep.subr.bf16.mxu0 %v1681
    %1919 = vmatpush1.bf16.msra.mxu0 %v1680
    %1920 = vmatprep.subr.bf16.mxu0 %v1689
    %1921 = vmatpush1.bf16.msra.mxu0 %v1688
    %1922 = vmatprep.subr.bf16.mxu0 %v1697
    %1923 = vmatpush1.bf16.msra.mxu0 %v1696
    %1924 = vmatprep.subr.bf16.mxu0 %v1705
    %1925 = vmatpush1.bf16.msra.mxu0 %v1704
    %1926 = vmatprep.subr.bf16.mxu0 %v1713
    %1927 = vmatpush1.bf16.msra.mxu0 %v1712
    %1928 = vmatprep.subr.bf16.mxu0 %v1721
    %1929 = vmatpush1.bf16.msra.mxu0 %v1720
    %1930 = vmatprep.subr.bf16.mxu0 %v1729
    %1931 = vmatpush1.bf16.msra.mxu0 %v1728
    %1932 = vmatprep.subr.bf16.mxu0 %v1737
    %1933 = vmatpush1.bf16.msra.mxu0 %v1736
    %1934 = vmatprep.subr.bf16.mxu0 %v1745
    %1935 = vmatpush1.bf16.msra.mxu0 %v1744
    %1936 = vmatprep.subr.bf16.mxu0 %v1753
    %1937 = vmatpush1.bf16.msra.mxu0 %v1752
    %1938 = vmatprep.subr.bf16.mxu0 %v1761
    %1939 = vmatpush1.bf16.msra.mxu0 %v1760
    %1940 = vmatprep.subr.bf16.mxu0 %v1769
    %1941 = vmatpush1.bf16.msra.mxu0 %v1768
    %1942 = vmatprep.subr.bf16.mxu0 %v1777
    %1943 = vmatpush1.bf16.msra.mxu0 %v1776
    %1944 = vmatprep.mubr.bf16.mxu0 %v1269
    %1945 = vmatmul.mubr.bf16.gmra.mrb[0].mxu0 %v1268
    %v1946 = vpop.f32.mrb[0].mxu0
    %v1947 = vadd.f32 %v1111, %v1946
    %v1948 = vpop.f32.mrb[0].mxu0
    %v1949 = vadd.f32 %v1113, %v1948
    %v1950 = vpop.f32.mrb[0].mxu0
    %v1951 = vpop.f32.mrb[0].mxu0
    %1952 = vdwg.mxu0
    %1953 = vmatprep.subr.bf16.mxu0 %v1659
    %1954 = vmatpush1.bf16.msra.mxu0 %v1658
    %1955 = vmatprep.subr.bf16.mxu0 %v1667
    %1956 = vmatpush1.bf16.msra.mxu0 %v1666
    %1957 = vmatprep.subr.bf16.mxu0 %v1675
    %1958 = vmatpush1.bf16.msra.mxu0 %v1674
    %1959 = vmatprep.subr.bf16.mxu0 %v1683
    %1960 = vmatpush1.bf16.msra.mxu0 %v1682
    %1961 = vmatprep.subr.bf16.mxu0 %v1691
    %1962 = vmatpush1.bf16.msra.mxu0 %v1690
    %1963 = vmatprep.subr.bf16.mxu0 %v1699
    %1964 = vmatpush1.bf16.msra.mxu0 %v1698
    %1965 = vmatprep.subr.bf16.mxu0 %v1707
    %1966 = vmatpush1.bf16.msra.mxu0 %v1706
    %1967 = vmatprep.subr.bf16.mxu0 %v1715
    %1968 = vmatpush1.bf16.msra.mxu0 %v1714
    %1969 = vmatprep.subr.bf16.mxu0 %v1723
    %1970 = vmatpush1.bf16.msra.mxu0 %v1722
    %1971 = vmatprep.subr.bf16.mxu0 %v1731
    %1972 = vmatpush1.bf16.msra.mxu0 %v1730
    %1973 = vmatprep.subr.bf16.mxu0 %v1739
    %1974 = vmatpush1.bf16.msra.mxu0 %v1738
    %1975 = vmatprep.subr.bf16.mxu0 %v1747
    %1976 = vmatpush1.bf16.msra.mxu0 %v1746
    %1977 = vmatprep.subr.bf16.mxu0 %v1755
    %1978 = vmatpush1.bf16.msra.mxu0 %v1754
    %1979 = vmatprep.subr.bf16.mxu0 %v1763
    %1980 = vmatpush1.bf16.msra.mxu0 %v1762
    %1981 = vmatprep.subr.bf16.mxu0 %v1771
    %1982 = vmatpush1.bf16.msra.mxu0 %v1770
    %1983 = vmatprep.subr.bf16.mxu0 %v1779
    %1984 = vmatpush1.bf16.msra.mxu0 %v1778
    %1985 = vmatprep.mubr.bf16.mxu0 %v1269
    %1986 = vmatmul.mubr.bf16.gmra.mrb[0].mxu0 %v1268
    %v1987 = vpop.f32.mrb[0].mxu0
    %v1988 = vadd.f32 %v1152, %v1987
    %v1989 = vpop.f32.mrb[0].mxu0
    %v1990 = vadd.f32 %v1154, %v1989
    %v1991 = vpop.f32.mrb[0].mxu0
    %v1992 = vpop.f32.mrb[0].mxu0
    %1993 = vdwg.mxu0
    %1994 = vmatprep.subr.bf16.mxu0 %v1661
    %1995 = vmatpush1.bf16.msra.mxu0 %v1660
    %1996 = vmatprep.subr.bf16.mxu0 %v1669
    %1997 = vmatpush1.bf16.msra.mxu0 %v1668
    %1998 = vmatprep.subr.bf16.mxu0 %v1677
    %1999 = vmatpush1.bf16.msra.mxu0 %v1676
    %2000 = vmatprep.subr.bf16.mxu0 %v1685
    %2001 = vmatpush1.bf16.msra.mxu0 %v1684
    %2002 = vmatprep.subr.bf16.mxu0 %v1693
    %2003 = vmatpush1.bf16.msra.mxu0 %v1692
    %2004 = vmatprep.subr.bf16.mxu0 %v1701
    %2005 = vmatpush1.bf16.msra.mxu0 %v1700
    %2006 = vmatprep.subr.bf16.mxu0 %v1709
    %2007 = vmatpush1.bf16.msra.mxu0 %v1708
    %2008 = vmatprep.subr.bf16.mxu0 %v1717
    %2009 = vmatpush1.bf16.msra.mxu0 %v1716
    %2010 = vmatprep.subr.bf16.mxu0 %v1725
    %2011 = vmatpush1.bf16.msra.mxu0 %v1724
    %2012 = vmatprep.subr.bf16.mxu0 %v1733
    %2013 = vmatpush1.bf16.msra.mxu0 %v1732
    %2014 = vmatprep.subr.bf16.mxu0 %v1741
    %2015 = vmatpush1.bf16.msra.mxu0 %v1740
    %2016 = vmatprep.subr.bf16.mxu0 %v1749
    %2017 = vmatpush1.bf16.msra.mxu0 %v1748
    %2018 = vmatprep.subr.bf16.mxu0 %v1757
    %2019 = vmatpush1.bf16.msra.mxu0 %v1756
    %2020 = vmatprep.subr.bf16.mxu0 %v1765
    %2021 = vmatpush1.bf16.msra.mxu0 %v1764
    %2022 = vmatprep.subr.bf16.mxu0 %v1773
    %2023 = vmatpush1.bf16.msra.mxu0 %v1772
    %2024 = vmatprep.subr.bf16.mxu0 %v1781
    %2025 = vmatpush1.bf16.msra.mxu0 %v1780
    %2026 = vmatprep.mubr.bf16.mxu0 %v1269
    %2027 = vmatmul.mubr.bf16.gmra.mrb[0].mxu0 %v1268
    %v2028 = vpop.f32.mrb[0].mxu0
    %v2029 = vadd.f32 %v1193, %v2028
    %v2030 = vpop.f32.mrb[0].mxu0
    %v2031 = vadd.f32 %v1195, %v2030
    %v2032 = vpop.f32.mrb[0].mxu0
    %v2033 = vpop.f32.mrb[0].mxu0
    %2034 = vdwg.mxu0
    %2035 = vmatprep.subr.bf16.mxu0 %v1663
    %2036 = vmatpush1.bf16.msra.mxu0 %v1662
    %2037 = vmatprep.subr.bf16.mxu0 %v1671
    %2038 = vmatpush1.bf16.msra.mxu0 %v1670
    %2039 = vmatprep.subr.bf16.mxu0 %v1679
    %2040 = vmatpush1.bf16.msra.mxu0 %v1678
    %2041 = vmatprep.subr.bf16.mxu0 %v1687
    %2042 = vmatpush1.bf16.msra.mxu0 %v1686
    %2043 = vmatprep.subr.bf16.mxu0 %v1695
    %2044 = vmatpush1.bf16.msra.mxu0 %v1694
    %2045 = vmatprep.subr.bf16.mxu0 %v1703
    %2046 = vmatpush1.bf16.msra.mxu0 %v1702
    %2047 = vmatprep.subr.bf16.mxu0 %v1711
    %2048 = vmatpush1.bf16.msra.mxu0 %v1710
    %2049 = vmatprep.subr.bf16.mxu0 %v1719
    %2050 = vmatpush1.bf16.msra.mxu0 %v1718
    %2051 = vmatprep.subr.bf16.mxu0 %v1727
    %2052 = vmatpush1.bf16.msra.mxu0 %v1726
    %2053 = vmatprep.subr.bf16.mxu0 %v1735
    %2054 = vmatpush1.bf16.msra.mxu0 %v1734
    %2055 = vmatprep.subr.bf16.mxu0 %v1743
    %2056 = vmatpush1.bf16.msra.mxu0 %v1742
    %2057 = vmatprep.subr.bf16.mxu0 %v1751
    %2058 = vmatpush1.bf16.msra.mxu0 %v1750
    %2059 = vmatprep.subr.bf16.mxu0 %v1759
    %2060 = vmatpush1.bf16.msra.mxu0 %v1758
    %2061 = vmatprep.subr.bf16.mxu0 %v1767
    %2062 = vmatpush1.bf16.msra.mxu0 %v1766
    %2063 = vmatprep.subr.bf16.mxu0 %v1775
    %2064 = vmatpush1.bf16.msra.mxu0 %v1774
    %2065 = vmatprep.subr.bf16.mxu0 %v1783
    %2066 = vmatpush1.bf16.msra.mxu0 %v1782
    %2067 = vmatprep.mubr.bf16.mxu0 %v1269
    %2068 = vmatmul.mubr.bf16.gmra.mrb[0].mxu0 %v1268
    %v2069 = vpop.f32.mrb[0].mxu0
    %v2070 = vadd.f32 %v1234, %v2069
    %v2071 = vpop.f32.mrb[0].mxu0
    %v2072 = vadd.f32 %v1236, %v2071
    %v2073 = vpop.f32.mrb[0].mxu0
    %v2074 = vpop.f32.mrb[0].mxu0
    %2075 = vdwg.mxu0
    %s2076 = scalar_lea.vmem %s0, 2
    %v2077 = vld [vmem:[%s2076] ss:$4 sm:$0x3]
    %s2078 = scalar_lea.vmem %s0, 10
    %v2079 = vld [vmem:[%s2078] ss:$4 sm:$0x3]
    %s2080 = scalar_lea.vmem %s0, 18
    %v2081 = vld [vmem:[%s2080] ss:$4 sm:$0x3]
    %s2082 = scalar_lea.vmem %s0, 26
    %v2083 = vld [vmem:[%s2082] ss:$4 sm:$0x3]
    %v2088 = vlaneseq
    %v2089 = vshrl.u32 %v2088, 7
    %v2090 = vsub.s32 0, %v2089
    %v2091 = vrot.slane %v2077, %v2090
    %v2092 = vlaneseq
    %v2093 = vshrl.u32 %v2092, 7
    %v2094 = vsub.s32 1, %v2093
    %v2095 = vrot.slane %v2077, %v2094
    %v2096 = vlaneseq
    %v2097 = vshrl.u32 %v2096, 7
    %v2098 = vsub.s32 0, %v2097
    %v2099 = vrot.slane %v2079, %v2098
    %v2100 = vlaneseq
    %v2101 = vshrl.u32 %v2100, 7
    %v2102 = vsub.s32 1, %v2101
    %v2103 = vrot.slane %v2079, %v2102
    %v2104 = vlaneseq
    %v2105 = vshrl.u32 %v2104, 7
    %v2106 = vsub.s32 0, %v2105
    %v2107 = vrot.slane %v2081, %v2106
    %v2108 = vlaneseq
    %v2109 = vshrl.u32 %v2108, 7
    %v2110 = vsub.s32 1, %v2109
    %v2111 = vrot.slane %v2081, %v2110
    %v2112 = vlaneseq
    %v2113 = vshrl.u32 %v2112, 7
    %v2114 = vsub.s32 0, %v2113
    %v2115 = vrot.slane %v2083, %v2114
    %v2116 = vlaneseq
    %v2117 = vshrl.u32 %v2116, 7
    %v2118 = vsub.s32 1, %v2117
    %v2119 = vrot.slane %v2083, %v2118
    %v2128 = vpack.c.bf16 %v2091, %v2091
    %v2129 = vpack.c.bf16 %v2095, %v2095
    %v2130 = vpack.c.bf16 %v2099, %v2099
    %v2131 = vpack.c.bf16 %v2103, %v2103
    %v2132 = vpack.c.bf16 %v2107, %v2107
    %v2133 = vpack.c.bf16 %v2111, %v2111
    %v2134 = vpack.c.bf16 %v2115, %v2115
    %v2135 = vpack.c.bf16 %v2119, %v2119
    %s2136 = scalar_lea.vmem %s1, 2048
    %v2137 = vld [vmem:[%s2136] sm:$0xff]
    %v2138 = vld [vmem:[%s2136 + $0x8] sm:$0xff]
    %v2139 = vld [vmem:[%s2136 + $0x10] sm:$0xff]
    %v2140 = vld [vmem:[%s2136 + $0x18] sm:$0xff]
    %v2141 = vld [vmem:[%s2136 + $0x20] sm:$0xff]
    %v2142 = vld [vmem:[%s2136 + $0x28] sm:$0xff]
    %v2143 = vld [vmem:[%s2136 + $0x30] sm:$0xff]
    %v2144 = vld [vmem:[%s2136 + $0x38] sm:$0xff]
    %v2145 = vld [vmem:[%s2136 + $0x40] sm:$0xff]
    %v2146 = vld [vmem:[%s2136 + $0x48] sm:$0xff]
    %v2147 = vld [vmem:[%s2136 + $0x50] sm:$0xff]
    %v2148 = vld [vmem:[%s2136 + $0x58] sm:$0xff]
    %v2149 = vld [vmem:[%s2136 + $0x60] sm:$0xff]
    %v2150 = vld [vmem:[%s2136 + $0x68] sm:$0xff]
    %v2151 = vld [vmem:[%s2136 + $0x70] sm:$0xff]
    %v2152 = vld [vmem:[%s2136 + $0x78] sm:$0xff]
    %v2153 = vld [vmem:[%s2136 + $0x80] sm:$0xff]
    %v2154 = vld [vmem:[%s2136 + $0x88] sm:$0xff]
    %v2155 = vld [vmem:[%s2136 + $0x90] sm:$0xff]
    %v2156 = vld [vmem:[%s2136 + $0x98] sm:$0xff]
    %v2157 = vld [vmem:[%s2136 + $0xa0] sm:$0xff]
    %v2158 = vld [vmem:[%s2136 + $0xa8] sm:$0xff]
    %v2159 = vld [vmem:[%s2136 + $0xb0] sm:$0xff]
    %v2160 = vld [vmem:[%s2136 + $0xb8] sm:$0xff]
    %v2161 = vld [vmem:[%s2136 + $0xc0] sm:$0xff]
    %v2162 = vld [vmem:[%s2136 + $0xc8] sm:$0xff]
    %v2163 = vld [vmem:[%s2136 + $0xd0] sm:$0xff]
    %v2164 = vld [vmem:[%s2136 + $0xd8] sm:$0xff]
    %v2165 = vld [vmem:[%s2136 + $0xe0] sm:$0xff]
    %v2166 = vld [vmem:[%s2136 + $0xe8] sm:$0xff]
    %v2167 = vld [vmem:[%s2136 + $0xf0] sm:$0xff]
    %v2168 = vld [vmem:[%s2136 + $0xf8] sm:$0xff]
    %v2169 = vld [vmem:[%s2136 + $0x100] sm:$0xff]
    %v2170 = vld [vmem:[%s2136 + $0x108] sm:$0xff]
    %v2171 = vld [vmem:[%s2136 + $0x110] sm:$0xff]
    %v2172 = vld [vmem:[%s2136 + $0x118] sm:$0xff]
    %v2173 = vld [vmem:[%s2136 + $0x120] sm:$0xff]
    %v2174 = vld [vmem:[%s2136 + $0x128] sm:$0xff]
    %v2175 = vld [vmem:[%s2136 + $0x130] sm:$0xff]
    %v2176 = vld [vmem:[%s2136 + $0x138] sm:$0xff]
    %v2177 = vld [vmem:[%s2136 + $0x140] sm:$0xff]
    %v2178 = vld [vmem:[%s2136 + $0x148] sm:$0xff]
    %v2179 = vld [vmem:[%s2136 + $0x150] sm:$0xff]
    %v2180 = vld [vmem:[%s2136 + $0x158] sm:$0xff]
    %v2181 = vld [vmem:[%s2136 + $0x160] sm:$0xff]
    %v2182 = vld [vmem:[%s2136 + $0x168] sm:$0xff]
    %v2183 = vld [vmem:[%s2136 + $0x170] sm:$0xff]
    %v2184 = vld [vmem:[%s2136 + $0x178] sm:$0xff]
    %v2185 = vld [vmem:[%s2136 + $0x180] sm:$0xff]
    %v2186 = vld [vmem:[%s2136 + $0x188] sm:$0xff]
    %v2187 = vld [vmem:[%s2136 + $0x190] sm:$0xff]
    %v2188 = vld [vmem:[%s2136 + $0x198] sm:$0xff]
    %v2189 = vld [vmem:[%s2136 + $0x1a0] sm:$0xff]
    %v2190 = vld [vmem:[%s2136 + $0x1a8] sm:$0xff]
    %v2191 = vld [vmem:[%s2136 + $0x1b0] sm:$0xff]
    %v2192 = vld [vmem:[%s2136 + $0x1b8] sm:$0xff]
    %v2193 = vld [vmem:[%s2136 + $0x1c0] sm:$0xff]
    %v2194 = vld [vmem:[%s2136 + $0x1c8] sm:$0xff]
    %v2195 = vld [vmem:[%s2136 + $0x1d0] sm:$0xff]
    %v2196 = vld [vmem:[%s2136 + $0x1d8] sm:$0xff]
    %v2197 = vld [vmem:[%s2136 + $0x1e0] sm:$0xff]
    %v2198 = vld [vmem:[%s2136 + $0x1e8] sm:$0xff]
    %v2199 = vld [vmem:[%s2136 + $0x1f0] sm:$0xff]
    %v2200 = vld [vmem:[%s2136 + $0x1f8] sm:$0xff]
    %v2201 = vld [vmem:[%s2136 + $0x200] sm:$0xff]
    %v2202 = vld [vmem:[%s2136 + $0x208] sm:$0xff]
    %v2203 = vld [vmem:[%s2136 + $0x210] sm:$0xff]
    %v2204 = vld [vmem:[%s2136 + $0x218] sm:$0xff]
    %v2205 = vld [vmem:[%s2136 + $0x220] sm:$0xff]
    %v2206 = vld [vmem:[%s2136 + $0x228] sm:$0xff]
    %v2207 = vld [vmem:[%s2136 + $0x230] sm:$0xff]
    %v2208 = vld [vmem:[%s2136 + $0x238] sm:$0xff]
    %v2209 = vld [vmem:[%s2136 + $0x240] sm:$0xff]
    %v2210 = vld [vmem:[%s2136 + $0x248] sm:$0xff]
    %v2211 = vld [vmem:[%s2136 + $0x250] sm:$0xff]
    %v2212 = vld [vmem:[%s2136 + $0x258] sm:$0xff]
    %v2213 = vld [vmem:[%s2136 + $0x260] sm:$0xff]
    %v2214 = vld [vmem:[%s2136 + $0x268] sm:$0xff]
    %v2215 = vld [vmem:[%s2136 + $0x270] sm:$0xff]
    %v2216 = vld [vmem:[%s2136 + $0x278] sm:$0xff]
    %v2217 = vld [vmem:[%s2136 + $0x280] sm:$0xff]
    %v2218 = vld [vmem:[%s2136 + $0x288] sm:$0xff]
    %v2219 = vld [vmem:[%s2136 + $0x290] sm:$0xff]
    %v2220 = vld [vmem:[%s2136 + $0x298] sm:$0xff]
    %v2221 = vld [vmem:[%s2136 + $0x2a0] sm:$0xff]
    %v2222 = vld [vmem:[%s2136 + $0x2a8] sm:$0xff]
    %v2223 = vld [vmem:[%s2136 + $0x2b0] sm:$0xff]
    %v2224 = vld [vmem:[%s2136 + $0x2b8] sm:$0xff]
    %v2225 = vld [vmem:[%s2136 + $0x2c0] sm:$0xff]
    %v2226 = vld [vmem:[%s2136 + $0x2c8] sm:$0xff]
    %v2227 = vld [vmem:[%s2136 + $0x2d0] sm:$0xff]
    %v2228 = vld [vmem:[%s2136 + $0x2d8] sm:$0xff]
    %v2229 = vld [vmem:[%s2136 + $0x2e0] sm:$0xff]
    %v2230 = vld [vmem:[%s2136 + $0x2e8] sm:$0xff]
    %v2231 = vld [vmem:[%s2136 + $0x2f0] sm:$0xff]
    %v2232 = vld [vmem:[%s2136 + $0x2f8] sm:$0xff]
    %v2233 = vld [vmem:[%s2136 + $0x300] sm:$0xff]
    %v2234 = vld [vmem:[%s2136 + $0x308] sm:$0xff]
    %v2235 = vld [vmem:[%s2136 + $0x310] sm:$0xff]
    %v2236 = vld [vmem:[%s2136 + $0x318] sm:$0xff]
    %v2237 = vld [vmem:[%s2136 + $0x320] sm:$0xff]
    %v2238 = vld [vmem:[%s2136 + $0x328] sm:$0xff]
    %v2239 = vld [vmem:[%s2136 + $0x330] sm:$0xff]
    %v2240 = vld [vmem:[%s2136 + $0x338] sm:$0xff]
    %v2241 = vld [vmem:[%s2136 + $0x340] sm:$0xff]
    %v2242 = vld [vmem:[%s2136 + $0x348] sm:$0xff]
    %v2243 = vld [vmem:[%s2136 + $0x350] sm:$0xff]
    %v2244 = vld [vmem:[%s2136 + $0x358] sm:$0xff]
    %v2245 = vld [vmem:[%s2136 + $0x360] sm:$0xff]
    %v2246 = vld [vmem:[%s2136 + $0x368] sm:$0xff]
    %v2247 = vld [vmem:[%s2136 + $0x370] sm:$0xff]
    %v2248 = vld [vmem:[%s2136 + $0x378] sm:$0xff]
    %v2249 = vld [vmem:[%s2136 + $0x380] sm:$0xff]
    %v2250 = vld [vmem:[%s2136 + $0x388] sm:$0xff]
    %v2251 = vld [vmem:[%s2136 + $0x390] sm:$0xff]
    %v2252 = vld [vmem:[%s2136 + $0x398] sm:$0xff]
    %v2253 = vld [vmem:[%s2136 + $0x3a0] sm:$0xff]
    %v2254 = vld [vmem:[%s2136 + $0x3a8] sm:$0xff]
    %v2255 = vld [vmem:[%s2136 + $0x3b0] sm:$0xff]
    %v2256 = vld [vmem:[%s2136 + $0x3b8] sm:$0xff]
    %v2257 = vld [vmem:[%s2136 + $0x3c0] sm:$0xff]
    %v2258 = vld [vmem:[%s2136 + $0x3c8] sm:$0xff]
    %v2259 = vld [vmem:[%s2136 + $0x3d0] sm:$0xff]
    %v2260 = vld [vmem:[%s2136 + $0x3d8] sm:$0xff]
    %v2261 = vld [vmem:[%s2136 + $0x3e0] sm:$0xff]
    %v2262 = vld [vmem:[%s2136 + $0x3e8] sm:$0xff]
    %v2263 = vld [vmem:[%s2136 + $0x3f0] sm:$0xff]
    %v2264 = vld [vmem:[%s2136 + $0x3f8] sm:$0xff]
    %v2273 = vunpack.c.l.b16 %v2128
    %v2274 = vunpack.c.l.b16 %v2129
    %v2275 = vunpack.c.l.b16 %v2130
    %v2276 = vunpack.c.l.b16 %v2131
    %v2277 = vunpack.c.l.b16 %v2132
    %v2278 = vunpack.c.l.b16 %v2133
    %v2279 = vunpack.c.l.b16 %v2134
    %v2280 = vunpack.c.l.b16 %v2135
    %v2281 = vrot.slane %v2275, 7
    %v2282 = vsel %vm418, %v2281, %v2273
    %v2283 = vrot.slane %v2277, 6
    %v2284 = vsel %vm421, %v2283, %v2282
    %v2285 = vrot.slane %v2279, 5
    %v2286 = vsel %vm424, %v2285, %v2284
    %v2287 = vrot.slane %v2276, 7
    %v2288 = vsel %vm418, %v2287, %v2274
    %v2289 = vrot.slane %v2278, 6
    %v2290 = vsel %vm421, %v2289, %v2288
    %v2291 = vrot.slane %v2280, 5
    %v2292 = vsel %vm424, %v2291, %v2290
    %v2293 = vpack.c.b16 %v2286, %v2286
    %v2294 = vpack.c.b16 %v2292, %v2292
    %v2425 = vunpack.c.l.b16 %v2137
    %v2426 = vunpack.c.h.b16 %v2137
    %v2427 = vunpack.c.l.b16 %v2138
    %v2428 = vunpack.c.h.b16 %v2138
    %v2429 = vunpack.c.l.b16 %v2139
    %v2430 = vunpack.c.h.b16 %v2139
    %v2431 = vunpack.c.l.b16 %v2140
    %v2432 = vunpack.c.h.b16 %v2140
    %v2433 = vunpack.c.l.b16 %v2141
    %v2434 = vunpack.c.h.b16 %v2141
    %v2435 = vunpack.c.l.b16 %v2142
    %v2436 = vunpack.c.h.b16 %v2142
    %v2437 = vunpack.c.l.b16 %v2143
    %v2438 = vunpack.c.h.b16 %v2143
    %v2439 = vunpack.c.l.b16 %v2144
    %v2440 = vunpack.c.h.b16 %v2144
    %v2441 = vunpack.c.l.b16 %v2145
    %v2442 = vunpack.c.h.b16 %v2145
    %v2443 = vunpack.c.l.b16 %v2146
    %v2444 = vunpack.c.h.b16 %v2146
    %v2445 = vunpack.c.l.b16 %v2147
    %v2446 = vunpack.c.h.b16 %v2147
    %v2447 = vunpack.c.l.b16 %v2148
    %v2448 = vunpack.c.h.b16 %v2148
    %v2449 = vunpack.c.l.b16 %v2149
    %v2450 = vunpack.c.h.b16 %v2149
    %v2451 = vunpack.c.l.b16 %v2150
    %v2452 = vunpack.c.h.b16 %v2150
    %v2453 = vunpack.c.l.b16 %v2151
    %v2454 = vunpack.c.h.b16 %v2151
    %v2455 = vunpack.c.l.b16 %v2152
    %v2456 = vunpack.c.h.b16 %v2152
    %v2457 = vunpack.c.l.b16 %v2153
    %v2458 = vunpack.c.h.b16 %v2153
    %v2459 = vunpack.c.l.b16 %v2154
    %v2460 = vunpack.c.h.b16 %v2154
    %v2461 = vunpack.c.l.b16 %v2155
    %v2462 = vunpack.c.h.b16 %v2155
    %v2463 = vunpack.c.l.b16 %v2156
    %v2464 = vunpack.c.h.b16 %v2156
    %v2465 = vunpack.c.l.b16 %v2157
    %v2466 = vunpack.c.h.b16 %v2157
    %v2467 = vunpack.c.l.b16 %v2158
    %v2468 = vunpack.c.h.b16 %v2158
    %v2469 = vunpack.c.l.b16 %v2159
    %v2470 = vunpack.c.h.b16 %v2159
    %v2471 = vunpack.c.l.b16 %v2160
    %v2472 = vunpack.c.h.b16 %v2160
    %v2473 = vunpack.c.l.b16 %v2161
    %v2474 = vunpack.c.h.b16 %v2161
    %v2475 = vunpack.c.l.b16 %v2162
    %v2476 = vunpack.c.h.b16 %v2162
    %v2477 = vunpack.c.l.b16 %v2163
    %v2478 = vunpack.c.h.b16 %v2163
    %v2479 = vunpack.c.l.b16 %v2164
    %v2480 = vunpack.c.h.b16 %v2164
    %v2481 = vunpack.c.l.b16 %v2165
    %v2482 = vunpack.c.h.b16 %v2165
    %v2483 = vunpack.c.l.b16 %v2166
    %v2484 = vunpack.c.h.b16 %v2166
    %v2485 = vunpack.c.l.b16 %v2167
    %v2486 = vunpack.c.h.b16 %v2167
    %v2487 = vunpack.c.l.b16 %v2168
    %v2488 = vunpack.c.h.b16 %v2168
    %v2489 = vunpack.c.l.b16 %v2169
    %v2490 = vunpack.c.h.b16 %v2169
    %v2491 = vunpack.c.l.b16 %v2170
    %v2492 = vunpack.c.h.b16 %v2170
    %v2493 = vunpack.c.l.b16 %v2171
    %v2494 = vunpack.c.h.b16 %v2171
    %v2495 = vunpack.c.l.b16 %v2172
    %v2496 = vunpack.c.h.b16 %v2172
    %v2497 = vunpack.c.l.b16 %v2173
    %v2498 = vunpack.c.h.b16 %v2173
    %v2499 = vunpack.c.l.b16 %v2174
    %v2500 = vunpack.c.h.b16 %v2174
    %v2501 = vunpack.c.l.b16 %v2175
    %v2502 = vunpack.c.h.b16 %v2175
    %v2503 = vunpack.c.l.b16 %v2176
    %v2504 = vunpack.c.h.b16 %v2176
    %v2505 = vunpack.c.l.b16 %v2177
    %v2506 = vunpack.c.h.b16 %v2177
    %v2507 = vunpack.c.l.b16 %v2178
    %v2508 = vunpack.c.h.b16 %v2178
    %v2509 = vunpack.c.l.b16 %v2179
    %v2510 = vunpack.c.h.b16 %v2179
    %v2511 = vunpack.c.l.b16 %v2180
    %v2512 = vunpack.c.h.b16 %v2180
    %v2513 = vunpack.c.l.b16 %v2181
    %v2514 = vunpack.c.h.b16 %v2181
    %v2515 = vunpack.c.l.b16 %v2182
    %v2516 = vunpack.c.h.b16 %v2182
    %v2517 = vunpack.c.l.b16 %v2183
    %v2518 = vunpack.c.h.b16 %v2183
    %v2519 = vunpack.c.l.b16 %v2184
    %v2520 = vunpack.c.h.b16 %v2184
    %v2521 = vunpack.c.l.b16 %v2185
    %v2522 = vunpack.c.h.b16 %v2185
    %v2523 = vunpack.c.l.b16 %v2186
    %v2524 = vunpack.c.h.b16 %v2186
    %v2525 = vunpack.c.l.b16 %v2187
    %v2526 = vunpack.c.h.b16 %v2187
    %v2527 = vunpack.c.l.b16 %v2188
    %v2528 = vunpack.c.h.b16 %v2188
    %v2529 = vunpack.c.l.b16 %v2189
    %v2530 = vunpack.c.h.b16 %v2189
    %v2531 = vunpack.c.l.b16 %v2190
    %v2532 = vunpack.c.h.b16 %v2190
    %v2533 = vunpack.c.l.b16 %v2191
    %v2534 = vunpack.c.h.b16 %v2191
    %v2535 = vunpack.c.l.b16 %v2192
    %v2536 = vunpack.c.h.b16 %v2192
    %v2537 = vunpack.c.l.b16 %v2193
    %v2538 = vunpack.c.h.b16 %v2193
    %v2539 = vunpack.c.l.b16 %v2194
    %v2540 = vunpack.c.h.b16 %v2194
    %v2541 = vunpack.c.l.b16 %v2195
    %v2542 = vunpack.c.h.b16 %v2195
    %v2543 = vunpack.c.l.b16 %v2196
    %v2544 = vunpack.c.h.b16 %v2196
    %v2545 = vunpack.c.l.b16 %v2197
    %v2546 = vunpack.c.h.b16 %v2197
    %v2547 = vunpack.c.l.b16 %v2198
    %v2548 = vunpack.c.h.b16 %v2198
    %v2549 = vunpack.c.l.b16 %v2199
    %v2550 = vunpack.c.h.b16 %v2199
    %v2551 = vunpack.c.l.b16 %v2200
    %v2552 = vunpack.c.h.b16 %v2200
    %v2553 = vunpack.c.l.b16 %v2201
    %v2554 = vunpack.c.h.b16 %v2201
    %v2555 = vunpack.c.l.b16 %v2202
    %v2556 = vunpack.c.h.b16 %v2202
    %v2557 = vunpack.c.l.b16 %v2203
    %v2558 = vunpack.c.h.b16 %v2203
    %v2559 = vunpack.c.l.b16 %v2204
    %v2560 = vunpack.c.h.b16 %v2204
    %v2561 = vunpack.c.l.b16 %v2205
    %v2562 = vunpack.c.h.b16 %v2205
    %v2563 = vunpack.c.l.b16 %v2206
    %v2564 = vunpack.c.h.b16 %v2206
    %v2565 = vunpack.c.l.b16 %v2207
    %v2566 = vunpack.c.h.b16 %v2207
    %v2567 = vunpack.c.l.b16 %v2208
    %v2568 = vunpack.c.h.b16 %v2208
    %v2569 = vunpack.c.l.b16 %v2209
    %v2570 = vunpack.c.h.b16 %v2209
    %v2571 = vunpack.c.l.b16 %v2210
    %v2572 = vunpack.c.h.b16 %v2210
    %v2573 = vunpack.c.l.b16 %v2211
    %v2574 = vunpack.c.h.b16 %v2211
    %v2575 = vunpack.c.l.b16 %v2212
    %v2576 = vunpack.c.h.b16 %v2212
    %v2577 = vunpack.c.l.b16 %v2213
    %v2578 = vunpack.c.h.b16 %v2213
    %v2579 = vunpack.c.l.b16 %v2214
    %v2580 = vunpack.c.h.b16 %v2214
    %v2581 = vunpack.c.l.b16 %v2215
    %v2582 = vunpack.c.h.b16 %v2215
    %v2583 = vunpack.c.l.b16 %v2216
    %v2584 = vunpack.c.h.b16 %v2216
    %v2585 = vunpack.c.l.b16 %v2217
    %v2586 = vunpack.c.h.b16 %v2217
    %v2587 = vunpack.c.l.b16 %v2218
    %v2588 = vunpack.c.h.b16 %v2218
    %v2589 = vunpack.c.l.b16 %v2219
    %v2590 = vunpack.c.h.b16 %v2219
    %v2591 = vunpack.c.l.b16 %v2220
    %v2592 = vunpack.c.h.b16 %v2220
    %v2593 = vunpack.c.l.b16 %v2221
    %v2594 = vunpack.c.h.b16 %v2221
    %v2595 = vunpack.c.l.b16 %v2222
    %v2596 = vunpack.c.h.b16 %v2222
    %v2597 = vunpack.c.l.b16 %v2223
    %v2598 = vunpack.c.h.b16 %v2223
    %v2599 = vunpack.c.l.b16 %v2224
    %v2600 = vunpack.c.h.b16 %v2224
    %v2601 = vunpack.c.l.b16 %v2225
    %v2602 = vunpack.c.h.b16 %v2225
    %v2603 = vunpack.c.l.b16 %v2226
    %v2604 = vunpack.c.h.b16 %v2226
    %v2605 = vunpack.c.l.b16 %v2227
    %v2606 = vunpack.c.h.b16 %v2227
    %v2607 = vunpack.c.l.b16 %v2228
    %v2608 = vunpack.c.h.b16 %v2228
    %v2609 = vunpack.c.l.b16 %v2229
    %v2610 = vunpack.c.h.b16 %v2229
    %v2611 = vunpack.c.l.b16 %v2230
    %v2612 = vunpack.c.h.b16 %v2230
    %v2613 = vunpack.c.l.b16 %v2231
    %v2614 = vunpack.c.h.b16 %v2231
    %v2615 = vunpack.c.l.b16 %v2232
    %v2616 = vunpack.c.h.b16 %v2232
    %v2617 = vunpack.c.l.b16 %v2233
    %v2618 = vunpack.c.h.b16 %v2233
    %v2619 = vunpack.c.l.b16 %v2234
    %v2620 = vunpack.c.h.b16 %v2234
    %v2621 = vunpack.c.l.b16 %v2235
    %v2622 = vunpack.c.h.b16 %v2235
    %v2623 = vunpack.c.l.b16 %v2236
    %v2624 = vunpack.c.h.b16 %v2236
    %v2625 = vunpack.c.l.b16 %v2237
    %v2626 = vunpack.c.h.b16 %v2237
    %v2627 = vunpack.c.l.b16 %v2238
    %v2628 = vunpack.c.h.b16 %v2238
    %v2629 = vunpack.c.l.b16 %v2239
    %v2630 = vunpack.c.h.b16 %v2239
    %v2631 = vunpack.c.l.b16 %v2240
    %v2632 = vunpack.c.h.b16 %v2240
    %v2633 = vunpack.c.l.b16 %v2241
    %v2634 = vunpack.c.h.b16 %v2241
    %v2635 = vunpack.c.l.b16 %v2242
    %v2636 = vunpack.c.h.b16 %v2242
    %v2637 = vunpack.c.l.b16 %v2243
    %v2638 = vunpack.c.h.b16 %v2243
    %v2639 = vunpack.c.l.b16 %v2244
    %v2640 = vunpack.c.h.b16 %v2244
    %v2641 = vunpack.c.l.b16 %v2245
    %v2642 = vunpack.c.h.b16 %v2245
    %v2643 = vunpack.c.l.b16 %v2246
    %v2644 = vunpack.c.h.b16 %v2246
    %v2645 = vunpack.c.l.b16 %v2247
    %v2646 = vunpack.c.h.b16 %v2247
    %v2647 = vunpack.c.l.b16 %v2248
    %v2648 = vunpack.c.h.b16 %v2248
    %v2649 = vunpack.c.l.b16 %v2249
    %v2650 = vunpack.c.h.b16 %v2249
    %v2651 = vunpack.c.l.b16 %v2250
    %v2652 = vunpack.c.h.b16 %v2250
    %v2653 = vunpack.c.l.b16 %v2251
    %v2654 = vunpack.c.h.b16 %v2251
    %v2655 = vunpack.c.l.b16 %v2252
    %v2656 = vunpack.c.h.b16 %v2252
    %v2657 = vunpack.c.l.b16 %v2253
    %v2658 = vunpack.c.h.b16 %v2253
    %v2659 = vunpack.c.l.b16 %v2254
    %v2660 = vunpack.c.h.b16 %v2254
    %v2661 = vunpack.c.l.b16 %v2255
    %v2662 = vunpack.c.h.b16 %v2255
    %v2663 = vunpack.c.l.b16 %v2256
    %v2664 = vunpack.c.h.b16 %v2256
    %v2665 = vunpack.c.l.b16 %v2257
    %v2666 = vunpack.c.h.b16 %v2257
    %v2667 = vunpack.c.l.b16 %v2258
    %v2668 = vunpack.c.h.b16 %v2258
    %v2669 = vunpack.c.l.b16 %v2259
    %v2670 = vunpack.c.h.b16 %v2259
    %v2671 = vunpack.c.l.b16 %v2260
    %v2672 = vunpack.c.h.b16 %v2260
    %v2673 = vunpack.c.l.b16 %v2261
    %v2674 = vunpack.c.h.b16 %v2261
    %v2675 = vunpack.c.l.b16 %v2262
    %v2676 = vunpack.c.h.b16 %v2262
    %v2677 = vunpack.c.l.b16 %v2263
    %v2678 = vunpack.c.h.b16 %v2263
    %v2679 = vunpack.c.l.b16 %v2264
    %v2680 = vunpack.c.h.b16 %v2264
    %v2681 = vpack.c.b16 %v2433, %v2425
    %v2682 = vpack.c.b16 %v2434, %v2426
    %v2683 = vpack.c.b16 %v2435, %v2427
    %v2684 = vpack.c.b16 %v2436, %v2428
    %v2685 = vpack.c.b16 %v2437, %v2429
    %v2686 = vpack.c.b16 %v2438, %v2430
    %v2687 = vpack.c.b16 %v2439, %v2431
    %v2688 = vpack.c.b16 %v2440, %v2432
    %v2689 = vpack.c.b16 %v2449, %v2441
    %v2690 = vpack.c.b16 %v2450, %v2442
    %v2691 = vpack.c.b16 %v2451, %v2443
    %v2692 = vpack.c.b16 %v2452, %v2444
    %v2693 = vpack.c.b16 %v2453, %v2445
    %v2694 = vpack.c.b16 %v2454, %v2446
    %v2695 = vpack.c.b16 %v2455, %v2447
    %v2696 = vpack.c.b16 %v2456, %v2448
    %v2697 = vpack.c.b16 %v2465, %v2457
    %v2698 = vpack.c.b16 %v2466, %v2458
    %v2699 = vpack.c.b16 %v2467, %v2459
    %v2700 = vpack.c.b16 %v2468, %v2460
    %v2701 = vpack.c.b16 %v2469, %v2461
    %v2702 = vpack.c.b16 %v2470, %v2462
    %v2703 = vpack.c.b16 %v2471, %v2463
    %v2704 = vpack.c.b16 %v2472, %v2464
    %v2705 = vpack.c.b16 %v2481, %v2473
    %v2706 = vpack.c.b16 %v2482, %v2474
    %v2707 = vpack.c.b16 %v2483, %v2475
    %v2708 = vpack.c.b16 %v2484, %v2476
    %v2709 = vpack.c.b16 %v2485, %v2477
    %v2710 = vpack.c.b16 %v2486, %v2478
    %v2711 = vpack.c.b16 %v2487, %v2479
    %v2712 = vpack.c.b16 %v2488, %v2480
    %v2713 = vpack.c.b16 %v2497, %v2489
    %v2714 = vpack.c.b16 %v2498, %v2490
    %v2715 = vpack.c.b16 %v2499, %v2491
    %v2716 = vpack.c.b16 %v2500, %v2492
    %v2717 = vpack.c.b16 %v2501, %v2493
    %v2718 = vpack.c.b16 %v2502, %v2494
    %v2719 = vpack.c.b16 %v2503, %v2495
    %v2720 = vpack.c.b16 %v2504, %v2496
    %v2721 = vpack.c.b16 %v2513, %v2505
    %v2722 = vpack.c.b16 %v2514, %v2506
    %v2723 = vpack.c.b16 %v2515, %v2507
    %v2724 = vpack.c.b16 %v2516, %v2508
    %v2725 = vpack.c.b16 %v2517, %v2509
    %v2726 = vpack.c.b16 %v2518, %v2510
    %v2727 = vpack.c.b16 %v2519, %v2511
    %v2728 = vpack.c.b16 %v2520, %v2512
    %v2729 = vpack.c.b16 %v2529, %v2521
    %v2730 = vpack.c.b16 %v2530, %v2522
    %v2731 = vpack.c.b16 %v2531, %v2523
    %v2732 = vpack.c.b16 %v2532, %v2524
    %v2733 = vpack.c.b16 %v2533, %v2525
    %v2734 = vpack.c.b16 %v2534, %v2526
    %v2735 = vpack.c.b16 %v2535, %v2527
    %v2736 = vpack.c.b16 %v2536, %v2528
    %v2737 = vpack.c.b16 %v2545, %v2537
    %v2738 = vpack.c.b16 %v2546, %v2538
    %v2739 = vpack.c.b16 %v2547, %v2539
    %v2740 = vpack.c.b16 %v2548, %v2540
    %v2741 = vpack.c.b16 %v2549, %v2541
    %v2742 = vpack.c.b16 %v2550, %v2542
    %v2743 = vpack.c.b16 %v2551, %v2543
    %v2744 = vpack.c.b16 %v2552, %v2544
    %v2745 = vpack.c.b16 %v2561, %v2553
    %v2746 = vpack.c.b16 %v2562, %v2554
    %v2747 = vpack.c.b16 %v2563, %v2555
    %v2748 = vpack.c.b16 %v2564, %v2556
    %v2749 = vpack.c.b16 %v2565, %v2557
    %v2750 = vpack.c.b16 %v2566, %v2558
    %v2751 = vpack.c.b16 %v2567, %v2559
    %v2752 = vpack.c.b16 %v2568, %v2560
    %v2753 = vpack.c.b16 %v2577, %v2569
    %v2754 = vpack.c.b16 %v2578, %v2570
    %v2755 = vpack.c.b16 %v2579, %v2571
    %v2756 = vpack.c.b16 %v2580, %v2572
    %v2757 = vpack.c.b16 %v2581, %v2573
    %v2758 = vpack.c.b16 %v2582, %v2574
    %v2759 = vpack.c.b16 %v2583, %v2575
    %v2760 = vpack.c.b16 %v2584, %v2576
    %v2761 = vpack.c.b16 %v2593, %v2585
    %v2762 = vpack.c.b16 %v2594, %v2586
    %v2763 = vpack.c.b16 %v2595, %v2587
    %v2764 = vpack.c.b16 %v2596, %v2588
    %v2765 = vpack.c.b16 %v2597, %v2589
    %v2766 = vpack.c.b16 %v2598, %v2590
    %v2767 = vpack.c.b16 %v2599, %v2591
    %v2768 = vpack.c.b16 %v2600, %v2592
    %v2769 = vpack.c.b16 %v2609, %v2601
    %v2770 = vpack.c.b16 %v2610, %v2602
    %v2771 = vpack.c.b16 %v2611, %v2603
    %v2772 = vpack.c.b16 %v2612, %v2604
    %v2773 = vpack.c.b16 %v2613, %v2605
    %v2774 = vpack.c.b16 %v2614, %v2606
    %v2775 = vpack.c.b16 %v2615, %v2607
    %v2776 = vpack.c.b16 %v2616, %v2608
    %v2777 = vpack.c.b16 %v2625, %v2617
    %v2778 = vpack.c.b16 %v2626, %v2618
    %v2779 = vpack.c.b16 %v2627, %v2619
    %v2780 = vpack.c.b16 %v2628, %v2620
    %v2781 = vpack.c.b16 %v2629, %v2621
    %v2782 = vpack.c.b16 %v2630, %v2622
    %v2783 = vpack.c.b16 %v2631, %v2623
    %v2784 = vpack.c.b16 %v2632, %v2624
    %v2785 = vpack.c.b16 %v2641, %v2633
    %v2786 = vpack.c.b16 %v2642, %v2634
    %v2787 = vpack.c.b16 %v2643, %v2635
    %v2788 = vpack.c.b16 %v2644, %v2636
    %v2789 = vpack.c.b16 %v2645, %v2637
    %v2790 = vpack.c.b16 %v2646, %v2638
    %v2791 = vpack.c.b16 %v2647, %v2639
    %v2792 = vpack.c.b16 %v2648, %v2640
    %v2793 = vpack.c.b16 %v2657, %v2649
    %v2794 = vpack.c.b16 %v2658, %v2650
    %v2795 = vpack.c.b16 %v2659, %v2651
    %v2796 = vpack.c.b16 %v2660, %v2652
    %v2797 = vpack.c.b16 %v2661, %v2653
    %v2798 = vpack.c.b16 %v2662, %v2654
    %v2799 = vpack.c.b16 %v2663, %v2655
    %v2800 = vpack.c.b16 %v2664, %v2656
    %v2801 = vpack.c.b16 %v2673, %v2665
    %v2802 = vpack.c.b16 %v2674, %v2666
    %v2803 = vpack.c.b16 %v2675, %v2667
    %v2804 = vpack.c.b16 %v2676, %v2668
    %v2805 = vpack.c.b16 %v2677, %v2669
    %v2806 = vpack.c.b16 %v2678, %v2670
    %v2807 = vpack.c.b16 %v2679, %v2671
    %v2808 = vpack.c.b16 %v2680, %v2672
    %2937 = vmatprep.subr.bf16.mxu0 %v2682
    %2938 = vmatpush1.bf16.msra.mxu0 %v2681
    %2939 = vmatprep.subr.bf16.mxu0 %v2690
    %2940 = vmatpush1.bf16.msra.mxu0 %v2689
    %2941 = vmatprep.subr.bf16.mxu0 %v2698
    %2942 = vmatpush1.bf16.msra.mxu0 %v2697
    %2943 = vmatprep.subr.bf16.mxu0 %v2706
    %2944 = vmatpush1.bf16.msra.mxu0 %v2705
    %2945 = vmatprep.subr.bf16.mxu0 %v2714
    %2946 = vmatpush1.bf16.msra.mxu0 %v2713
    %2947 = vmatprep.subr.bf16.mxu0 %v2722
    %2948 = vmatpush1.bf16.msra.mxu0 %v2721
    %2949 = vmatprep.subr.bf16.mxu0 %v2730
    %2950 = vmatpush1.bf16.msra.mxu0 %v2729
    %2951 = vmatprep.subr.bf16.mxu0 %v2738
    %2952 = vmatpush1.bf16.msra.mxu0 %v2737
    %2953 = vmatprep.subr.bf16.mxu0 %v2746
    %2954 = vmatpush1.bf16.msra.mxu0 %v2745
    %2955 = vmatprep.subr.bf16.mxu0 %v2754
    %2956 = vmatpush1.bf16.msra.mxu0 %v2753
    %2957 = vmatprep.subr.bf16.mxu0 %v2762
    %2958 = vmatpush1.bf16.msra.mxu0 %v2761
    %2959 = vmatprep.subr.bf16.mxu0 %v2770
    %2960 = vmatpush1.bf16.msra.mxu0 %v2769
    %2961 = vmatprep.subr.bf16.mxu0 %v2778
    %2962 = vmatpush1.bf16.msra.mxu0 %v2777
    %2963 = vmatprep.subr.bf16.mxu0 %v2786
    %2964 = vmatpush1.bf16.msra.mxu0 %v2785
    %2965 = vmatprep.subr.bf16.mxu0 %v2794
    %2966 = vmatpush1.bf16.msra.mxu0 %v2793
    %2967 = vmatprep.subr.bf16.mxu0 %v2802
    %2968 = vmatpush1.bf16.msra.mxu0 %v2801
    %2969 = vmatprep.mubr.bf16.mxu0 %v2294
    %2970 = vmatmul.mubr.bf16.gmra.mrb[0].mxu0 %v2293
    %v2971 = vpop.f32.mrb[0].mxu0
    %v2972 = vadd.f32 0.0, %v2971
    %v2973 = vpop.f32.mrb[0].mxu0
    %v2974 = vadd.f32 0.0, %v2973
    %v2975 = vpop.f32.mrb[0].mxu0
    %v2976 = vpop.f32.mrb[0].mxu0
    %2977 = vdwg.mxu0
    %2978 = vmatprep.subr.bf16.mxu0 %v2684
    %2979 = vmatpush1.bf16.msra.mxu0 %v2683
    %2980 = vmatprep.subr.bf16.mxu0 %v2692
    %2981 = vmatpush1.bf16.msra.mxu0 %v2691
    %2982 = vmatprep.subr.bf16.mxu0 %v2700
    %2983 = vmatpush1.bf16.msra.mxu0 %v2699
    %2984 = vmatprep.subr.bf16.mxu0 %v2708
    %2985 = vmatpush1.bf16.msra.mxu0 %v2707
    %2986 = vmatprep.subr.bf16.mxu0 %v2716
    %2987 = vmatpush1.bf16.msra.mxu0 %v2715
    %2988 = vmatprep.subr.bf16.mxu0 %v2724
    %2989 = vmatpush1.bf16.msra.mxu0 %v2723
    %2990 = vmatprep.subr.bf16.mxu0 %v2732
    %2991 = vmatpush1.bf16.msra.mxu0 %v2731
    %2992 = vmatprep.subr.bf16.mxu0 %v2740
    %2993 = vmatpush1.bf16.msra.mxu0 %v2739
    %2994 = vmatprep.subr.bf16.mxu0 %v2748
    %2995 = vmatpush1.bf16.msra.mxu0 %v2747
    %2996 = vmatprep.subr.bf16.mxu0 %v2756
    %2997 = vmatpush1.bf16.msra.mxu0 %v2755
    %2998 = vmatprep.subr.bf16.mxu0 %v2764
    %2999 = vmatpush1.bf16.msra.mxu0 %v2763
    %3000 = vmatprep.subr.bf16.mxu0 %v2772
    %3001 = vmatpush1.bf16.msra.mxu0 %v2771
    %3002 = vmatprep.subr.bf16.mxu0 %v2780
    %3003 = vmatpush1.bf16.msra.mxu0 %v2779
    %3004 = vmatprep.subr.bf16.mxu0 %v2788
    %3005 = vmatpush1.bf16.msra.mxu0 %v2787
    %3006 = vmatprep.subr.bf16.mxu0 %v2796
    %3007 = vmatpush1.bf16.msra.mxu0 %v2795
    %3008 = vmatprep.subr.bf16.mxu0 %v2804
    %3009 = vmatpush1.bf16.msra.mxu0 %v2803
    %3010 = vmatprep.mubr.bf16.mxu0 %v2294
    %3011 = vmatmul.mubr.bf16.gmra.mrb[0].mxu0 %v2293
    %v3012 = vpop.f32.mrb[0].mxu0
    %v3013 = vadd.f32 0.0, %v3012
    %v3014 = vpop.f32.mrb[0].mxu0
    %v3015 = vadd.f32 0.0, %v3014
    %v3016 = vpop.f32.mrb[0].mxu0
    %v3017 = vpop.f32.mrb[0].mxu0
    %3018 = vdwg.mxu0
    %3019 = vmatprep.subr.bf16.mxu0 %v2686
    %3020 = vmatpush1.bf16.msra.mxu0 %v2685
    %3021 = vmatprep.subr.bf16.mxu0 %v2694
    %3022 = vmatpush1.bf16.msra.mxu0 %v2693
    %3023 = vmatprep.subr.bf16.mxu0 %v2702
    %3024 = vmatpush1.bf16.msra.mxu0 %v2701
    %3025 = vmatprep.subr.bf16.mxu0 %v2710
    %3026 = vmatpush1.bf16.msra.mxu0 %v2709
    %3027 = vmatprep.subr.bf16.mxu0 %v2718
    %3028 = vmatpush1.bf16.msra.mxu0 %v2717
    %3029 = vmatprep.subr.bf16.mxu0 %v2726
    %3030 = vmatpush1.bf16.msra.mxu0 %v2725
    %3031 = vmatprep.subr.bf16.mxu0 %v2734
    %3032 = vmatpush1.bf16.msra.mxu0 %v2733
    %3033 = vmatprep.subr.bf16.mxu0 %v2742
    %3034 = vmatpush1.bf16.msra.mxu0 %v2741
    %3035 = vmatprep.subr.bf16.mxu0 %v2750
    %3036 = vmatpush1.bf16.msra.mxu0 %v2749
    %3037 = vmatprep.subr.bf16.mxu0 %v2758
    %3038 = vmatpush1.bf16.msra.mxu0 %v2757
    %3039 = vmatprep.subr.bf16.mxu0 %v2766
    %3040 = vmatpush1.bf16.msra.mxu0 %v2765
    %3041 = vmatprep.subr.bf16.mxu0 %v2774
    %3042 = vmatpush1.bf16.msra.mxu0 %v2773
    %3043 = vmatprep.subr.bf16.mxu0 %v2782
    %3044 = vmatpush1.bf16.msra.mxu0 %v2781
    %3045 = vmatprep.subr.bf16.mxu0 %v2790
    %3046 = vmatpush1.bf16.msra.mxu0 %v2789
    %3047 = vmatprep.subr.bf16.mxu0 %v2798
    %3048 = vmatpush1.bf16.msra.mxu0 %v2797
    %3049 = vmatprep.subr.bf16.mxu0 %v2806
    %3050 = vmatpush1.bf16.msra.mxu0 %v2805
    %3051 = vmatprep.mubr.bf16.mxu0 %v2294
    %3052 = vmatmul.mubr.bf16.gmra.mrb[0].mxu0 %v2293
    %v3053 = vpop.f32.mrb[0].mxu0
    %v3054 = vadd.f32 0.0, %v3053
    %v3055 = vpop.f32.mrb[0].mxu0
    %v3056 = vadd.f32 0.0, %v3055
    %v3057 = vpop.f32.mrb[0].mxu0
    %v3058 = vpop.f32.mrb[0].mxu0
    %3059 = vdwg.mxu0
    %3060 = vmatprep.subr.bf16.mxu0 %v2688
    %3061 = vmatpush1.bf16.msra.mxu0 %v2687
    %3062 = vmatprep.subr.bf16.mxu0 %v2696
    %3063 = vmatpush1.bf16.msra.mxu0 %v2695
    %3064 = vmatprep.subr.bf16.mxu0 %v2704
    %3065 = vmatpush1.bf16.msra.mxu0 %v2703
    %3066 = vmatprep.subr.bf16.mxu0 %v2712
    %3067 = vmatpush1.bf16.msra.mxu0 %v2711
    %3068 = vmatprep.subr.bf16.mxu0 %v2720
    %3069 = vmatpush1.bf16.msra.mxu0 %v2719
    %3070 = vmatprep.subr.bf16.mxu0 %v2728
    %3071 = vmatpush1.bf16.msra.mxu0 %v2727
    %3072 = vmatprep.subr.bf16.mxu0 %v2736
    %3073 = vmatpush1.bf16.msra.mxu0 %v2735
    %3074 = vmatprep.subr.bf16.mxu0 %v2744
    %3075 = vmatpush1.bf16.msra.mxu0 %v2743
    %3076 = vmatprep.subr.bf16.mxu0 %v2752
    %3077 = vmatpush1.bf16.msra.mxu0 %v2751
    %3078 = vmatprep.subr.bf16.mxu0 %v2760
    %3079 = vmatpush1.bf16.msra.mxu0 %v2759
    %3080 = vmatprep.subr.bf16.mxu0 %v2768
    %3081 = vmatpush1.bf16.msra.mxu0 %v2767
    %3082 = vmatprep.subr.bf16.mxu0 %v2776
    %3083 = vmatpush1.bf16.msra.mxu0 %v2775
    %3084 = vmatprep.subr.bf16.mxu0 %v2784
    %3085 = vmatpush1.bf16.msra.mxu0 %v2783
    %3086 = vmatprep.subr.bf16.mxu0 %v2792
    %3087 = vmatpush1.bf16.msra.mxu0 %v2791
    %3088 = vmatprep.subr.bf16.mxu0 %v2800
    %3089 = vmatpush1.bf16.msra.mxu0 %v2799
    %3090 = vmatprep.subr.bf16.mxu0 %v2808
    %3091 = vmatpush1.bf16.msra.mxu0 %v2807
    %3092 = vmatprep.mubr.bf16.mxu0 %v2294
    %3093 = vmatmul.mubr.bf16.gmra.mrb[0].mxu0 %v2293
    %v3094 = vpop.f32.mrb[0].mxu0
    %v3095 = vadd.f32 0.0, %v3094
    %v3096 = vpop.f32.mrb[0].mxu0
    %v3097 = vadd.f32 0.0, %v3096
    %v3098 = vpop.f32.mrb[0].mxu0
    %v3099 = vpop.f32.mrb[0].mxu0
    %3100 = vdwg.mxu0
    %v3101 = vadd.f32 %v1947, %v2972
    %v3102 = vadd.f32 %v1949, %v2974
    %v3103 = vadd.f32 %v1988, %v3013
    %v3104 = vadd.f32 %v1990, %v3015
    %v3105 = vadd.f32 %v2029, %v3054
    %v3106 = vadd.f32 %v2031, %v3056
    %v3107 = vadd.f32 %v2070, %v3095
    %v3108 = vadd.f32 %v2072, %v3097
    %s3109 = scalar_lea.vmem %s0, 3
    %v3110 = vld [vmem:[%s3109] ss:$4 sm:$0x3]
    %s3111 = scalar_lea.vmem %s0, 11
    %v3112 = vld [vmem:[%s3111] ss:$4 sm:$0x3]
    %s3113 = scalar_lea.vmem %s0, 19
    %v3114 = vld [vmem:[%s3113] ss:$4 sm:$0x3]
    %s3115 = scalar_lea.vmem %s0, 27
    %v3116 = vld [vmem:[%s3115] ss:$4 sm:$0x3]
    %v3121 = vlaneseq
    %v3122 = vshrl.u32 %v3121, 7
    %v3123 = vsub.s32 0, %v3122
    %v3124 = vrot.slane %v3110, %v3123
    %v3125 = vlaneseq
    %v3126 = vshrl.u32 %v3125, 7
    %v3127 = vsub.s32 1, %v3126
    %v3128 = vrot.slane %v3110, %v3127
    %v3129 = vlaneseq
    %v3130 = vshrl.u32 %v3129, 7
    %v3131 = vsub.s32 0, %v3130
    %v3132 = vrot.slane %v3112, %v3131
    %v3133 = vlaneseq
    %v3134 = vshrl.u32 %v3133, 7
    %v3135 = vsub.s32 1, %v3134
    %v3136 = vrot.slane %v3112, %v3135
    %v3137 = vlaneseq
    %v3138 = vshrl.u32 %v3137, 7
    %v3139 = vsub.s32 0, %v3138
    %v3140 = vrot.slane %v3114, %v3139
    %v3141 = vlaneseq
    %v3142 = vshrl.u32 %v3141, 7
    %v3143 = vsub.s32 1, %v3142
    %v3144 = vrot.slane %v3114, %v3143
    %v3145 = vlaneseq
    %v3146 = vshrl.u32 %v3145, 7
    %v3147 = vsub.s32 0, %v3146
    %v3148 = vrot.slane %v3116, %v3147
    %v3149 = vlaneseq
    %v3150 = vshrl.u32 %v3149, 7
    %v3151 = vsub.s32 1, %v3150
    %v3152 = vrot.slane %v3116, %v3151
    %v3161 = vpack.c.bf16 %v3124, %v3124
    %v3162 = vpack.c.bf16 %v3128, %v3128
    %v3163 = vpack.c.bf16 %v3132, %v3132
    %v3164 = vpack.c.bf16 %v3136, %v3136
    %v3165 = vpack.c.bf16 %v3140, %v3140
    %v3166 = vpack.c.bf16 %v3144, %v3144
    %v3167 = vpack.c.bf16 %v3148, %v3148
    %v3168 = vpack.c.bf16 %v3152, %v3152
    %s3169 = scalar_lea.vmem %s1, 3072
    %v3170 = vld [vmem:[%s3169] sm:$0xff]
    %v3171 = vld [vmem:[%s3169 + $0x8] sm:$0xff]
    %v3172 = vld [vmem:[%s3169 + $0x10] sm:$0xff]
    %v3173 = vld [vmem:[%s3169 + $0x18] sm:$0xff]
    %v3174 = vld [vmem:[%s3169 + $0x20] sm:$0xff]
    %v3175 = vld [vmem:[%s3169 + $0x28] sm:$0xff]
    %v3176 = vld [vmem:[%s3169 + $0x30] sm:$0xff]
    %v3177 = vld [vmem:[%s3169 + $0x38] sm:$0xff]
    %v3178 = vld [vmem:[%s3169 + $0x40] sm:$0xff]
    %v3179 = vld [vmem:[%s3169 + $0x48] sm:$0xff]
    %v3180 = vld [vmem:[%s3169 + $0x50] sm:$0xff]
    %v3181 = vld [vmem:[%s3169 + $0x58] sm:$0xff]
    %v3182 = vld [vmem:[%s3169 + $0x60] sm:$0xff]
    %v3183 = vld [vmem:[%s3169 + $0x68] sm:$0xff]
    %v3184 = vld [vmem:[%s3169 + $0x70] sm:$0xff]
    %v3185 = vld [vmem:[%s3169 + $0x78] sm:$0xff]
    %v3186 = vld [vmem:[%s3169 + $0x80] sm:$0xff]
    %v3187 = vld [vmem:[%s3169 + $0x88] sm:$0xff]
    %v3188 = vld [vmem:[%s3169 + $0x90] sm:$0xff]
    %v3189 = vld [vmem:[%s3169 + $0x98] sm:$0xff]
    %v3190 = vld [vmem:[%s3169 + $0xa0] sm:$0xff]
    %v3191 = vld [vmem:[%s3169 + $0xa8] sm:$0xff]
    %v3192 = vld [vmem:[%s3169 + $0xb0] sm:$0xff]
    %v3193 = vld [vmem:[%s3169 + $0xb8] sm:$0xff]
    %v3194 = vld [vmem:[%s3169 + $0xc0] sm:$0xff]
    %v3195 = vld [vmem:[%s3169 + $0xc8] sm:$0xff]
    %v3196 = vld [vmem:[%s3169 + $0xd0] sm:$0xff]
    %v3197 = vld [vmem:[%s3169 + $0xd8] sm:$0xff]
    %v3198 = vld [vmem:[%s3169 + $0xe0] sm:$0xff]
    %v3199 = vld [vmem:[%s3169 + $0xe8] sm:$0xff]
    %v3200 = vld [vmem:[%s3169 + $0xf0] sm:$0xff]
    %v3201 = vld [vmem:[%s3169 + $0xf8] sm:$0xff]
    %v3202 = vld [vmem:[%s3169 + $0x100] sm:$0xff]
    %v3203 = vld [vmem:[%s3169 + $0x108] sm:$0xff]
    %v3204 = vld [vmem:[%s3169 + $0x110] sm:$0xff]
    %v3205 = vld [vmem:[%s3169 + $0x118] sm:$0xff]
    %v3206 = vld [vmem:[%s3169 + $0x120] sm:$0xff]
    %v3207 = vld [vmem:[%s3169 + $0x128] sm:$0xff]
    %v3208 = vld [vmem:[%s3169 + $0x130] sm:$0xff]
    %v3209 = vld [vmem:[%s3169 + $0x138] sm:$0xff]
    %v3210 = vld [vmem:[%s3169 + $0x140] sm:$0xff]
    %v3211 = vld [vmem:[%s3169 + $0x148] sm:$0xff]
    %v3212 = vld [vmem:[%s3169 + $0x150] sm:$0xff]
    %v3213 = vld [vmem:[%s3169 + $0x158] sm:$0xff]
    %v3214 = vld [vmem:[%s3169 + $0x160] sm:$0xff]
    %v3215 = vld [vmem:[%s3169 + $0x168] sm:$0xff]
    %v3216 = vld [vmem:[%s3169 + $0x170] sm:$0xff]
    %v3217 = vld [vmem:[%s3169 + $0x178] sm:$0xff]
    %v3218 = vld [vmem:[%s3169 + $0x180] sm:$0xff]
    %v3219 = vld [vmem:[%s3169 + $0x188] sm:$0xff]
    %v3220 = vld [vmem:[%s3169 + $0x190] sm:$0xff]
    %v3221 = vld [vmem:[%s3169 + $0x198] sm:$0xff]
    %v3222 = vld [vmem:[%s3169 + $0x1a0] sm:$0xff]
    %v3223 = vld [vmem:[%s3169 + $0x1a8] sm:$0xff]
    %v3224 = vld [vmem:[%s3169 + $0x1b0] sm:$0xff]
    %v3225 = vld [vmem:[%s3169 + $0x1b8] sm:$0xff]
    %v3226 = vld [vmem:[%s3169 + $0x1c0] sm:$0xff]
    %v3227 = vld [vmem:[%s3169 + $0x1c8] sm:$0xff]
    %v3228 = vld [vmem:[%s3169 + $0x1d0] sm:$0xff]
    %v3229 = vld [vmem:[%s3169 + $0x1d8] sm:$0xff]
    %v3230 = vld [vmem:[%s3169 + $0x1e0] sm:$0xff]
    %v3231 = vld [vmem:[%s3169 + $0x1e8] sm:$0xff]
    %v3232 = vld [vmem:[%s3169 + $0x1f0] sm:$0xff]
    %v3233 = vld [vmem:[%s3169 + $0x1f8] sm:$0xff]
    %v3234 = vld [vmem:[%s3169 + $0x200] sm:$0xff]
    %v3235 = vld [vmem:[%s3169 + $0x208] sm:$0xff]
    %v3236 = vld [vmem:[%s3169 + $0x210] sm:$0xff]
    %v3237 = vld [vmem:[%s3169 + $0x218] sm:$0xff]
    %v3238 = vld [vmem:[%s3169 + $0x220] sm:$0xff]
    %v3239 = vld [vmem:[%s3169 + $0x228] sm:$0xff]
    %v3240 = vld [vmem:[%s3169 + $0x230] sm:$0xff]
    %v3241 = vld [vmem:[%s3169 + $0x238] sm:$0xff]
    %v3242 = vld [vmem:[%s3169 + $0x240] sm:$0xff]
    %v3243 = vld [vmem:[%s3169 + $0x248] sm:$0xff]
    %v3244 = vld [vmem:[%s3169 + $0x250] sm:$0xff]
    %v3245 = vld [vmem:[%s3169 + $0x258] sm:$0xff]
    %v3246 = vld [vmem:[%s3169 + $0x260] sm:$0xff]
    %v3247 = vld [vmem:[%s3169 + $0x268] sm:$0xff]
    %v3248 = vld [vmem:[%s3169 + $0x270] sm:$0xff]
    %v3249 = vld [vmem:[%s3169 + $0x278] sm:$0xff]
    %v3250 = vld [vmem:[%s3169 + $0x280] sm:$0xff]
    %v3251 = vld [vmem:[%s3169 + $0x288] sm:$0xff]
    %v3252 = vld [vmem:[%s3169 + $0x290] sm:$0xff]
    %v3253 = vld [vmem:[%s3169 + $0x298] sm:$0xff]
    %v3254 = vld [vmem:[%s3169 + $0x2a0] sm:$0xff]
    %v3255 = vld [vmem:[%s3169 + $0x2a8] sm:$0xff]
    %v3256 = vld [vmem:[%s3169 + $0x2b0] sm:$0xff]
    %v3257 = vld [vmem:[%s3169 + $0x2b8] sm:$0xff]
    %v3258 = vld [vmem:[%s3169 + $0x2c0] sm:$0xff]
    %v3259 = vld [vmem:[%s3169 + $0x2c8] sm:$0xff]
    %v3260 = vld [vmem:[%s3169 + $0x2d0] sm:$0xff]
    %v3261 = vld [vmem:[%s3169 + $0x2d8] sm:$0xff]
    %v3262 = vld [vmem:[%s3169 + $0x2e0] sm:$0xff]
    %v3263 = vld [vmem:[%s3169 + $0x2e8] sm:$0xff]
    %v3264 = vld [vmem:[%s3169 + $0x2f0] sm:$0xff]
    %v3265 = vld [vmem:[%s3169 + $0x2f8] sm:$0xff]
    %v3266 = vld [vmem:[%s3169 + $0x300] sm:$0xff]
    %v3267 = vld [vmem:[%s3169 + $0x308] sm:$0xff]
    %v3268 = vld [vmem:[%s3169 + $0x310] sm:$0xff]
    %v3269 = vld [vmem:[%s3169 + $0x318] sm:$0xff]
    %v3270 = vld [vmem:[%s3169 + $0x320] sm:$0xff]
    %v3271 = vld [vmem:[%s3169 + $0x328] sm:$0xff]
    %v3272 = vld [vmem:[%s3169 + $0x330] sm:$0xff]
    %v3273 = vld [vmem:[%s3169 + $0x338] sm:$0xff]
    %v3274 = vld [vmem:[%s3169 + $0x340] sm:$0xff]
    %v3275 = vld [vmem:[%s3169 + $0x348] sm:$0xff]
    %v3276 = vld [vmem:[%s3169 + $0x350] sm:$0xff]
    %v3277 = vld [vmem:[%s3169 + $0x358] sm:$0xff]
    %v3278 = vld [vmem:[%s3169 + $0x360] sm:$0xff]
    %v3279 = vld [vmem:[%s3169 + $0x368] sm:$0xff]
    %v3280 = vld [vmem:[%s3169 + $0x370] sm:$0xff]
    %v3281 = vld [vmem:[%s3169 + $0x378] sm:$0xff]
    %v3282 = vld [vmem:[%s3169 + $0x380] sm:$0xff]
    %v3283 = vld [vmem:[%s3169 + $0x388] sm:$0xff]
    %v3284 = vld [vmem:[%s3169 + $0x390] sm:$0xff]
    %v3285 = vld [vmem:[%s3169 + $0x398] sm:$0xff]
    %v3286 = vld [vmem:[%s3169 + $0x3a0] sm:$0xff]
    %v3287 = vld [vmem:[%s3169 + $0x3a8] sm:$0xff]
    %v3288 = vld [vmem:[%s3169 + $0x3b0] sm:$0xff]
    %v3289 = vld [vmem:[%s3169 + $0x3b8] sm:$0xff]
    %v3290 = vld [vmem:[%s3169 + $0x3c0] sm:$0xff]
    %v3291 = vld [vmem:[%s3169 + $0x3c8] sm:$0xff]
    %v3292 = vld [vmem:[%s3169 + $0x3d0] sm:$0xff]
    %v3293 = vld [vmem:[%s3169 + $0x3d8] sm:$0xff]
    %v3294 = vld [vmem:[%s3169 + $0x3e0] sm:$0xff]
    %v3295 = vld [vmem:[%s3169 + $0x3e8] sm:$0xff]
    %v3296 = vld [vmem:[%s3169 + $0x3f0] sm:$0xff]
    %v3297 = vld [vmem:[%s3169 + $0x3f8] sm:$0xff]
    %v3306 = vunpack.c.l.b16 %v3161
    %v3307 = vunpack.c.l.b16 %v3162
    %v3308 = vunpack.c.l.b16 %v3163
    %v3309 = vunpack.c.l.b16 %v3164
    %v3310 = vunpack.c.l.b16 %v3165
    %v3311 = vunpack.c.l.b16 %v3166
    %v3312 = vunpack.c.l.b16 %v3167
    %v3313 = vunpack.c.l.b16 %v3168
    %v3314 = vrot.slane %v3308, 7
    %v3315 = vsel %vm418, %v3314, %v3306
    %v3316 = vrot.slane %v3310, 6
    %v3317 = vsel %vm421, %v3316, %v3315
    %v3318 = vrot.slane %v3312, 5
    %v3319 = vsel %vm424, %v3318, %v3317
    %v3320 = vrot.slane %v3309, 7
    %v3321 = vsel %vm418, %v3320, %v3307
    %v3322 = vrot.slane %v3311, 6
    %v3323 = vsel %vm421, %v3322, %v3321
    %v3324 = vrot.slane %v3313, 5
    %v3325 = vsel %vm424, %v3324, %v3323
    %v3326 = vpack.c.b16 %v3319, %v3319
    %v3327 = vpack.c.b16 %v3325, %v3325
    %v3458 = vunpack.c.l.b16 %v3170
    %v3459 = vunpack.c.h.b16 %v3170
    %v3460 = vunpack.c.l.b16 %v3171
    %v3461 = vunpack.c.h.b16 %v3171
    %v3462 = vunpack.c.l.b16 %v3172
    %v3463 = vunpack.c.h.b16 %v3172
    %v3464 = vunpack.c.l.b16 %v3173
    %v3465 = vunpack.c.h.b16 %v3173
    %v3466 = vunpack.c.l.b16 %v3174
    %v3467 = vunpack.c.h.b16 %v3174
    %v3468 = vunpack.c.l.b16 %v3175
    %v3469 = vunpack.c.h.b16 %v3175
    %v3470 = vunpack.c.l.b16 %v3176
    %v3471 = vunpack.c.h.b16 %v3176
    %v3472 = vunpack.c.l.b16 %v3177
    %v3473 = vunpack.c.h.b16 %v3177
    %v3474 = vunpack.c.l.b16 %v3178
    %v3475 = vunpack.c.h.b16 %v3178
    %v3476 = vunpack.c.l.b16 %v3179
    %v3477 = vunpack.c.h.b16 %v3179
    %v3478 = vunpack.c.l.b16 %v3180
    %v3479 = vunpack.c.h.b16 %v3180
    %v3480 = vunpack.c.l.b16 %v3181
    %v3481 = vunpack.c.h.b16 %v3181
    %v3482 = vunpack.c.l.b16 %v3182
    %v3483 = vunpack.c.h.b16 %v3182
    %v3484 = vunpack.c.l.b16 %v3183
    %v3485 = vunpack.c.h.b16 %v3183
    %v3486 = vunpack.c.l.b16 %v3184
    %v3487 = vunpack.c.h.b16 %v3184
    %v3488 = vunpack.c.l.b16 %v3185
    %v3489 = vunpack.c.h.b16 %v3185
    %v3490 = vunpack.c.l.b16 %v3186
    %v3491 = vunpack.c.h.b16 %v3186
    %v3492 = vunpack.c.l.b16 %v3187
    %v3493 = vunpack.c.h.b16 %v3187
    %v3494 = vunpack.c.l.b16 %v3188
    %v3495 = vunpack.c.h.b16 %v3188
    %v3496 = vunpack.c.l.b16 %v3189
    %v3497 = vunpack.c.h.b16 %v3189
    %v3498 = vunpack.c.l.b16 %v3190
    %v3499 = vunpack.c.h.b16 %v3190
    %v3500 = vunpack.c.l.b16 %v3191
    %v3501 = vunpack.c.h.b16 %v3191
    %v3502 = vunpack.c.l.b16 %v3192
    %v3503 = vunpack.c.h.b16 %v3192
    %v3504 = vunpack.c.l.b16 %v3193
    %v3505 = vunpack.c.h.b16 %v3193
    %v3506 = vunpack.c.l.b16 %v3194
    %v3507 = vunpack.c.h.b16 %v3194
    %v3508 = vunpack.c.l.b16 %v3195
    %v3509 = vunpack.c.h.b16 %v3195
    %v3510 = vunpack.c.l.b16 %v3196
    %v3511 = vunpack.c.h.b16 %v3196
    %v3512 = vunpack.c.l.b16 %v3197
    %v3513 = vunpack.c.h.b16 %v3197
    %v3514 = vunpack.c.l.b16 %v3198
    %v3515 = vunpack.c.h.b16 %v3198
    %v3516 = vunpack.c.l.b16 %v3199
    %v3517 = vunpack.c.h.b16 %v3199
    %v3518 = vunpack.c.l.b16 %v3200
    %v3519 = vunpack.c.h.b16 %v3200
    %v3520 = vunpack.c.l.b16 %v3201
    %v3521 = vunpack.c.h.b16 %v3201
    %v3522 = vunpack.c.l.b16 %v3202
    %v3523 = vunpack.c.h.b16 %v3202
    %v3524 = vunpack.c.l.b16 %v3203
    %v3525 = vunpack.c.h.b16 %v3203
    %v3526 = vunpack.c.l.b16 %v3204
    %v3527 = vunpack.c.h.b16 %v3204
    %v3528 = vunpack.c.l.b16 %v3205
    %v3529 = vunpack.c.h.b16 %v3205
    %v3530 = vunpack.c.l.b16 %v3206
    %v3531 = vunpack.c.h.b16 %v3206
    %v3532 = vunpack.c.l.b16 %v3207
    %v3533 = vunpack.c.h.b16 %v3207
    %v3534 = vunpack.c.l.b16 %v3208
    %v3535 = vunpack.c.h.b16 %v3208
    %v3536 = vunpack.c.l.b16 %v3209
    %v3537 = vunpack.c.h.b16 %v3209
    %v3538 = vunpack.c.l.b16 %v3210
    %v3539 = vunpack.c.h.b16 %v3210
    %v3540 = vunpack.c.l.b16 %v3211
    %v3541 = vunpack.c.h.b16 %v3211
    %v3542 = vunpack.c.l.b16 %v3212
    %v3543 = vunpack.c.h.b16 %v3212
    %v3544 = vunpack.c.l.b16 %v3213
    %v3545 = vunpack.c.h.b16 %v3213
    %v3546 = vunpack.c.l.b16 %v3214
    %v3547 = vunpack.c.h.b16 %v3214
    %v3548 = vunpack.c.l.b16 %v3215
    %v3549 = vunpack.c.h.b16 %v3215
    %v3550 = vunpack.c.l.b16 %v3216
    %v3551 = vunpack.c.h.b16 %v3216
    %v3552 = vunpack.c.l.b16 %v3217
    %v3553 = vunpack.c.h.b16 %v3217
    %v3554 = vunpack.c.l.b16 %v3218
    %v3555 = vunpack.c.h.b16 %v3218
    %v3556 = vunpack.c.l.b16 %v3219
    %v3557 = vunpack.c.h.b16 %v3219
    %v3558 = vunpack.c.l.b16 %v3220
    %v3559 = vunpack.c.h.b16 %v3220
    %v3560 = vunpack.c.l.b16 %v3221
    %v3561 = vunpack.c.h.b16 %v3221
    %v3562 = vunpack.c.l.b16 %v3222
    %v3563 = vunpack.c.h.b16 %v3222
    %v3564 = vunpack.c.l.b16 %v3223
    %v3565 = vunpack.c.h.b16 %v3223
    %v3566 = vunpack.c.l.b16 %v3224
    %v3567 = vunpack.c.h.b16 %v3224
    %v3568 = vunpack.c.l.b16 %v3225
    %v3569 = vunpack.c.h.b16 %v3225
    %v3570 = vunpack.c.l.b16 %v3226
    %v3571 = vunpack.c.h.b16 %v3226
    %v3572 = vunpack.c.l.b16 %v3227
    %v3573 = vunpack.c.h.b16 %v3227
    %v3574 = vunpack.c.l.b16 %v3228
    %v3575 = vunpack.c.h.b16 %v3228
    %v3576 = vunpack.c.l.b16 %v3229
    %v3577 = vunpack.c.h.b16 %v3229
    %v3578 = vunpack.c.l.b16 %v3230
    %v3579 = vunpack.c.h.b16 %v3230
    %v3580 = vunpack.c.l.b16 %v3231
    %v3581 = vunpack.c.h.b16 %v3231
    %v3582 = vunpack.c.l.b16 %v3232
    %v3583 = vunpack.c.h.b16 %v3232
    %v3584 = vunpack.c.l.b16 %v3233
    %v3585 = vunpack.c.h.b16 %v3233
    %v3586 = vunpack.c.l.b16 %v3234
    %v3587 = vunpack.c.h.b16 %v3234
    %v3588 = vunpack.c.l.b16 %v3235
    %v3589 = vunpack.c.h.b16 %v3235
    %v3590 = vunpack.c.l.b16 %v3236
    %v3591 = vunpack.c.h.b16 %v3236
    %v3592 = vunpack.c.l.b16 %v3237
    %v3593 = vunpack.c.h.b16 %v3237
    %v3594 = vunpack.c.l.b16 %v3238
    %v3595 = vunpack.c.h.b16 %v3238
    %v3596 = vunpack.c.l.b16 %v3239
    %v3597 = vunpack.c.h.b16 %v3239
    %v3598 = vunpack.c.l.b16 %v3240
    %v3599 = vunpack.c.h.b16 %v3240
    %v3600 = vunpack.c.l.b16 %v3241
    %v3601 = vunpack.c.h.b16 %v3241
    %v3602 = vunpack.c.l.b16 %v3242
    %v3603 = vunpack.c.h.b16 %v3242
    %v3604 = vunpack.c.l.b16 %v3243
    %v3605 = vunpack.c.h.b16 %v3243
    %v3606 = vunpack.c.l.b16 %v3244
    %v3607 = vunpack.c.h.b16 %v3244
    %v3608 = vunpack.c.l.b16 %v3245
    %v3609 = vunpack.c.h.b16 %v3245
    %v3610 = vunpack.c.l.b16 %v3246
    %v3611 = vunpack.c.h.b16 %v3246
    %v3612 = vunpack.c.l.b16 %v3247
    %v3613 = vunpack.c.h.b16 %v3247
    %v3614 = vunpack.c.l.b16 %v3248
    %v3615 = vunpack.c.h.b16 %v3248
    %v3616 = vunpack.c.l.b16 %v3249
    %v3617 = vunpack.c.h.b16 %v3249
    %v3618 = vunpack.c.l.b16 %v3250
    %v3619 = vunpack.c.h.b16 %v3250
    %v3620 = vunpack.c.l.b16 %v3251
    %v3621 = vunpack.c.h.b16 %v3251
    %v3622 = vunpack.c.l.b16 %v3252
    %v3623 = vunpack.c.h.b16 %v3252
    %v3624 = vunpack.c.l.b16 %v3253
    %v3625 = vunpack.c.h.b16 %v3253
    %v3626 = vunpack.c.l.b16 %v3254
    %v3627 = vunpack.c.h.b16 %v3254
    %v3628 = vunpack.c.l.b16 %v3255
    %v3629 = vunpack.c.h.b16 %v3255
    %v3630 = vunpack.c.l.b16 %v3256
    %v3631 = vunpack.c.h.b16 %v3256
    %v3632 = vunpack.c.l.b16 %v3257
    %v3633 = vunpack.c.h.b16 %v3257
    %v3634 = vunpack.c.l.b16 %v3258
    %v3635 = vunpack.c.h.b16 %v3258
    %v3636 = vunpack.c.l.b16 %v3259
    %v3637 = vunpack.c.h.b16 %v3259
    %v3638 = vunpack.c.l.b16 %v3260
    %v3639 = vunpack.c.h.b16 %v3260
    %v3640 = vunpack.c.l.b16 %v3261
    %v3641 = vunpack.c.h.b16 %v3261
    %v3642 = vunpack.c.l.b16 %v3262
    %v3643 = vunpack.c.h.b16 %v3262
    %v3644 = vunpack.c.l.b16 %v3263
    %v3645 = vunpack.c.h.b16 %v3263
    %v3646 = vunpack.c.l.b16 %v3264
    %v3647 = vunpack.c.h.b16 %v3264
    %v3648 = vunpack.c.l.b16 %v3265
    %v3649 = vunpack.c.h.b16 %v3265
    %v3650 = vunpack.c.l.b16 %v3266
    %v3651 = vunpack.c.h.b16 %v3266
    %v3652 = vunpack.c.l.b16 %v3267
    %v3653 = vunpack.c.h.b16 %v3267
    %v3654 = vunpack.c.l.b16 %v3268
    %v3655 = vunpack.c.h.b16 %v3268
    %v3656 = vunpack.c.l.b16 %v3269
    %v3657 = vunpack.c.h.b16 %v3269
    %v3658 = vunpack.c.l.b16 %v3270
    %v3659 = vunpack.c.h.b16 %v3270
    %v3660 = vunpack.c.l.b16 %v3271
    %v3661 = vunpack.c.h.b16 %v3271
    %v3662 = vunpack.c.l.b16 %v3272
    %v3663 = vunpack.c.h.b16 %v3272
    %v3664 = vunpack.c.l.b16 %v3273
    %v3665 = vunpack.c.h.b16 %v3273
    %v3666 = vunpack.c.l.b16 %v3274
    %v3667 = vunpack.c.h.b16 %v3274
    %v3668 = vunpack.c.l.b16 %v3275
    %v3669 = vunpack.c.h.b16 %v3275
    %v3670 = vunpack.c.l.b16 %v3276
    %v3671 = vunpack.c.h.b16 %v3276
    %v3672 = vunpack.c.l.b16 %v3277
    %v3673 = vunpack.c.h.b16 %v3277
    %v3674 = vunpack.c.l.b16 %v3278
    %v3675 = vunpack.c.h.b16 %v3278
    %v3676 = vunpack.c.l.b16 %v3279
    %v3677 = vunpack.c.h.b16 %v3279
    %v3678 = vunpack.c.l.b16 %v3280
    %v3679 = vunpack.c.h.b16 %v3280
    %v3680 = vunpack.c.l.b16 %v3281
    %v3681 = vunpack.c.h.b16 %v3281
    %v3682 = vunpack.c.l.b16 %v3282
    %v3683 = vunpack.c.h.b16 %v3282
    %v3684 = vunpack.c.l.b16 %v3283
    %v3685 = vunpack.c.h.b16 %v3283
    %v3686 = vunpack.c.l.b16 %v3284
    %v3687 = vunpack.c.h.b16 %v3284
    %v3688 = vunpack.c.l.b16 %v3285
    %v3689 = vunpack.c.h.b16 %v3285
    %v3690 = vunpack.c.l.b16 %v3286
    %v3691 = vunpack.c.h.b16 %v3286
    %v3692 = vunpack.c.l.b16 %v3287
    %v3693 = vunpack.c.h.b16 %v3287
    %v3694 = vunpack.c.l.b16 %v3288
    %v3695 = vunpack.c.h.b16 %v3288
    %v3696 = vunpack.c.l.b16 %v3289
    %v3697 = vunpack.c.h.b16 %v3289
    %v3698 = vunpack.c.l.b16 %v3290
    %v3699 = vunpack.c.h.b16 %v3290
    %v3700 = vunpack.c.l.b16 %v3291
    %v3701 = vunpack.c.h.b16 %v3291
    %v3702 = vunpack.c.l.b16 %v3292
    %v3703 = vunpack.c.h.b16 %v3292
    %v3704 = vunpack.c.l.b16 %v3293
    %v3705 = vunpack.c.h.b16 %v3293
    %v3706 = vunpack.c.l.b16 %v3294
    %v3707 = vunpack.c.h.b16 %v3294
    %v3708 = vunpack.c.l.b16 %v3295
    %v3709 = vunpack.c.h.b16 %v3295
    %v3710 = vunpack.c.l.b16 %v3296
    %v3711 = vunpack.c.h.b16 %v3296
    %v3712 = vunpack.c.l.b16 %v3297
    %v3713 = vunpack.c.h.b16 %v3297
    %v3714 = vpack.c.b16 %v3466, %v3458
    %v3715 = vpack.c.b16 %v3467, %v3459
    %v3716 = vpack.c.b16 %v3468, %v3460
    %v3717 = vpack.c.b16 %v3469, %v3461
    %v3718 = vpack.c.b16 %v3470, %v3462
    %v3719 = vpack.c.b16 %v3471, %v3463
    %v3720 = vpack.c.b16 %v3472, %v3464
    %v3721 = vpack.c.b16 %v3473, %v3465
    %v3722 = vpack.c.b16 %v3482, %v3474
    %v3723 = vpack.c.b16 %v3483, %v3475
    %v3724 = vpack.c.b16 %v3484, %v3476
    %v3725 = vpack.c.b16 %v3485, %v3477
    %v3726 = vpack.c.b16 %v3486, %v3478
    %v3727 = vpack.c.b16 %v3487, %v3479
    %v3728 = vpack.c.b16 %v3488, %v3480
    %v3729 = vpack.c.b16 %v3489, %v3481
    %v3730 = vpack.c.b16 %v3498, %v3490
    %v3731 = vpack.c.b16 %v3499, %v3491
    %v3732 = vpack.c.b16 %v3500, %v3492
    %v3733 = vpack.c.b16 %v3501, %v3493
    %v3734 = vpack.c.b16 %v3502, %v3494
    %v3735 = vpack.c.b16 %v3503, %v3495
    %v3736 = vpack.c.b16 %v3504, %v3496
    %v3737 = vpack.c.b16 %v3505, %v3497
    %v3738 = vpack.c.b16 %v3514, %v3506
    %v3739 = vpack.c.b16 %v3515, %v3507
    %v3740 = vpack.c.b16 %v3516, %v3508
    %v3741 = vpack.c.b16 %v3517, %v3509
    %v3742 = vpack.c.b16 %v3518, %v3510
    %v3743 = vpack.c.b16 %v3519, %v3511
    %v3744 = vpack.c.b16 %v3520, %v3512
    %v3745 = vpack.c.b16 %v3521, %v3513
    %v3746 = vpack.c.b16 %v3530, %v3522
    %v3747 = vpack.c.b16 %v3531, %v3523
    %v3748 = vpack.c.b16 %v3532, %v3524
    %v3749 = vpack.c.b16 %v3533, %v3525
    %v3750 = vpack.c.b16 %v3534, %v3526
    %v3751 = vpack.c.b16 %v3535, %v3527
    %v3752 = vpack.c.b16 %v3536, %v3528
    %v3753 = vpack.c.b16 %v3537, %v3529
    %v3754 = vpack.c.b16 %v3546, %v3538
    %v3755 = vpack.c.b16 %v3547, %v3539
    %v3756 = vpack.c.b16 %v3548, %v3540
    %v3757 = vpack.c.b16 %v3549, %v3541
    %v3758 = vpack.c.b16 %v3550, %v3542
    %v3759 = vpack.c.b16 %v3551, %v3543
    %v3760 = vpack.c.b16 %v3552, %v3544
    %v3761 = vpack.c.b16 %v3553, %v3545
    %v3762 = vpack.c.b16 %v3562, %v3554
    %v3763 = vpack.c.b16 %v3563, %v3555
    %v3764 = vpack.c.b16 %v3564, %v3556
    %v3765 = vpack.c.b16 %v3565, %v3557
    %v3766 = vpack.c.b16 %v3566, %v3558
    %v3767 = vpack.c.b16 %v3567, %v3559
    %v3768 = vpack.c.b16 %v3568, %v3560
    %v3769 = vpack.c.b16 %v3569, %v3561
    %v3770 = vpack.c.b16 %v3578, %v3570
    %v3771 = vpack.c.b16 %v3579, %v3571
    %v3772 = vpack.c.b16 %v3580, %v3572
    %v3773 = vpack.c.b16 %v3581, %v3573
    %v3774 = vpack.c.b16 %v3582, %v3574
    %v3775 = vpack.c.b16 %v3583, %v3575
    %v3776 = vpack.c.b16 %v3584, %v3576
    %v3777 = vpack.c.b16 %v3585, %v3577
    %v3778 = vpack.c.b16 %v3594, %v3586
    %v3779 = vpack.c.b16 %v3595, %v3587
    %v3780 = vpack.c.b16 %v3596, %v3588
    %v3781 = vpack.c.b16 %v3597, %v3589
    %v3782 = vpack.c.b16 %v3598, %v3590
    %v3783 = vpack.c.b16 %v3599, %v3591
    %v3784 = vpack.c.b16 %v3600, %v3592
    %v3785 = vpack.c.b16 %v3601, %v3593
    %v3786 = vpack.c.b16 %v3610, %v3602
    %v3787 = vpack.c.b16 %v3611, %v3603
    %v3788 = vpack.c.b16 %v3612, %v3604
    %v3789 = vpack.c.b16 %v3613, %v3605
    %v3790 = vpack.c.b16 %v3614, %v3606
    %v3791 = vpack.c.b16 %v3615, %v3607
    %v3792 = vpack.c.b16 %v3616, %v3608
    %v3793 = vpack.c.b16 %v3617, %v3609
    %v3794 = vpack.c.b16 %v3626, %v3618
    %v3795 = vpack.c.b16 %v3627, %v3619
    %v3796 = vpack.c.b16 %v3628, %v3620
    %v3797 = vpack.c.b16 %v3629, %v3621
    %v3798 = vpack.c.b16 %v3630, %v3622
    %v3799 = vpack.c.b16 %v3631, %v3623
    %v3800 = vpack.c.b16 %v3632, %v3624
    %v3801 = vpack.c.b16 %v3633, %v3625
    %v3802 = vpack.c.b16 %v3642, %v3634
    %v3803 = vpack.c.b16 %v3643, %v3635
    %v3804 = vpack.c.b16 %v3644, %v3636
    %v3805 = vpack.c.b16 %v3645, %v3637
    %v3806 = vpack.c.b16 %v3646, %v3638
    %v3807 = vpack.c.b16 %v3647, %v3639
    %v3808 = vpack.c.b16 %v3648, %v3640
    %v3809 = vpack.c.b16 %v3649, %v3641
    %v3810 = vpack.c.b16 %v3658, %v3650
    %v3811 = vpack.c.b16 %v3659, %v3651
    %v3812 = vpack.c.b16 %v3660, %v3652
    %v3813 = vpack.c.b16 %v3661, %v3653
    %v3814 = vpack.c.b16 %v3662, %v3654
    %v3815 = vpack.c.b16 %v3663, %v3655
    %v3816 = vpack.c.b16 %v3664, %v3656
    %v3817 = vpack.c.b16 %v3665, %v3657
    %v3818 = vpack.c.b16 %v3674, %v3666
    %v3819 = vpack.c.b16 %v3675, %v3667
    %v3820 = vpack.c.b16 %v3676, %v3668
    %v3821 = vpack.c.b16 %v3677, %v3669
    %v3822 = vpack.c.b16 %v3678, %v3670
    %v3823 = vpack.c.b16 %v3679, %v3671
    %v3824 = vpack.c.b16 %v3680, %v3672
    %v3825 = vpack.c.b16 %v3681, %v3673
    %v3826 = vpack.c.b16 %v3690, %v3682
    %v3827 = vpack.c.b16 %v3691, %v3683
    %v3828 = vpack.c.b16 %v3692, %v3684
    %v3829 = vpack.c.b16 %v3693, %v3685
    %v3830 = vpack.c.b16 %v3694, %v3686
    %v3831 = vpack.c.b16 %v3695, %v3687
    %v3832 = vpack.c.b16 %v3696, %v3688
    %v3833 = vpack.c.b16 %v3697, %v3689
    %v3834 = vpack.c.b16 %v3706, %v3698
    %v3835 = vpack.c.b16 %v3707, %v3699
    %v3836 = vpack.c.b16 %v3708, %v3700
    %v3837 = vpack.c.b16 %v3709, %v3701
    %v3838 = vpack.c.b16 %v3710, %v3702
    %v3839 = vpack.c.b16 %v3711, %v3703
    %v3840 = vpack.c.b16 %v3712, %v3704
    %v3841 = vpack.c.b16 %v3713, %v3705
    %3970 = vmatprep.subr.bf16.mxu0 %v3715
    %3971 = vmatpush1.bf16.msra.mxu0 %v3714
    %3972 = vmatprep.subr.bf16.mxu0 %v3723
    %3973 = vmatpush1.bf16.msra.mxu0 %v3722
    %3974 = vmatprep.subr.bf16.mxu0 %v3731
    %3975 = vmatpush1.bf16.msra.mxu0 %v3730
    %3976 = vmatprep.subr.bf16.mxu0 %v3739
    %3977 = vmatpush1.bf16.msra.mxu0 %v3738
    %3978 = vmatprep.subr.bf16.mxu0 %v3747
    %3979 = vmatpush1.bf16.msra.mxu0 %v3746
    %3980 = vmatprep.subr.bf16.mxu0 %v3755
    %3981 = vmatpush1.bf16.msra.mxu0 %v3754
    %3982 = vmatprep.subr.bf16.mxu0 %v3763
    %3983 = vmatpush1.bf16.msra.mxu0 %v3762
    %3984 = vmatprep.subr.bf16.mxu0 %v3771
    %3985 = vmatpush1.bf16.msra.mxu0 %v3770
    %3986 = vmatprep.subr.bf16.mxu0 %v3779
    %3987 = vmatpush1.bf16.msra.mxu0 %v3778
    %3988 = vmatprep.subr.bf16.mxu0 %v3787
    %3989 = vmatpush1.bf16.msra.mxu0 %v3786
    %3990 = vmatprep.subr.bf16.mxu0 %v3795
    %3991 = vmatpush1.bf16.msra.mxu0 %v3794
    %3992 = vmatprep.subr.bf16.mxu0 %v3803
    %3993 = vmatpush1.bf16.msra.mxu0 %v3802
    %3994 = vmatprep.subr.bf16.mxu0 %v3811
    %3995 = vmatpush1.bf16.msra.mxu0 %v3810
    %3996 = vmatprep.subr.bf16.mxu0 %v3819
    %3997 = vmatpush1.bf16.msra.mxu0 %v3818
    %3998 = vmatprep.subr.bf16.mxu0 %v3827
    %3999 = vmatpush1.bf16.msra.mxu0 %v3826
    %4000 = vmatprep.subr.bf16.mxu0 %v3835
    %4001 = vmatpush1.bf16.msra.mxu0 %v3834
    %4002 = vmatprep.mubr.bf16.mxu0 %v3327
    %4003 = vmatmul.mubr.bf16.gmra.mrb[0].mxu0 %v3326
    %v4004 = vpop.f32.mrb[0].mxu0
    %v4005 = vadd.f32 0.0, %v4004
    %v4006 = vpop.f32.mrb[0].mxu0
    %v4007 = vadd.f32 0.0, %v4006
    %v4008 = vpop.f32.mrb[0].mxu0
    %v4009 = vpop.f32.mrb[0].mxu0
    %4010 = vdwg.mxu0
    %4011 = vmatprep.subr.bf16.mxu0 %v3717
    %4012 = vmatpush1.bf16.msra.mxu0 %v3716
    %4013 = vmatprep.subr.bf16.mxu0 %v3725
    %4014 = vmatpush1.bf16.msra.mxu0 %v3724
    %4015 = vmatprep.subr.bf16.mxu0 %v3733
    %4016 = vmatpush1.bf16.msra.mxu0 %v3732
    %4017 = vmatprep.subr.bf16.mxu0 %v3741
    %4018 = vmatpush1.bf16.msra.mxu0 %v3740
    %4019 = vmatprep.subr.bf16.mxu0 %v3749
    %4020 = vmatpush1.bf16.msra.mxu0 %v3748
    %4021 = vmatprep.subr.bf16.mxu0 %v3757
    %4022 = vmatpush1.bf16.msra.mxu0 %v3756
    %4023 = vmatprep.subr.bf16.mxu0 %v3765
    %4024 = vmatpush1.bf16.msra.mxu0 %v3764
    %4025 = vmatprep.subr.bf16.mxu0 %v3773
    %4026 = vmatpush1.bf16.msra.mxu0 %v3772
    %4027 = vmatprep.subr.bf16.mxu0 %v3781
    %4028 = vmatpush1.bf16.msra.mxu0 %v3780
    %4029 = vmatprep.subr.bf16.mxu0 %v3789
    %4030 = vmatpush1.bf16.msra.mxu0 %v3788
    %4031 = vmatprep.subr.bf16.mxu0 %v3797
    %4032 = vmatpush1.bf16.msra.mxu0 %v3796
    %4033 = vmatprep.subr.bf16.mxu0 %v3805
    %4034 = vmatpush1.bf16.msra.mxu0 %v3804
    %4035 = vmatprep.subr.bf16.mxu0 %v3813
    %4036 = vmatpush1.bf16.msra.mxu0 %v3812
    %4037 = vmatprep.subr.bf16.mxu0 %v3821
    %4038 = vmatpush1.bf16.msra.mxu0 %v3820
    %4039 = vmatprep.subr.bf16.mxu0 %v3829
    %4040 = vmatpush1.bf16.msra.mxu0 %v3828
    %4041 = vmatprep.subr.bf16.mxu0 %v3837
    %4042 = vmatpush1.bf16.msra.mxu0 %v3836
    %4043 = vmatprep.mubr.bf16.mxu0 %v3327
    %4044 = vmatmul.mubr.bf16.gmra.mrb[0].mxu0 %v3326
    %v4045 = vpop.f32.mrb[0].mxu0
    %v4046 = vadd.f32 0.0, %v4045
    %v4047 = vpop.f32.mrb[0].mxu0
    %v4048 = vadd.f32 0.0, %v4047
    %v4049 = vpop.f32.mrb[0].mxu0
    %v4050 = vpop.f32.mrb[0].mxu0
    %4051 = vdwg.mxu0
    %4052 = vmatprep.subr.bf16.mxu0 %v3719
    %4053 = vmatpush1.bf16.msra.mxu0 %v3718
    %4054 = vmatprep.subr.bf16.mxu0 %v3727
    %4055 = vmatpush1.bf16.msra.mxu0 %v3726
    %4056 = vmatprep.subr.bf16.mxu0 %v3735
    %4057 = vmatpush1.bf16.msra.mxu0 %v3734
    %4058 = vmatprep.subr.bf16.mxu0 %v3743
    %4059 = vmatpush1.bf16.msra.mxu0 %v3742
    %4060 = vmatprep.subr.bf16.mxu0 %v3751
    %4061 = vmatpush1.bf16.msra.mxu0 %v3750
    %4062 = vmatprep.subr.bf16.mxu0 %v3759
    %4063 = vmatpush1.bf16.msra.mxu0 %v3758
    %4064 = vmatprep.subr.bf16.mxu0 %v3767
    %4065 = vmatpush1.bf16.msra.mxu0 %v3766
    %4066 = vmatprep.subr.bf16.mxu0 %v3775
    %4067 = vmatpush1.bf16.msra.mxu0 %v3774
    %4068 = vmatprep.subr.bf16.mxu0 %v3783
    %4069 = vmatpush1.bf16.msra.mxu0 %v3782
    %4070 = vmatprep.subr.bf16.mxu0 %v3791
    %4071 = vmatpush1.bf16.msra.mxu0 %v3790
    %4072 = vmatprep.subr.bf16.mxu0 %v3799
    %4073 = vmatpush1.bf16.msra.mxu0 %v3798
    %4074 = vmatprep.subr.bf16.mxu0 %v3807
    %4075 = vmatpush1.bf16.msra.mxu0 %v3806
    %4076 = vmatprep.subr.bf16.mxu0 %v3815
    %4077 = vmatpush1.bf16.msra.mxu0 %v3814
    %4078 = vmatprep.subr.bf16.mxu0 %v3823
    %4079 = vmatpush1.bf16.msra.mxu0 %v3822
    %4080 = vmatprep.subr.bf16.mxu0 %v3831
    %4081 = vmatpush1.bf16.msra.mxu0 %v3830
    %4082 = vmatprep.subr.bf16.mxu0 %v3839
    %4083 = vmatpush1.bf16.msra.mxu0 %v3838
    %4084 = vmatprep.mubr.bf16.mxu0 %v3327
    %4085 = vmatmul.mubr.bf16.gmra.mrb[0].mxu0 %v3326
    %v4086 = vpop.f32.mrb[0].mxu0
    %v4087 = vadd.f32 0.0, %v4086
    %v4088 = vpop.f32.mrb[0].mxu0
    %v4089 = vadd.f32 0.0, %v4088
    %v4090 = vpop.f32.mrb[0].mxu0
    %v4091 = vpop.f32.mrb[0].mxu0
    %4092 = vdwg.mxu0
    %4093 = vmatprep.subr.bf16.mxu0 %v3721
    %4094 = vmatpush1.bf16.msra.mxu0 %v3720
    %4095 = vmatprep.subr.bf16.mxu0 %v3729
    %4096 = vmatpush1.bf16.msra.mxu0 %v3728
    %4097 = vmatprep.subr.bf16.mxu0 %v3737
    %4098 = vmatpush1.bf16.msra.mxu0 %v3736
    %4099 = vmatprep.subr.bf16.mxu0 %v3745
    %4100 = vmatpush1.bf16.msra.mxu0 %v3744
    %4101 = vmatprep.subr.bf16.mxu0 %v3753
    %4102 = vmatpush1.bf16.msra.mxu0 %v3752
    %4103 = vmatprep.subr.bf16.mxu0 %v3761
    %4104 = vmatpush1.bf16.msra.mxu0 %v3760
    %4105 = vmatprep.subr.bf16.mxu0 %v3769
    %4106 = vmatpush1.bf16.msra.mxu0 %v3768
    %4107 = vmatprep.subr.bf16.mxu0 %v3777
    %4108 = vmatpush1.bf16.msra.mxu0 %v3776
    %4109 = vmatprep.subr.bf16.mxu0 %v3785
    %4110 = vmatpush1.bf16.msra.mxu0 %v3784
    %4111 = vmatprep.subr.bf16.mxu0 %v3793
    %4112 = vmatpush1.bf16.msra.mxu0 %v3792
    %4113 = vmatprep.subr.bf16.mxu0 %v3801
    %4114 = vmatpush1.bf16.msra.mxu0 %v3800
    %4115 = vmatprep.subr.bf16.mxu0 %v3809
    %4116 = vmatpush1.bf16.msra.mxu0 %v3808
    %4117 = vmatprep.subr.bf16.mxu0 %v3817
    %4118 = vmatpush1.bf16.msra.mxu0 %v3816
    %4119 = vmatprep.subr.bf16.mxu0 %v3825
    %4120 = vmatpush1.bf16.msra.mxu0 %v3824
    %4121 = vmatprep.subr.bf16.mxu0 %v3833
    %4122 = vmatpush1.bf16.msra.mxu0 %v3832
    %4123 = vmatprep.subr.bf16.mxu0 %v3841
    %4124 = vmatpush1.bf16.msra.mxu0 %v3840
    %4125 = vmatprep.mubr.bf16.mxu0 %v3327
    %4126 = vmatmul.mubr.bf16.gmra.mrb[0].mxu0 %v3326
    %v4127 = vpop.f32.mrb[0].mxu0
    %v4128 = vadd.f32 0.0, %v4127
    %v4129 = vpop.f32.mrb[0].mxu0
    %v4130 = vadd.f32 0.0, %v4129
    %v4131 = vpop.f32.mrb[0].mxu0
    %v4132 = vpop.f32.mrb[0].mxu0
    %4133 = vdwg.mxu0
    %v4134 = vadd.f32 %v3101, %v4005
    %v4135 = vadd.f32 %v3102, %v4007
    %v4136 = vadd.f32 %v3103, %v4046
    %v4137 = vadd.f32 %v3104, %v4048
    %v4138 = vadd.f32 %v3105, %v4087
    %v4139 = vadd.f32 %v3106, %v4089
    %v4140 = vadd.f32 %v3107, %v4128
    %v4141 = vadd.f32 %v3108, %v4130
    %v4142 = vld [vmem:[%s2] sm:$0xff]
    %v4144 = vlaneseq
    %v4145 = vshrl.u32 %v4144, 7
    %v4146 = vsub.s32 0, %v4145
    %v4147 = vrot.slane %v4142, %v4146
    %v4148 = vlaneseq
    %v4149 = vshrl.u32 %v4148, 7
    %v4150 = vsub.s32 1, %v4149
    %v4151 = vrot.slane %v4142, %v4150
    %v4152 = vlaneseq
    %v4153 = vshrl.u32 %v4152, 7
    %v4154 = vsub.s32 2, %v4153
    %v4155 = vrot.slane %v4142, %v4154
    %v4156 = vlaneseq
    %v4157 = vshrl.u32 %v4156, 7
    %v4158 = vsub.s32 3, %v4157
    %v4159 = vrot.slane %v4142, %v4158
    %v4160 = vlaneseq
    %v4161 = vshrl.u32 %v4160, 7
    %v4162 = vsub.s32 4, %v4161
    %v4163 = vrot.slane %v4142, %v4162
    %v4164 = vlaneseq
    %v4165 = vshrl.u32 %v4164, 7
    %v4166 = vsub.s32 5, %v4165
    %v4167 = vrot.slane %v4142, %v4166
    %v4168 = vlaneseq
    %v4169 = vshrl.u32 %v4168, 7
    %v4170 = vsub.s32 6, %v4169
    %v4171 = vrot.slane %v4142, %v4170
    %v4172 = vlaneseq
    %v4173 = vshrl.u32 %v4172, 7
    %v4174 = vsub.s32 7, %v4173
    %v4175 = vrot.slane %v4142, %v4174
    %v4184 = vadd.f32 %v4134, %v4147
    %v4185 = vadd.f32 %v4135, %v4151
    %v4186 = vadd.f32 %v4136, %v4155
    %v4187 = vadd.f32 %v4137, %v4159
    %v4188 = vadd.f32 %v4138, %v4163
    %v4189 = vadd.f32 %v4139, %v4167
    %v4190 = vadd.f32 %v4140, %v4171
    %v4191 = vadd.f32 %v4141, %v4175
    %v4192 = vmax.f32 %v4184, 0.0
    %v4193 = vmax.f32 %v4185, 0.0
    %v4194 = vmax.f32 %v4186, 0.0
    %v4195 = vmax.f32 %v4187, 0.0
    %v4196 = vmax.f32 %v4188, 0.0
    %v4197 = vmax.f32 %v4189, 0.0
    %v4198 = vmax.f32 %v4190, 0.0
    %v4199 = vmax.f32 %v4191, 0.0
    %v4200 = vpack.c.bf16 %v4192, %v4192
    %v4201 = vpack.c.bf16 %v4193, %v4193
    %v4202 = vpack.c.bf16 %v4194, %v4194
    %v4203 = vpack.c.bf16 %v4195, %v4195
    %v4204 = vpack.c.bf16 %v4196, %v4196
    %v4205 = vpack.c.bf16 %v4197, %v4197
    %v4206 = vpack.c.bf16 %v4198, %v4198
    %v4207 = vpack.c.bf16 %v4199, %v4199
    %v4208 = vld [vmem:[%s3] sm:$0xf]
    %v4209 = vld [vmem:[%s3 + $0x4] sm:$0xf]
    %v4210 = vld [vmem:[%s3 + $0x8] sm:$0xf]
    %v4211 = vld [vmem:[%s3 + $0xc] sm:$0xf]
    %v4212 = vld [vmem:[%s3 + $0x10] sm:$0xf]
    %v4213 = vld [vmem:[%s3 + $0x14] sm:$0xf]
    %v4214 = vld [vmem:[%s3 + $0x18] sm:$0xf]
    %v4215 = vld [vmem:[%s3 + $0x1c] sm:$0xf]
    %v4216 = vld [vmem:[%s3 + $0x20] sm:$0xf]
    %v4217 = vld [vmem:[%s3 + $0x24] sm:$0xf]
    %v4218 = vld [vmem:[%s3 + $0x28] sm:$0xf]
    %v4219 = vld [vmem:[%s3 + $0x2c] sm:$0xf]
    %v4220 = vld [vmem:[%s3 + $0x30] sm:$0xf]
    %v4221 = vld [vmem:[%s3 + $0x34] sm:$0xf]
    %v4222 = vld [vmem:[%s3 + $0x38] sm:$0xf]
    %v4223 = vld [vmem:[%s3 + $0x3c] sm:$0xf]
    %v4224 = vld [vmem:[%s3 + $0x40] sm:$0xf]
    %v4225 = vld [vmem:[%s3 + $0x44] sm:$0xf]
    %v4226 = vld [vmem:[%s3 + $0x48] sm:$0xf]
    %v4227 = vld [vmem:[%s3 + $0x4c] sm:$0xf]
    %v4228 = vld [vmem:[%s3 + $0x50] sm:$0xf]
    %v4229 = vld [vmem:[%s3 + $0x54] sm:$0xf]
    %v4230 = vld [vmem:[%s3 + $0x58] sm:$0xf]
    %v4231 = vld [vmem:[%s3 + $0x5c] sm:$0xf]
    %v4232 = vld [vmem:[%s3 + $0x60] sm:$0xf]
    %v4233 = vld [vmem:[%s3 + $0x64] sm:$0xf]
    %v4234 = vld [vmem:[%s3 + $0x68] sm:$0xf]
    %v4235 = vld [vmem:[%s3 + $0x6c] sm:$0xf]
    %v4236 = vld [vmem:[%s3 + $0x70] sm:$0xf]
    %v4237 = vld [vmem:[%s3 + $0x74] sm:$0xf]
    %v4238 = vld [vmem:[%s3 + $0x78] sm:$0xf]
    %v4239 = vld [vmem:[%s3 + $0x7c] sm:$0xf]
    %v4240 = vld [vmem:[%s3 + $0x80] sm:$0xf]
    %v4241 = vld [vmem:[%s3 + $0x84] sm:$0xf]
    %v4242 = vld [vmem:[%s3 + $0x88] sm:$0xf]
    %v4243 = vld [vmem:[%s3 + $0x8c] sm:$0xf]
    %v4244 = vld [vmem:[%s3 + $0x90] sm:$0xf]
    %v4245 = vld [vmem:[%s3 + $0x94] sm:$0xf]
    %v4246 = vld [vmem:[%s3 + $0x98] sm:$0xf]
    %v4247 = vld [vmem:[%s3 + $0x9c] sm:$0xf]
    %v4248 = vld [vmem:[%s3 + $0xa0] sm:$0xf]
    %v4249 = vld [vmem:[%s3 + $0xa4] sm:$0xf]
    %v4250 = vld [vmem:[%s3 + $0xa8] sm:$0xf]
    %v4251 = vld [vmem:[%s3 + $0xac] sm:$0xf]
    %v4252 = vld [vmem:[%s3 + $0xb0] sm:$0xf]
    %v4253 = vld [vmem:[%s3 + $0xb4] sm:$0xf]
    %v4254 = vld [vmem:[%s3 + $0xb8] sm:$0xf]
    %v4255 = vld [vmem:[%s3 + $0xbc] sm:$0xf]
    %v4256 = vld [vmem:[%s3 + $0xc0] sm:$0xf]
    %v4257 = vld [vmem:[%s3 + $0xc4] sm:$0xf]
    %v4258 = vld [vmem:[%s3 + $0xc8] sm:$0xf]
    %v4259 = vld [vmem:[%s3 + $0xcc] sm:$0xf]
    %v4260 = vld [vmem:[%s3 + $0xd0] sm:$0xf]
    %v4261 = vld [vmem:[%s3 + $0xd4] sm:$0xf]
    %v4262 = vld [vmem:[%s3 + $0xd8] sm:$0xf]
    %v4263 = vld [vmem:[%s3 + $0xdc] sm:$0xf]
    %v4264 = vld [vmem:[%s3 + $0xe0] sm:$0xf]
    %v4265 = vld [vmem:[%s3 + $0xe4] sm:$0xf]
    %v4266 = vld [vmem:[%s3 + $0xe8] sm:$0xf]
    %v4267 = vld [vmem:[%s3 + $0xec] sm:$0xf]
    %v4268 = vld [vmem:[%s3 + $0xf0] sm:$0xf]
    %v4269 = vld [vmem:[%s3 + $0xf4] sm:$0xf]
    %v4270 = vld [vmem:[%s3 + $0xf8] sm:$0xf]
    %v4271 = vld [vmem:[%s3 + $0xfc] sm:$0xf]
    %v4272 = vld [vmem:[%s3 + $0x100] sm:$0xf]
    %v4273 = vld [vmem:[%s3 + $0x104] sm:$0xf]
    %v4274 = vld [vmem:[%s3 + $0x108] sm:$0xf]
    %v4275 = vld [vmem:[%s3 + $0x10c] sm:$0xf]
    %v4276 = vld [vmem:[%s3 + $0x110] sm:$0xf]
    %v4277 = vld [vmem:[%s3 + $0x114] sm:$0xf]
    %v4278 = vld [vmem:[%s3 + $0x118] sm:$0xf]
    %v4279 = vld [vmem:[%s3 + $0x11c] sm:$0xf]
    %v4280 = vld [vmem:[%s3 + $0x120] sm:$0xf]
    %v4281 = vld [vmem:[%s3 + $0x124] sm:$0xf]
    %v4282 = vld [vmem:[%s3 + $0x128] sm:$0xf]
    %v4283 = vld [vmem:[%s3 + $0x12c] sm:$0xf]
    %v4284 = vld [vmem:[%s3 + $0x130] sm:$0xf]
    %v4285 = vld [vmem:[%s3 + $0x134] sm:$0xf]
    %v4286 = vld [vmem:[%s3 + $0x138] sm:$0xf]
    %v4287 = vld [vmem:[%s3 + $0x13c] sm:$0xf]
    %v4288 = vld [vmem:[%s3 + $0x140] sm:$0xf]
    %v4289 = vld [vmem:[%s3 + $0x144] sm:$0xf]
    %v4290 = vld [vmem:[%s3 + $0x148] sm:$0xf]
    %v4291 = vld [vmem:[%s3 + $0x14c] sm:$0xf]
    %v4292 = vld [vmem:[%s3 + $0x150] sm:$0xf]
    %v4293 = vld [vmem:[%s3 + $0x154] sm:$0xf]
    %v4294 = vld [vmem:[%s3 + $0x158] sm:$0xf]
    %v4295 = vld [vmem:[%s3 + $0x15c] sm:$0xf]
    %v4296 = vld [vmem:[%s3 + $0x160] sm:$0xf]
    %v4297 = vld [vmem:[%s3 + $0x164] sm:$0xf]
    %v4298 = vld [vmem:[%s3 + $0x168] sm:$0xf]
    %v4299 = vld [vmem:[%s3 + $0x16c] sm:$0xf]
    %v4300 = vld [vmem:[%s3 + $0x170] sm:$0xf]
    %v4301 = vld [vmem:[%s3 + $0x174] sm:$0xf]
    %v4302 = vld [vmem:[%s3 + $0x178] sm:$0xf]
    %v4303 = vld [vmem:[%s3 + $0x17c] sm:$0xf]
    %v4304 = vld [vmem:[%s3 + $0x180] sm:$0xf]
    %v4305 = vld [vmem:[%s3 + $0x184] sm:$0xf]
    %v4306 = vld [vmem:[%s3 + $0x188] sm:$0xf]
    %v4307 = vld [vmem:[%s3 + $0x18c] sm:$0xf]
    %v4308 = vld [vmem:[%s3 + $0x190] sm:$0xf]
    %v4309 = vld [vmem:[%s3 + $0x194] sm:$0xf]
    %v4310 = vld [vmem:[%s3 + $0x198] sm:$0xf]
    %v4311 = vld [vmem:[%s3 + $0x19c] sm:$0xf]
    %v4312 = vld [vmem:[%s3 + $0x1a0] sm:$0xf]
    %v4313 = vld [vmem:[%s3 + $0x1a4] sm:$0xf]
    %v4314 = vld [vmem:[%s3 + $0x1a8] sm:$0xf]
    %v4315 = vld [vmem:[%s3 + $0x1ac] sm:$0xf]
    %v4316 = vld [vmem:[%s3 + $0x1b0] sm:$0xf]
    %v4317 = vld [vmem:[%s3 + $0x1b4] sm:$0xf]
    %v4318 = vld [vmem:[%s3 + $0x1b8] sm:$0xf]
    %v4319 = vld [vmem:[%s3 + $0x1bc] sm:$0xf]
    %v4320 = vld [vmem:[%s3 + $0x1c0] sm:$0xf]
    %v4321 = vld [vmem:[%s3 + $0x1c4] sm:$0xf]
    %v4322 = vld [vmem:[%s3 + $0x1c8] sm:$0xf]
    %v4323 = vld [vmem:[%s3 + $0x1cc] sm:$0xf]
    %v4324 = vld [vmem:[%s3 + $0x1d0] sm:$0xf]
    %v4325 = vld [vmem:[%s3 + $0x1d4] sm:$0xf]
    %v4326 = vld [vmem:[%s3 + $0x1d8] sm:$0xf]
    %v4327 = vld [vmem:[%s3 + $0x1dc] sm:$0xf]
    %v4328 = vld [vmem:[%s3 + $0x1e0] sm:$0xf]
    %v4329 = vld [vmem:[%s3 + $0x1e4] sm:$0xf]
    %v4330 = vld [vmem:[%s3 + $0x1e8] sm:$0xf]
    %v4331 = vld [vmem:[%s3 + $0x1ec] sm:$0xf]
    %v4332 = vld [vmem:[%s3 + $0x1f0] sm:$0xf]
    %v4333 = vld [vmem:[%s3 + $0x1f4] sm:$0xf]
    %v4334 = vld [vmem:[%s3 + $0x1f8] sm:$0xf]
    %v4335 = vld [vmem:[%s3 + $0x1fc] sm:$0xf]
    %v4336 = vld [vmem:[%s4] sm:$0x1]
    %v4338 = vlaneseq
    %v4339 = vshrl.u32 %v4338, 7
    %v4340 = vsub.s32 0, %v4339
    %v4341 = vrot.slane %v4336, %v4340
    %v4471 = vunpack.c.l.b16 %v4208
    %v4472 = vunpack.c.l.b16 %v4209
    %v4473 = vunpack.c.l.b16 %v4210
    %v4474 = vunpack.c.l.b16 %v4211
    %v4475 = vunpack.c.l.b16 %v4212
    %v4476 = vunpack.c.l.b16 %v4213
    %v4477 = vunpack.c.l.b16 %v4214
    %v4478 = vunpack.c.l.b16 %v4215
    %v4479 = vunpack.c.l.b16 %v4216
    %v4480 = vunpack.c.l.b16 %v4217
    %v4481 = vunpack.c.l.b16 %v4218
    %v4482 = vunpack.c.l.b16 %v4219
    %v4483 = vunpack.c.l.b16 %v4220
    %v4484 = vunpack.c.l.b16 %v4221
    %v4485 = vunpack.c.l.b16 %v4222
    %v4486 = vunpack.c.l.b16 %v4223
    %v4487 = vunpack.c.l.b16 %v4224
    %v4488 = vunpack.c.l.b16 %v4225
    %v4489 = vunpack.c.l.b16 %v4226
    %v4490 = vunpack.c.l.b16 %v4227
    %v4491 = vunpack.c.l.b16 %v4228
    %v4492 = vunpack.c.l.b16 %v4229
    %v4493 = vunpack.c.l.b16 %v4230
    %v4494 = vunpack.c.l.b16 %v4231
    %v4495 = vunpack.c.l.b16 %v4232
    %v4496 = vunpack.c.l.b16 %v4233
    %v4497 = vunpack.c.l.b16 %v4234
    %v4498 = vunpack.c.l.b16 %v4235
    %v4499 = vunpack.c.l.b16 %v4236
    %v4500 = vunpack.c.l.b16 %v4237
    %v4501 = vunpack.c.l.b16 %v4238
    %v4502 = vunpack.c.l.b16 %v4239
    %v4503 = vunpack.c.l.b16 %v4240
    %v4504 = vunpack.c.l.b16 %v4241
    %v4505 = vunpack.c.l.b16 %v4242
    %v4506 = vunpack.c.l.b16 %v4243
    %v4507 = vunpack.c.l.b16 %v4244
    %v4508 = vunpack.c.l.b16 %v4245
    %v4509 = vunpack.c.l.b16 %v4246
    %v4510 = vunpack.c.l.b16 %v4247
    %v4511 = vunpack.c.l.b16 %v4248
    %v4512 = vunpack.c.l.b16 %v4249
    %v4513 = vunpack.c.l.b16 %v4250
    %v4514 = vunpack.c.l.b16 %v4251
    %v4515 = vunpack.c.l.b16 %v4252
    %v4516 = vunpack.c.l.b16 %v4253
    %v4517 = vunpack.c.l.b16 %v4254
    %v4518 = vunpack.c.l.b16 %v4255
    %v4519 = vunpack.c.l.b16 %v4256
    %v4520 = vunpack.c.l.b16 %v4257
    %v4521 = vunpack.c.l.b16 %v4258
    %v4522 = vunpack.c.l.b16 %v4259
    %v4523 = vunpack.c.l.b16 %v4260
    %v4524 = vunpack.c.l.b16 %v4261
    %v4525 = vunpack.c.l.b16 %v4262
    %v4526 = vunpack.c.l.b16 %v4263
    %v4527 = vunpack.c.l.b16 %v4264
    %v4528 = vunpack.c.l.b16 %v4265
    %v4529 = vunpack.c.l.b16 %v4266
    %v4530 = vunpack.c.l.b16 %v4267
    %v4531 = vunpack.c.l.b16 %v4268
    %v4532 = vunpack.c.l.b16 %v4269
    %v4533 = vunpack.c.l.b16 %v4270
    %v4534 = vunpack.c.l.b16 %v4271
    %v4535 = vunpack.c.l.b16 %v4272
    %v4536 = vunpack.c.l.b16 %v4273
    %v4537 = vunpack.c.l.b16 %v4274
    %v4538 = vunpack.c.l.b16 %v4275
    %v4539 = vunpack.c.l.b16 %v4276
    %v4540 = vunpack.c.l.b16 %v4277
    %v4541 = vunpack.c.l.b16 %v4278
    %v4542 = vunpack.c.l.b16 %v4279
    %v4543 = vunpack.c.l.b16 %v4280
    %v4544 = vunpack.c.l.b16 %v4281
    %v4545 = vunpack.c.l.b16 %v4282
    %v4546 = vunpack.c.l.b16 %v4283
    %v4547 = vunpack.c.l.b16 %v4284
    %v4548 = vunpack.c.l.b16 %v4285
    %v4549 = vunpack.c.l.b16 %v4286
    %v4550 = vunpack.c.l.b16 %v4287
    %v4551 = vunpack.c.l.b16 %v4288
    %v4552 = vunpack.c.l.b16 %v4289
    %v4553 = vunpack.c.l.b16 %v4290
    %v4554 = vunpack.c.l.b16 %v4291
    %v4555 = vunpack.c.l.b16 %v4292
    %v4556 = vunpack.c.l.b16 %v4293
    %v4557 = vunpack.c.l.b16 %v4294
    %v4558 = vunpack.c.l.b16 %v4295
    %v4559 = vunpack.c.l.b16 %v4296
    %v4560 = vunpack.c.l.b16 %v4297
    %v4561 = vunpack.c.l.b16 %v4298
    %v4562 = vunpack.c.l.b16 %v4299
    %v4563 = vunpack.c.l.b16 %v4300
    %v4564 = vunpack.c.l.b16 %v4301
    %v4565 = vunpack.c.l.b16 %v4302
    %v4566 = vunpack.c.l.b16 %v4303
    %v4567 = vunpack.c.l.b16 %v4304
    %v4568 = vunpack.c.l.b16 %v4305
    %v4569 = vunpack.c.l.b16 %v4306
    %v4570 = vunpack.c.l.b16 %v4307
    %v4571 = vunpack.c.l.b16 %v4308
    %v4572 = vunpack.c.l.b16 %v4309
    %v4573 = vunpack.c.l.b16 %v4310
    %v4574 = vunpack.c.l.b16 %v4311
    %v4575 = vunpack.c.l.b16 %v4312
    %v4576 = vunpack.c.l.b16 %v4313
    %v4577 = vunpack.c.l.b16 %v4314
    %v4578 = vunpack.c.l.b16 %v4315
    %v4579 = vunpack.c.l.b16 %v4316
    %v4580 = vunpack.c.l.b16 %v4317
    %v4581 = vunpack.c.l.b16 %v4318
    %v4582 = vunpack.c.l.b16 %v4319
    %v4583 = vunpack.c.l.b16 %v4320
    %v4584 = vunpack.c.l.b16 %v4321
    %v4585 = vunpack.c.l.b16 %v4322
    %v4586 = vunpack.c.l.b16 %v4323
    %v4587 = vunpack.c.l.b16 %v4324
    %v4588 = vunpack.c.l.b16 %v4325
    %v4589 = vunpack.c.l.b16 %v4326
    %v4590 = vunpack.c.l.b16 %v4327
    %v4591 = vunpack.c.l.b16 %v4328
    %v4592 = vunpack.c.l.b16 %v4329
    %v4593 = vunpack.c.l.b16 %v4330
    %v4594 = vunpack.c.l.b16 %v4331
    %v4595 = vunpack.c.l.b16 %v4332
    %v4596 = vunpack.c.l.b16 %v4333
    %v4597 = vunpack.c.l.b16 %v4334
    %v4598 = vunpack.c.l.b16 %v4335
    %v4599 = vpack.c.b16 %v4472, %v4471
    %v4600 = vpack.c.b16 %v4474, %v4473
    %v4601 = vpack.c.b16 %v4476, %v4475
    %v4602 = vpack.c.b16 %v4478, %v4477
    %v4603 = vpack.c.b16 %v4480, %v4479
    %v4604 = vpack.c.b16 %v4482, %v4481
    %v4605 = vpack.c.b16 %v4484, %v4483
    %v4606 = vpack.c.b16 %v4486, %v4485
    %v4607 = vpack.c.b16 %v4488, %v4487
    %v4608 = vpack.c.b16 %v4490, %v4489
    %v4609 = vpack.c.b16 %v4492, %v4491
    %v4610 = vpack.c.b16 %v4494, %v4493
    %v4611 = vpack.c.b16 %v4496, %v4495
    %v4612 = vpack.c.b16 %v4498, %v4497
    %v4613 = vpack.c.b16 %v4500, %v4499
    %v4614 = vpack.c.b16 %v4502, %v4501
    %v4615 = vpack.c.b16 %v4504, %v4503
    %v4616 = vpack.c.b16 %v4506, %v4505
    %v4617 = vpack.c.b16 %v4508, %v4507
    %v4618 = vpack.c.b16 %v4510, %v4509
    %v4619 = vpack.c.b16 %v4512, %v4511
    %v4620 = vpack.c.b16 %v4514, %v4513
    %v4621 = vpack.c.b16 %v4516, %v4515
    %v4622 = vpack.c.b16 %v4518, %v4517
    %v4623 = vpack.c.b16 %v4520, %v4519
    %v4624 = vpack.c.b16 %v4522, %v4521
    %v4625 = vpack.c.b16 %v4524, %v4523
    %v4626 = vpack.c.b16 %v4526, %v4525
    %v4627 = vpack.c.b16 %v4528, %v4527
    %v4628 = vpack.c.b16 %v4530, %v4529
    %v4629 = vpack.c.b16 %v4532, %v4531
    %v4630 = vpack.c.b16 %v4534, %v4533
    %v4631 = vpack.c.b16 %v4536, %v4535
    %v4632 = vpack.c.b16 %v4538, %v4537
    %v4633 = vpack.c.b16 %v4540, %v4539
    %v4634 = vpack.c.b16 %v4542, %v4541
    %v4635 = vpack.c.b16 %v4544, %v4543
    %v4636 = vpack.c.b16 %v4546, %v4545
    %v4637 = vpack.c.b16 %v4548, %v4547
    %v4638 = vpack.c.b16 %v4550, %v4549
    %v4639 = vpack.c.b16 %v4552, %v4551
    %v4640 = vpack.c.b16 %v4554, %v4553
    %v4641 = vpack.c.b16 %v4556, %v4555
    %v4642 = vpack.c.b16 %v4558, %v4557
    %v4643 = vpack.c.b16 %v4560, %v4559
    %v4644 = vpack.c.b16 %v4562, %v4561
    %v4645 = vpack.c.b16 %v4564, %v4563
    %v4646 = vpack.c.b16 %v4566, %v4565
    %v4647 = vpack.c.b16 %v4568, %v4567
    %v4648 = vpack.c.b16 %v4570, %v4569
    %v4649 = vpack.c.b16 %v4572, %v4571
    %v4650 = vpack.c.b16 %v4574, %v4573
    %v4651 = vpack.c.b16 %v4576, %v4575
    %v4652 = vpack.c.b16 %v4578, %v4577
    %v4653 = vpack.c.b16 %v4580, %v4579
    %v4654 = vpack.c.b16 %v4582, %v4581
    %v4655 = vpack.c.b16 %v4584, %v4583
    %v4656 = vpack.c.b16 %v4586, %v4585
    %v4657 = vpack.c.b16 %v4588, %v4587
    %v4658 = vpack.c.b16 %v4590, %v4589
    %v4659 = vpack.c.b16 %v4592, %v4591
    %v4660 = vpack.c.b16 %v4594, %v4593
    %v4661 = vpack.c.b16 %v4596, %v4595
    %v4662 = vpack.c.b16 %v4598, %v4597
    %4727 = vmatprep.subr.bf16.mxu0 0
    %4728 = vmatpush1.bf16.msra.mxu0 %v4599
    %4729 = vmatprep.subr.bf16.mxu0 0
    %4730 = vmatpush1.bf16.msra.mxu0 %v4600
    %4731 = vmatprep.subr.bf16.mxu0 0
    %4732 = vmatpush1.bf16.msra.mxu0 %v4601
    %4733 = vmatprep.subr.bf16.mxu0 0
    %4734 = vmatpush1.bf16.msra.mxu0 %v4602
    %4735 = vmatprep.subr.bf16.mxu0 0
    %4736 = vmatpush1.bf16.msra.mxu0 %v4603
    %4737 = vmatprep.subr.bf16.mxu0 0
    %4738 = vmatpush1.bf16.msra.mxu0 %v4604
    %4739 = vmatprep.subr.bf16.mxu0 0
    %4740 = vmatpush1.bf16.msra.mxu0 %v4605
    %4741 = vmatprep.subr.bf16.mxu0 0
    %4742 = vmatpush1.bf16.msra.mxu0 %v4606
    %4743 = vmatprep.subr.bf16.mxu0 0
    %4744 = vmatpush1.bf16.msra.mxu0 %v4607
    %4745 = vmatprep.subr.bf16.mxu0 0
    %4746 = vmatpush1.bf16.msra.mxu0 %v4608
    %4747 = vmatprep.subr.bf16.mxu0 0
    %4748 = vmatpush1.bf16.msra.mxu0 %v4609
    %4749 = vmatprep.subr.bf16.mxu0 0
    %4750 = vmatpush1.bf16.msra.mxu0 %v4610
    %4751 = vmatprep.subr.bf16.mxu0 0
    %4752 = vmatpush1.bf16.msra.mxu0 %v4611
    %4753 = vmatprep.subr.bf16.mxu0 0
    %4754 = vmatpush1.bf16.msra.mxu0 %v4612
    %4755 = vmatprep.subr.bf16.mxu0 0
    %4756 = vmatpush1.bf16.msra.mxu0 %v4613
    %4757 = vmatprep.subr.bf16.mxu0 0
    %4758 = vmatpush1.bf16.msra.mxu0 %v4614
    %4759 = vmatprep.mubr.bf16.mxu0 %v4201
    %4760 = vmatmul.mubr.bf16.gmra.mrb[0].mxu0 %v4200
    %v4761 = vpop.f32.mrb[0].mxu0
    %v4762 = vadd.f32 %v4341, %v4761
    %v4763 = vpop.f32.mrb[0].mxu0
    %v4764 = vpop.f32.mrb[0].mxu0
    %v4765 = vpop.f32.mrb[0].mxu0
    %4766 = vdwg.mxu0
    %4767 = vmatprep.subr.bf16.mxu0 0
    %4768 = vmatpush1.bf16.msra.mxu0 %v4615
    %4769 = vmatprep.subr.bf16.mxu0 0
    %4770 = vmatpush1.bf16.msra.mxu0 %v4616
    %4771 = vmatprep.subr.bf16.mxu0 0
    %4772 = vmatpush1.bf16.msra.mxu0 %v4617
    %4773 = vmatprep.subr.bf16.mxu0 0
    %4774 = vmatpush1.bf16.msra.mxu0 %v4618
    %4775 = vmatprep.subr.bf16.mxu0 0
    %4776 = vmatpush1.bf16.msra.mxu0 %v4619
    %4777 = vmatprep.subr.bf16.mxu0 0
    %4778 = vmatpush1.bf16.msra.mxu0 %v4620
    %4779 = vmatprep.subr.bf16.mxu0 0
    %4780 = vmatpush1.bf16.msra.mxu0 %v4621
    %4781 = vmatprep.subr.bf16.mxu0 0
    %4782 = vmatpush1.bf16.msra.mxu0 %v4622
    %4783 = vmatprep.subr.bf16.mxu0 0
    %4784 = vmatpush1.bf16.msra.mxu0 %v4623
    %4785 = vmatprep.subr.bf16.mxu0 0
    %4786 = vmatpush1.bf16.msra.mxu0 %v4624
    %4787 = vmatprep.subr.bf16.mxu0 0
    %4788 = vmatpush1.bf16.msra.mxu0 %v4625
    %4789 = vmatprep.subr.bf16.mxu0 0
    %4790 = vmatpush1.bf16.msra.mxu0 %v4626
    %4791 = vmatprep.subr.bf16.mxu0 0
    %4792 = vmatpush1.bf16.msra.mxu0 %v4627
    %4793 = vmatprep.subr.bf16.mxu0 0
    %4794 = vmatpush1.bf16.msra.mxu0 %v4628
    %4795 = vmatprep.subr.bf16.mxu0 0
    %4796 = vmatpush1.bf16.msra.mxu0 %v4629
    %4797 = vmatprep.subr.bf16.mxu0 0
    %4798 = vmatpush1.bf16.msra.mxu0 %v4630
    %4799 = vmatprep.mubr.bf16.mxu0 %v4203
    %4800 = vmatmul.mubr.bf16.gmra.mrb[0].mxu0 %v4202
    %v4801 = vpop.f32.mrb[0].mxu0
    %v4802 = vadd.f32 %v4762, %v4801
    %v4803 = vpop.f32.mrb[0].mxu0
    %v4804 = vpop.f32.mrb[0].mxu0
    %v4805 = vpop.f32.mrb[0].mxu0
    %4806 = vdwg.mxu0
    %4807 = vmatprep.subr.bf16.mxu0 0
    %4808 = vmatpush1.bf16.msra.mxu0 %v4631
    %4809 = vmatprep.subr.bf16.mxu0 0
    %4810 = vmatpush1.bf16.msra.mxu0 %v4632
    %4811 = vmatprep.subr.bf16.mxu0 0
    %4812 = vmatpush1.bf16.msra.mxu0 %v4633
    %4813 = vmatprep.subr.bf16.mxu0 0
    %4814 = vmatpush1.bf16.msra.mxu0 %v4634
    %4815 = vmatprep.subr.bf16.mxu0 0
    %4816 = vmatpush1.bf16.msra.mxu0 %v4635
    %4817 = vmatprep.subr.bf16.mxu0 0
    %4818 = vmatpush1.bf16.msra.mxu0 %v4636
    %4819 = vmatprep.subr.bf16.mxu0 0
    %4820 = vmatpush1.bf16.msra.mxu0 %v4637
    %4821 = vmatprep.subr.bf16.mxu0 0
    %4822 = vmatpush1.bf16.msra.mxu0 %v4638
    %4823 = vmatprep.subr.bf16.mxu0 0
    %4824 = vmatpush1.bf16.msra.mxu0 %v4639
    %4825 = vmatprep.subr.bf16.mxu0 0
    %4826 = vmatpush1.bf16.msra.mxu0 %v4640
    %4827 = vmatprep.subr.bf16.mxu0 0
    %4828 = vmatpush1.bf16.msra.mxu0 %v4641
    %4829 = vmatprep.subr.bf16.mxu0 0
    %4830 = vmatpush1.bf16.msra.mxu0 %v4642
    %4831 = vmatprep.subr.bf16.mxu0 0
    %4832 = vmatpush1.bf16.msra.mxu0 %v4643
    %4833 = vmatprep.subr.bf16.mxu0 0
    %4834 = vmatpush1.bf16.msra.mxu0 %v4644
    %4835 = vmatprep.subr.bf16.mxu0 0
    %4836 = vmatpush1.bf16.msra.mxu0 %v4645
    %4837 = vmatprep.subr.bf16.mxu0 0
    %4838 = vmatpush1.bf16.msra.mxu0 %v4646
    %4839 = vmatprep.mubr.bf16.mxu0 %v4205
    %4840 = vmatmul.mubr.bf16.gmra.mrb[0].mxu0 %v4204
    %v4841 = vpop.f32.mrb[0].mxu0
    %v4842 = vadd.f32 %v4802, %v4841
    %v4843 = vpop.f32.mrb[0].mxu0
    %v4844 = vpop.f32.mrb[0].mxu0
    %v4845 = vpop.f32.mrb[0].mxu0
    %4846 = vdwg.mxu0
    %4847 = vmatprep.subr.bf16.mxu0 0
    %4848 = vmatpush1.bf16.msra.mxu0 %v4647
    %4849 = vmatprep.subr.bf16.mxu0 0
    %4850 = vmatpush1.bf16.msra.mxu0 %v4648
    %4851 = vmatprep.subr.bf16.mxu0 0
    %4852 = vmatpush1.bf16.msra.mxu0 %v4649
    %4853 = vmatprep.subr.bf16.mxu0 0
    %4854 = vmatpush1.bf16.msra.mxu0 %v4650
    %4855 = vmatprep.subr.bf16.mxu0 0
    %4856 = vmatpush1.bf16.msra.mxu0 %v4651
    %4857 = vmatprep.subr.bf16.mxu0 0
    %4858 = vmatpush1.bf16.msra.mxu0 %v4652
    %4859 = vmatprep.subr.bf16.mxu0 0
    %4860 = vmatpush1.bf16.msra.mxu0 %v4653
    %4861 = vmatprep.subr.bf16.mxu0 0
    %4862 = vmatpush1.bf16.msra.mxu0 %v4654
    %4863 = vmatprep.subr.bf16.mxu0 0
    %4864 = vmatpush1.bf16.msra.mxu0 %v4655
    %4865 = vmatprep.subr.bf16.mxu0 0
    %4866 = vmatpush1.bf16.msra.mxu0 %v4656
    %4867 = vmatprep.subr.bf16.mxu0 0
    %4868 = vmatpush1.bf16.msra.mxu0 %v4657
    %4869 = vmatprep.subr.bf16.mxu0 0
    %4870 = vmatpush1.bf16.msra.mxu0 %v4658
    %4871 = vmatprep.subr.bf16.mxu0 0
    %4872 = vmatpush1.bf16.msra.mxu0 %v4659
    %4873 = vmatprep.subr.bf16.mxu0 0
    %4874 = vmatpush1.bf16.msra.mxu0 %v4660
    %4875 = vmatprep.subr.bf16.mxu0 0
    %4876 = vmatpush1.bf16.msra.mxu0 %v4661
    %4877 = vmatprep.subr.bf16.mxu0 0
    %4878 = vmatpush1.bf16.msra.mxu0 %v4662
    %4879 = vmatprep.mubr.bf16.mxu0 %v4207
    %4880 = vmatmul.mubr.bf16.gmra.mrb[0].mxu0 %v4206
    %v4881 = vpop.f32.mrb[0].mxu0
    %v4882 = vadd.f32 %v4842, %v4881
    %v4883 = vpop.f32.mrb[0].mxu0
    %v4884 = vpop.f32.mrb[0].mxu0
    %v4885 = vpop.f32.mrb[0].mxu0
    %4886 = vdwg.mxu0
    %vm4887 = vcmask 76800
    %v4888 = vsel %vm4887, %v4882, -inf
    %4889 = vmax.xlane.f32.xlu0 %v4888
    %v4890 = vpop.xlane.xlu0 %4889
    %v4891 = vsub.f32 %v4882, %v4890
    %v4892 = vmul.f32 %v4891, 1.442695
    %v4893 = vpow.pop %v4892
    %v4894 = vsel %vm4887, %v4893, 0.0
    %4895 = vadd.xlane.f32.xlu0 %v4894
    %v4896 = vpop.xlane.xlu0 %4895
    %v4897 = vrcp.pop %v4896
    %v4898 = vmul.f32 %v4893, %v4897
    %v4899 = vld [vmem:[%s5] sm:$0xff]
    %v4900 = vld [vmem:[%s5 + $0x8] sm:$0x3]
    %v4902 = vrot.slane %v4898, 2
    %vm4903 = vcmask 80896
    %v4904 = vsel %vm4903, %v4902, 0
    %vm4906 = vcmask 1041408
    %v4908 = vsel %vm4906, %v4900, 0
    %4910 = vmatprep.subr.mxu0 0.0
    %4911 = vmatpush1.msra.mxu0 %v4899
    %4912 = vmatprep.subr.mxu0 0.0
    %4913 = vmatpush1.msra.mxu0 %v4908
    %4914 = vmatprep.subr.mxu0 0.0
    %4915 = vmatpush1.msra.mxu0 0.0
    %4916 = vmatprep.subr.mxu0 0.0
    %4917 = vmatpush1.msra.mxu0 0.0
    %4918 = vmatprep.subr.mxu0 0.0
    %4919 = vmatpush1.msra.mxu0 0.0
    %4920 = vmatprep.subr.mxu0 0.0
    %4921 = vmatpush1.msra.mxu0 0.0
    %4922 = vmatprep.subr.mxu0 0.0
    %4923 = vmatpush1.msra.mxu0 0.0
    %4924 = vmatprep.subr.mxu0 0.0
    %4925 = vmatpush1.msra.mxu0 0.0
    %4926 = vmatprep.subr.mxu0 0.0
    %4927 = vmatpush1.msra.mxu0 0.0
    %4928 = vmatprep.subr.mxu0 0.0
    %4929 = vmatpush1.msra.mxu0 0.0
    %4930 = vmatprep.subr.mxu0 0.0
    %4931 = vmatpush1.msra.mxu0 0.0
    %4932 = vmatprep.subr.mxu0 0.0
    %4933 = vmatpush1.msra.mxu0 0.0
    %4934 = vmatprep.subr.mxu0 0.0
    %4935 = vmatpush1.msra.mxu0 0.0
    %4936 = vmatprep.subr.mxu0 0.0
    %4937 = vmatpush1.msra.mxu0 0.0
    %4938 = vmatprep.subr.mxu0 0.0
    %4939 = vmatpush1.msra.mxu0 0.0
    %4940 = vmatprep.subr.mxu0 0.0
    %4941 = vmatpush1.msra.mxu0 0.0
    %4942 = vmatprep.subr.mxu0 0.0
    %4943 = vmatpush1.msra.mxu0 0.0
    %4944 = vmatprep.subr.mxu0 0.0
    %4945 = vmatpush1.msra.mxu0 0.0
    %4946 = vmatprep.subr.mxu0 0.0
    %4947 = vmatpush1.msra.mxu0 0.0
    %4948 = vmatprep.subr.mxu0 0.0
    %4949 = vmatpush1.msra.mxu0 0.0
    %4950 = vmatprep.subr.mxu0 0.0
    %4951 = vmatpush1.msra.mxu0 0.0
    %4952 = vmatprep.subr.mxu0 0.0
    %4953 = vmatpush1.msra.mxu0 0.0
    %4954 = vmatprep.subr.mxu0 0.0
    %4955 = vmatpush1.msra.mxu0 0.0
    %4956 = vmatprep.subr.mxu0 0.0
    %4957 = vmatpush1.msra.mxu0 0.0
    %4958 = vmatprep.subr.mxu0 0.0
    %4959 = vmatpush1.msra.mxu0 0.0
    %4960 = vmatprep.subr.mxu0 0.0
    %4961 = vmatpush1.msra.mxu0 0.0
    %4962 = vmatprep.subr.mxu0 0.0
    %4963 = vmatpush1.msra.mxu0 0.0
    %4964 = vmatprep.subr.mxu0 0.0
    %4965 = vmatpush1.msra.mxu0 0.0
    %4966 = vmatprep.subr.mxu0 0.0
    %4967 = vmatpush1.msra.mxu0 0.0
    %4968 = vmatprep.subr.mxu0 0.0
    %4969 = vmatpush1.msra.mxu0 0.0
    %4970 = vmatprep.subr.mxu0 0.0
    %4971 = vmatpush1.msra.mxu0 0.0
    %4972 = vmatprep.subr.mxu0 0.0
    %4973 = vmatpush1.msra.mxu0 0.0
    %4974 = vmatprep.mubr.f32.mxu0 0.0
    %4975 = vmatmul.mubr.f32.gmra.mrb[0].mxu0 %v4904
    %v4976 = vpop.f32.mrb[0].mxu0
    %v4977 = vadd.f32 0.0, %v4976
    %v4978 = vpop.f32.mrb[0].mxu0
    %4979 = vdwg.mxu0
    %4980 = vset.pattern.permute.xlu0 0
    %4981 = vperm.xlu0 %4980, %v4898
    %v4982 = vpop.permute.xlu0 %4981
    %v4984 = vmul.f32 %v4982, %v4977
    %v4985 = vadd.f32 %v4984, 0.0
    %s4986 = scalar_lea.vmem %s5, 16
    %v4987 = vld [vmem:[%s4986] sm:$0xff]
    %v4988 = vld [vmem:[%s4986 + $0x8] sm:$0x3]
    %v4990 = vsel %vm4906, %v4988, 0
    %4992 = vmatprep.subr.mxu0 0.0
    %4993 = vmatpush1.msra.mxu0 %v4987
    %4994 = vmatprep.subr.mxu0 0.0
    %4995 = vmatpush1.msra.mxu0 %v4990
    %4996 = vmatprep.subr.mxu0 0.0
    %4997 = vmatpush1.msra.mxu0 0.0
    %4998 = vmatprep.subr.mxu0 0.0
    %4999 = vmatpush1.msra.mxu0 0.0
    %5000 = vmatprep.subr.mxu0 0.0
    %5001 = vmatpush1.msra.mxu0 0.0
    %5002 = vmatprep.subr.mxu0 0.0
    %5003 = vmatpush1.msra.mxu0 0.0
    %5004 = vmatprep.subr.mxu0 0.0
    %5005 = vmatpush1.msra.mxu0 0.0
    %5006 = vmatprep.subr.mxu0 0.0
    %5007 = vmatpush1.msra.mxu0 0.0
    %5008 = vmatprep.subr.mxu0 0.0
    %5009 = vmatpush1.msra.mxu0 0.0
    %5010 = vmatprep.subr.mxu0 0.0
    %5011 = vmatpush1.msra.mxu0 0.0
    %5012 = vmatprep.subr.mxu0 0.0
    %5013 = vmatpush1.msra.mxu0 0.0
    %5014 = vmatprep.subr.mxu0 0.0
    %5015 = vmatpush1.msra.mxu0 0.0
    %5016 = vmatprep.subr.mxu0 0.0
    %5017 = vmatpush1.msra.mxu0 0.0
    %5018 = vmatprep.subr.mxu0 0.0
    %5019 = vmatpush1.msra.mxu0 0.0
    %5020 = vmatprep.subr.mxu0 0.0
    %5021 = vmatpush1.msra.mxu0 0.0
    %5022 = vmatprep.subr.mxu0 0.0
    %5023 = vmatpush1.msra.mxu0 0.0
    %5024 = vmatprep.subr.mxu0 0.0
    %5025 = vmatpush1.msra.mxu0 0.0
    %5026 = vmatprep.subr.mxu0 0.0
    %5027 = vmatpush1.msra.mxu0 0.0
    %5028 = vmatprep.subr.mxu0 0.0
    %5029 = vmatpush1.msra.mxu0 0.0
    %5030 = vmatprep.subr.mxu0 0.0
    %5031 = vmatpush1.msra.mxu0 0.0
    %5032 = vmatprep.subr.mxu0 0.0
    %5033 = vmatpush1.msra.mxu0 0.0
    %5034 = vmatprep.subr.mxu0 0.0
    %5035 = vmatpush1.msra.mxu0 0.0
    %5036 = vmatprep.subr.mxu0 0.0
    %5037 = vmatpush1.msra.mxu0 0.0
    %5038 = vmatprep.subr.mxu0 0.0
    %5039 = vmatpush1.msra.mxu0 0.0
    %5040 = vmatprep.subr.mxu0 0.0
    %5041 = vmatpush1.msra.mxu0 0.0
    %5042 = vmatprep.subr.mxu0 0.0
    %5043 = vmatpush1.msra.mxu0 0.0
    %5044 = vmatprep.subr.mxu0 0.0
    %5045 = vmatpush1.msra.mxu0 0.0
    %5046 = vmatprep.subr.mxu0 0.0
    %5047 = vmatpush1.msra.mxu0 0.0
    %5048 = vmatprep.subr.mxu0 0.0
    %5049 = vmatpush1.msra.mxu0 0.0
    %5050 = vmatprep.subr.mxu0 0.0
    %5051 = vmatpush1.msra.mxu0 0.0
    %5052 = vmatprep.subr.mxu0 0.0
    %5053 = vmatpush1.msra.mxu0 0.0
    %5054 = vmatprep.subr.mxu0 0.0
    %5055 = vmatpush1.msra.mxu0 0.0
    %5056 = vmatprep.mubr.f32.mxu0 0.0
    %5057 = vmatmul.mubr.f32.gmra.mrb[0].mxu0 %v4904
    %v5058 = vpop.f32.mrb[0].mxu0
    %v5059 = vadd.f32 0.0, %v5058
    %v5060 = vpop.f32.mrb[0].mxu0
    %5061 = vdwg.mxu0
    %5062 = vset.pattern.permute.xlu0 1
    %5063 = vperm.xlu0 %5062, %v4898
    %v5064 = vpop.permute.xlu0 %5063
    %v5066 = vmul.f32 %v5064, %v5059
    %v5067 = vadd.f32 %v4985, %v5066
    %s5068 = scalar_lea.vmem %s5, 32
    %v5069 = vld [vmem:[%s5068] sm:$0xff]
    %v5070 = vld [vmem:[%s5068 + $0x8] sm:$0x3]
    %v5072 = vsel %vm4906, %v5070, 0
    %5074 = vmatprep.subr.mxu0 0.0
    %5075 = vmatpush1.msra.mxu0 %v5069
    %5076 = vmatprep.subr.mxu0 0.0
    %5077 = vmatpush1.msra.mxu0 %v5072
    %5078 = vmatprep.subr.mxu0 0.0
    %5079 = vmatpush1.msra.mxu0 0.0
    %5080 = vmatprep.subr.mxu0 0.0
    %5081 = vmatpush1.msra.mxu0 0.0
    %5082 = vmatprep.subr.mxu0 0.0
    %5083 = vmatpush1.msra.mxu0 0.0
    %5084 = vmatprep.subr.mxu0 0.0
    %5085 = vmatpush1.msra.mxu0 0.0
    %5086 = vmatprep.subr.mxu0 0.0
    %5087 = vmatpush1.msra.mxu0 0.0
    %5088 = vmatprep.subr.mxu0 0.0
    %5089 = vmatpush1.msra.mxu0 0.0
    %5090 = vmatprep.subr.mxu0 0.0
    %5091 = vmatpush1.msra.mxu0 0.0
    %5092 = vmatprep.subr.mxu0 0.0
    %5093 = vmatpush1.msra.mxu0 0.0
    %5094 = vmatprep.subr.mxu0 0.0
    %5095 = vmatpush1.msra.mxu0 0.0
    %5096 = vmatprep.subr.mxu0 0.0
    %5097 = vmatpush1.msra.mxu0 0.0
    %5098 = vmatprep.subr.mxu0 0.0
    %5099 = vmatpush1.msra.mxu0 0.0
    %5100 = vmatprep.subr.mxu0 0.0
    %5101 = vmatpush1.msra.mxu0 0.0
    %5102 = vmatprep.subr.mxu0 0.0
    %5103 = vmatpush1.msra.mxu0 0.0
    %5104 = vmatprep.subr.mxu0 0.0
    %5105 = vmatpush1.msra.mxu0 0.0
    %5106 = vmatprep.subr.mxu0 0.0
    %5107 = vmatpush1.msra.mxu0 0.0
    %5108 = vmatprep.subr.mxu0 0.0
    %5109 = vmatpush1.msra.mxu0 0.0
    %5110 = vmatprep.subr.mxu0 0.0
    %5111 = vmatpush1.msra.mxu0 0.0
    %5112 = vmatprep.subr.mxu0 0.0
    %5113 = vmatpush1.msra.mxu0 0.0
    %5114 = vmatprep.subr.mxu0 0.0
    %5115 = vmatpush1.msra.mxu0 0.0
    %5116 = vmatprep.subr.mxu0 0.0
    %5117 = vmatpush1.msra.mxu0 0.0
    %5118 = vmatprep.subr.mxu0 0.0
    %5119 = vmatpush1.msra.mxu0 0.0
    %5120 = vmatprep.subr.mxu0 0.0
    %5121 = vmatpush1.msra.mxu0 0.0
    %5122 = vmatprep.subr.mxu0 0.0
    %5123 = vmatpush1.msra.mxu0 0.0
    %5124 = vmatprep.subr.mxu0 0.0
    %5125 = vmatpush1.msra.mxu0 0.0
    %5126 = vmatprep.subr.mxu0 0.0
    %5127 = vmatpush1.msra.mxu0 0.0
    %5128 = vmatprep.subr.mxu0 0.0
    %5129 = vmatpush1.msra.mxu0 0.0
    %5130 = vmatprep.subr.mxu0 0.0
    %5131 = vmatpush1.msra.mxu0 0.0
    %5132 = vmatprep.subr.mxu0 0.0
    %5133 = vmatpush1.msra.mxu0 0.0
    %5134 = vmatprep.subr.mxu0 0.0
    %5135 = vmatpush1.msra.mxu0 0.0
    %5136 = vmatprep.subr.mxu0 0.0
    %5137 = vmatpush1.msra.mxu0 0.0
    %5138 = vmatprep.mubr.f32.mxu0 0.0
    %5139 = vmatmul.mubr.f32.gmra.mrb[0].mxu0 %v4904
    %v5140 = vpop.f32.mrb[0].mxu0
    %v5141 = vadd.f32 0.0, %v5140
    %v5142 = vpop.f32.mrb[0].mxu0
    %5143 = vdwg.mxu0
    %5144 = vset.pattern.permute.xlu0 2
    %5145 = vperm.xlu0 %5144, %v4898
    %v5146 = vpop.permute.xlu0 %5145
    %v5148 = vmul.f32 %v5146, %v5141
    %v5149 = vadd.f32 %v5067, %v5148
    %s5150 = scalar_lea.vmem %s5, 48
    %v5151 = vld [vmem:[%s5150] sm:$0xff]
    %v5152 = vld [vmem:[%s5150 + $0x8] sm:$0x3]
    %v5154 = vsel %vm4906, %v5152, 0
    %5156 = vmatprep.subr.mxu0 0.0
    %5157 = vmatpush1.msra.mxu0 %v5151
    %5158 = vmatprep.subr.mxu0 0.0
    %5159 = vmatpush1.msra.mxu0 %v5154
    %5160 = vmatprep.subr.mxu0 0.0
    %5161 = vmatpush1.msra.mxu0 0.0
    %5162 = vmatprep.subr.mxu0 0.0
    %5163 = vmatpush1.msra.mxu0 0.0
    %5164 = vmatprep.subr.mxu0 0.0
    %5165 = vmatpush1.msra.mxu0 0.0
    %5166 = vmatprep.subr.mxu0 0.0
    %5167 = vmatpush1.msra.mxu0 0.0
    %5168 = vmatprep.subr.mxu0 0.0
    %5169 = vmatpush1.msra.mxu0 0.0
    %5170 = vmatprep.subr.mxu0 0.0
    %5171 = vmatpush1.msra.mxu0 0.0
    %5172 = vmatprep.subr.mxu0 0.0
    %5173 = vmatpush1.msra.mxu0 0.0
    %5174 = vmatprep.subr.mxu0 0.0
    %5175 = vmatpush1.msra.mxu0 0.0
    %5176 = vmatprep.subr.mxu0 0.0
    %5177 = vmatpush1.msra.mxu0 0.0
    %5178 = vmatprep.subr.mxu0 0.0
    %5179 = vmatpush1.msra.mxu0 0.0
    %5180 = vmatprep.subr.mxu0 0.0
    %5181 = vmatpush1.msra.mxu0 0.0
    %5182 = vmatprep.subr.mxu0 0.0
    %5183 = vmatpush1.msra.mxu0 0.0
    %5184 = vmatprep.subr.mxu0 0.0
    %5185 = vmatpush1.msra.mxu0 0.0
    %5186 = vmatprep.subr.mxu0 0.0
    %5187 = vmatpush1.msra.mxu0 0.0
    %5188 = vmatprep.subr.mxu0 0.0
    %5189 = vmatpush1.msra.mxu0 0.0
    %5190 = vmatprep.subr.mxu0 0.0
    %5191 = vmatpush1.msra.mxu0 0.0
    %5192 = vmatprep.subr.mxu0 0.0
    %5193 = vmatpush1.msra.mxu0 0.0
    %5194 = vmatprep.subr.mxu0 0.0
    %5195 = vmatpush1.msra.mxu0 0.0
    %5196 = vmatprep.subr.mxu0 0.0
    %5197 = vmatpush1.msra.mxu0 0.0
    %5198 = vmatprep.subr.mxu0 0.0
    %5199 = vmatpush1.msra.mxu0 0.0
    %5200 = vmatprep.subr.mxu0 0.0
    %5201 = vmatpush1.msra.mxu0 0.0
    %5202 = vmatprep.subr.mxu0 0.0
    %5203 = vmatpush1.msra.mxu0 0.0
    %5204 = vmatprep.subr.mxu0 0.0
    %5205 = vmatpush1.msra.mxu0 0.0
    %5206 = vmatprep.subr.mxu0 0.0
    %5207 = vmatpush1.msra.mxu0 0.0
    %5208 = vmatprep.subr.mxu0 0.0
    %5209 = vmatpush1.msra.mxu0 0.0
    %5210 = vmatprep.subr.mxu0 0.0
    %5211 = vmatpush1.msra.mxu0 0.0
    %5212 = vmatprep.subr.mxu0 0.0
    %5213 = vmatpush1.msra.mxu0 0.0
    %5214 = vmatprep.subr.mxu0 0.0
    %5215 = vmatpush1.msra.mxu0 0.0
    %5216 = vmatprep.subr.mxu0 0.0
    %5217 = vmatpush1.msra.mxu0 0.0
    %5218 = vmatprep.subr.mxu0 0.0
    %5219 = vmatpush1.msra.mxu0 0.0
    %5220 = vmatprep.mubr.f32.mxu0 0.0
    %5221 = vmatmul.mubr.f32.gmra.mrb[0].mxu0 %v4904
    %v5222 = vpop.f32.mrb[0].mxu0
    %v5223 = vadd.f32 0.0, %v5222
    %v5224 = vpop.f32.mrb[0].mxu0
    %5225 = vdwg.mxu0
    %5226 = vset.pattern.permute.xlu0 3
    %5227 = vperm.xlu0 %5226, %v4898
    %v5228 = vpop.permute.xlu0 %5227
    %v5230 = vmul.f32 %v5228, %v5223
    %v5231 = vadd.f32 %v5149, %v5230
    %s5232 = scalar_lea.vmem %s5, 64
    %v5233 = vld [vmem:[%s5232] sm:$0xff]
    %v5234 = vld [vmem:[%s5232 + $0x8] sm:$0x3]
    %v5236 = vsel %vm4906, %v5234, 0
    %5238 = vmatprep.subr.mxu0 0.0
    %5239 = vmatpush1.msra.mxu0 %v5233
    %5240 = vmatprep.subr.mxu0 0.0
    %5241 = vmatpush1.msra.mxu0 %v5236
    %5242 = vmatprep.subr.mxu0 0.0
    %5243 = vmatpush1.msra.mxu0 0.0
    %5244 = vmatprep.subr.mxu0 0.0
    %5245 = vmatpush1.msra.mxu0 0.0
    %5246 = vmatprep.subr.mxu0 0.0
    %5247 = vmatpush1.msra.mxu0 0.0
    %5248 = vmatprep.subr.mxu0 0.0
    %5249 = vmatpush1.msra.mxu0 0.0
    %5250 = vmatprep.subr.mxu0 0.0
    %5251 = vmatpush1.msra.mxu0 0.0
    %5252 = vmatprep.subr.mxu0 0.0
    %5253 = vmatpush1.msra.mxu0 0.0
    %5254 = vmatprep.subr.mxu0 0.0
    %5255 = vmatpush1.msra.mxu0 0.0
    %5256 = vmatprep.subr.mxu0 0.0
    %5257 = vmatpush1.msra.mxu0 0.0
    %5258 = vmatprep.subr.mxu0 0.0
    %5259 = vmatpush1.msra.mxu0 0.0
    %5260 = vmatprep.subr.mxu0 0.0
    %5261 = vmatpush1.msra.mxu0 0.0
    %5262 = vmatprep.subr.mxu0 0.0
    %5263 = vmatpush1.msra.mxu0 0.0
    %5264 = vmatprep.subr.mxu0 0.0
    %5265 = vmatpush1.msra.mxu0 0.0
    %5266 = vmatprep.subr.mxu0 0.0
    %5267 = vmatpush1.msra.mxu0 0.0
    %5268 = vmatprep.subr.mxu0 0.0
    %5269 = vmatpush1.msra.mxu0 0.0
    %5270 = vmatprep.subr.mxu0 0.0
    %5271 = vmatpush1.msra.mxu0 0.0
    %5272 = vmatprep.subr.mxu0 0.0
    %5273 = vmatpush1.msra.mxu0 0.0
    %5274 = vmatprep.subr.mxu0 0.0
    %5275 = vmatpush1.msra.mxu0 0.0
    %5276 = vmatprep.subr.mxu0 0.0
    %5277 = vmatpush1.msra.mxu0 0.0
    %5278 = vmatprep.subr.mxu0 0.0
    %5279 = vmatpush1.msra.mxu0 0.0
    %5280 = vmatprep.subr.mxu0 0.0
    %5281 = vmatpush1.msra.mxu0 0.0
    %5282 = vmatprep.subr.mxu0 0.0
    %5283 = vmatpush1.msra.mxu0 0.0
    %5284 = vmatprep.subr.mxu0 0.0
    %5285 = vmatpush1.msra.mxu0 0.0
    %5286 = vmatprep.subr.mxu0 0.0
    %5287 = vmatpush1.msra.mxu0 0.0
    %5288 = vmatprep.subr.mxu0 0.0
    %5289 = vmatpush1.msra.mxu0 0.0
    %5290 = vmatprep.subr.mxu0 0.0
    %5291 = vmatpush1.msra.mxu0 0.0
    %5292 = vmatprep.subr.mxu0 0.0
    %5293 = vmatpush1.msra.mxu0 0.0
    %5294 = vmatprep.subr.mxu0 0.0
    %5295 = vmatpush1.msra.mxu0 0.0
    %5296 = vmatprep.subr.mxu0 0.0
    %5297 = vmatpush1.msra.mxu0 0.0
    %5298 = vmatprep.subr.mxu0 0.0
    %5299 = vmatpush1.msra.mxu0 0.0
    %5300 = vmatprep.subr.mxu0 0.0
    %5301 = vmatpush1.msra.mxu0 0.0
    %5302 = vmatprep.mubr.f32.mxu0 0.0
    %5303 = vmatmul.mubr.f32.gmra.mrb[0].mxu0 %v4904
    %v5304 = vpop.f32.mrb[0].mxu0
    %v5305 = vadd.f32 0.0, %v5304
    %v5306 = vpop.f32.mrb[0].mxu0
    %5307 = vdwg.mxu0
    %5308 = vset.pattern.permute.xlu0 4
    %5309 = vperm.xlu0 %5308, %v4898
    %v5310 = vpop.permute.xlu0 %5309
    %v5312 = vmul.f32 %v5310, %v5305
    %v5313 = vadd.f32 %v5231, %v5312
    %s5314 = scalar_lea.vmem %s5, 80
    %v5315 = vld [vmem:[%s5314] sm:$0xff]
    %v5316 = vld [vmem:[%s5314 + $0x8] sm:$0x3]
    %v5318 = vsel %vm4906, %v5316, 0
    %5320 = vmatprep.subr.mxu0 0.0
    %5321 = vmatpush1.msra.mxu0 %v5315
    %5322 = vmatprep.subr.mxu0 0.0
    %5323 = vmatpush1.msra.mxu0 %v5318
    %5324 = vmatprep.subr.mxu0 0.0
    %5325 = vmatpush1.msra.mxu0 0.0
    %5326 = vmatprep.subr.mxu0 0.0
    %5327 = vmatpush1.msra.mxu0 0.0
    %5328 = vmatprep.subr.mxu0 0.0
    %5329 = vmatpush1.msra.mxu0 0.0
    %5330 = vmatprep.subr.mxu0 0.0
    %5331 = vmatpush1.msra.mxu0 0.0
    %5332 = vmatprep.subr.mxu0 0.0
    %5333 = vmatpush1.msra.mxu0 0.0
    %5334 = vmatprep.subr.mxu0 0.0
    %5335 = vmatpush1.msra.mxu0 0.0
    %5336 = vmatprep.subr.mxu0 0.0
    %5337 = vmatpush1.msra.mxu0 0.0
    %5338 = vmatprep.subr.mxu0 0.0
    %5339 = vmatpush1.msra.mxu0 0.0
    %5340 = vmatprep.subr.mxu0 0.0
    %5341 = vmatpush1.msra.mxu0 0.0
    %5342 = vmatprep.subr.mxu0 0.0
    %5343 = vmatpush1.msra.mxu0 0.0
    %5344 = vmatprep.subr.mxu0 0.0
    %5345 = vmatpush1.msra.mxu0 0.0
    %5346 = vmatprep.subr.mxu0 0.0
    %5347 = vmatpush1.msra.mxu0 0.0
    %5348 = vmatprep.subr.mxu0 0.0
    %5349 = vmatpush1.msra.mxu0 0.0
    %5350 = vmatprep.subr.mxu0 0.0
    %5351 = vmatpush1.msra.mxu0 0.0
    %5352 = vmatprep.subr.mxu0 0.0
    %5353 = vmatpush1.msra.mxu0 0.0
    %5354 = vmatprep.subr.mxu0 0.0
    %5355 = vmatpush1.msra.mxu0 0.0
    %5356 = vmatprep.subr.mxu0 0.0
    %5357 = vmatpush1.msra.mxu0 0.0
    %5358 = vmatprep.subr.mxu0 0.0
    %5359 = vmatpush1.msra.mxu0 0.0
    %5360 = vmatprep.subr.mxu0 0.0
    %5361 = vmatpush1.msra.mxu0 0.0
    %5362 = vmatprep.subr.mxu0 0.0
    %5363 = vmatpush1.msra.mxu0 0.0
    %5364 = vmatprep.subr.mxu0 0.0
    %5365 = vmatpush1.msra.mxu0 0.0
    %5366 = vmatprep.subr.mxu0 0.0
    %5367 = vmatpush1.msra.mxu0 0.0
    %5368 = vmatprep.subr.mxu0 0.0
    %5369 = vmatpush1.msra.mxu0 0.0
    %5370 = vmatprep.subr.mxu0 0.0
    %5371 = vmatpush1.msra.mxu0 0.0
    %5372 = vmatprep.subr.mxu0 0.0
    %5373 = vmatpush1.msra.mxu0 0.0
    %5374 = vmatprep.subr.mxu0 0.0
    %5375 = vmatpush1.msra.mxu0 0.0
    %5376 = vmatprep.subr.mxu0 0.0
    %5377 = vmatpush1.msra.mxu0 0.0
    %5378 = vmatprep.subr.mxu0 0.0
    %5379 = vmatpush1.msra.mxu0 0.0
    %5380 = vmatprep.subr.mxu0 0.0
    %5381 = vmatpush1.msra.mxu0 0.0
    %5382 = vmatprep.subr.mxu0 0.0
    %5383 = vmatpush1.msra.mxu0 0.0
    %5384 = vmatprep.mubr.f32.mxu0 0.0
    %5385 = vmatmul.mubr.f32.gmra.mrb[0].mxu0 %v4904
    %v5386 = vpop.f32.mrb[0].mxu0
    %v5387 = vadd.f32 0.0, %v5386
    %v5388 = vpop.f32.mrb[0].mxu0
    %5389 = vdwg.mxu0
    %5390 = vset.pattern.permute.xlu0 5
    %5391 = vperm.xlu0 %5390, %v4898
    %v5392 = vpop.permute.xlu0 %5391
    %v5394 = vmul.f32 %v5392, %v5387
    %v5395 = vadd.f32 %v5313, %v5394
    %s5396 = scalar_lea.vmem %s5, 96
    %v5397 = vld [vmem:[%s5396] sm:$0xff]
    %v5398 = vld [vmem:[%s5396 + $0x8] sm:$0x3]
    %v5400 = vsel %vm4906, %v5398, 0
    %5402 = vmatprep.subr.mxu0 0.0
    %5403 = vmatpush1.msra.mxu0 %v5397
    %5404 = vmatprep.subr.mxu0 0.0
    %5405 = vmatpush1.msra.mxu0 %v5400
    %5406 = vmatprep.subr.mxu0 0.0
    %5407 = vmatpush1.msra.mxu0 0.0
    %5408 = vmatprep.subr.mxu0 0.0
    %5409 = vmatpush1.msra.mxu0 0.0
    %5410 = vmatprep.subr.mxu0 0.0
    %5411 = vmatpush1.msra.mxu0 0.0
    %5412 = vmatprep.subr.mxu0 0.0
    %5413 = vmatpush1.msra.mxu0 0.0
    %5414 = vmatprep.subr.mxu0 0.0
    %5415 = vmatpush1.msra.mxu0 0.0
    %5416 = vmatprep.subr.mxu0 0.0
    %5417 = vmatpush1.msra.mxu0 0.0
    %5418 = vmatprep.subr.mxu0 0.0
    %5419 = vmatpush1.msra.mxu0 0.0
    %5420 = vmatprep.subr.mxu0 0.0
    %5421 = vmatpush1.msra.mxu0 0.0
    %5422 = vmatprep.subr.mxu0 0.0
    %5423 = vmatpush1.msra.mxu0 0.0
    %5424 = vmatprep.subr.mxu0 0.0
    %5425 = vmatpush1.msra.mxu0 0.0
    %5426 = vmatprep.subr.mxu0 0.0
    %5427 = vmatpush1.msra.mxu0 0.0
    %5428 = vmatprep.subr.mxu0 0.0
    %5429 = vmatpush1.msra.mxu0 0.0
    %5430 = vmatprep.subr.mxu0 0.0
    %5431 = vmatpush1.msra.mxu0 0.0
    %5432 = vmatprep.subr.mxu0 0.0
    %5433 = vmatpush1.msra.mxu0 0.0
    %5434 = vmatprep.subr.mxu0 0.0
    %5435 = vmatpush1.msra.mxu0 0.0
    %5436 = vmatprep.subr.mxu0 0.0
    %5437 = vmatpush1.msra.mxu0 0.0
    %5438 = vmatprep.subr.mxu0 0.0
    %5439 = vmatpush1.msra.mxu0 0.0
    %5440 = vmatprep.subr.mxu0 0.0
    %5441 = vmatpush1.msra.mxu0 0.0
    %5442 = vmatprep.subr.mxu0 0.0
    %5443 = vmatpush1.msra.mxu0 0.0
    %5444 = vmatprep.subr.mxu0 0.0
    %5445 = vmatpush1.msra.mxu0 0.0
    %5446 = vmatprep.subr.mxu0 0.0
    %5447 = vmatpush1.msra.mxu0 0.0
    %5448 = vmatprep.subr.mxu0 0.0
    %5449 = vmatpush1.msra.mxu0 0.0
    %5450 = vmatprep.subr.mxu0 0.0
    %5451 = vmatpush1.msra.mxu0 0.0
    %5452 = vmatprep.subr.mxu0 0.0
    %5453 = vmatpush1.msra.mxu0 0.0
    %5454 = vmatprep.subr.mxu0 0.0
    %5455 = vmatpush1.msra.mxu0 0.0
    %5456 = vmatprep.subr.mxu0 0.0
    %5457 = vmatpush1.msra.mxu0 0.0
    %5458 = vmatprep.subr.mxu0 0.0
    %5459 = vmatpush1.msra.mxu0 0.0
    %5460 = vmatprep.subr.mxu0 0.0
    %5461 = vmatpush1.msra.mxu0 0.0
    %5462 = vmatprep.subr.mxu0 0.0
    %5463 = vmatpush1.msra.mxu0 0.0
    %5464 = vmatprep.subr.mxu0 0.0
    %5465 = vmatpush1.msra.mxu0 0.0
    %5466 = vmatprep.mubr.f32.mxu0 0.0
    %5467 = vmatmul.mubr.f32.gmra.mrb[0].mxu0 %v4904
    %v5468 = vpop.f32.mrb[0].mxu0
    %v5469 = vadd.f32 0.0, %v5468
    %v5470 = vpop.f32.mrb[0].mxu0
    %5471 = vdwg.mxu0
    %5472 = vset.pattern.permute.xlu0 6
    %5473 = vperm.xlu0 %5472, %v4898
    %v5474 = vpop.permute.xlu0 %5473
    %v5476 = vmul.f32 %v5474, %v5469
    %v5477 = vadd.f32 %v5395, %v5476
    %s5478 = scalar_lea.vmem %s5, 112
    %v5479 = vld [vmem:[%s5478] sm:$0xff]
    %v5480 = vld [vmem:[%s5478 + $0x8] sm:$0x3]
    %v5482 = vsel %vm4906, %v5480, 0
    %5484 = vmatprep.subr.mxu0 0.0
    %5485 = vmatpush1.msra.mxu0 %v5479
    %5486 = vmatprep.subr.mxu0 0.0
    %5487 = vmatpush1.msra.mxu0 %v5482
    %5488 = vmatprep.subr.mxu0 0.0
    %5489 = vmatpush1.msra.mxu0 0.0
    %5490 = vmatprep.subr.mxu0 0.0
    %5491 = vmatpush1.msra.mxu0 0.0
    %5492 = vmatprep.subr.mxu0 0.0
    %5493 = vmatpush1.msra.mxu0 0.0
    %5494 = vmatprep.subr.mxu0 0.0
    %5495 = vmatpush1.msra.mxu0 0.0
    %5496 = vmatprep.subr.mxu0 0.0
    %5497 = vmatpush1.msra.mxu0 0.0
    %5498 = vmatprep.subr.mxu0 0.0
    %5499 = vmatpush1.msra.mxu0 0.0
    %5500 = vmatprep.subr.mxu0 0.0
    %5501 = vmatpush1.msra.mxu0 0.0
    %5502 = vmatprep.subr.mxu0 0.0
    %5503 = vmatpush1.msra.mxu0 0.0
    %5504 = vmatprep.subr.mxu0 0.0
    %5505 = vmatpush1.msra.mxu0 0.0
    %5506 = vmatprep.subr.mxu0 0.0
    %5507 = vmatpush1.msra.mxu0 0.0
    %5508 = vmatprep.subr.mxu0 0.0
    %5509 = vmatpush1.msra.mxu0 0.0
    %5510 = vmatprep.subr.mxu0 0.0
    %5511 = vmatpush1.msra.mxu0 0.0
    %5512 = vmatprep.subr.mxu0 0.0
    %5513 = vmatpush1.msra.mxu0 0.0
    %5514 = vmatprep.subr.mxu0 0.0
    %5515 = vmatpush1.msra.mxu0 0.0
    %5516 = vmatprep.subr.mxu0 0.0
    %5517 = vmatpush1.msra.mxu0 0.0
    %5518 = vmatprep.subr.mxu0 0.0
    %5519 = vmatpush1.msra.mxu0 0.0
    %5520 = vmatprep.subr.mxu0 0.0
    %5521 = vmatpush1.msra.mxu0 0.0
    %5522 = vmatprep.subr.mxu0 0.0
    %5523 = vmatpush1.msra.mxu0 0.0
    %5524 = vmatprep.subr.mxu0 0.0
    %5525 = vmatpush1.msra.mxu0 0.0
    %5526 = vmatprep.subr.mxu0 0.0
    %5527 = vmatpush1.msra.mxu0 0.0
    %5528 = vmatprep.subr.mxu0 0.0
    %5529 = vmatpush1.msra.mxu0 0.0
    %5530 = vmatprep.subr.mxu0 0.0
    %5531 = vmatpush1.msra.mxu0 0.0
    %5532 = vmatprep.subr.mxu0 0.0
    %5533 = vmatpush1.msra.mxu0 0.0
    %5534 = vmatprep.subr.mxu0 0.0
    %5535 = vmatpush1.msra.mxu0 0.0
    %5536 = vmatprep.subr.mxu0 0.0
    %5537 = vmatpush1.msra.mxu0 0.0
    %5538 = vmatprep.subr.mxu0 0.0
    %5539 = vmatpush1.msra.mxu0 0.0
    %5540 = vmatprep.subr.mxu0 0.0
    %5541 = vmatpush1.msra.mxu0 0.0
    %5542 = vmatprep.subr.mxu0 0.0
    %5543 = vmatpush1.msra.mxu0 0.0
    %5544 = vmatprep.subr.mxu0 0.0
    %5545 = vmatpush1.msra.mxu0 0.0
    %5546 = vmatprep.subr.mxu0 0.0
    %5547 = vmatpush1.msra.mxu0 0.0
    %5548 = vmatprep.mubr.f32.mxu0 0.0
    %5549 = vmatmul.mubr.f32.gmra.mrb[0].mxu0 %v4904
    %v5550 = vpop.f32.mrb[0].mxu0
    %v5551 = vadd.f32 0.0, %v5550
    %v5552 = vpop.f32.mrb[0].mxu0
    %5553 = vdwg.mxu0
    %5554 = vset.pattern.permute.xlu0 7
    %5555 = vperm.xlu0 %5554, %v4898
    %v5556 = vpop.permute.xlu0 %5555
    %v5558 = vmul.f32 %v5556, %v5551
    %v5559 = vadd.f32 %v5477, %v5558
    %s5560 = scalar_lea.vmem %s5, 128
    %v5561 = vld [vmem:[%s5560] sm:$0xff]
    %v5562 = vld [vmem:[%s5560 + $0x8] sm:$0x3]
    %v5564 = vsel %vm4906, %v5562, 0
    %5566 = vmatprep.subr.mxu0 0.0
    %5567 = vmatpush1.msra.mxu0 %v5561
    %5568 = vmatprep.subr.mxu0 0.0
    %5569 = vmatpush1.msra.mxu0 %v5564
    %5570 = vmatprep.subr.mxu0 0.0
    %5571 = vmatpush1.msra.mxu0 0.0
    %5572 = vmatprep.subr.mxu0 0.0
    %5573 = vmatpush1.msra.mxu0 0.0
    %5574 = vmatprep.subr.mxu0 0.0
    %5575 = vmatpush1.msra.mxu0 0.0
    %5576 = vmatprep.subr.mxu0 0.0
    %5577 = vmatpush1.msra.mxu0 0.0
    %5578 = vmatprep.subr.mxu0 0.0
    %5579 = vmatpush1.msra.mxu0 0.0
    %5580 = vmatprep.subr.mxu0 0.0
    %5581 = vmatpush1.msra.mxu0 0.0
    %5582 = vmatprep.subr.mxu0 0.0
    %5583 = vmatpush1.msra.mxu0 0.0
    %5584 = vmatprep.subr.mxu0 0.0
    %5585 = vmatpush1.msra.mxu0 0.0
    %5586 = vmatprep.subr.mxu0 0.0
    %5587 = vmatpush1.msra.mxu0 0.0
    %5588 = vmatprep.subr.mxu0 0.0
    %5589 = vmatpush1.msra.mxu0 0.0
    %5590 = vmatprep.subr.mxu0 0.0
    %5591 = vmatpush1.msra.mxu0 0.0
    %5592 = vmatprep.subr.mxu0 0.0
    %5593 = vmatpush1.msra.mxu0 0.0
    %5594 = vmatprep.subr.mxu0 0.0
    %5595 = vmatpush1.msra.mxu0 0.0
    %5596 = vmatprep.subr.mxu0 0.0
    %5597 = vmatpush1.msra.mxu0 0.0
    %5598 = vmatprep.subr.mxu0 0.0
    %5599 = vmatpush1.msra.mxu0 0.0
    %5600 = vmatprep.subr.mxu0 0.0
    %5601 = vmatpush1.msra.mxu0 0.0
    %5602 = vmatprep.subr.mxu0 0.0
    %5603 = vmatpush1.msra.mxu0 0.0
    %5604 = vmatprep.subr.mxu0 0.0
    %5605 = vmatpush1.msra.mxu0 0.0
    %5606 = vmatprep.subr.mxu0 0.0
    %5607 = vmatpush1.msra.mxu0 0.0
    %5608 = vmatprep.subr.mxu0 0.0
    %5609 = vmatpush1.msra.mxu0 0.0
    %5610 = vmatprep.subr.mxu0 0.0
    %5611 = vmatpush1.msra.mxu0 0.0
    %5612 = vmatprep.subr.mxu0 0.0
    %5613 = vmatpush1.msra.mxu0 0.0
    %5614 = vmatprep.subr.mxu0 0.0
    %5615 = vmatpush1.msra.mxu0 0.0
    %5616 = vmatprep.subr.mxu0 0.0
    %5617 = vmatpush1.msra.mxu0 0.0
    %5618 = vmatprep.subr.mxu0 0.0
    %5619 = vmatpush1.msra.mxu0 0.0
    %5620 = vmatprep.subr.mxu0 0.0
    %5621 = vmatpush1.msra.mxu0 0.0
    %5622 = vmatprep.subr.mxu0 0.0
    %5623 = vmatpush1.msra.mxu0 0.0
    %5624 = vmatprep.subr.mxu0 0.0
    %5625 = vmatpush1.msra.mxu0 0.0
    %5626 = vmatprep.subr.mxu0 0.0
    %5627 = vmatpush1.msra.mxu0 0.0
    %5628 = vmatprep.subr.mxu0 0.0
    %5629 = vmatpush1.msra.mxu0 0.0
    %5630 = vmatprep.mubr.f32.mxu0 0.0
    %5631 = vmatmul.mubr.f32.gmra.mrb[0].mxu0 %v4904
    %v5632 = vpop.f32.mrb[0].mxu0
    %v5633 = vadd.f32 0.0, %v5632
    %v5634 = vpop.f32.mrb[0].mxu0
    %5635 = vdwg.mxu0
    %5636 = vset.pattern.permute.xlu0 8
    %5637 = vperm.xlu0 %5636, %v4898
    %v5638 = vpop.permute.xlu0 %5637
    %v5640 = vmul.f32 %v5638, %v5633
    %v5641 = vadd.f32 %v5559, %v5640
    %s5642 = scalar_lea.vmem %s5, 144
    %v5643 = vld [vmem:[%s5642] sm:$0xff]
    %v5644 = vld [vmem:[%s5642 + $0x8] sm:$0x3]
    %v5646 = vsel %vm4906, %v5644, 0
    %5648 = vmatprep.subr.mxu0 0.0
    %5649 = vmatpush1.msra.mxu0 %v5643
    %5650 = vmatprep.subr.mxu0 0.0
    %5651 = vmatpush1.msra.mxu0 %v5646
    %5652 = vmatprep.subr.mxu0 0.0
    %5653 = vmatpush1.msra.mxu0 0.0
    %5654 = vmatprep.subr.mxu0 0.0
    %5655 = vmatpush1.msra.mxu0 0.0
    %5656 = vmatprep.subr.mxu0 0.0
    %5657 = vmatpush1.msra.mxu0 0.0
    %5658 = vmatprep.subr.mxu0 0.0
    %5659 = vmatpush1.msra.mxu0 0.0
    %5660 = vmatprep.subr.mxu0 0.0
    %5661 = vmatpush1.msra.mxu0 0.0
    %5662 = vmatprep.subr.mxu0 0.0
    %5663 = vmatpush1.msra.mxu0 0.0
    %5664 = vmatprep.subr.mxu0 0.0
    %5665 = vmatpush1.msra.mxu0 0.0
    %5666 = vmatprep.subr.mxu0 0.0
    %5667 = vmatpush1.msra.mxu0 0.0
    %5668 = vmatprep.subr.mxu0 0.0
    %5669 = vmatpush1.msra.mxu0 0.0
    %5670 = vmatprep.subr.mxu0 0.0
    %5671 = vmatpush1.msra.mxu0 0.0
    %5672 = vmatprep.subr.mxu0 0.0
    %5673 = vmatpush1.msra.mxu0 0.0
    %5674 = vmatprep.subr.mxu0 0.0
    %5675 = vmatpush1.msra.mxu0 0.0
    %5676 = vmatprep.subr.mxu0 0.0
    %5677 = vmatpush1.msra.mxu0 0.0
    %5678 = vmatprep.subr.mxu0 0.0
    %5679 = vmatpush1.msra.mxu0 0.0
    %5680 = vmatprep.subr.mxu0 0.0
    %5681 = vmatpush1.msra.mxu0 0.0
    %5682 = vmatprep.subr.mxu0 0.0
    %5683 = vmatpush1.msra.mxu0 0.0
    %5684 = vmatprep.subr.mxu0 0.0
    %5685 = vmatpush1.msra.mxu0 0.0
    %5686 = vmatprep.subr.mxu0 0.0
    %5687 = vmatpush1.msra.mxu0 0.0
    %5688 = vmatprep.subr.mxu0 0.0
    %5689 = vmatpush1.msra.mxu0 0.0
    %5690 = vmatprep.subr.mxu0 0.0
    %5691 = vmatpush1.msra.mxu0 0.0
    %5692 = vmatprep.subr.mxu0 0.0
    %5693 = vmatpush1.msra.mxu0 0.0
    %5694 = vmatprep.subr.mxu0 0.0
    %5695 = vmatpush1.msra.mxu0 0.0
    %5696 = vmatprep.subr.mxu0 0.0
    %5697 = vmatpush1.msra.mxu0 0.0
    %5698 = vmatprep.subr.mxu0 0.0
    %5699 = vmatpush1.msra.mxu0 0.0
    %5700 = vmatprep.subr.mxu0 0.0
    %5701 = vmatpush1.msra.mxu0 0.0
    %5702 = vmatprep.subr.mxu0 0.0
    %5703 = vmatpush1.msra.mxu0 0.0
    %5704 = vmatprep.subr.mxu0 0.0
    %5705 = vmatpush1.msra.mxu0 0.0
    %5706 = vmatprep.subr.mxu0 0.0
    %5707 = vmatpush1.msra.mxu0 0.0
    %5708 = vmatprep.subr.mxu0 0.0
    %5709 = vmatpush1.msra.mxu0 0.0
    %5710 = vmatprep.subr.mxu0 0.0
    %5711 = vmatpush1.msra.mxu0 0.0
    %5712 = vmatprep.mubr.f32.mxu0 0.0
    %5713 = vmatmul.mubr.f32.gmra.mrb[0].mxu0 %v4904
    %v5714 = vpop.f32.mrb[0].mxu0
    %v5715 = vadd.f32 0.0, %v5714
    %v5716 = vpop.f32.mrb[0].mxu0
    %5717 = vdwg.mxu0
    %5718 = vset.pattern.permute.xlu0 9
    %5719 = vperm.xlu0 %5718, %v4898
    %v5720 = vpop.permute.xlu0 %5719
    %v5722 = vmul.f32 %v5720, %v5715
    %v5723 = vadd.f32 %v5641, %v5722
    %vm5724 = vcmask 664576
    %5725 = vst.msk [vmem:[#allocation2] sm:$0x3] %vm5724, %v5723
    // Predicated region
    $region26: #{_lambda_.3} parent=1 // pred_check
      _
    $region27: #{_lambda_.3} parent=1 // pred_check_branch
      %5727 = sbr.rel (0) target = $region29
    $region28: #{_lambda_.3} parent=1 // pred_region
      %s5729 = ssub.s32 32, 32
      %5730 = vsyncadd [#allocation3], %s5729
      %s5732 = sshll.u32 [#allocation2], 4
      %s5733 = int_to_ptr.vmem [resolvable:$true] %s5732
      %5735 = dma.vmem_to_hbm [thread:$0]  %s5733, 32, %s6, [#allocation3]
    $region29: #{_lambda_.3} parent=1 // pred_fallthru
      _
    // Predicated region
    $region30: #{_lambda_.3} parent=1 // pred_check
      _
    $region31: #{_lambda_.3} parent=1 // pred_check_branch
      %5737 = sbr.rel (0) target = $region33
    $region32: #{_lambda_.3} parent=1 // pred_region
      %5738 = dma.done [#allocation3], 32
    $region33: #{_lambda_.3} parent=1 // pred_fallthru
      _
    %5739 = vsyncpa [#allocation3], 1

</llo_original>
